<compile_context>
chip_gen: v7x
topology: tpu7x:2x2x1
jax: 0.10.0
libtpu: 0.0.40
codegen_flags: <defaults>
</compile_context>

<pallas_src>
import functools

import numpy as np
import jax
import jax.numpy as jnp
from jax import lax
from jax.experimental import pallas as pl
from jax.experimental.pallas import tpu as pltpu


_BN_EPS = 1e-5


# ----------------------------------------------------------------------------
# Fused kernel: conv stack + head + TPS grid + bilinear sampling, per image.
# ----------------------------------------------------------------------------

def _fused_tps_stn_kernel(x1_ref, img_ref,
                          w1_ref, w2_ref, w3_ref, w4_ref,
                          s1_ref, s2_ref, s3_ref,
                          fc1w_ref, fc1b_ref, wxy_ref, bxy_ref,
                          out_ref,
                          c2_ref, c3_ref, c4_ref,
                          *, H, W, geom):
    (Wp2, L2), (Wp3, L3), (Wp4, L4) = geom
    f32 = jnp.float32

    def pool_to_padded(y, row_stride, s_ref):
        """ReLU'd conv output (rows = flattened pixels) -> 2x2/2 max-pool -> next
        layer's zero-padded flattened input, via one constant selection matmul."""
        h = jnp.maximum(y[:-1, :], y[1:, :])                       # horizontal pair max
        v = jnp.maximum(h[:-row_stride, :], h[row_stride:, :])     # + vertical pair max
        return jnp.dot(s_ref[...], v.astype(jnp.bfloat16),
                       preferred_element_type=f32)                 # (next_pad_rows, C)

    def conv3x3_packed(x, w_ref, c_ref, Wp, L):
        """Assemble the (L, 9*Cin) im2col tile in VMEM scratch (9 shifted row-slices at
        128-aligned lane offsets), then one K-packed MXU matmul + ReLU."""
        cin = x.shape[1]
        for t in range(9):
            ky, kx = divmod(t, 3)
            off = ky * Wp + kx
            c_ref[:, t * cin:(t + 1) * cin] = x[off:off + L, :].astype(jnp.bfloat16)
        return jnp.maximum(
            jnp.dot(c_ref[...], w_ref[...], preferred_element_type=f32), 0.0)

    # ---- layer 1: wrapper-packed im2col (H*W, 9*Cin) @ (9*Cin, 128) --------------
    y = jnp.maximum(
        jnp.dot(x1_ref[0], w1_ref[...], preferred_element_type=f32), 0.0)
    x = pool_to_padded(y, W, s1_ref)                               # (Hp2*Wp2, 128)

    # ---- layers 2..4 --------------------------------------------------------------
    y = conv3x3_packed(x, w2_ref, c2_ref, Wp2, L2)
    x = pool_to_padded(y, Wp2, s2_ref)                             # (Hp3*Wp3, 128)

    y = conv3x3_packed(x, w3_ref, c3_ref, Wp3, L3)
    x = pool_to_padded(y, Wp3, s3_ref)                             # (Hp4*Wp4, 256)

    y = conv3x3_packed(x, w4_ref, c4_ref, Wp4, L4)                 # (L4, 512)

    # ---- AdaptiveAvgPool2d(1): mean over the valid conv rows of the last layer ----
    H4, W4 = H // 8, W // 8
    feat = jnp.sum(y[0:W4, :], axis=0, keepdims=True)
    for r in range(1, H4):
        feat = feat + jnp.sum(y[r * Wp4:r * Wp4 + W4, :], axis=0, keepdims=True)
    feat = feat * (1.0 / float(H4 * W4))                           # (1, 512)

    # ---- localization head: fc1+ReLU, fc2 pre-folded with P_hat @ inv_delta_C -----
    feat8 = jnp.broadcast_to(feat, (8, feat.shape[1]))             # avoid an M=1 matmul
    hfc = jnp.maximum(
        jnp.dot(feat8, fc1w_ref[...], preferred_element_type=f32) + fc1b_ref[...], 0.0)
    g = jnp.dot(hfc, wxy_ref[...], preferred_element_type=f32) + bxy_ref[...]
    n = H * W
    gx = g[0:1, 0:n]                                               # (1, H*W) grid x
    gy = g[0:1, n:2 * n]                                           # (1, H*W) grid y

    # ---- grid_sample (bilinear, padding_mode='border', align_corners=False) -------
    ix = jnp.clip((gx + 1.0) * (W * 0.5) - 0.5, 0.0, W - 1.0)
    iy = jnp.clip((gy + 1.0) * (H * 0.5) - 0.5, 0.0, H - 1.0)
    x0f = jnp.floor(ix)
    y0f = jnp.floor(iy)
    fx = ix - x0f
    fy = iy - y0f
    x0 = x0f.astype(jnp.int32)
    y0 = y0f.astype(jnp.int32)
    x1 = jnp.minimum(x0 + 1, W - 1)
    y1 = jnp.minimum(y0 + 1, H - 1)
    # (H*W, H*W) interpolation matrix; coincident taps (border clamp) sum correctly.
    pp = lax.broadcasted_iota(jnp.int32, (n, n), 0)
    interp = (jnp.where(pp == y0 * W + x0, (1.0 - fx) * (1.0 - fy), 0.0)
              + jnp.where(pp == y0 * W + x1, fx * (1.0 - fy), 0.0)
              + jnp.where(pp == y1 * W + x0, (1.0 - fx) * fy, 0.0)
              + jnp.where(pp == y1 * W + x1, fx * fy, 0.0))
    # (C, H*W) = (C, H*W) @ (H*W, H*W): output lane axis = H*W (lane-dense), f32.
    out_ref[0] = jnp.dot(img_ref[0], interp, preferred_element_type=f32)


# ----------------------------------------------------------------------------
# Constant preparation (done ONCE, outside the jitted forward)
# ----------------------------------------------------------------------------

def _pool_pad_matrix(h_in, w_in, row_stride, next_wp, len_v):
    """Selection matrix folding: pick the rows of the shifted-max array that hold the
    2x2 pool results and scatter them into the next layer's zero-padded flat layout."""
    h_out, w_out = h_in // 2, w_in // 2
    next_hp = h_out + 2
    S = np.zeros((next_hp * next_wp, len_v), np.float32)
    for yo in range(h_out):
        for xo in range(w_out):
            S[(yo + 1) * next_wp + (xo + 1), 2 * yo * row_stride + 2 * xo] = 1.0
    return jnp.asarray(S, jnp.bfloat16)


def prepare_constants(params, A_F, H, W):
    """BN-fold + repack conv weights (bf16), pooling/padding selection matrices, and
    the fc2 weights pre-folded with the constant TPS transform."""
    scale = float(1.0 / np.sqrt(1.0 + _BN_EPS))   # BN eval with default buffers

    def pack_conv(w_hwio, cin_pad=0, cout_pad=0):
        w = w_hwio * scale
        if cin_pad or cout_pad:
            w = jnp.pad(w, ((0, 0), (0, 0), (0, cin_pad), (0, cout_pad)))
        kh, kw, ci, co = w.shape
        return w.reshape(kh * kw * ci, co).astype(jnp.bfloat16)

    H2, W2 = H // 2, W // 2
    H3, W3 = H // 4, W // 4
    Wp2, L2 = W2 + 2, (H2 - 1) * (W2 + 2) + W2
    Wp3, L3 = W3 + 2, (H3 - 1) * (W3 + 2) + W3
    Wp4 = (W // 8) + 2

    consts = {
        "w1p": pack_conv(params["w1"], cout_pad=64),   # Cout 64 -> 128 (lane-dense)
        "w2p": pack_conv(params["w2"], cin_pad=64),    # match the padded layer-1 output
        "w3p": pack_conv(params["w3"]),
        "w4p": pack_conv(params["w4"]),
        "S1": _pool_pad_matrix(H, W, W, Wp2, H * W - 1 - W),
        "S2": _pool_pad_matrix(H2, W2, Wp2, Wp3, L2 - 1 - Wp2),
        "S3": _pool_pad_matrix(H3, W3, Wp3, Wp4, L3 - 1 - Wp3),
        "fc1w": params["fc1_w"],
        "fc1b": params["fc1_b"][None, :],
    }
    # Fold fc2 with the fiducial part of P_hat @ inv_delta_C (x / y columns).
    w2, b2 = params["fc2_w"], params["fc2_b"]
    wx = w2[:, 0::2] @ A_F
    wy = w2[:, 1::2] @ A_F
    bx = (b2[0::2] @ A_F)[None, :]
    by = (b2[1::2] @ A_F)[None, :]
    consts["wxy"] = jnp.concatenate([wx, wy], axis=1)   # (256, 2*H*W)
    consts["bxy"] = jnp.concatenate([bx, by], axis=1)   # (1,   2*H*W)
    return consts


# ----------------------------------------------------------------------------
# Forward
# ----------------------------------------------------------------------------

def tps_forward(consts, batch_I):
    B, C, H, W = batch_I.shape
    assert H % 8 == 0 and W % 8 == 0
    n = H * W

    H2, W2 = H // 2, W // 2
    H3, W3 = H // 4, W // 4
    H4, W4 = H // 8, W // 8
    Wp2, L2 = W2 + 2, (H2 - 1) * (W2 + 2) + W2
    Wp3, L3 = W3 + 2, (H3 - 1) * (W3 + 2) + W3
    Wp4, L4 = W4 + 2, (H4 - 1) * (W4 + 2) + W4
    geom = ((Wp2, L2), (Wp3, L3), (Wp4, L4))

    # Layer-1 im2col (K = 9*Cin = 36) built once by XLA; everything downstream stays
    # in VMEM inside the single fused kernel.
    x_nhwc = jnp.transpose(batch_I, (0, 2, 3, 1))
    xp = jnp.pad(x_nhwc, ((0, 0), (1, 1), (1, 1), (0, 0)))
    x1im = jnp.concatenate(
        [xp[:, ky:ky + H, kx:kx + W, :] for ky in range(3) for kx in range(3)],
        axis=-1).reshape(B, n, 9 * C).astype(jnp.bfloat16)
    img_flat = batch_I.reshape(B, C, n)   # f32 source pixels for the sampler

    kernel = functools.partial(_fused_tps_stn_kernel, H=H, W=W, geom=geom)
    out = pl.pallas_call(
        kernel,
        out_shape=jax.ShapeDtypeStruct((B, C, n), jnp.float32),
        grid=(B,),
        in_specs=[
            pl.BlockSpec((1, n, 9 * C), lambda b: (b, 0, 0)),   # per-image im2col
            pl.BlockSpec((1, C, n), lambda b: (b, 0, 0)),       # per-image source pixels
            pl.BlockSpec(consts["w1p"].shape, lambda b: (0, 0)),
            pl.BlockSpec(consts["w2p"].shape, lambda b: (0, 0)),
            pl.BlockSpec(consts["w3p"].shape, lambda b: (0, 0)),
            pl.BlockSpec(consts["w4p"].shape, lambda b: (0, 0)),
            pl.BlockSpec(consts["S1"].shape, lambda b: (0, 0)),
            pl.BlockSpec(consts["S2"].shape, lambda b: (0, 0)),
            pl.BlockSpec(consts["S3"].shape, lambda b: (0, 0)),
            pl.BlockSpec(consts["fc1w"].shape, lambda b: (0, 0)),
            pl.BlockSpec(consts["fc1b"].shape, lambda b: (0, 0)),
            pl.BlockSpec(consts["wxy"].shape, lambda b: (0, 0)),
            pl.BlockSpec(consts["bxy"].shape, lambda b: (0, 0)),
        ],
        out_specs=pl.BlockSpec((1, C, n), lambda b: (b, 0, 0)),
        scratch_shapes=[
            pltpu.VMEM((L2, 9 * 128), jnp.bfloat16),   # layer-2 im2col tile
            pltpu.VMEM((L3, 9 * 128), jnp.bfloat16),   # layer-3 im2col tile
            pltpu.VMEM((L4, 9 * 256), jnp.bfloat16),   # layer-4 im2col tile
        ],
        compiler_params=pltpu.CompilerParams(
            dimension_semantics=("parallel",),
            vmem_limit_bytes=48 * 1024 * 1024),        # < 64 MiB physical on v7x
    )(x1im, img_flat,
      consts["w1p"], consts["w2p"], consts["w3p"], consts["w4p"],
      consts["S1"], consts["S2"], consts["S3"],
      consts["fc1w"], consts["fc1b"], consts["wxy"], consts["bxy"])
    return out.reshape(B, C, H, W)


# ----------------------------------------------------------------------------
# GridGenerator constants (numpy, same math as the PyTorch __init__)
# ----------------------------------------------------------------------------

def build_C(F_):
    ctrl_pts_x = np.linspace(-1.0, 1.0, int(F_ / 2))
    ctrl_pts_y_top = -1 * np.ones(int(F_ / 2))
    ctrl_pts_y_bottom = np.ones(int(F_ / 2))
    ctrl_pts_top = np.stack([ctrl_pts_x, ctrl_pts_y_top], axis=1)
    ctrl_pts_bottom = np.stack([ctrl_pts_x, ctrl_pts_y_bottom], axis=1)
    return np.concatenate([ctrl_pts_top, ctrl_pts_bottom], axis=0)


def build_inv_delta_C(F_, C):
    hat_C = np.zeros((F_, F_), dtype=float)
    for i in range(F_):
        for j in range(i, F_):
            r = np.linalg.norm(C[i] - C[j])
            hat_C[i, j] = r
            hat_C[j, i] = r
    np.fill_diagonal(hat_C, 1)
    hat_C = hat_C ** 2 * np.log(hat_C)
    delta_C = np.concatenate([
        np.concatenate([np.ones((F_, 1)), C, hat_C], axis=1),
        np.concatenate([np.zeros((2, 3)), np.transpose(C)], axis=1),
        np.concatenate([np.zeros((1, 3)), np.ones((1, F_))], axis=1)], axis=0)
    return np.linalg.inv(delta_C)


def build_P(I_r_width, I_r_height):
    I_r_grid_x = (np.arange(-I_r_width, I_r_width, 2) + 1.0) / I_r_width
    I_r_grid_y = (np.arange(-I_r_height, I_r_height, 2) + 1.0) / I_r_height
    P = np.stack(np.meshgrid(I_r_grid_x, I_r_grid_y), axis=2)
    return P.reshape([-1, 2])


def build_P_hat(F_, C, P, eps=1e-6):
    n = P.shape[0]
    P_tile = np.tile(np.expand_dims(P, axis=1), (1, F_, 1))
    C_tile = np.expand_dims(C, axis=0)
    P_diff = P_tile - C_tile
    rbf_norm = np.linalg.norm(P_diff, ord=2, axis=2, keepdims=False)
    rbf = np.multiply(np.square(rbf_norm), np.log(rbf_norm + eps))
    return np.concatenate([np.ones((n, 1)), P, rbf], axis=1)


def build_A_F(F_, I_r_width, I_r_height):
    """A_F = ((P_hat @ inv_delta_C)[:, :F]).T — the only part of the TPS transform that
    acts on the predicted fiducials (the trailing 3 rows of C_aug are zero)."""
    C_np = build_C(F_)
    inv_delta_C = build_inv_delta_C(F_, C_np)
    P_hat = build_P_hat(F_, C_np, build_P(I_r_width, I_r_height))
    M0 = P_hat @ inv_delta_C
    return jnp.asarray(M0[:, :F_].T, jnp.float32)                 # (F, H*W)


# ----------------------------------------------------------------------------
# Parameter init (matches the PyTorch module's init, incl. RARE fc2 init)
# ----------------------------------------------------------------------------

def init_params(key, F_, in_ch):
    ks = jax.random.split(key, 5)

    def conv_w(k, cin, cout):
        return (jax.random.normal(k, (3, 3, cin, cout), jnp.float32)
                / np.sqrt(9.0 * cin))

    params = {
        "w1": conv_w(ks[0], in_ch, 64),
        "w2": conv_w(ks[1], 64, 128),
        "w3": conv_w(ks[2], 128, 256),
        "w4": conv_w(ks[3], 256, 512),
        "fc1_w": jax.random.normal(ks[4], (512, 256), jnp.float32) / np.sqrt(512.0),
        "fc1_b": jnp.zeros((256,), jnp.float32),
        "fc2_w": jnp.zeros((256, F_ * 2), jnp.float32),   # RARE init: zero weight
    }
    ctrl_pts_x = np.linspace(-1.0, 1.0, int(F_ / 2))
    ctrl_pts_y_top = np.linspace(0.0, -1.0, num=int(F_ / 2))
    ctrl_pts_y_bottom = np.linspace(1.0, 0.0, num=int(F_ / 2))
    initial_bias = np.concatenate(
        [np.stack([ctrl_pts_x, ctrl_pts_y_top], axis=1),
         np.stack([ctrl_pts_x, ctrl_pts_y_bottom], axis=1)], axis=0)
    params["fc2_b"] = jnp.asarray(initial_bias.reshape(-1), jnp.float32)
    return params


if __name__ == "__main__":
    configs = {"NUM_FIDUCIAL": 20, "IMG_HEIGHT_SIZE": 16,
               "IMG_WIDTH_SIZE": 16, "INPUT_CHANNEL": 4}
    F_ = configs["NUM_FIDUCIAL"]
    H = configs["IMG_HEIGHT_SIZE"]
    W = configs["IMG_WIDTH_SIZE"]
    Cin = configs["INPUT_CHANNEL"]
    B = 2

    key = jax.random.PRNGKey(0)
    k_param, k_data = jax.random.split(key)
    params = init_params(k_param, F_, Cin)
    A_F = build_A_F(F_, W, H)                              # (F, H*W), I_r_size == I_size
    consts = prepare_constants(params, A_F, H, W)          # hoisted: done once

    batch_I = jax.random.normal(k_data, (B, Cin, H, W), jnp.float32)

    fwd = jax.jit(tps_forward)
    out = jax.block_until_ready(fwd(consts, batch_I))

    assert out.shape == (B, Cin, H, W), out.shape
    out_np = np.asarray(out)
    assert np.all(np.isfinite(out_np))

    # Self-check: at RARE init fc2's weight is zero, so the sampling grid equals the
    # folded bias alone; verify the fused f32 sampler against a numpy bilinear reference.
    bxy_np = np.asarray(consts["bxy"])[0]
    gx_np, gy_np = bxy_np[:H * W], bxy_np[H * W:]
    img_np = np.asarray(batch_I)
    ixr = np.clip((gx_np + 1.0) * (W * 0.5) - 0.5, 0.0, W - 1.0)
    iyr = np.clip((gy_np + 1.0) * (H * 0.5) - 0.5, 0.0, H - 1.0)
    x0r = np.floor(ixr).astype(np.int64)
    y0r = np.floor(iyr).astype(np.int64)
    fxr, fyr = ixr - x0r, iyr - y0r
    x1r = np.minimum(x0r + 1, W - 1)
    y1r = np.minimum(y0r + 1, H - 1)
    ref = ((1 - fxr) * (1 - fyr) * img_np[:, :, y0r, x0r]
           + fxr * (1 - fyr) * img_np[:, :, y0r, x1r]
           + (1 - fxr) * fyr * img_np[:, :, y1r, x0r]
           + fxr * fyr * img_np[:, :, y1r, x1r]).reshape(B, Cin, H, W)
    assert np.allclose(out_np, ref, atol=1e-3), "mismatch vs bilinear reference"

    print("KERNEL_OK")
</pallas_src>

<mosaic_0001>
module attributes {stable_mosaic.version = 11 : i64} {
  func.func @_fused_tps_stn_kernel(%arg0: i32, %arg1: memref<1x256x36xbf16, #tpu.memory_space<vmem>>, %arg2: memref<1x4x256xf32, #tpu.memory_space<vmem>>, %arg3: memref<36x128xbf16, #tpu.memory_space<vmem>>, %arg4: memref<1152x128xbf16, #tpu.memory_space<vmem>>, %arg5: memref<1152x256xbf16, #tpu.memory_space<vmem>>, %arg6: memref<2304x512xbf16, #tpu.memory_space<vmem>>, %arg7: memref<100x239xbf16, #tpu.memory_space<vmem>>, %arg8: memref<36x67xbf16, #tpu.memory_space<vmem>>, %arg9: memref<16x15xbf16, #tpu.memory_space<vmem>>, %arg10: memref<512x256xf32, #tpu.memory_space<vmem>>, %arg11: memref<1x256xf32, #tpu.memory_space<vmem>>, %arg12: memref<256x512xf32, #tpu.memory_space<vmem>>, %arg13: memref<1x512xf32, #tpu.memory_space<vmem>>, %arg14: memref<1x4x256xf32, #tpu.memory_space<vmem>>, %arg15: memref<78x1152xbf16, #tpu.memory_space<vmem>>, %arg16: memref<22x1152xbf16, #tpu.memory_space<vmem>>, %arg17: memref<6x2304xbf16, #tpu.memory_space<vmem>>) attributes {dimension_semantics = [#tpu.dimension_semantics<parallel>], iteration_bounds = array<i64: 2>, scalar_prefetch = 0 : i64, scratch_operands = 3 : i64, tpu.core_type = #tpu.core_type<tc>, window_params = [{transform_indices = @transform_0, window_bounds = array<i64: 1, 256, 36>}, {transform_indices = @transform_1, window_bounds = array<i64: 1, 4, 256>}, {pipeline_mode = #tpu.pipeline_mode<synchronous>, transform_indices = @transform_2, window_bounds = array<i64: 36, 128>}, {pipeline_mode = #tpu.pipeline_mode<synchronous>, transform_indices = @transform_3, window_bounds = array<i64: 1152, 128>}, {pipeline_mode = #tpu.pipeline_mode<synchronous>, transform_indices = @transform_4, window_bounds = array<i64: 1152, 256>}, {pipeline_mode = #tpu.pipeline_mode<synchronous>, transform_indices = @transform_5, window_bounds = array<i64: 2304, 512>}, {pipeline_mode = #tpu.pipeline_mode<synchronous>, transform_indices = @transform_6, window_bounds = array<i64: 100, 239>}, {pipeline_mode = #tpu.pipeline_mode<synchronous>, transform_indices = @transform_7, window_bounds = array<i64: 36, 67>}, {pipeline_mode = #tpu.pipeline_mode<synchronous>, transform_indices = @transform_8, window_bounds = array<i64: 16, 15>}, {pipeline_mode = #tpu.pipeline_mode<synchronous>, transform_indices = @transform_9, window_bounds = array<i64: 512, 256>}, {pipeline_mode = #tpu.pipeline_mode<synchronous>, transform_indices = @transform_10, window_bounds = array<i64: 1, 256>}, {pipeline_mode = #tpu.pipeline_mode<synchronous>, transform_indices = @transform_11, window_bounds = array<i64: 256, 512>}, {pipeline_mode = #tpu.pipeline_mode<synchronous>, transform_indices = @transform_12, window_bounds = array<i64: 1, 512>}, {transform_indices = @transform_13, window_bounds = array<i64: 1, 4, 256>}]} {
    %c0 = arith.constant 0 : index
    %c0_0 = arith.constant 0 : index
    %c0_1 = arith.constant 0 : index
    %0 = vector.load %arg1[%c0, %c0_0, %c0_1] : memref<1x256x36xbf16, #tpu.memory_space<vmem>>, vector<1x256x36xbf16>
    %1 = vector.shape_cast %0 : vector<1x256x36xbf16> to vector<256x36xbf16>
    %c0_2 = arith.constant 0 : index
    %c0_3 = arith.constant 0 : index
    %2 = vector.load %arg3[%c0_2, %c0_3] : memref<36x128xbf16, #tpu.memory_space<vmem>>, vector<36x128xbf16>
    %cst = arith.constant dense<0.000000e+00> : vector<256x128xf32>
    %3 = tpu.matmul %1, %2, %cst {dimension_numbers = #tpu.dot_dimension_numbers<[1], [0], [0], [1], [0, 0, 1, 1], [], []>} : vector<256x36xbf16>, vector<36x128xbf16>, vector<256x128xf32> -> vector<256x128xf32>
    %cst_4 = arith.constant 0.000000e+00 : f32
    %4 = vector.broadcast %cst_4 : f32 to vector<256x128xf32>
    %5 = arith.maximumf %3, %4 : vector<256x128xf32>
    %6 = vector.extract_strided_slice %5 {offsets = [0, 0], sizes = [255, 128], strides = [1, 1]} : vector<256x128xf32> to vector<255x128xf32>
    %7 = vector.extract_strided_slice %5 {offsets = [1, 0], sizes = [255, 128], strides = [1, 1]} : vector<256x128xf32> to vector<255x128xf32>
    %8 = arith.maximumf %6, %7 : vector<255x128xf32>
    %9 = vector.extract_strided_slice %8 {offsets = [0, 0], sizes = [239, 128], strides = [1, 1]} : vector<255x128xf32> to vector<239x128xf32>
    %10 = vector.extract_strided_slice %8 {offsets = [16, 0], sizes = [239, 128], strides = [1, 1]} : vector<255x128xf32> to vector<239x128xf32>
    %11 = arith.maximumf %9, %10 : vector<239x128xf32>
    %c0_5 = arith.constant 0 : index
    %c0_6 = arith.constant 0 : index
    %12 = vector.load %arg7[%c0_5, %c0_6] : memref<100x239xbf16, #tpu.memory_space<vmem>>, vector<100x239xbf16>
    %13 = arith.truncf %11 : vector<239x128xf32> to vector<239x128xbf16>
    %cst_7 = arith.constant dense<0.000000e+00> : vector<100x128xf32>
    %14 = tpu.matmul %12, %13, %cst_7 {dimension_numbers = #tpu.dot_dimension_numbers<[1], [0], [0], [1], [0, 0, 1, 1], [], []>} : vector<100x239xbf16>, vector<239x128xbf16>, vector<100x128xf32> -> vector<100x128xf32>
    %15 = vector.extract_strided_slice %14 {offsets = [0, 0], sizes = [78, 128], strides = [1, 1]} : vector<100x128xf32> to vector<78x128xf32>
    %16 = arith.truncf %15 : vector<78x128xf32> to vector<78x128xbf16>
    %c0_8 = arith.constant 0 : index
    %c0_9 = arith.constant 0 : index
    %17 = vector.load %arg15[%c0_8, %c0_9] : memref<78x1152xbf16, #tpu.memory_space<vmem>>, vector<78x128xbf16>
    tpu.vector_store %arg15[%c0_8, %c0_9], %16 {strides = array<i32>} : memref<78x1152xbf16, #tpu.memory_space<vmem>>, vector<78x128xbf16>,
    %18 = vector.extract_strided_slice %14 {offsets = [1, 0], sizes = [78, 128], strides = [1, 1]} : vector<100x128xf32> to vector<78x128xf32>
    %19 = arith.truncf %18 : vector<78x128xf32> to vector<78x128xbf16>
    %c0_10 = arith.constant 0 : index
    %c128 = arith.constant 128 : index
    %20 = vector.load %arg15[%c0_10, %c128] : memref<78x1152xbf16, #tpu.memory_space<vmem>>, vector<78x128xbf16>
    tpu.vector_store %arg15[%c0_10, %c128], %19 {strides = array<i32>} : memref<78x1152xbf16, #tpu.memory_space<vmem>>, vector<78x128xbf16>,
    %21 = vector.extract_strided_slice %14 {offsets = [2, 0], sizes = [78, 128], strides = [1, 1]} : vector<100x128xf32> to vector<78x128xf32>
    %22 = arith.truncf %21 : vector<78x128xf32> to vector<78x128xbf16>
    %c0_11 = arith.constant 0 : index
    %c256 = arith.constant 256 : index
    %23 = vector.load %arg15[%c0_11, %c256] : memref<78x1152xbf16, #tpu.memory_space<vmem>>, vector<78x128xbf16>
    tpu.vector_store %arg15[%c0_11, %c256], %22 {strides = array<i32>} : memref<78x1152xbf16, #tpu.memory_space<vmem>>, vector<78x128xbf16>,
    %24 = vector.extract_strided_slice %14 {offsets = [10, 0], sizes = [78, 128], strides = [1, 1]} : vector<100x128xf32> to vector<78x128xf32>
    %25 = arith.truncf %24 : vector<78x128xf32> to vector<78x128xbf16>
    %c0_12 = arith.constant 0 : index
    %c384 = arith.constant 384 : index
    %26 = vector.load %arg15[%c0_12, %c384] : memref<78x1152xbf16, #tpu.memory_space<vmem>>, vector<78x128xbf16>
    tpu.vector_store %arg15[%c0_12, %c384], %25 {strides = array<i32>} : memref<78x1152xbf16, #tpu.memory_space<vmem>>, vector<78x128xbf16>,
    %27 = vector.extract_strided_slice %14 {offsets = [11, 0], sizes = [78, 128], strides = [1, 1]} : vector<100x128xf32> to vector<78x128xf32>
    %28 = arith.truncf %27 : vector<78x128xf32> to vector<78x128xbf16>
    %c0_13 = arith.constant 0 : index
    %c512 = arith.constant 512 : index
    %29 = vector.load %arg15[%c0_13, %c512] : memref<78x1152xbf16, #tpu.memory_space<vmem>>, vector<78x128xbf16>
    tpu.vector_store %arg15[%c0_13, %c512], %28 {strides = array<i32>} : memref<78x1152xbf16, #tpu.memory_space<vmem>>, vector<78x128xbf16>,
    %30 = vector.extract_strided_slice %14 {offsets = [12, 0], sizes = [78, 128], strides = [1, 1]} : vector<100x128xf32> to vector<78x128xf32>
    %31 = arith.truncf %30 : vector<78x128xf32> to vector<78x128xbf16>
    %c0_14 = arith.constant 0 : index
    %c640 = arith.constant 640 : index
    %32 = vector.load %arg15[%c0_14, %c640] : memref<78x1152xbf16, #tpu.memory_space<vmem>>, vector<78x128xbf16>
    tpu.vector_store %arg15[%c0_14, %c640], %31 {strides = array<i32>} : memref<78x1152xbf16, #tpu.memory_space<vmem>>, vector<78x128xbf16>,
    %33 = vector.extract_strided_slice %14 {offsets = [20, 0], sizes = [78, 128], strides = [1, 1]} : vector<100x128xf32> to vector<78x128xf32>
    %34 = arith.truncf %33 : vector<78x128xf32> to vector<78x128xbf16>
    %c0_15 = arith.constant 0 : index
    %c768 = arith.constant 768 : index
    %35 = vector.load %arg15[%c0_15, %c768] : memref<78x1152xbf16, #tpu.memory_space<vmem>>, vector<78x128xbf16>
    tpu.vector_store %arg15[%c0_15, %c768], %34 {strides = array<i32>} : memref<78x1152xbf16, #tpu.memory_space<vmem>>, vector<78x128xbf16>,
    %36 = vector.extract_strided_slice %14 {offsets = [21, 0], sizes = [78, 128], strides = [1, 1]} : vector<100x128xf32> to vector<78x128xf32>
    %37 = arith.truncf %36 : vector<78x128xf32> to vector<78x128xbf16>
    %c0_16 = arith.constant 0 : index
    %c896 = arith.constant 896 : index
    %38 = vector.load %arg15[%c0_16, %c896] : memref<78x1152xbf16, #tpu.memory_space<vmem>>, vector<78x128xbf16>
    tpu.vector_store %arg15[%c0_16, %c896], %37 {strides = array<i32>} : memref<78x1152xbf16, #tpu.memory_space<vmem>>, vector<78x128xbf16>,
    %39 = vector.extract_strided_slice %14 {offsets = [22, 0], sizes = [78, 128], strides = [1, 1]} : vector<100x128xf32> to vector<78x128xf32>
    %40 = arith.truncf %39 : vector<78x128xf32> to vector<78x128xbf16>
    %c0_17 = arith.constant 0 : index
    %c1024 = arith.constant 1024 : index
    %41 = vector.load %arg15[%c0_17, %c1024] : memref<78x1152xbf16, #tpu.memory_space<vmem>>, vector<78x128xbf16>
    tpu.vector_store %arg15[%c0_17, %c1024], %40 {strides = array<i32>} : memref<78x1152xbf16, #tpu.memory_space<vmem>>, vector<78x128xbf16>,
    %c0_18 = arith.constant 0 : index
    %c0_19 = arith.constant 0 : index
    %42 = vector.load %arg15[%c0_18, %c0_19] : memref<78x1152xbf16, #tpu.memory_space<vmem>>, vector<78x1152xbf16>
    %c0_20 = arith.constant 0 : index
    %c0_21 = arith.constant 0 : index
    %43 = vector.load %arg4[%c0_20, %c0_21] : memref<1152x128xbf16, #tpu.memory_space<vmem>>, vector<1152x128xbf16>
    %cst_22 = arith.constant dense<0.000000e+00> : vector<78x128xf32>
    %44 = tpu.matmul %42, %43, %cst_22 {dimension_numbers = #tpu.dot_dimension_numbers<[1], [0], [0], [1], [0, 0, 1, 1], [], []>} : vector<78x1152xbf16>, vector<1152x128xbf16>, vector<78x128xf32> -> vector<78x128xf32>
    %cst_23 = arith.constant 0.000000e+00 : f32
    %45 = vector.broadcast %cst_23 : f32 to vector<78x128xf32>
    %46 = arith.maximumf %44, %45 : vector<78x128xf32>
    %47 = vector.extract_strided_slice %46 {offsets = [0, 0], sizes = [77, 128], strides = [1, 1]} : vector<78x128xf32> to vector<77x128xf32>
    %48 = vector.extract_strided_slice %46 {offsets = [1, 0], sizes = [77, 128], strides = [1, 1]} : vector<78x128xf32> to vector<77x128xf32>
    %49 = arith.maximumf %47, %48 : vector<77x128xf32>
    %50 = vector.extract_strided_slice %49 {offsets = [0, 0], sizes = [67, 128], strides = [1, 1]} : vector<77x128xf32> to vector<67x128xf32>
    %51 = vector.extract_strided_slice %49 {offsets = [10, 0], sizes = [67, 128], strides = [1, 1]} : vector<77x128xf32> to vector<67x128xf32>
    %52 = arith.maximumf %50, %51 : vector<67x128xf32>
    %c0_24 = arith.constant 0 : index
    %c0_25 = arith.constant 0 : index
    %53 = vector.load %arg8[%c0_24, %c0_25] : memref<36x67xbf16, #tpu.memory_space<vmem>>, vector<36x67xbf16>
    %54 = arith.truncf %52 : vector<67x128xf32> to vector<67x128xbf16>
    %cst_26 = arith.constant dense<0.000000e+00> : vector<36x128xf32>
    %55 = tpu.matmul %53, %54, %cst_26 {dimension_numbers = #tpu.dot_dimension_numbers<[1], [0], [0], [1], [0, 0, 1, 1], [], []>} : vector<36x67xbf16>, vector<67x128xbf16>, vector<36x128xf32> -> vector<36x128xf32>
    %56 = vector.extract_strided_slice %55 {offsets = [0, 0], sizes = [22, 128], strides = [1, 1]} : vector<36x128xf32> to vector<22x128xf32>
    %57 = arith.truncf %56 : vector<22x128xf32> to vector<22x128xbf16>
    %c0_27 = arith.constant 0 : index
    %c0_28 = arith.constant 0 : index
    %58 = vector.load %arg16[%c0_27, %c0_28] : memref<22x1152xbf16, #tpu.memory_space<vmem>>, vector<22x128xbf16>
    tpu.vector_store %arg16[%c0_27, %c0_28], %57 {strides = array<i32>} : memref<22x1152xbf16, #tpu.memory_space<vmem>>, vector<22x128xbf16>,
    %59 = vector.extract_strided_slice %55 {offsets = [1, 0], sizes = [22, 128], strides = [1, 1]} : vector<36x128xf32> to vector<22x128xf32>
    %60 = arith.truncf %59 : vector<22x128xf32> to vector<22x128xbf16>
    %c0_29 = arith.constant 0 : index
    %c128_30 = arith.constant 128 : index
    %61 = vector.load %arg16[%c0_29, %c128_30] : memref<22x1152xbf16, #tpu.memory_space<vmem>>, vector<22x128xbf16>
    tpu.vector_store %arg16[%c0_29, %c128_30], %60 {strides = array<i32>} : memref<22x1152xbf16, #tpu.memory_space<vmem>>, vector<22x128xbf16>,
    %62 = vector.extract_strided_slice %55 {offsets = [2, 0], sizes = [22, 128], strides = [1, 1]} : vector<36x128xf32> to vector<22x128xf32>
    %63 = arith.truncf %62 : vector<22x128xf32> to vector<22x128xbf16>
    %c0_31 = arith.constant 0 : index
    %c256_32 = arith.constant 256 : index
    %64 = vector.load %arg16[%c0_31, %c256_32] : memref<22x1152xbf16, #tpu.memory_space<vmem>>, vector<22x128xbf16>
    tpu.vector_store %arg16[%c0_31, %c256_32], %63 {strides = array<i32>} : memref<22x1152xbf16, #tpu.memory_space<vmem>>, vector<22x128xbf16>,
    %65 = vector.extract_strided_slice %55 {offsets = [6, 0], sizes = [22, 128], strides = [1, 1]} : vector<36x128xf32> to vector<22x128xf32>
    %66 = arith.truncf %65 : vector<22x128xf32> to vector<22x128xbf16>
    %c0_33 = arith.constant 0 : index
    %c384_34 = arith.constant 384 : index
    %67 = vector.load %arg16[%c0_33, %c384_34] : memref<22x1152xbf16, #tpu.memory_space<vmem>>, vector<22x128xbf16>
    tpu.vector_store %arg16[%c0_33, %c384_34], %66 {strides = array<i32>} : memref<22x1152xbf16, #tpu.memory_space<vmem>>, vector<22x128xbf16>,
    %68 = vector.extract_strided_slice %55 {offsets = [7, 0], sizes = [22, 128], strides = [1, 1]} : vector<36x128xf32> to vector<22x128xf32>
    %69 = arith.truncf %68 : vector<22x128xf32> to vector<22x128xbf16>
    %c0_35 = arith.constant 0 : index
    %c512_36 = arith.constant 512 : index
    %70 = vector.load %arg16[%c0_35, %c512_36] : memref<22x1152xbf16, #tpu.memory_space<vmem>>, vector<22x128xbf16>
    tpu.vector_store %arg16[%c0_35, %c512_36], %69 {strides = array<i32>} : memref<22x1152xbf16, #tpu.memory_space<vmem>>, vector<22x128xbf16>,
    %71 = vector.extract_strided_slice %55 {offsets = [8, 0], sizes = [22, 128], strides = [1, 1]} : vector<36x128xf32> to vector<22x128xf32>
    %72 = arith.truncf %71 : vector<22x128xf32> to vector<22x128xbf16>
    %c0_37 = arith.constant 0 : index
    %c640_38 = arith.constant 640 : index
    %73 = vector.load %arg16[%c0_37, %c640_38] : memref<22x1152xbf16, #tpu.memory_space<vmem>>, vector<22x128xbf16>
    tpu.vector_store %arg16[%c0_37, %c640_38], %72 {strides = array<i32>} : memref<22x1152xbf16, #tpu.memory_space<vmem>>, vector<22x128xbf16>,
    %74 = vector.extract_strided_slice %55 {offsets = [12, 0], sizes = [22, 128], strides = [1, 1]} : vector<36x128xf32> to vector<22x128xf32>
    %75 = arith.truncf %74 : vector<22x128xf32> to vector<22x128xbf16>
    %c0_39 = arith.constant 0 : index
    %c768_40 = arith.constant 768 : index
    %76 = vector.load %arg16[%c0_39, %c768_40] : memref<22x1152xbf16, #tpu.memory_space<vmem>>, vector<22x128xbf16>
    tpu.vector_store %arg16[%c0_39, %c768_40], %75 {strides = array<i32>} : memref<22x1152xbf16, #tpu.memory_space<vmem>>, vector<22x128xbf16>,
    %77 = vector.extract_strided_slice %55 {offsets = [13, 0], sizes = [22, 128], strides = [1, 1]} : vector<36x128xf32> to vector<22x128xf32>
    %78 = arith.truncf %77 : vector<22x128xf32> to vector<22x128xbf16>
    %c0_41 = arith.constant 0 : index
    %c896_42 = arith.constant 896 : index
    %79 = vector.load %arg16[%c0_41, %c896_42] : memref<22x1152xbf16, #tpu.memory_space<vmem>>, vector<22x128xbf16>
    tpu.vector_store %arg16[%c0_41, %c896_42], %78 {strides = array<i32>} : memref<22x1152xbf16, #tpu.memory_space<vmem>>, vector<22x128xbf16>,
    %80 = vector.extract_strided_slice %55 {offsets = [14, 0], sizes = [22, 128], strides = [1, 1]} : vector<36x128xf32> to vector<22x128xf32>
    %81 = arith.truncf %80 : vector<22x128xf32> to vector<22x128xbf16>
    %c0_43 = arith.constant 0 : index
    %c1024_44 = arith.constant 1024 : index
    %82 = vector.load %arg16[%c0_43, %c1024_44] : memref<22x1152xbf16, #tpu.memory_space<vmem>>, vector<22x128xbf16>
    tpu.vector_store %arg16[%c0_43, %c1024_44], %81 {strides = array<i32>} : memref<22x1152xbf16, #tpu.memory_space<vmem>>, vector<22x128xbf16>,
    %c0_45 = arith.constant 0 : index
    %c0_46 = arith.constant 0 : index
    %83 = vector.load %arg16[%c0_45, %c0_46] : memref<22x1152xbf16, #tpu.memory_space<vmem>>, vector<22x1152xbf16>
    %c0_47 = arith.constant 0 : index
    %c0_48 = arith.constant 0 : index
    %84 = vector.load %arg5[%c0_47, %c0_48] : memref<1152x256xbf16, #tpu.memory_space<vmem>>, vector<1152x256xbf16>
    %cst_49 = arith.constant dense<0.000000e+00> : vector<22x256xf32>
    %85 = tpu.matmul %83, %84, %cst_49 {dimension_numbers = #tpu.dot_dimension_numbers<[1], [0], [0], [1], [0, 0, 1, 1], [], []>} : vector<22x1152xbf16>, vector<1152x256xbf16>, vector<22x256xf32> -> vector<22x256xf32>
    %cst_50 = arith.constant 0.000000e+00 : f32
    %86 = vector.broadcast %cst_50 : f32 to vector<22x256xf32>
    %87 = arith.maximumf %85, %86 : vector<22x256xf32>
    %88 = vector.extract_strided_slice %87 {offsets = [0, 0], sizes = [21, 256], strides = [1, 1]} : vector<22x256xf32> to vector<21x256xf32>
    %89 = vector.extract_strided_slice %87 {offsets = [1, 0], sizes = [21, 256], strides = [1, 1]} : vector<22x256xf32> to vector<21x256xf32>
    %90 = arith.maximumf %88, %89 : vector<21x256xf32>
    %91 = vector.extract_strided_slice %90 {offsets = [0, 0], sizes = [15, 256], strides = [1, 1]} : vector<21x256xf32> to vector<15x256xf32>
    %92 = vector.extract_strided_slice %90 {offsets = [6, 0], sizes = [15, 256], strides = [1, 1]} : vector<21x256xf32> to vector<15x256xf32>
    %93 = arith.maximumf %91, %92 : vector<15x256xf32>
    %c0_51 = arith.constant 0 : index
    %c0_52 = arith.constant 0 : index
    %94 = vector.load %arg9[%c0_51, %c0_52] : memref<16x15xbf16, #tpu.memory_space<vmem>>, vector<16x15xbf16>
    %95 = arith.truncf %93 : vector<15x256xf32> to vector<15x256xbf16>
    %cst_53 = arith.constant dense<0.000000e+00> : vector<16x256xf32>
    %96 = tpu.matmul %94, %95, %cst_53 {dimension_numbers = #tpu.dot_dimension_numbers<[1], [0], [0], [1], [0, 0, 1, 1], [], []>} : vector<16x15xbf16>, vector<15x256xbf16>, vector<16x256xf32> -> vector<16x256xf32>
    %97 = vector.extract_strided_slice %96 {offsets = [0, 0], sizes = [6, 256], strides = [1, 1]} : vector<16x256xf32> to vector<6x256xf32>
    %98 = arith.truncf %97 : vector<6x256xf32> to vector<6x256xbf16>
    %c0_54 = arith.constant 0 : index
    %c0_55 = arith.constant 0 : index
    %99 = vector.load %arg17[%c0_54, %c0_55] : memref<6x2304xbf16, #tpu.memory_space<vmem>>, vector<6x256xbf16>
    tpu.vector_store %arg17[%c0_54, %c0_55], %98 {strides = array<i32>} : memref<6x2304xbf16, #tpu.memory_space<vmem>>, vector<6x256xbf16>,
    %100 = vector.extract_strided_slice %96 {offsets = [1, 0], sizes = [6, 256], strides = [1, 1]} : vector<16x256xf32> to vector<6x256xf32>
    %101 = arith.truncf %100 : vector<6x256xf32> to vector<6x256xbf16>
    %c0_56 = arith.constant 0 : index
    %c256_57 = arith.constant 256 : index
    %102 = vector.load %arg17[%c0_56, %c256_57] : memref<6x2304xbf16, #tpu.memory_space<vmem>>, vector<6x256xbf16>
    tpu.vector_store %arg17[%c0_56, %c256_57], %101 {strides = array<i32>} : memref<6x2304xbf16, #tpu.memory_space<vmem>>, vector<6x256xbf16>,
    %103 = vector.extract_strided_slice %96 {offsets = [2, 0], sizes = [6, 256], strides = [1, 1]} : vector<16x256xf32> to vector<6x256xf32>
    %104 = arith.truncf %103 : vector<6x256xf32> to vector<6x256xbf16>
    %c0_58 = arith.constant 0 : index
    %c512_59 = arith.constant 512 : index
    %105 = vector.load %arg17[%c0_58, %c512_59] : memref<6x2304xbf16, #tpu.memory_space<vmem>>, vector<6x256xbf16>
    tpu.vector_store %arg17[%c0_58, %c512_59], %104 {strides = array<i32>} : memref<6x2304xbf16, #tpu.memory_space<vmem>>, vector<6x256xbf16>,
    %106 = vector.extract_strided_slice %96 {offsets = [4, 0], sizes = [6, 256], strides = [1, 1]} : vector<16x256xf32> to vector<6x256xf32>
    %107 = arith.truncf %106 : vector<6x256xf32> to vector<6x256xbf16>
    %c0_60 = arith.constant 0 : index
    %c768_61 = arith.constant 768 : index
    %108 = vector.load %arg17[%c0_60, %c768_61] : memref<6x2304xbf16, #tpu.memory_space<vmem>>, vector<6x256xbf16>
    tpu.vector_store %arg17[%c0_60, %c768_61], %107 {strides = array<i32>} : memref<6x2304xbf16, #tpu.memory_space<vmem>>, vector<6x256xbf16>,
    %109 = vector.extract_strided_slice %96 {offsets = [5, 0], sizes = [6, 256], strides = [1, 1]} : vector<16x256xf32> to vector<6x256xf32>
    %110 = arith.truncf %109 : vector<6x256xf32> to vector<6x256xbf16>
    %c0_62 = arith.constant 0 : index
    %c1024_63 = arith.constant 1024 : index
    %111 = vector.load %arg17[%c0_62, %c1024_63] : memref<6x2304xbf16, #tpu.memory_space<vmem>>, vector<6x256xbf16>
    tpu.vector_store %arg17[%c0_62, %c1024_63], %110 {strides = array<i32>} : memref<6x2304xbf16, #tpu.memory_space<vmem>>, vector<6x256xbf16>,
    %112 = vector.extract_strided_slice %96 {offsets = [6, 0], sizes = [6, 256], strides = [1, 1]} : vector<16x256xf32> to vector<6x256xf32>
    %113 = arith.truncf %112 : vector<6x256xf32> to vector<6x256xbf16>
    %c0_64 = arith.constant 0 : index
    %c1280 = arith.constant 1280 : index
    %114 = vector.load %arg17[%c0_64, %c1280] : memref<6x2304xbf16, #tpu.memory_space<vmem>>, vector<6x256xbf16>
    tpu.vector_store %arg17[%c0_64, %c1280], %113 {strides = array<i32>} : memref<6x2304xbf16, #tpu.memory_space<vmem>>, vector<6x256xbf16>,
    %115 = vector.extract_strided_slice %96 {offsets = [8, 0], sizes = [6, 256], strides = [1, 1]} : vector<16x256xf32> to vector<6x256xf32>
    %116 = arith.truncf %115 : vector<6x256xf32> to vector<6x256xbf16>
    %c0_65 = arith.constant 0 : index
    %c1536 = arith.constant 1536 : index
    %117 = vector.load %arg17[%c0_65, %c1536] : memref<6x2304xbf16, #tpu.memory_space<vmem>>, vector<6x256xbf16>
    tpu.vector_store %arg17[%c0_65, %c1536], %116 {strides = array<i32>} : memref<6x2304xbf16, #tpu.memory_space<vmem>>, vector<6x256xbf16>,
    %118 = vector.extract_strided_slice %96 {offsets = [9, 0], sizes = [6, 256], strides = [1, 1]} : vector<16x256xf32> to vector<6x256xf32>
    %119 = arith.truncf %118 : vector<6x256xf32> to vector<6x256xbf16>
    %c0_66 = arith.constant 0 : index
    %c1792 = arith.constant 1792 : index
    %120 = vector.load %arg17[%c0_66, %c1792] : memref<6x2304xbf16, #tpu.memory_space<vmem>>, vector<6x256xbf16>
    tpu.vector_store %arg17[%c0_66, %c1792], %119 {strides = array<i32>} : memref<6x2304xbf16, #tpu.memory_space<vmem>>, vector<6x256xbf16>,
    %121 = vector.extract_strided_slice %96 {offsets = [10, 0], sizes = [6, 256], strides = [1, 1]} : vector<16x256xf32> to vector<6x256xf32>
    %122 = arith.truncf %121 : vector<6x256xf32> to vector<6x256xbf16>
    %c0_67 = arith.constant 0 : index
    %c2048 = arith.constant 2048 : index
    %123 = vector.load %arg17[%c0_67, %c2048] : memref<6x2304xbf16, #tpu.memory_space<vmem>>, vector<6x256xbf16>
    tpu.vector_store %arg17[%c0_67, %c2048], %122 {strides = array<i32>} : memref<6x2304xbf16, #tpu.memory_space<vmem>>, vector<6x256xbf16>,
    %c0_68 = arith.constant 0 : index
    %c0_69 = arith.constant 0 : index
    %124 = vector.load %arg17[%c0_68, %c0_69] : memref<6x2304xbf16, #tpu.memory_space<vmem>>, vector<6x2304xbf16>
    %c0_70 = arith.constant 0 : index
    %c0_71 = arith.constant 0 : index
    %125 = vector.load %arg6[%c0_70, %c0_71] : memref<2304x512xbf16, #tpu.memory_space<vmem>>, vector<2304x512xbf16>
    %cst_72 = arith.constant dense<0.000000e+00> : vector<6x512xf32>
    %126 = tpu.matmul %124, %125, %cst_72 {dimension_numbers = #tpu.dot_dimension_numbers<[1], [0], [0], [1], [0, 0, 1, 1], [], []>} : vector<6x2304xbf16>, vector<2304x512xbf16>, vector<6x512xf32> -> vector<6x512xf32>
    %cst_73 = arith.constant 0.000000e+00 : f32
    %127 = vector.broadcast %cst_73 : f32 to vector<6x512xf32>
    %128 = arith.maximumf %126, %127 : vector<6x512xf32>
    %129 = vector.extract_strided_slice %128 {offsets = [0, 0], sizes = [2, 512], strides = [1, 1]} : vector<6x512xf32> to vector<2x512xf32>
    %cst_74 = arith.constant dense<0.000000e+00> : vector<512xf32>
    %130 = vector.multi_reduction <add>, %129, %cst_74 [0] : vector<2x512xf32> to vector<512xf32>
    %131 = vector.shape_cast %130 : vector<512xf32> to vector<1x512xf32>
    %132 = vector.extract_strided_slice %128 {offsets = [4, 0], sizes = [2, 512], strides = [1, 1]} : vector<6x512xf32> to vector<2x512xf32>
    %cst_75 = arith.constant dense<0.000000e+00> : vector<512xf32>
    %133 = vector.multi_reduction <add>, %132, %cst_75 [0] : vector<2x512xf32> to vector<512xf32>
    %134 = vector.shape_cast %133 : vector<512xf32> to vector<1x512xf32>
    %135 = arith.addf %131, %134 : vector<1x512xf32>
    %cst_76 = arith.constant 2.500000e-01 : f32
    %136 = vector.broadcast %cst_76 : f32 to vector<1x512xf32>
    %137 = arith.mulf %135, %136 : vector<1x512xf32>
    %138 = vector.shape_cast %137 : vector<1x512xf32> to vector<1x512xf32>
    %139 = vector.broadcast %138 : vector<1x512xf32> to vector<8x512xf32>
    %c0_77 = arith.constant 0 : index
    %c0_78 = arith.constant 0 : index
    %140 = vector.load %arg10[%c0_77, %c0_78] : memref<512x256xf32, #tpu.memory_space<vmem>>, vector<512x256xf32>
    %cst_79 = arith.constant dense<0.000000e+00> : vector<8x256xf32>
    %141 = tpu.matmul %139, %140, %cst_79 {dimension_numbers = #tpu.dot_dimension_numbers<[1], [0], [0], [1], [0, 0, 1, 1], [], []>} : vector<8x512xf32>, vector<512x256xf32>, vector<8x256xf32> -> vector<8x256xf32>
    %c0_80 = arith.constant 0 : index
    %c0_81 = arith.constant 0 : index
    %142 = vector.load %arg11[%c0_80, %c0_81] : memref<1x256xf32, #tpu.memory_space<vmem>>, vector<1x256xf32>
    %143 = vector.broadcast %142 : vector<1x256xf32> to vector<8x256xf32>
    %144 = arith.addf %141, %143 : vector<8x256xf32>
    %cst_82 = arith.constant 0.000000e+00 : f32
    %145 = vector.broadcast %cst_82 : f32 to vector<8x256xf32>
    %146 = arith.maximumf %144, %145 : vector<8x256xf32>
    %c0_83 = arith.constant 0 : index
    %c0_84 = arith.constant 0 : index
    %147 = vector.load %arg12[%c0_83, %c0_84] : memref<256x512xf32, #tpu.memory_space<vmem>>, vector<256x512xf32>
    %cst_85 = arith.constant dense<0.000000e+00> : vector<8x512xf32>
    %148 = tpu.matmul %146, %147, %cst_85 {dimension_numbers = #tpu.dot_dimension_numbers<[1], [0], [0], [1], [0, 0, 1, 1], [], []>} : vector<8x256xf32>, vector<256x512xf32>, vector<8x512xf32> -> vector<8x512xf32>
    %c0_86 = arith.constant 0 : index
    %c0_87 = arith.constant 0 : index
    %149 = vector.load %arg13[%c0_86, %c0_87] : memref<1x512xf32, #tpu.memory_space<vmem>>, vector<1x512xf32>
    %150 = vector.broadcast %149 : vector<1x512xf32> to vector<8x512xf32>
    %151 = arith.addf %148, %150 : vector<8x512xf32>
    %152 = vector.extract_strided_slice %151 {offsets = [0, 0], sizes = [1, 256], strides = [1, 1]} : vector<8x512xf32> to vector<1x256xf32>
    %153 = vector.extract_strided_slice %151 {offsets = [0, 256], sizes = [1, 256], strides = [1, 1]} : vector<8x512xf32> to vector<1x256xf32>
    %cst_88 = arith.constant 1.000000e+00 : f32
    %154 = vector.broadcast %cst_88 : f32 to vector<1x256xf32>
    %155 = arith.addf %152, %154 : vector<1x256xf32>
    %cst_89 = arith.constant 8.000000e+00 : f32
    %156 = vector.broadcast %cst_89 : f32 to vector<1x256xf32>
    %157 = arith.mulf %155, %156 : vector<1x256xf32>
    %cst_90 = arith.constant 5.000000e-01 : f32
    %158 = vector.broadcast %cst_90 : f32 to vector<1x256xf32>
    %159 = arith.subf %157, %158 : vector<1x256xf32>
    %cst_91 = arith.constant 0.000000e+00 : f32
    %cst_92 = arith.constant 1.500000e+01 : f32
    %160 = vector.broadcast %cst_91 : f32 to vector<1x256xf32>
    %161 = arith.maximumf %160, %159 : vector<1x256xf32>
    %162 = vector.broadcast %cst_92 : f32 to vector<1x256xf32>
    %163 = arith.minimumf %162, %161 : vector<1x256xf32>
    %cst_93 = arith.constant 1.000000e+00 : f32
    %164 = vector.broadcast %cst_93 : f32 to vector<1x256xf32>
    %165 = arith.addf %153, %164 : vector<1x256xf32>
    %cst_94 = arith.constant 8.000000e+00 : f32
    %166 = vector.broadcast %cst_94 : f32 to vector<1x256xf32>
    %167 = arith.mulf %165, %166 : vector<1x256xf32>
    %cst_95 = arith.constant 5.000000e-01 : f32
    %168 = vector.broadcast %cst_95 : f32 to vector<1x256xf32>
    %169 = arith.subf %167, %168 : vector<1x256xf32>
    %cst_96 = arith.constant 0.000000e+00 : f32
    %cst_97 = arith.constant 1.500000e+01 : f32
    %170 = vector.broadcast %cst_96 : f32 to vector<1x256xf32>
    %171 = arith.maximumf %170, %169 : vector<1x256xf32>
    %172 = vector.broadcast %cst_97 : f32 to vector<1x256xf32>
    %173 = arith.minimumf %172, %171 : vector<1x256xf32>
    %174 = math.floor %163 : vector<1x256xf32>
    %175 = math.floor %173 : vector<1x256xf32>
    %176 = arith.subf %163, %174 : vector<1x256xf32>
    %177 = arith.subf %173, %175 : vector<1x256xf32>
    %178 = arith.fptosi %174 : vector<1x256xf32> to vector<1x256xi32>
    %179 = arith.fptosi %175 : vector<1x256xf32> to vector<1x256xi32>
    %c1_i32 = arith.constant 1 : i32
    %180 = vector.broadcast %c1_i32 : i32 to vector<1x256xi32>
    %181 = arith.addi %178, %180 : vector<1x256xi32>
    %c15_i32 = arith.constant 15 : i32
    %182 = vector.broadcast %c15_i32 : i32 to vector<1x256xi32>
    %183 = arith.minsi %181, %182 : vector<1x256xi32>
    %c1_i32_98 = arith.constant 1 : i32
    %184 = vector.broadcast %c1_i32_98 : i32 to vector<1x256xi32>
    %185 = arith.addi %179, %184 : vector<1x256xi32>
    %c15_i32_99 = arith.constant 15 : i32
    %186 = vector.broadcast %c15_i32_99 : i32 to vector<1x256xi32>
    %187 = arith.minsi %185, %186 : vector<1x256xi32>
    %188 = tpu.iota {dimensions = array<i32: 0>} : vector<256x256xi32>
    %c16_i32 = arith.constant 16 : i32
    %189 = vector.broadcast %c16_i32 : i32 to vector<1x256xi32>
    %190 = arith.muli %179, %189 : vector<1x256xi32>
    %191 = arith.addi %190, %178 : vector<1x256xi32>
    %192 = vector.broadcast %191 : vector<1x256xi32> to vector<256x256xi32>
    %193 = arith.cmpi eq, %188, %192 : vector<256x256xi32>
    %cst_100 = arith.constant 1.000000e+00 : f32
    %194 = vector.broadcast %cst_100 : f32 to vector<1x256xf32>
    %195 = arith.subf %194, %176 : vector<1x256xf32>
    %cst_101 = arith.constant 1.000000e+00 : f32
    %196 = vector.broadcast %cst_101 : f32 to vector<1x256xf32>
    %197 = arith.subf %196, %177 : vector<1x256xf32>
    %198 = arith.mulf %195, %197 : vector<1x256xf32>
    %cst_102 = arith.constant 0.000000e+00 : f32
    %199 = vector.shape_cast %198 : vector<1x256xf32> to vector<1x256xf32>
    %200 = vector.broadcast %199 : vector<1x256xf32> to vector<256x256xf32>
    %201 = vector.broadcast %cst_102 : f32 to vector<256x256xf32>
    %202 = arith.select %193, %200, %201 : vector<256x256xi1>, vector<256x256xf32>
    %c16_i32_103 = arith.constant 16 : i32
    %203 = vector.broadcast %c16_i32_103 : i32 to vector<1x256xi32>
    %204 = arith.muli %179, %203 : vector<1x256xi32>
    %205 = arith.addi %204, %183 : vector<1x256xi32>
    %206 = vector.broadcast %205 : vector<1x256xi32> to vector<256x256xi32>
    %207 = arith.cmpi eq, %188, %206 : vector<256x256xi32>
    %cst_104 = arith.constant 1.000000e+00 : f32
    %208 = vector.broadcast %cst_104 : f32 to vector<1x256xf32>
    %209 = arith.subf %208, %177 : vector<1x256xf32>
    %210 = arith.mulf %176, %209 : vector<1x256xf32>
    %cst_105 = arith.constant 0.000000e+00 : f32
    %211 = vector.shape_cast %210 : vector<1x256xf32> to vector<1x256xf32>
    %212 = vector.broadcast %211 : vector<1x256xf32> to vector<256x256xf32>
    %213 = vector.broadcast %cst_105 : f32 to vector<256x256xf32>
    %214 = arith.select %207, %212, %213 : vector<256x256xi1>, vector<256x256xf32>
    %215 = arith.addf %202, %214 : vector<256x256xf32>
    %c16_i32_106 = arith.constant 16 : i32
    %216 = vector.broadcast %c16_i32_106 : i32 to vector<1x256xi32>
    %217 = arith.muli %187, %216 : vector<1x256xi32>
    %218 = arith.addi %217, %178 : vector<1x256xi32>
    %219 = vector.broadcast %218 : vector<1x256xi32> to vector<256x256xi32>
    %220 = arith.cmpi eq, %188, %219 : vector<256x256xi32>
    %cst_107 = arith.constant 1.000000e+00 : f32
    %221 = vector.broadcast %cst_107 : f32 to vector<1x256xf32>
    %222 = arith.subf %221, %176 : vector<1x256xf32>
    %223 = arith.mulf %222, %177 : vector<1x256xf32>
    %cst_108 = arith.constant 0.000000e+00 : f32
    %224 = vector.shape_cast %223 : vector<1x256xf32> to vector<1x256xf32>
    %225 = vector.broadcast %224 : vector<1x256xf32> to vector<256x256xf32>
    %226 = vector.broadcast %cst_108 : f32 to vector<256x256xf32>
    %227 = arith.select %220, %225, %226 : vector<256x256xi1>, vector<256x256xf32>
    %228 = arith.addf %215, %227 : vector<256x256xf32>
    %c16_i32_109 = arith.constant 16 : i32
    %229 = vector.broadcast %c16_i32_109 : i32 to vector<1x256xi32>
    %230 = arith.muli %187, %229 : vector<1x256xi32>
    %231 = arith.addi %230, %183 : vector<1x256xi32>
    %232 = vector.broadcast %231 : vector<1x256xi32> to vector<256x256xi32>
    %233 = arith.cmpi eq, %188, %232 : vector<256x256xi32>
    %234 = arith.mulf %176, %177 : vector<1x256xf32>
    %cst_110 = arith.constant 0.000000e+00 : f32
    %235 = vector.shape_cast %234 : vector<1x256xf32> to vector<1x256xf32>
    %236 = vector.broadcast %235 : vector<1x256xf32> to vector<256x256xf32>
    %237 = vector.broadcast %cst_110 : f32 to vector<256x256xf32>
    %238 = arith.select %233, %236, %237 : vector<256x256xi1>, vector<256x256xf32>
    %239 = arith.addf %228, %238 : vector<256x256xf32>
    %c0_111 = arith.constant 0 : index
    %c0_112 = arith.constant 0 : index
    %c0_113 = arith.constant 0 : index
    %240 = vector.load %arg2[%c0_111, %c0_112, %c0_113] : memref<1x4x256xf32, #tpu.memory_space<vmem>>, vector<1x4x256xf32>
    %241 = vector.shape_cast %240 : vector<1x4x256xf32> to vector<4x256xf32>
    %cst_114 = arith.constant dense<0.000000e+00> : vector<4x256xf32>
    %242 = tpu.matmul %241, %239, %cst_114 {dimension_numbers = #tpu.dot_dimension_numbers<[1], [0], [0], [1], [0, 0, 1, 1], [], []>} : vector<4x256xf32>, vector<256x256xf32>, vector<4x256xf32> -> vector<4x256xf32>
    %c0_115 = arith.constant 0 : index
    %c0_116 = arith.constant 0 : index
    %c0_117 = arith.constant 0 : index
    %243 = vector.load %arg14[%c0_115, %c0_116, %c0_117] : memref<1x4x256xf32, #tpu.memory_space<vmem>>, vector<1x4x256xf32>
    %244 = vector.shape_cast %243 : vector<1x4x256xf32> to vector<4x256xf32>
    %245 = vector.shape_cast %242 : vector<4x256xf32> to vector<1x4x256xf32>
    tpu.vector_store %arg14[%c0_115, %c0_116, %c0_117], %245 {strides = array<i32>} : memref<1x4x256xf32, #tpu.memory_space<vmem>>, vector<1x4x256xf32>,
    return
  }
  func.func @transform_0(%arg0: i32) -> (i32, i32, i32) {
    %c0_i32 = arith.constant 0 : i32
    %c0_i32_0 = arith.constant 0 : i32
    %c0_i32_1 = arith.constant 0 : i32
    return %arg0, %c0_i32, %c0_i32_0 : i32, i32, i32
  }
  func.func @transform_1(%arg0: i32) -> (i32, i32, i32) {
    %c0_i32 = arith.constant 0 : i32
    %c0_i32_0 = arith.constant 0 : i32
    %c0_i32_1 = arith.constant 0 : i32
    return %arg0, %c0_i32, %c0_i32_0 : i32, i32, i32
  }
  func.func @transform_2(%arg0: i32) -> (i32, i32) {
    %c0_i32 = arith.constant 0 : i32
    %c0_i32_0 = arith.constant 0 : i32
    %c0_i32_1 = arith.constant 0 : i32
    return %c0_i32, %c0_i32_0 : i32, i32
  }
  func.func @transform_3(%arg0: i32) -> (i32, i32) {
    %c0_i32 = arith.constant 0 : i32
    %c0_i32_0 = arith.constant 0 : i32
    %c0_i32_1 = arith.constant 0 : i32
    return %c0_i32, %c0_i32_0 : i32, i32
  }
  func.func @transform_4(%arg0: i32) -> (i32, i32) {
    %c0_i32 = arith.constant 0 : i32
    %c0_i32_0 = arith.constant 0 : i32
    %c0_i32_1 = arith.constant 0 : i32
    return %c0_i32, %c0_i32_0 : i32, i32
  }
  func.func @transform_5(%arg0: i32) -> (i32, i32) {
    %c0_i32 = arith.constant 0 : i32
    %c0_i32_0 = arith.constant 0 : i32
    %c0_i32_1 = arith.constant 0 : i32
    return %c0_i32, %c0_i32_0 : i32, i32
  }
  func.func @transform_6(%arg0: i32) -> (i32, i32) {
    %c0_i32 = arith.constant 0 : i32
    %c0_i32_0 = arith.constant 0 : i32
    %c0_i32_1 = arith.constant 0 : i32
    return %c0_i32, %c0_i32_0 : i32, i32
  }
  func.func @transform_7(%arg0: i32) -> (i32, i32) {
    %c0_i32 = arith.constant 0 : i32
    %c0_i32_0 = arith.constant 0 : i32
    %c0_i32_1 = arith.constant 0 : i32
    return %c0_i32, %c0_i32_0 : i32, i32
  }
  func.func @transform_8(%arg0: i32) -> (i32, i32) {
    %c0_i32 = arith.constant 0 : i32
    %c0_i32_0 = arith.constant 0 : i32
    %c0_i32_1 = arith.constant 0 : i32
    return %c0_i32, %c0_i32_0 : i32, i32
  }
  func.func @transform_9(%arg0: i32) -> (i32, i32) {
    %c0_i32 = arith.constant 0 : i32
    %c0_i32_0 = arith.constant 0 : i32
    %c0_i32_1 = arith.constant 0 : i32
    return %c0_i32, %c0_i32_0 : i32, i32
  }
  func.func @transform_10(%arg0: i32) -> (i32, i32) {
    %c0_i32 = arith.constant 0 : i32
    %c0_i32_0 = arith.constant 0 : i32
    %c0_i32_1 = arith.constant 0 : i32
    return %c0_i32, %c0_i32_0 : i32, i32
  }
  func.func @transform_11(%arg0: i32) -> (i32, i32) {
    %c0_i32 = arith.constant 0 : i32
    %c0_i32_0 = arith.constant 0 : i32
    %c0_i32_1 = arith.constant 0 : i32
    return %c0_i32, %c0_i32_0 : i32, i32
  }
  func.func @transform_12(%arg0: i32) -> (i32, i32) {
    %c0_i32 = arith.constant 0 : i32
    %c0_i32_0 = arith.constant 0 : i32
    %c0_i32_1 = arith.constant 0 : i32
    return %c0_i32, %c0_i32_0 : i32, i32
  }
  func.func @transform_13(%arg0: i32) -> (i32, i32, i32) {
    %c0_i32 = arith.constant 0 : i32
    %c0_i32_0 = arith.constant 0 : i32
    %c0_i32_1 = arith.constant 0 : i32
    return %arg0, %c0_i32, %c0_i32_0 : i32, i32, i32
  }
}

</mosaic_0001>

<llo_original>
// kernel: tps_forward.1
$region0: #{tps_forward.1}
  #allocation0 [shape = 'u32[]', space=smem, size = 0x4, offset = 0x4, fixed_abs, tag = 'smem constant byte address 0x4 - core index']
  #allocation1 [shape = 'u32[144,128]{1,0:T(1,128)}', space=vmem, size = 0x12000, scoped, tag = 'internal scratch']
  #allocation2 [shape = 'bf16[78,1152]{1,0:T(8,128)(2,1)}', space=vmem, size = 0x2d000, scoped, tag = 'scratch operand']
  #allocation3 [shape = 'bf16[22,1152]{1,0:T(8,128)(2,1)}', space=vmem, size = 0xd800, scoped, tag = 'scratch operand']
  #allocation4 [shape = 'bf16[6,2304]{1,0:T(8,128)(2,1)}', space=vmem, size = 0x9000, scoped, tag = 'scratch operand']
  %s0 = inlined_call_operand.vmem [shape: bf16[2,256,36], index: 0, kind: input, shape index: {}]
  %s1 = inlined_call_operand.vmem [shape: f32[2,4,256], index: 1, kind: input, shape index: {}]
  %s2 = inlined_call_operand.hbm [shape: bf16[36,128], index: 2, kind: input, shape index: {}]
  %s3 = inlined_call_operand.hbm [shape: bf16[1152,128], index: 3, kind: input, shape index: {}]
  %s4 = inlined_call_operand.vmem [shape: bf16[1152,256], index: 4, kind: input, shape index: {}]
  %s5 = inlined_call_operand.vmem [shape: bf16[2304,512], index: 5, kind: input, shape index: {}]
  %s6 = inlined_call_operand.hbm [shape: bf16[100,239], index: 6, kind: input, shape index: {}]
  %s7 = inlined_call_operand.hbm [shape: bf16[36,67], index: 7, kind: input, shape index: {}]
  %s8 = inlined_call_operand.vmem [shape: bf16[16,15], index: 8, kind: input, shape index: {}]
  %s9 = inlined_call_operand.vmem [shape: f32[512,256], index: 9, kind: input, shape index: {}]
  %s10 = inlined_call_operand.vmem [shape: f32[1,256], index: 10, kind: input, shape index: {}]
  %s11 = inlined_call_operand.vmem [shape: f32[256,512], index: 11, kind: input, shape index: {}]
  %s12 = inlined_call_operand.vmem [shape: f32[1,512], index: 12, kind: input, shape index: {}]
  %s13 = inlined_call_operand.vmem [shape: f32[2,4,256], index: 13, kind: output, shape index: {}]
  %s14 = sld [smem:[#allocation0]]
  $region101: #{tps_forward.1} parent=0
    _
  %s16 = ssub.s32 1, %s14
  %s17 = scalar_select 0, %s16, %s14
  $region1: #{tps_forward.1} parent=0
    #allocation5 [shape = 'u8[10240]{0}', space=vmem, size = 0x2800, scoped, tag = 'input window, operand 2, single buffered']
    #allocation6 [shape = 's32[2]{0}', space=sflag, size = 0x8, scoped, tag = 'scoped memory for tps_forward.1']
    #allocation7 [shape = 'u8[294912]{0}', space=vmem, size = 0x48000, scoped, tag = 'input window, operand 3, single buffered']
    #allocation8 [shape = 's32[1]{0}', space=sflag, size = 0x4, scoped, tag = 'scoped memory for tps_forward.1']
    #allocation9 [shape = 'u8[53248]{0}', space=vmem, size = 0xd000, scoped, tag = 'input window, operand 6, single buffered']
    #allocation10 [shape = 'u8[10240]{0}', space=vmem, size = 0x2800, scoped, tag = 'input window, operand 7, single buffered']
    #allocation11 [shape = 's32[1]{0}', space=sflag, size = 0x4, scoped, tag = 'scoped memory for tps_forward.1']
    %18 = vsyncpa [#allocation6], 0
    %19 = vsyncpa [#allocation8], 0
    %20 = vsyncpa [#allocation11], 0
    loop: start=0, step=1, limit=4
    $region2: #{tps_forward.1} parent=1 // loop_pre_header
      _
    $region3: #{tps_forward.1} parent=1 // loop_header
      %s22 = sphi 0, %s26
      %p23 = scmp.ge.s32.totalorder %s22, 4
      %s32 = sphi 0, %s34
      %s35 = sphi 0, %s32
      %s36 = sphi 0, %s35
      %s52 = sphi 0, %s36
      %s58 = sphi 0, %s60
      %s61 = sphi 0, %s58
      %s62 = sphi 0, %s61
      %s78 = sphi 0, %s62
      %s82 = sphi 0, %s82
      %s84 = sphi 0, %s82
      %s85 = sphi 0, %s84
      %s99 = sphi 0, %s85
      %s103 = sphi 0, %s103
      %s105 = sphi 0, %s103
      %s106 = sphi 0, %s105
      %s120 = sphi 0, %s106
      %s124 = sphi 0, %s124
      %s126 = sphi 0, %s124
      %s127 = sphi 0, %s126
      %s141 = sphi 0, %s127
      %s145 = sphi 0, %s145
      %s147 = sphi 0, %s145
      %s148 = sphi 0, %s147
      %s162 = sphi 0, %s148
      %s166 = sphi 0, %s166
      %s168 = sphi 0, %s166
      %s169 = sphi 0, %s168
      %s183 = sphi 0, %s169
      %s187 = sphi 0, %s187
      %s189 = sphi 0, %s187
      %s190 = sphi 0, %s189
      %s204 = sphi 0, %s190
      %s208 = sphi 0, %s208
      %s210 = sphi 0, %s208
      %s211 = sphi 0, %s210
      %s225 = sphi 0, %s211
      %s229 = sphi 0, %s229
      %s231 = sphi 0, %s229
      %s232 = sphi 0, %s231
      %s246 = sphi 0, %s232
      %s250 = sphi 0, %s250
      %s252 = sphi 0, %s250
      %s253 = sphi 0, %s252
      %s267 = sphi 0, %s253
      %s271 = sphi 0, %s271
      %s273 = sphi 0, %s271
      %s274 = sphi 0, %s273
      %s288 = sphi 0, %s274
      %s292 = sphi 0, %s292
      %s294 = sphi 0, %s292
      %s295 = sphi 0, %s294
      %s309 = sphi 0, %s295
      %s315 = sphi 0, %s317
      %s318 = sphi 0, %s315
      %s319 = sphi 0, %s318
      %s335 = sphi 0, %s319
    $region4: #{tps_forward.1} parent=1 // loop_header_branch
      %25 = sbr.rel (%p23) target = $region8
    $region5: #{tps_forward.1} parent=1 // loop_body
      %s27 = ssub.s32 %s22, 1
      %s28 = ssub.s32 %s22, 2
      %s29 = sadd.s32 %s22, 1
      %s30 = ssub.s32 %s22, %s29
      %p31 = scmp.eq.s32.totalorder %s30, 0
      %s33 = sadd.s32 %s32, 1
      %s34 = scalar_select %p31, %s32, %s33
      %p37 = pneg %p31
      %p38 = scmp.eq.s32.totalorder %s22, 1
      %p39 = por %p37, %p38
      %p40 = scmp.ne.s32.totalorder %s32, %s35
      %p41 = scmp.eq.s32.totalorder %s22, 0
      %p42 = por %p40, %p41
      %p43 = scmp.ne.s32.totalorder %s32, %s35
      %p44 = scmp.eq.s32.totalorder %s27, 1
      %p45 = por %p43, %p44
      %p46 = scmp.ne.s32.totalorder %s35, %s36
      %p47 = scmp.eq.s32.totalorder %s27, 0
      %p48 = por %p46, %p47
      %p49 = scmp.ne.s32.totalorder %s35, %s36
      %p50 = scmp.eq.s32.totalorder %s28, 1
      %p51 = por %p49, %p50
      %p53 = scmp.ne.s32.totalorder %s36, %s52
      %p54 = scmp.eq.s32.totalorder %s28, 0
      %p55 = por %p53, %p54
      %s56 = ssub.s32 %s22, %s29
      %p57 = scmp.eq.s32.totalorder %s56, 0
      %s59 = sadd.s32 %s58, 1
      %s60 = scalar_select %p57, %s58, %s59
      %p63 = pneg %p57
      %p64 = scmp.eq.s32.totalorder %s22, 1
      %p65 = por %p63, %p64
      %p66 = scmp.ne.s32.totalorder %s58, %s61
      %p67 = scmp.eq.s32.totalorder %s22, 0
      %p68 = por %p66, %p67
      %p69 = scmp.ne.s32.totalorder %s58, %s61
      %p70 = scmp.eq.s32.totalorder %s27, 1
      %p71 = por %p69, %p70
      %p72 = scmp.ne.s32.totalorder %s61, %s62
      %p73 = scmp.eq.s32.totalorder %s27, 0
      %p74 = por %p72, %p73
      %p75 = scmp.ne.s32.totalorder %s61, %s62
      %p76 = scmp.eq.s32.totalorder %s28, 1
      %p77 = por %p75, %p76
      %p79 = scmp.ne.s32.totalorder %s62, %s78
      %p80 = scmp.eq.s32.totalorder %s28, 0
      %p81 = por %p79, %p80
      %s83 = sadd.s32 %s82, 1
      %p86 = scmp.eq.s32.totalorder %s22, 1
      %p87 = scmp.ne.s32.totalorder %s82, %s84
      %p88 = scmp.eq.s32.totalorder %s22, 0
      %p89 = por %p87, %p88
      %p90 = scmp.ne.s32.totalorder %s82, %s84
      %p91 = scmp.eq.s32.totalorder %s27, 1
      %p92 = por %p90, %p91
      %p93 = scmp.ne.s32.totalorder %s84, %s85
      %p94 = scmp.eq.s32.totalorder %s27, 0
      %p95 = por %p93, %p94
      %p96 = scmp.ne.s32.totalorder %s84, %s85
      %p97 = scmp.eq.s32.totalorder %s28, 1
      %p98 = por %p96, %p97
      %p100 = scmp.ne.s32.totalorder %s85, %s99
      %p101 = scmp.eq.s32.totalorder %s28, 0
      %p102 = por %p100, %p101
      %s104 = sadd.s32 %s103, 1
      %p107 = scmp.eq.s32.totalorder %s22, 1
      %p108 = scmp.ne.s32.totalorder %s103, %s105
      %p109 = scmp.eq.s32.totalorder %s22, 0
      %p110 = por %p108, %p109
      %p111 = scmp.ne.s32.totalorder %s103, %s105
      %p112 = scmp.eq.s32.totalorder %s27, 1
      %p113 = por %p111, %p112
      %p114 = scmp.ne.s32.totalorder %s105, %s106
      %p115 = scmp.eq.s32.totalorder %s27, 0
      %p116 = por %p114, %p115
      %p117 = scmp.ne.s32.totalorder %s105, %s106
      %p118 = scmp.eq.s32.totalorder %s28, 1
      %p119 = por %p117, %p118
      %p121 = scmp.ne.s32.totalorder %s106, %s120
      %p122 = scmp.eq.s32.totalorder %s28, 0
      %p123 = por %p121, %p122
      %s125 = sadd.s32 %s124, 1
      %p128 = scmp.eq.s32.totalorder %s22, 1
      %p129 = scmp.ne.s32.totalorder %s124, %s126
      %p130 = scmp.eq.s32.totalorder %s22, 0
      %p131 = por %p129, %p130
      %p132 = scmp.ne.s32.totalorder %s124, %s126
      %p133 = scmp.eq.s32.totalorder %s27, 1
      %p134 = por %p132, %p133
      %p135 = scmp.ne.s32.totalorder %s126, %s127
      %p136 = scmp.eq.s32.totalorder %s27, 0
      %p137 = por %p135, %p136
      %p138 = scmp.ne.s32.totalorder %s126, %s127
      %p139 = scmp.eq.s32.totalorder %s28, 1
      %p140 = por %p138, %p139
      %p142 = scmp.ne.s32.totalorder %s127, %s141
      %p143 = scmp.eq.s32.totalorder %s28, 0
      %p144 = por %p142, %p143
      %s146 = sadd.s32 %s145, 1
      %p149 = scmp.eq.s32.totalorder %s22, 1
      %p150 = scmp.ne.s32.totalorder %s145, %s147
      %p151 = scmp.eq.s32.totalorder %s22, 0
      %p152 = por %p150, %p151
      %p153 = scmp.ne.s32.totalorder %s145, %s147
      %p154 = scmp.eq.s32.totalorder %s27, 1
      %p155 = por %p153, %p154
      %p156 = scmp.ne.s32.totalorder %s147, %s148
      %p157 = scmp.eq.s32.totalorder %s27, 0
      %p158 = por %p156, %p157
      %p159 = scmp.ne.s32.totalorder %s147, %s148
      %p160 = scmp.eq.s32.totalorder %s28, 1
      %p161 = por %p159, %p160
      %p163 = scmp.ne.s32.totalorder %s148, %s162
      %p164 = scmp.eq.s32.totalorder %s28, 0
      %p165 = por %p163, %p164
      %s167 = sadd.s32 %s166, 1
      %p170 = scmp.eq.s32.totalorder %s22, 1
      %p171 = scmp.ne.s32.totalorder %s166, %s168
      %p172 = scmp.eq.s32.totalorder %s22, 0
      %p173 = por %p171, %p172
      %p174 = scmp.ne.s32.totalorder %s166, %s168
      %p175 = scmp.eq.s32.totalorder %s27, 1
      %p176 = por %p174, %p175
      %p177 = scmp.ne.s32.totalorder %s168, %s169
      %p178 = scmp.eq.s32.totalorder %s27, 0
      %p179 = por %p177, %p178
      %p180 = scmp.ne.s32.totalorder %s168, %s169
      %p181 = scmp.eq.s32.totalorder %s28, 1
      %p182 = por %p180, %p181
      %p184 = scmp.ne.s32.totalorder %s169, %s183
      %p185 = scmp.eq.s32.totalorder %s28, 0
      %p186 = por %p184, %p185
      %s188 = sadd.s32 %s187, 1
      %p191 = scmp.eq.s32.totalorder %s22, 1
      %p192 = scmp.ne.s32.totalorder %s187, %s189
      %p193 = scmp.eq.s32.totalorder %s22, 0
      %p194 = por %p192, %p193
      %p195 = scmp.ne.s32.totalorder %s187, %s189
      %p196 = scmp.eq.s32.totalorder %s27, 1
      %p197 = por %p195, %p196
      %p198 = scmp.ne.s32.totalorder %s189, %s190
      %p199 = scmp.eq.s32.totalorder %s27, 0
      %p200 = por %p198, %p199
      %p201 = scmp.ne.s32.totalorder %s189, %s190
      %p202 = scmp.eq.s32.totalorder %s28, 1
      %p203 = por %p201, %p202
      %p205 = scmp.ne.s32.totalorder %s190, %s204
      %p206 = scmp.eq.s32.totalorder %s28, 0
      %p207 = por %p205, %p206
      %s209 = sadd.s32 %s208, 1
      %p212 = scmp.eq.s32.totalorder %s22, 1
      %p213 = scmp.ne.s32.totalorder %s208, %s210
      %p214 = scmp.eq.s32.totalorder %s22, 0
      %p215 = por %p213, %p214
      %p216 = scmp.ne.s32.totalorder %s208, %s210
      %p217 = scmp.eq.s32.totalorder %s27, 1
      %p218 = por %p216, %p217
      %p219 = scmp.ne.s32.totalorder %s210, %s211
      %p220 = scmp.eq.s32.totalorder %s27, 0
      %p221 = por %p219, %p220
      %p222 = scmp.ne.s32.totalorder %s210, %s211
      %p223 = scmp.eq.s32.totalorder %s28, 1
      %p224 = por %p222, %p223
      %p226 = scmp.ne.s32.totalorder %s211, %s225
      %p227 = scmp.eq.s32.totalorder %s28, 0
      %p228 = por %p226, %p227
      %s230 = sadd.s32 %s229, 1
      %p233 = scmp.eq.s32.totalorder %s22, 1
      %p234 = scmp.ne.s32.totalorder %s229, %s231
      %p235 = scmp.eq.s32.totalorder %s22, 0
      %p236 = por %p234, %p235
      %p237 = scmp.ne.s32.totalorder %s229, %s231
      %p238 = scmp.eq.s32.totalorder %s27, 1
      %p239 = por %p237, %p238
      %p240 = scmp.ne.s32.totalorder %s231, %s232
      %p241 = scmp.eq.s32.totalorder %s27, 0
      %p242 = por %p240, %p241
      %p243 = scmp.ne.s32.totalorder %s231, %s232
      %p244 = scmp.eq.s32.totalorder %s28, 1
      %p245 = por %p243, %p244
      %p247 = scmp.ne.s32.totalorder %s232, %s246
      %p248 = scmp.eq.s32.totalorder %s28, 0
      %p249 = por %p247, %p248
      %s251 = sadd.s32 %s250, 1
      %p254 = scmp.eq.s32.totalorder %s22, 1
      %p255 = scmp.ne.s32.totalorder %s250, %s252
      %p256 = scmp.eq.s32.totalorder %s22, 0
      %p257 = por %p255, %p256
      %p258 = scmp.ne.s32.totalorder %s250, %s252
      %p259 = scmp.eq.s32.totalorder %s27, 1
      %p260 = por %p258, %p259
      %p261 = scmp.ne.s32.totalorder %s252, %s253
      %p262 = scmp.eq.s32.totalorder %s27, 0
      %p263 = por %p261, %p262
      %p264 = scmp.ne.s32.totalorder %s252, %s253
      %p265 = scmp.eq.s32.totalorder %s28, 1
      %p266 = por %p264, %p265
      %p268 = scmp.ne.s32.totalorder %s253, %s267
      %p269 = scmp.eq.s32.totalorder %s28, 0
      %p270 = por %p268, %p269
      %s272 = sadd.s32 %s271, 1
      %p275 = scmp.eq.s32.totalorder %s22, 1
      %p276 = scmp.ne.s32.totalorder %s271, %s273
      %p277 = scmp.eq.s32.totalorder %s22, 0
      %p278 = por %p276, %p277
      %p279 = scmp.ne.s32.totalorder %s271, %s273
      %p280 = scmp.eq.s32.totalorder %s27, 1
      %p281 = por %p279, %p280
      %p282 = scmp.ne.s32.totalorder %s273, %s274
      %p283 = scmp.eq.s32.totalorder %s27, 0
      %p284 = por %p282, %p283
      %p285 = scmp.ne.s32.totalorder %s273, %s274
      %p286 = scmp.eq.s32.totalorder %s28, 1
      %p287 = por %p285, %p286
      %p289 = scmp.ne.s32.totalorder %s274, %s288
      %p290 = scmp.eq.s32.totalorder %s28, 0
      %p291 = por %p289, %p290
      %s293 = sadd.s32 %s292, 1
      %p296 = scmp.eq.s32.totalorder %s22, 1
      %p297 = scmp.ne.s32.totalorder %s292, %s294
      %p298 = scmp.eq.s32.totalorder %s22, 0
      %p299 = por %p297, %p298
      %p300 = scmp.ne.s32.totalorder %s292, %s294
      %p301 = scmp.eq.s32.totalorder %s27, 1
      %p302 = por %p300, %p301
      %p303 = scmp.ne.s32.totalorder %s294, %s295
      %p304 = scmp.eq.s32.totalorder %s27, 0
      %p305 = por %p303, %p304
      %p306 = scmp.ne.s32.totalorder %s294, %s295
      %p307 = scmp.eq.s32.totalorder %s28, 1
      %p308 = por %p306, %p307
      %p310 = scmp.ne.s32.totalorder %s295, %s309
      %p311 = scmp.eq.s32.totalorder %s28, 0
      %p312 = por %p310, %p311
      %s313 = ssub.s32 %s22, %s29
      %p314 = scmp.eq.s32.totalorder %s313, 0
      %s316 = sadd.s32 %s315, 1
      %s317 = scalar_select %p314, %s315, %s316
      %p320 = pneg %p314
      %p321 = scmp.eq.s32.totalorder %s22, 1
      %p322 = por %p320, %p321
      %p323 = scmp.ne.s32.totalorder %s315, %s318
      %p324 = scmp.eq.s32.totalorder %s22, 0
      %p325 = por %p323, %p324
      %p326 = scmp.ne.s32.totalorder %s315, %s318
      %p327 = scmp.eq.s32.totalorder %s27, 1
      %p328 = por %p326, %p327
      %p329 = scmp.ne.s32.totalorder %s318, %s319
      %p330 = scmp.eq.s32.totalorder %s27, 0
      %p331 = por %p329, %p330
      %p332 = scmp.ne.s32.totalorder %s318, %s319
      %p333 = scmp.eq.s32.totalorder %s28, 1
      %p334 = por %p332, %p333
      %p336 = scmp.ne.s32.totalorder %s319, %s335
      %p337 = scmp.eq.s32.totalorder %s28, 0
      %p338 = por %p336, %p337
      %p339 = scmp.le.s32.totalorder 1, %s22
      %p340 = scmp.lt.s32.totalorder %s22, 3
      %p341 = pnand %p339, %p340
      %p342 = pneg %p341
      // Predicated region
      $region9: #{tps_forward.1} parent=5 // pred_check
        _
      $region10: #{tps_forward.1} parent=5 // pred_check_branch
        %344 = sbr.rel (%p341) target = $region12
      $region11: #{tps_forward.1} parent=5 // pred_region
        %s345 = ssub.s32 %s22, 1
        // Predicated region
        $region13: #{tps_forward.1} parent=11 // pred_check
          %p346 = pneg %p95
        $region14: #{tps_forward.1} parent=11 // pred_check_branch
          %348 = sbr.rel (%p346) target = $region16
        $region15: #{tps_forward.1} parent=11 // pred_region
          %s350 = ssub.s32 320, 320
          %351 = vsyncadd [#allocation6], %s350
          %s352 = sshll.u32 [#allocation5], 4
          %s353 = int_to_ptr.vmem [resolvable:$true] %s352
          %358 = dma.hbm_to_vmem [thread:$0]  %s2, 320, %s353, [#allocation6], 64, 64, 4
        $region16: #{tps_forward.1} parent=11 // pred_fallthru
          _
        // Predicated region
        $region17: #{tps_forward.1} parent=11 // pred_check
          %p359 = pneg %p116
        $region18: #{tps_forward.1} parent=11 // pred_check_branch
          %361 = sbr.rel (%p359) target = $region20
        $region19: #{tps_forward.1} parent=11 // pred_region
          %s363 = ssub.s32 9216, 9216
          %364 = vsyncadd [#allocation8], %s363
          %s365 = sshll.u32 [#allocation7], 4
          %s366 = int_to_ptr.vmem [resolvable:$true] %s365
          %371 = dma.hbm_to_vmem [thread:$0]  %s3, 9216, %s366, [#allocation8], 64, 64, 4
        $region20: #{tps_forward.1} parent=11 // pred_fallthru
          _
        // Predicated region
        $region21: #{tps_forward.1} parent=11 // pred_check
          %p372 = pneg %p137
        $region22: #{tps_forward.1} parent=11 // pred_check_branch
          %374 = sbr.rel (%p372) target = $region24
        $region23: #{tps_forward.1} parent=11 // pred_region
          _
        $region24: #{tps_forward.1} parent=11 // pred_fallthru
          _
        // Predicated region
        $region25: #{tps_forward.1} parent=11 // pred_check
          %p375 = pneg %p158
        $region26: #{tps_forward.1} parent=11 // pred_check_branch
          %377 = sbr.rel (%p375) target = $region28
        $region27: #{tps_forward.1} parent=11 // pred_region
          _
        $region28: #{tps_forward.1} parent=11 // pred_fallthru
          _
        // Predicated region
        $region29: #{tps_forward.1} parent=11 // pred_check
          %p378 = pneg %p179
        $region30: #{tps_forward.1} parent=11 // pred_check_branch
          %380 = sbr.rel (%p378) target = $region32
        $region31: #{tps_forward.1} parent=11 // pred_region
          %s382 = ssub.s32 1664, 1664
          %383 = vsyncadd [#allocation8], %s382
          %s384 = sshll.u32 [#allocation9], 4
          %s385 = int_to_ptr.vmem [resolvable:$true] %s384
          %390 = dma.hbm_to_vmem [thread:$0]  %s6, 1664, %s385, [#allocation8], 128, 128, 8
        $region32: #{tps_forward.1} parent=11 // pred_fallthru
          _
        // Predicated region
        $region33: #{tps_forward.1} parent=11 // pred_check
          %p391 = pneg %p200
        $region34: #{tps_forward.1} parent=11 // pred_check_branch
          %393 = sbr.rel (%p391) target = $region36
        $region35: #{tps_forward.1} parent=11 // pred_region
          %s395 = ssub.s32 320, 320
          %396 = vsyncadd [#allocation11], %s395
          %s397 = sshll.u32 [#allocation10], 4
          %s398 = int_to_ptr.vmem [resolvable:$true] %s397
          %403 = dma.hbm_to_vmem [thread:$0]  %s7, 320, %s398, [#allocation11], 64, 64, 4
        $region36: #{tps_forward.1} parent=11 // pred_fallthru
          _
        // Predicated region
        $region37: #{tps_forward.1} parent=11 // pred_check
          %p404 = pneg %p221
        $region38: #{tps_forward.1} parent=11 // pred_check_branch
          %406 = sbr.rel (%p404) target = $region40
        $region39: #{tps_forward.1} parent=11 // pred_region
          _
        $region40: #{tps_forward.1} parent=11 // pred_fallthru
          _
        // Predicated region
        $region41: #{tps_forward.1} parent=11 // pred_check
          %p407 = pneg %p242
        $region42: #{tps_forward.1} parent=11 // pred_check_branch
          %409 = sbr.rel (%p407) target = $region44
        $region43: #{tps_forward.1} parent=11 // pred_region
          _
        $region44: #{tps_forward.1} parent=11 // pred_fallthru
          _
        // Predicated region
        $region45: #{tps_forward.1} parent=11 // pred_check
          %p410 = pneg %p263
        $region46: #{tps_forward.1} parent=11 // pred_check_branch
          %412 = sbr.rel (%p410) target = $region48
        $region47: #{tps_forward.1} parent=11 // pred_region
          _
        $region48: #{tps_forward.1} parent=11 // pred_fallthru
          _
        // Predicated region
        $region49: #{tps_forward.1} parent=11 // pred_check
          %p413 = pneg %p284
        $region50: #{tps_forward.1} parent=11 // pred_check_branch
          %415 = sbr.rel (%p413) target = $region52
        $region51: #{tps_forward.1} parent=11 // pred_region
          _
        $region52: #{tps_forward.1} parent=11 // pred_fallthru
          _
        // Predicated region
        $region53: #{tps_forward.1} parent=11 // pred_check
          %p416 = pneg %p305
        $region54: #{tps_forward.1} parent=11 // pred_check_branch
          %418 = sbr.rel (%p416) target = $region56
        $region55: #{tps_forward.1} parent=11 // pred_region
          _
        $region56: #{tps_forward.1} parent=11 // pred_fallthru
          _
      $region12: #{tps_forward.1} parent=5 // pred_fallthru
        _
      %p419 = scmp.lt.s32.totalorder %s22, 2
      // Predicated region
      $region57: #{tps_forward.1} parent=5 // pred_check
        %p420 = pneg %p419
      $region58: #{tps_forward.1} parent=5 // pred_check_branch
        %422 = sbr.rel (%p420) target = $region60
      $region59: #{tps_forward.1} parent=5 // pred_region
        // Predicated region
        $region61: #{tps_forward.1} parent=59 // pred_check
          %p423 = pneg %p42
        $region62: #{tps_forward.1} parent=59 // pred_check_branch
          %425 = sbr.rel (%p423) target = $region64
        $region63: #{tps_forward.1} parent=59 // pred_region
          %p426 = scmp.lt.s32.totalorder %s22, 1
          %s427 = scalar_select %p426, %s22, 1
          %s428 = smul.addr %s427, 32
          %s429 = smul.addr %s428, 4
          %s430 = scalar_lea.vmem %s0, %s429
        $region64: #{tps_forward.1} parent=59 // pred_fallthru
          _
        // Predicated region
        $region65: #{tps_forward.1} parent=59 // pred_check
          %p431 = pneg %p68
        $region66: #{tps_forward.1} parent=59 // pred_check_branch
          %433 = sbr.rel (%p431) target = $region68
        $region67: #{tps_forward.1} parent=59 // pred_region
          %p434 = scmp.lt.s32.totalorder %s22, 1
          %s435 = scalar_select %p434, %s22, 1
          %s436 = smul.addr %s435, 2
          %s437 = smul.addr %s436, 4
          %s438 = scalar_lea.vmem %s1, %s437
        $region68: #{tps_forward.1} parent=59 // pred_fallthru
          _
      $region60: #{tps_forward.1} parent=5 // pred_fallthru
        _
      %p439 = scmp.le.s32.totalorder 1, %s22
      %p440 = scmp.lt.s32.totalorder %s22, 3
      %p441 = pnand %p439, %p440
      %p442 = pneg %p441
      // Predicated region
      $region69: #{tps_forward.1} parent=5 // pred_check
        _
      $region70: #{tps_forward.1} parent=5 // pred_check_branch
        %444 = sbr.rel (%p441) target = $region72
      $region71: #{tps_forward.1} parent=5 // pred_region
        %s445 = ssub.s32 %s22, 1
        // Predicated region
        $region73: #{tps_forward.1} parent=71 // pred_check
          %p446 = pneg %p95
        $region74: #{tps_forward.1} parent=71 // pred_check_branch
          %448 = sbr.rel (%p446) target = $region76
        $region75: #{tps_forward.1} parent=71 // pred_region
          %449 = dma.done [#allocation6], 320
        $region76: #{tps_forward.1} parent=71 // pred_fallthru
          _
        // Predicated region
        $region77: #{tps_forward.1} parent=71 // pred_check
          %p450 = pneg %p116
        $region78: #{tps_forward.1} parent=71 // pred_check_branch
          %452 = sbr.rel (%p450) target = $region80
        $region79: #{tps_forward.1} parent=71 // pred_region
          %453 = dma.done [#allocation8], 9216
        $region80: #{tps_forward.1} parent=71 // pred_fallthru
          _
        // Predicated region
        $region81: #{tps_forward.1} parent=71 // pred_check
          %p454 = pneg %p179
        $region82: #{tps_forward.1} parent=71 // pred_check_branch
          %456 = sbr.rel (%p454) target = $region84
        $region83: #{tps_forward.1} parent=71 // pred_region
          %457 = dma.done [#allocation8], 1664
        $region84: #{tps_forward.1} parent=71 // pred_fallthru
          _
        // Predicated region
        $region85: #{tps_forward.1} parent=71 // pred_check
          %p458 = pneg %p200
        $region86: #{tps_forward.1} parent=71 // pred_check_branch
          %460 = sbr.rel (%p458) target = $region88
        $region87: #{tps_forward.1} parent=71 // pred_region
          %461 = dma.done [#allocation11], 320
        $region88: #{tps_forward.1} parent=71 // pred_fallthru
          _
        %p462 = scmp.lt.s32.totalorder %s27, 1
        %s463 = scalar_select %p462, %s27, 1
        %s464 = smul.addr %s463, 32
        %s465 = smul.addr %s464, 4
        %s466 = scalar_lea.vmem %s0, %s465
        %p467 = pneg %p48
        %p468 = pneg %p45
        %p469 = scmp.lt.s32.totalorder %s27, 1
        %s470 = scalar_select %p469, %s27, 1
        %s471 = smul.addr %s470, 2
        %s472 = smul.addr %s471, 4
        %s473 = scalar_lea.vmem %s1, %s472
        %p474 = pneg %p74
        %p475 = pneg %p71
        %p476 = pneg %p95
        %p477 = pneg %p92
        %p478 = pneg %p116
        %p479 = pneg %p113
        %p480 = pneg %p137
        %p481 = pneg %p134
        %p482 = pneg %p158
        %p483 = pneg %p155
        %p484 = pneg %p179
        %p485 = pneg %p176
        %p486 = pneg %p200
        %p487 = pneg %p197
        %p488 = pneg %p221
        %p489 = pneg %p218
        %p490 = pneg %p242
        %p491 = pneg %p239
        %p492 = pneg %p263
        %p493 = pneg %p260
        %p494 = pneg %p284
        %p495 = pneg %p281
        %p496 = pneg %p305
        %p497 = pneg %p302
        %p498 = pneg %p331
        %p499 = pneg %p328
        %p500 = scmp.lt.s32.totalorder %s27, 1
        %s501 = scalar_select %p500, %s27, 1
        %s502 = smul.addr %s501, 2
        %s503 = smul.addr %s502, 4
        %s504 = scalar_lea.vmem %s13, %s503
        %p505 = scmp.lt.s32.totalorder %s27, 1
        %s506 = scalar_select %p505, %s27, 1
        %s507 = smul.addr %s506, 32
        %s508 = smul.addr %s507, 4
        %s509 = scalar_lea.vmem %s0, %s508
        %p510 = scmp.lt.s32.totalorder %s27, 1
        %s511 = scalar_select %p510, %s27, 1
        %s512 = smul.addr %s511, 2
        %s513 = smul.addr %s512, 4
        %s514 = scalar_lea.vmem %s1, %s513
        %p515 = scmp.lt.s32.totalorder %s27, 1
        %s516 = scalar_select %p515, %s27, 1
        %s517 = smul.addr %s516, 2
        %s518 = smul.addr %s517, 4
        %s519 = scalar_lea.vmem %s13, %s518
        %v521 = vld [vmem:[%s509] sm:$0xf]
        %v522 = vld [vmem:[%s509 + $0x4] sm:$0xf]
        %v523 = vld [vmem:[%s509 + $0x8] sm:$0xf]
        %v524 = vld [vmem:[%s509 + $0xc] sm:$0xf]
        %v525 = vld [vmem:[%s509 + $0x10] sm:$0xf]
        %v526 = vld [vmem:[%s509 + $0x14] sm:$0xf]
        %v527 = vld [vmem:[%s509 + $0x18] sm:$0xf]
        %v528 = vld [vmem:[%s509 + $0x1c] sm:$0xf]
        %v529 = vld [vmem:[%s509 + $0x20] sm:$0xf]
        %v530 = vld [vmem:[%s509 + $0x24] sm:$0xf]
        %v531 = vld [vmem:[%s509 + $0x28] sm:$0xf]
        %v532 = vld [vmem:[%s509 + $0x2c] sm:$0xf]
        %v533 = vld [vmem:[%s509 + $0x30] sm:$0xf]
        %v534 = vld [vmem:[%s509 + $0x34] sm:$0xf]
        %v535 = vld [vmem:[%s509 + $0x38] sm:$0xf]
        %v536 = vld [vmem:[%s509 + $0x3c] sm:$0xf]
        %v537 = vld [vmem:[%s509 + $0x40] sm:$0xf]
        %v538 = vld [vmem:[%s509 + $0x44] sm:$0xf]
        %v539 = vld [vmem:[%s509 + $0x48] sm:$0xf]
        %v540 = vld [vmem:[%s509 + $0x4c] sm:$0xf]
        %v541 = vld [vmem:[%s509 + $0x50] sm:$0xf]
        %v542 = vld [vmem:[%s509 + $0x54] sm:$0xf]
        %v543 = vld [vmem:[%s509 + $0x58] sm:$0xf]
        %v544 = vld [vmem:[%s509 + $0x5c] sm:$0xf]
        %v545 = vld [vmem:[%s509 + $0x60] sm:$0xf]
        %v546 = vld [vmem:[%s509 + $0x64] sm:$0xf]
        %v547 = vld [vmem:[%s509 + $0x68] sm:$0xf]
        %v548 = vld [vmem:[%s509 + $0x6c] sm:$0xf]
        %v549 = vld [vmem:[%s509 + $0x70] sm:$0xf]
        %v550 = vld [vmem:[%s509 + $0x74] sm:$0xf]
        %v551 = vld [vmem:[%s509 + $0x78] sm:$0xf]
        %v552 = vld [vmem:[%s509 + $0x7c] sm:$0xf]
        %v553 = vld [vmem:[#allocation5] sm:$0xf]
        %v554 = vld [vmem:[#allocation5 + $0x4] sm:$0xf]
        %v555 = vld [vmem:[#allocation5 + $0x8] sm:$0xf]
        %v556 = vld [vmem:[#allocation5 + $0xc] sm:$0xf]
        %v557 = vld [vmem:[#allocation5 + $0x10] sm:$0x3]
        %v590 = vunpack.c.l.b16 %v521
        %v591 = vunpack.c.l.b16 %v522
        %v592 = vunpack.c.l.b16 %v523
        %v593 = vunpack.c.l.b16 %v524
        %v594 = vunpack.c.l.b16 %v525
        %v595 = vunpack.c.l.b16 %v526
        %v596 = vunpack.c.l.b16 %v527
        %v597 = vunpack.c.l.b16 %v528
        %v598 = vunpack.c.l.b16 %v529
        %v599 = vunpack.c.l.b16 %v530
        %v600 = vunpack.c.l.b16 %v531
        %v601 = vunpack.c.l.b16 %v532
        %v602 = vunpack.c.l.b16 %v533
        %v603 = vunpack.c.l.b16 %v534
        %v604 = vunpack.c.l.b16 %v535
        %v605 = vunpack.c.l.b16 %v536
        %v606 = vunpack.c.l.b16 %v537
        %v607 = vunpack.c.l.b16 %v538
        %v608 = vunpack.c.l.b16 %v539
        %v609 = vunpack.c.l.b16 %v540
        %v610 = vunpack.c.l.b16 %v541
        %v611 = vunpack.c.l.b16 %v542
        %v612 = vunpack.c.l.b16 %v543
        %v613 = vunpack.c.l.b16 %v544
        %v614 = vunpack.c.l.b16 %v545
        %v615 = vunpack.c.l.b16 %v546
        %v616 = vunpack.c.l.b16 %v547
        %v617 = vunpack.c.l.b16 %v548
        %v618 = vunpack.c.l.b16 %v549
        %v619 = vunpack.c.l.b16 %v550
        %v620 = vunpack.c.l.b16 %v551
        %v621 = vunpack.c.l.b16 %v552
        %v622 = vpack.c.b16 %v591, %v590
        %v623 = vpack.c.b16 %v593, %v592
        %v624 = vpack.c.b16 %v595, %v594
        %v625 = vpack.c.b16 %v597, %v596
        %v626 = vpack.c.b16 %v599, %v598
        %v627 = vpack.c.b16 %v601, %v600
        %v628 = vpack.c.b16 %v603, %v602
        %v629 = vpack.c.b16 %v605, %v604
        %v630 = vpack.c.b16 %v607, %v606
        %v631 = vpack.c.b16 %v609, %v608
        %v632 = vpack.c.b16 %v611, %v610
        %v633 = vpack.c.b16 %v613, %v612
        %v634 = vpack.c.b16 %v615, %v614
        %v635 = vpack.c.b16 %v617, %v616
        %v636 = vpack.c.b16 %v619, %v618
        %v637 = vpack.c.b16 %v621, %v620
        %v643 = vunpack.c.l.b16 %v553
        %v644 = vunpack.c.l.b16 %v554
        %v645 = vunpack.c.l.b16 %v555
        %v646 = vunpack.c.l.b16 %v556
        %v647 = vunpack.c.l.b16 %v557
        %v648 = vpack.c.b16 %v644, %v643
        %v649 = vpack.c.b16 %v646, %v645
        %v650 = vpack.c.b16 %v647, %v647
        %vm653 = vcmask 293888
        %v655 = vsel %vm653, %v622, 0
        %v658 = vsel %vm653, %v623, 0
        %v661 = vsel %vm653, %v624, 0
        %v664 = vsel %vm653, %v625, 0
        %v667 = vsel %vm653, %v626, 0
        %v670 = vsel %vm653, %v627, 0
        %v673 = vsel %vm653, %v628, 0
        %v676 = vsel %vm653, %v629, 0
        %v679 = vsel %vm653, %v630, 0
        %v682 = vsel %vm653, %v631, 0
        %v685 = vsel %vm653, %v632, 0
        %v688 = vsel %vm653, %v633, 0
        %v691 = vsel %vm653, %v634, 0
        %v694 = vsel %vm653, %v635, 0
        %v697 = vsel %vm653, %v636, 0
        %v700 = vsel %vm653, %v637, 0
        %vm702 = vcmask 1041408
        %v704 = vsel %vm702, %v650, 0
        %706 = vmatprep.subr.bf16.mxu0 0
        %707 = vmatpush1.bf16.msra.mxu0 %v648
        %708 = vmatprep.subr.bf16.mxu0 0
        %709 = vmatpush1.bf16.msra.mxu0 %v649
        %710 = vmatprep.subr.bf16.mxu0 0
        %711 = vmatpush1.bf16.msra.mxu0 %v704
        %712 = vmatprep.subr.bf16.mxu0 0
        %713 = vmatpush1.bf16.msra.mxu0 0
        %714 = vmatprep.subr.bf16.mxu0 0
        %715 = vmatpush1.bf16.msra.mxu0 0
        %716 = vmatprep.subr.bf16.mxu0 0
        %717 = vmatpush1.bf16.msra.mxu0 0
        %718 = vmatprep.subr.bf16.mxu0 0
        %719 = vmatpush1.bf16.msra.mxu0 0
        %720 = vmatprep.subr.bf16.mxu0 0
        %721 = vmatpush1.bf16.msra.mxu0 0
        %722 = vmatprep.subr.bf16.mxu0 0
        %723 = vmatpush1.bf16.msra.mxu0 0
        %724 = vmatprep.subr.bf16.mxu0 0
        %725 = vmatpush1.bf16.msra.mxu0 0
        %726 = vmatprep.subr.bf16.mxu0 0
        %727 = vmatpush1.bf16.msra.mxu0 0
        %728 = vmatprep.subr.bf16.mxu0 0
        %729 = vmatpush1.bf16.msra.mxu0 0
        %730 = vmatprep.subr.bf16.mxu0 0
        %731 = vmatpush1.bf16.msra.mxu0 0
        %732 = vmatprep.subr.bf16.mxu0 0
        %733 = vmatpush1.bf16.msra.mxu0 0
        %734 = vmatprep.subr.bf16.mxu0 0
        %735 = vmatpush1.bf16.msra.mxu0 0
        %736 = vmatprep.subr.bf16.mxu0 0
        %737 = vmatpush1.bf16.msra.mxu0 0
        %738 = vmatprep.mubr.bf16.mxu0 0
        %739 = vmatmul.mubr.bf16.gmra.mrb[0].mxu0 %v655
        %v740 = vpop.f32.mrb[0].mxu0
        %v741 = vadd.f32 0.0, %v740
        %v742 = vpop.f32.mrb[0].mxu0
        %v743 = vpop.f32.mrb[0].mxu0
        %v744 = vadd.f32 0.0, %v743
        %v745 = vpop.f32.mrb[0].mxu0
        %746 = vmatprep.mubr.bf16.mxu0 0
        %747 = vmatmul.mubr.bf16.gmra.mrb[0].mxu0 %v658
        %v748 = vpop.f32.mrb[0].mxu0
        %v749 = vadd.f32 0.0, %v748
        %v750 = vpop.f32.mrb[0].mxu0
        %v751 = vpop.f32.mrb[0].mxu0
        %v752 = vadd.f32 0.0, %v751
        %v753 = vpop.f32.mrb[0].mxu0
        %754 = vmatprep.mubr.bf16.mxu0 0
        %755 = vmatmul.mubr.bf16.gmra.mrb[0].mxu0 %v661
        %v756 = vpop.f32.mrb[0].mxu0
        %v757 = vadd.f32 0.0, %v756
        %v758 = vpop.f32.mrb[0].mxu0
        %v759 = vpop.f32.mrb[0].mxu0
        %v760 = vadd.f32 0.0, %v759
        %v761 = vpop.f32.mrb[0].mxu0
        %762 = vmatprep.mubr.bf16.mxu0 0
        %763 = vmatmul.mubr.bf16.gmra.mrb[0].mxu0 %v664
        %v764 = vpop.f32.mrb[0].mxu0
        %v765 = vadd.f32 0.0, %v764
        %v766 = vpop.f32.mrb[0].mxu0
        %v767 = vpop.f32.mrb[0].mxu0
        %v768 = vadd.f32 0.0, %v767
        %v769 = vpop.f32.mrb[0].mxu0
        %770 = vmatprep.mubr.bf16.mxu0 0
        %771 = vmatmul.mubr.bf16.gmra.mrb[0].mxu0 %v667
        %v772 = vpop.f32.mrb[0].mxu0
        %v773 = vadd.f32 0.0, %v772
        %v774 = vpop.f32.mrb[0].mxu0
        %v775 = vpop.f32.mrb[0].mxu0
        %v776 = vadd.f32 0.0, %v775
        %v777 = vpop.f32.mrb[0].mxu0
        %778 = vmatprep.mubr.bf16.mxu0 0
        %779 = vmatmul.mubr.bf16.gmra.mrb[0].mxu0 %v670
        %v780 = vpop.f32.mrb[0].mxu0
        %v781 = vadd.f32 0.0, %v780
        %v782 = vpop.f32.mrb[0].mxu0
        %v783 = vpop.f32.mrb[0].mxu0
        %v784 = vadd.f32 0.0, %v783
        %v785 = vpop.f32.mrb[0].mxu0
        %786 = vmatprep.mubr.bf16.mxu0 0
        %787 = vmatmul.mubr.bf16.gmra.mrb[0].mxu0 %v673
        %v788 = vpop.f32.mrb[0].mxu0
        %v789 = vadd.f32 0.0, %v788
        %v790 = vpop.f32.mrb[0].mxu0
        %v791 = vpop.f32.mrb[0].mxu0
        %v792 = vadd.f32 0.0, %v791
        %v793 = vpop.f32.mrb[0].mxu0
        %794 = vmatprep.mubr.bf16.mxu0 0
        %795 = vmatmul.mubr.bf16.gmra.mrb[0].mxu0 %v676
        %v796 = vpop.f32.mrb[0].mxu0
        %v797 = vadd.f32 0.0, %v796
        %v798 = vpop.f32.mrb[0].mxu0
        %v799 = vpop.f32.mrb[0].mxu0
        %v800 = vadd.f32 0.0, %v799
        %v801 = vpop.f32.mrb[0].mxu0
        %802 = vmatprep.mubr.bf16.mxu0 0
        %803 = vmatmul.mubr.bf16.gmra.mrb[0].mxu0 %v679
        %v804 = vpop.f32.mrb[0].mxu0
        %v805 = vadd.f32 0.0, %v804
        %v806 = vpop.f32.mrb[0].mxu0
        %v807 = vpop.f32.mrb[0].mxu0
        %v808 = vadd.f32 0.0, %v807
        %v809 = vpop.f32.mrb[0].mxu0
        %810 = vmatprep.mubr.bf16.mxu0 0
        %811 = vmatmul.mubr.bf16.gmra.mrb[0].mxu0 %v682
        %v812 = vpop.f32.mrb[0].mxu0
        %v813 = vadd.f32 0.0, %v812
        %v814 = vpop.f32.mrb[0].mxu0
        %v815 = vpop.f32.mrb[0].mxu0
        %v816 = vadd.f32 0.0, %v815
        %v817 = vpop.f32.mrb[0].mxu0
        %818 = vmatprep.mubr.bf16.mxu0 0
        %819 = vmatmul.mubr.bf16.gmra.mrb[0].mxu0 %v685
        %v820 = vpop.f32.mrb[0].mxu0
        %v821 = vadd.f32 0.0, %v820
        %v822 = vpop.f32.mrb[0].mxu0
        %v823 = vpop.f32.mrb[0].mxu0
        %v824 = vadd.f32 0.0, %v823
        %v825 = vpop.f32.mrb[0].mxu0
        %826 = vmatprep.mubr.bf16.mxu0 0
        %827 = vmatmul.mubr.bf16.gmra.mrb[0].mxu0 %v688
        %v828 = vpop.f32.mrb[0].mxu0
        %v829 = vadd.f32 0.0, %v828
        %v830 = vpop.f32.mrb[0].mxu0
        %v831 = vpop.f32.mrb[0].mxu0
        %v832 = vadd.f32 0.0, %v831
        %v833 = vpop.f32.mrb[0].mxu0
        %834 = vmatprep.mubr.bf16.mxu0 0
        %835 = vmatmul.mubr.bf16.gmra.mrb[0].mxu0 %v691
        %v836 = vpop.f32.mrb[0].mxu0
        %v837 = vadd.f32 0.0, %v836
        %v838 = vpop.f32.mrb[0].mxu0
        %v839 = vpop.f32.mrb[0].mxu0
        %v840 = vadd.f32 0.0, %v839
        %v841 = vpop.f32.mrb[0].mxu0
        %842 = vmatprep.mubr.bf16.mxu0 0
        %843 = vmatmul.mubr.bf16.gmra.mrb[0].mxu0 %v694
        %v844 = vpop.f32.mrb[0].mxu0
        %v845 = vadd.f32 0.0, %v844
        %v846 = vpop.f32.mrb[0].mxu0
        %v847 = vpop.f32.mrb[0].mxu0
        %v848 = vadd.f32 0.0, %v847
        %v849 = vpop.f32.mrb[0].mxu0
        %850 = vmatprep.mubr.bf16.mxu0 0
        %851 = vmatmul.mubr.bf16.gmra.mrb[0].mxu0 %v697
        %v852 = vpop.f32.mrb[0].mxu0
        %v853 = vadd.f32 0.0, %v852
        %v854 = vpop.f32.mrb[0].mxu0
        %v855 = vpop.f32.mrb[0].mxu0
        %v856 = vadd.f32 0.0, %v855
        %v857 = vpop.f32.mrb[0].mxu0
        %858 = vmatprep.mubr.bf16.mxu0 0
        %859 = vmatmul.mubr.bf16.gmra.mrb[0].mxu0 %v700
        %v860 = vpop.f32.mrb[0].mxu0
        %v861 = vadd.f32 0.0, %v860
        %v862 = vpop.f32.mrb[0].mxu0
        %v863 = vpop.f32.mrb[0].mxu0
        %v864 = vadd.f32 0.0, %v863
        %v865 = vpop.f32.mrb[0].mxu0
        %866 = vdwg.mxu0
        %v867 = vmax.f32 %v741, 0.0
        %v868 = vmax.f32 %v744, 0.0
        %v869 = vmax.f32 %v749, 0.0
        %v870 = vmax.f32 %v752, 0.0
        %v871 = vmax.f32 %v757, 0.0
        %v872 = vmax.f32 %v760, 0.0
        %v873 = vmax.f32 %v765, 0.0
        %v874 = vmax.f32 %v768, 0.0
        %v875 = vmax.f32 %v773, 0.0
        %v876 = vmax.f32 %v776, 0.0
        %v877 = vmax.f32 %v781, 0.0
        %v878 = vmax.f32 %v784, 0.0
        %v879 = vmax.f32 %v789, 0.0
        %v880 = vmax.f32 %v792, 0.0
        %v881 = vmax.f32 %v797, 0.0
        %v882 = vmax.f32 %v800, 0.0
        %v883 = vmax.f32 %v805, 0.0
        %v884 = vmax.f32 %v808, 0.0
        %v885 = vmax.f32 %v813, 0.0
        %v886 = vmax.f32 %v816, 0.0
        %v887 = vmax.f32 %v821, 0.0
        %v888 = vmax.f32 %v824, 0.0
        %v889 = vmax.f32 %v829, 0.0
        %v890 = vmax.f32 %v832, 0.0
        %v891 = vmax.f32 %v837, 0.0
        %v892 = vmax.f32 %v840, 0.0
        %v893 = vmax.f32 %v845, 0.0
        %v894 = vmax.f32 %v848, 0.0
        %v895 = vmax.f32 %v853, 0.0
        %v896 = vmax.f32 %v856, 0.0
        %v897 = vmax.f32 %v861, 0.0
        %v898 = vmax.f32 %v864, 0.0
        %vm931 = vcmask 1046528
        %v932 = vrot.slane %v867, 1
        %v933 = vrot.slane %v868, 1
        %v934 = vsel %vm931, %v932, %v933
        %v935 = vrot.slane %v869, 1
        %v936 = vsel %vm931, %v933, %v935
        %v937 = vrot.slane %v870, 1
        %v938 = vsel %vm931, %v935, %v937
        %v939 = vrot.slane %v871, 1
        %v940 = vsel %vm931, %v937, %v939
        %v941 = vrot.slane %v872, 1
        %v942 = vsel %vm931, %v939, %v941
        %v943 = vrot.slane %v873, 1
        %v944 = vsel %vm931, %v941, %v943
        %v945 = vrot.slane %v874, 1
        %v946 = vsel %vm931, %v943, %v945
        %v947 = vrot.slane %v875, 1
        %v948 = vsel %vm931, %v945, %v947
        %v949 = vrot.slane %v876, 1
        %v950 = vsel %vm931, %v947, %v949
        %v951 = vrot.slane %v877, 1
        %v952 = vsel %vm931, %v949, %v951
        %v953 = vrot.slane %v878, 1
        %v954 = vsel %vm931, %v951, %v953
        %v955 = vrot.slane %v879, 1
        %v956 = vsel %vm931, %v953, %v955
        %v957 = vrot.slane %v880, 1
        %v958 = vsel %vm931, %v955, %v957
        %v959 = vrot.slane %v881, 1
        %v960 = vsel %vm931, %v957, %v959
        %v961 = vrot.slane %v882, 1
        %v962 = vsel %vm931, %v959, %v961
        %v963 = vrot.slane %v883, 1
        %v964 = vsel %vm931, %v961, %v963
        %v965 = vrot.slane %v884, 1
        %v966 = vsel %vm931, %v963, %v965
        %v967 = vrot.slane %v885, 1
        %v968 = vsel %vm931, %v965, %v967
        %v969 = vrot.slane %v886, 1
        %v970 = vsel %vm931, %v967, %v969
        %v971 = vrot.slane %v887, 1
        %v972 = vsel %vm931, %v969, %v971
        %v973 = vrot.slane %v888, 1
        %v974 = vsel %vm931, %v971, %v973
        %v975 = vrot.slane %v889, 1
        %v976 = vsel %vm931, %v973, %v975
        %v977 = vrot.slane %v890, 1
        %v978 = vsel %vm931, %v975, %v977
        %v979 = vrot.slane %v891, 1
        %v980 = vsel %vm931, %v977, %v979
        %v981 = vrot.slane %v892, 1
        %v982 = vsel %vm931, %v979, %v981
        %v983 = vrot.slane %v893, 1
        %v984 = vsel %vm931, %v981, %v983
        %v985 = vrot.slane %v894, 1
        %v986 = vsel %vm931, %v983, %v985
        %v987 = vrot.slane %v895, 1
        %v988 = vsel %vm931, %v985, %v987
        %v989 = vrot.slane %v896, 1
        %v990 = vsel %vm931, %v987, %v989
        %v991 = vrot.slane %v897, 1
        %v992 = vsel %vm931, %v989, %v991
        %v993 = vrot.slane %v898, 1
        %v994 = vsel %vm931, %v991, %v993
        %v1027 = vmax.f32 %v867, %v934
        %v1028 = vmax.f32 %v868, %v936
        %v1029 = vmax.f32 %v869, %v938
        %v1030 = vmax.f32 %v870, %v940
        %v1031 = vmax.f32 %v871, %v942
        %v1032 = vmax.f32 %v872, %v944
        %v1033 = vmax.f32 %v873, %v946
        %v1034 = vmax.f32 %v874, %v948
        %v1035 = vmax.f32 %v875, %v950
        %v1036 = vmax.f32 %v876, %v952
        %v1037 = vmax.f32 %v877, %v954
        %v1038 = vmax.f32 %v878, %v956
        %v1039 = vmax.f32 %v879, %v958
        %v1040 = vmax.f32 %v880, %v960
        %v1041 = vmax.f32 %v881, %v962
        %v1042 = vmax.f32 %v882, %v964
        %v1043 = vmax.f32 %v883, %v966
        %v1044 = vmax.f32 %v884, %v968
        %v1045 = vmax.f32 %v885, %v970
        %v1046 = vmax.f32 %v886, %v972
        %v1047 = vmax.f32 %v887, %v974
        %v1048 = vmax.f32 %v888, %v976
        %v1049 = vmax.f32 %v889, %v978
        %v1050 = vmax.f32 %v890, %v980
        %v1051 = vmax.f32 %v891, %v982
        %v1052 = vmax.f32 %v892, %v984
        %v1053 = vmax.f32 %v893, %v986
        %v1054 = vmax.f32 %v894, %v988
        %v1055 = vmax.f32 %v895, %v990
        %v1056 = vmax.f32 %v896, %v992
        %v1057 = vmax.f32 %v897, %v994
        %v1058 = vmax.f32 %v898, %v993
        %v1059 = vmax.f32 %v1027, %v1029
        %v1060 = vmax.f32 %v1028, %v1030
        %v1061 = vmax.f32 %v1029, %v1031
        %v1062 = vmax.f32 %v1030, %v1032
        %v1063 = vmax.f32 %v1031, %v1033
        %v1064 = vmax.f32 %v1032, %v1034
        %v1065 = vmax.f32 %v1033, %v1035
        %v1066 = vmax.f32 %v1034, %v1036
        %v1067 = vmax.f32 %v1035, %v1037
        %v1068 = vmax.f32 %v1036, %v1038
        %v1069 = vmax.f32 %v1037, %v1039
        %v1070 = vmax.f32 %v1038, %v1040
        %v1071 = vmax.f32 %v1039, %v1041
        %v1072 = vmax.f32 %v1040, %v1042
        %v1073 = vmax.f32 %v1041, %v1043
        %v1074 = vmax.f32 %v1042, %v1044
        %v1075 = vmax.f32 %v1043, %v1045
        %v1076 = vmax.f32 %v1044, %v1046
        %v1077 = vmax.f32 %v1045, %v1047
        %v1078 = vmax.f32 %v1046, %v1048
        %v1079 = vmax.f32 %v1047, %v1049
        %v1080 = vmax.f32 %v1048, %v1050
        %v1081 = vmax.f32 %v1049, %v1051
        %v1082 = vmax.f32 %v1050, %v1052
        %v1083 = vmax.f32 %v1051, %v1053
        %v1084 = vmax.f32 %v1052, %v1054
        %v1085 = vmax.f32 %v1053, %v1055
        %v1086 = vmax.f32 %v1054, %v1056
        %v1087 = vmax.f32 %v1055, %v1057
        %v1088 = vmax.f32 %v1056, %v1058
        %v1089 = vld [vmem:[#allocation9] sm:$0xff]
        %v1090 = vld [vmem:[#allocation9 + $0x8] sm:$0xff]
        %v1091 = vld [vmem:[#allocation9 + $0x10] sm:$0xff]
        %v1092 = vld [vmem:[#allocation9 + $0x18] sm:$0xff]
        %v1093 = vld [vmem:[#allocation9 + $0x20] sm:$0xff]
        %v1094 = vld [vmem:[#allocation9 + $0x28] sm:$0xff]
        %v1095 = vld [vmem:[#allocation9 + $0x30] sm:$0xff]
        %v1096 = vld [vmem:[#allocation9 + $0x38] sm:$0xff]
        %v1097 = vld [vmem:[#allocation9 + $0x40] sm:$0xff]
        %v1098 = vld [vmem:[#allocation9 + $0x48] sm:$0xff]
        %v1099 = vld [vmem:[#allocation9 + $0x50] sm:$0xff]
        %v1100 = vld [vmem:[#allocation9 + $0x58] sm:$0xff]
        %v1101 = vld [vmem:[#allocation9 + $0x60] sm:$0x33]
        %v1102 = vpack.c.bf16 %v1060, %v1059
        %v1103 = vpack.c.bf16 %v1062, %v1061
        %v1104 = vpack.c.bf16 %v1064, %v1063
        %v1105 = vpack.c.bf16 %v1066, %v1065
        %v1106 = vpack.c.bf16 %v1068, %v1067
        %v1107 = vpack.c.bf16 %v1070, %v1069
        %v1108 = vpack.c.bf16 %v1072, %v1071
        %v1109 = vpack.c.bf16 %v1074, %v1073
        %v1110 = vpack.c.bf16 %v1076, %v1075
        %v1111 = vpack.c.bf16 %v1078, %v1077
        %v1112 = vpack.c.bf16 %v1080, %v1079
        %v1113 = vpack.c.bf16 %v1082, %v1081
        %v1114 = vpack.c.bf16 %v1084, %v1083
        %v1115 = vpack.c.bf16 %v1086, %v1085
        %v1116 = vpack.c.bf16 %v1088, %v1087
        %v1130 = vunpack.c.l.b16 %v1089
        %v1131 = vunpack.c.h.b16 %v1089
        %v1132 = vunpack.c.l.b16 %v1090
        %v1133 = vunpack.c.h.b16 %v1090
        %v1134 = vunpack.c.l.b16 %v1091
        %v1135 = vunpack.c.h.b16 %v1091
        %v1136 = vunpack.c.l.b16 %v1092
        %v1137 = vunpack.c.h.b16 %v1092
        %v1138 = vunpack.c.l.b16 %v1093
        %v1139 = vunpack.c.h.b16 %v1093
        %v1140 = vunpack.c.l.b16 %v1094
        %v1141 = vunpack.c.h.b16 %v1094
        %v1142 = vunpack.c.l.b16 %v1095
        %v1143 = vunpack.c.h.b16 %v1095
        %v1144 = vunpack.c.l.b16 %v1096
        %v1145 = vunpack.c.h.b16 %v1096
        %v1146 = vunpack.c.l.b16 %v1097
        %v1147 = vunpack.c.h.b16 %v1097
        %v1148 = vunpack.c.l.b16 %v1098
        %v1149 = vunpack.c.h.b16 %v1098
        %v1150 = vunpack.c.l.b16 %v1099
        %v1151 = vunpack.c.h.b16 %v1099
        %v1152 = vunpack.c.l.b16 %v1100
        %v1153 = vunpack.c.h.b16 %v1100
        %v1154 = vunpack.c.l.b16 %v1101
        %v1155 = vunpack.c.h.b16 %v1101
        %v1156 = vpack.c.b16 %v1132, %v1130
        %v1157 = vpack.c.b16 %v1133, %v1131
        %v1158 = vpack.c.b16 %v1136, %v1134
        %v1159 = vpack.c.b16 %v1137, %v1135
        %v1160 = vpack.c.b16 %v1140, %v1138
        %v1161 = vpack.c.b16 %v1141, %v1139
        %v1162 = vpack.c.b16 %v1144, %v1142
        %v1163 = vpack.c.b16 %v1145, %v1143
        %v1164 = vpack.c.b16 %v1148, %v1146
        %v1165 = vpack.c.b16 %v1149, %v1147
        %v1166 = vpack.c.b16 %v1152, %v1150
        %v1167 = vpack.c.b16 %v1153, %v1151
        %v1168 = vpack.c.b16 %v1154, %v1154
        %v1169 = vpack.c.b16 %v1155, %v1155
        %vm1177 = vcmask 908288
        %v1179 = vsel %vm1177, %v1157, 0
        %v1182 = vsel %vm1177, %v1159, 0
        %v1185 = vsel %vm1177, %v1161, 0
        %v1188 = vsel %vm1177, %v1163, 0
        %v1191 = vsel %vm1177, %v1165, 0
        %v1194 = vsel %vm1177, %v1167, 0
        %v1197 = vsel %vm1177, %v1169, 0
        %vm1199 = vcmask 1047552
        %v1200 = vsel %vm931, 4294967295, 65535
        %v1201 = vsel %vm1199, %v1200, 0
        %v1203 = vand.u32 %v1116, %v1201
        %1205 = vmatprep.subr.bf16.mxu0 0
        %1206 = vmatpush1.bf16.msra.mxu0 %v1102
        %1207 = vmatprep.subr.bf16.mxu0 0
        %1208 = vmatpush1.bf16.msra.mxu0 %v1103
        %1209 = vmatprep.subr.bf16.mxu0 0
        %1210 = vmatpush1.bf16.msra.mxu0 %v1104
        %1211 = vmatprep.subr.bf16.mxu0 0
        %1212 = vmatpush1.bf16.msra.mxu0 %v1105
        %1213 = vmatprep.subr.bf16.mxu0 0
        %1214 = vmatpush1.bf16.msra.mxu0 %v1106
        %1215 = vmatprep.subr.bf16.mxu0 0
        %1216 = vmatpush1.bf16.msra.mxu0 %v1107
        %1217 = vmatprep.subr.bf16.mxu0 0
        %1218 = vmatpush1.bf16.msra.mxu0 %v1108
        %1219 = vmatprep.subr.bf16.mxu0 0
        %1220 = vmatpush1.bf16.msra.mxu0 %v1109
        %1221 = vmatprep.subr.bf16.mxu0 0
        %1222 = vmatpush1.bf16.msra.mxu0 %v1110
        %1223 = vmatprep.subr.bf16.mxu0 0
        %1224 = vmatpush1.bf16.msra.mxu0 %v1111
        %1225 = vmatprep.subr.bf16.mxu0 0
        %1226 = vmatpush1.bf16.msra.mxu0 %v1112
        %1227 = vmatprep.subr.bf16.mxu0 0
        %1228 = vmatpush1.bf16.msra.mxu0 %v1113
        %1229 = vmatprep.subr.bf16.mxu0 0
        %1230 = vmatpush1.bf16.msra.mxu0 %v1114
        %1231 = vmatprep.subr.bf16.mxu0 0
        %1232 = vmatpush1.bf16.msra.mxu0 %v1115
        %1233 = vmatprep.subr.bf16.mxu0 0
        %1234 = vmatpush1.bf16.msra.mxu0 %v1203
        %1235 = vmatprep.subr.bf16.mxu0 0
        %1236 = vmatpush1.bf16.msra.mxu0 0
        %1237 = vmatprep.mubr.bf16.mxu0 %v1179
        %1238 = vmatmul.mubr.bf16.gmra.mrb[0].mxu0 %v1156
        %v1239 = vpop.f32.mrb[0].mxu0
        %v1240 = vadd.f32 0.0, %v1239
        %v1241 = vpop.f32.mrb[0].mxu0
        %v1242 = vpop.f32.mrb[0].mxu0
        %v1243 = vadd.f32 0.0, %v1242
        %v1244 = vpop.f32.mrb[0].mxu0
        %1245 = vmatprep.mubr.bf16.mxu0 %v1182
        %1246 = vmatmul.mubr.bf16.gmra.mrb[0].mxu0 %v1158
        %v1247 = vpop.f32.mrb[0].mxu0
        %v1248 = vadd.f32 0.0, %v1247
        %v1249 = vpop.f32.mrb[0].mxu0
        %v1250 = vpop.f32.mrb[0].mxu0
        %v1251 = vadd.f32 0.0, %v1250
        %v1252 = vpop.f32.mrb[0].mxu0
        %1253 = vmatprep.mubr.bf16.mxu0 %v1185
        %1254 = vmatmul.mubr.bf16.gmra.mrb[0].mxu0 %v1160
        %v1255 = vpop.f32.mrb[0].mxu0
        %v1256 = vadd.f32 0.0, %v1255
        %v1257 = vpop.f32.mrb[0].mxu0
        %v1258 = vpop.f32.mrb[0].mxu0
        %v1259 = vadd.f32 0.0, %v1258
        %v1260 = vpop.f32.mrb[0].mxu0
        %1261 = vmatprep.mubr.bf16.mxu0 %v1188
        %1262 = vmatmul.mubr.bf16.gmra.mrb[0].mxu0 %v1162
        %v1263 = vpop.f32.mrb[0].mxu0
        %v1264 = vadd.f32 0.0, %v1263
        %v1265 = vpop.f32.mrb[0].mxu0
        %v1266 = vpop.f32.mrb[0].mxu0
        %v1267 = vadd.f32 0.0, %v1266
        %v1268 = vpop.f32.mrb[0].mxu0
        %1269 = vmatprep.mubr.bf16.mxu0 %v1191
        %1270 = vmatmul.mubr.bf16.gmra.mrb[0].mxu0 %v1164
        %v1271 = vpop.f32.mrb[0].mxu0
        %v1272 = vadd.f32 0.0, %v1271
        %v1273 = vpop.f32.mrb[0].mxu0
        %v1274 = vpop.f32.mrb[0].mxu0
        %v1275 = vadd.f32 0.0, %v1274
        %v1276 = vpop.f32.mrb[0].mxu0
        %1277 = vmatprep.mubr.bf16.mxu0 %v1194
        %1278 = vmatmul.mubr.bf16.gmra.mrb[0].mxu0 %v1166
        %v1279 = vpop.f32.mrb[0].mxu0
        %v1280 = vadd.f32 0.0, %v1279
        %v1281 = vpop.f32.mrb[0].mxu0
        %v1282 = vpop.f32.mrb[0].mxu0
        %v1283 = vadd.f32 0.0, %v1282
        %v1284 = vpop.f32.mrb[0].mxu0
        %1285 = vmatprep.mubr.bf16.mxu0 %v1197
        %1286 = vmatmul.mubr.bf16.gmra.mrb[0].mxu0 %v1168
        %v1287 = vpop.f32.mrb[0].mxu0
        %v1288 = vadd.f32 0.0, %v1287
        %v1289 = vpop.f32.mrb[0].mxu0
        %v1290 = vpop.f32.mrb[0].mxu0
        %v1291 = vpop.f32.mrb[0].mxu0
        %1292 = vdwg.mxu0
        %v1293 = vpack.c.bf16 %v1243, %v1240
        %v1294 = vpack.c.bf16 %v1251, %v1248
        %v1295 = vpack.c.bf16 %v1259, %v1256
        %v1296 = vpack.c.bf16 %v1267, %v1264
        %v1297 = vpack.c.bf16 %v1275, %v1272
        %v1303 = vunpack.c.l.b16 %v1293
        %v1304 = vunpack.c.h.b16 %v1293
        %v1305 = vunpack.c.l.b16 %v1294
        %v1306 = vunpack.c.h.b16 %v1294
        %v1307 = vunpack.c.l.b16 %v1295
        %v1308 = vunpack.c.h.b16 %v1295
        %v1309 = vunpack.c.l.b16 %v1296
        %v1310 = vunpack.c.h.b16 %v1296
        %v1311 = vunpack.c.l.b16 %v1297
        %v1312 = vunpack.c.h.b16 %v1297
        %v1313 = vpack.c.b16 %v1303, %v1303
        %v1314 = vpack.c.b16 %v1304, %v1304
        %v1315 = vpack.c.b16 %v1305, %v1305
        %v1316 = vpack.c.b16 %v1306, %v1306
        %v1317 = vpack.c.b16 %v1307, %v1307
        %v1318 = vpack.c.b16 %v1308, %v1308
        %v1319 = vpack.c.b16 %v1309, %v1309
        %v1320 = vpack.c.b16 %v1310, %v1310
        %v1321 = vpack.c.b16 %v1311, %v1311
        %v1322 = vpack.c.b16 %v1312, %v1312
        %1333 = vst [vmem:[#allocation2] sm:$0xf] %v1313
        %1334 = vst [vmem:[#allocation2 + $0x24] sm:$0xf] %v1314
        %1335 = vst [vmem:[#allocation2 + $0x48] sm:$0xf] %v1315
        %1336 = vst [vmem:[#allocation2 + $0x6c] sm:$0xf] %v1316
        %1337 = vst [vmem:[#allocation2 + $0x90] sm:$0xf] %v1317
        %1338 = vst [vmem:[#allocation2 + $0xb4] sm:$0xf] %v1318
        %1339 = vst [vmem:[#allocation2 + $0xd8] sm:$0xf] %v1319
        %1340 = vst [vmem:[#allocation2 + $0xfc] sm:$0xf] %v1320
        %1341 = vst [vmem:[#allocation2 + $0x120] sm:$0xf] %v1321
        %1342 = vst [vmem:[#allocation2 + $0x144] sm:$0x7] %v1322
        %vm1343 = vsmask.f32 3328
        %vm1344 = vsmask.f32 7440
        %vm1345 = vmor %vm1343, %vm1344
        %v1347 = vshrl.u32 %v1313, 16
        %v1349 = vrot.slane %v1347, 4
        %v1350 = vshll.u32 %v1313, 16
        %v1352 = vrot.slane %v1350, 5
        %v1353 = vor.u32 %v1349, %v1352
        %v1354 = vrot.slane %v1353, 4
        %v1356 = vshll.u32 %v1314, 16
        %v1358 = vrot.slane %v1356, 5
        %v1359 = vsel %vm1345, %v1354, %v1358
        %v1360 = vshrl.u32 %v1314, 16
        %v1362 = vrot.slane %v1360, 4
        %v1363 = vor.u32 %v1362, %v1358
        %v1364 = vrot.slane %v1363, 4
        %v1366 = vshll.u32 %v1315, 16
        %v1368 = vrot.slane %v1366, 5
        %v1369 = vsel %vm1345, %v1364, %v1368
        %v1370 = vshrl.u32 %v1315, 16
        %v1372 = vrot.slane %v1370, 4
        %v1373 = vor.u32 %v1372, %v1368
        %v1374 = vrot.slane %v1373, 4
        %v1376 = vshll.u32 %v1316, 16
        %v1378 = vrot.slane %v1376, 5
        %v1379 = vsel %vm1345, %v1374, %v1378
        %v1380 = vshrl.u32 %v1316, 16
        %v1382 = vrot.slane %v1380, 4
        %v1383 = vor.u32 %v1382, %v1378
        %v1384 = vrot.slane %v1383, 4
        %v1386 = vshll.u32 %v1317, 16
        %v1388 = vrot.slane %v1386, 5
        %v1389 = vsel %vm1345, %v1384, %v1388
        %v1390 = vshrl.u32 %v1317, 16
        %v1392 = vrot.slane %v1390, 4
        %v1393 = vor.u32 %v1392, %v1388
        %v1394 = vrot.slane %v1393, 4
        %v1396 = vshll.u32 %v1318, 16
        %v1398 = vrot.slane %v1396, 5
        %v1399 = vsel %vm1345, %v1394, %v1398
        %v1400 = vshrl.u32 %v1318, 16
        %v1402 = vrot.slane %v1400, 4
        %v1403 = vor.u32 %v1402, %v1398
        %v1404 = vrot.slane %v1403, 4
        %v1406 = vshll.u32 %v1319, 16
        %v1408 = vrot.slane %v1406, 5
        %v1409 = vsel %vm1345, %v1404, %v1408
        %v1410 = vshrl.u32 %v1319, 16
        %v1412 = vrot.slane %v1410, 4
        %v1413 = vor.u32 %v1412, %v1408
        %v1414 = vrot.slane %v1413, 4
        %v1416 = vshll.u32 %v1320, 16
        %v1418 = vrot.slane %v1416, 5
        %v1419 = vsel %vm1345, %v1414, %v1418
        %v1420 = vshrl.u32 %v1320, 16
        %v1422 = vrot.slane %v1420, 4
        %v1423 = vor.u32 %v1422, %v1418
        %v1424 = vrot.slane %v1423, 4
        %v1426 = vshll.u32 %v1321, 16
        %v1428 = vrot.slane %v1426, 5
        %v1429 = vsel %vm1345, %v1424, %v1428
        %v1430 = vshrl.u32 %v1321, 16
        %v1432 = vrot.slane %v1430, 4
        %v1433 = vor.u32 %v1432, %v1428
        %v1434 = vrot.slane %v1433, 4
        %v1436 = vshll.u32 %v1322, 16
        %v1438 = vrot.slane %v1436, 5
        %v1439 = vsel %vm1345, %v1434, %v1438
        %v1440 = vshrl.u32 %v1322, 16
        %v1442 = vrot.slane %v1440, 4
        %v1443 = vor.u32 %v1442, %v1438
        %v1444 = vrot.slane %v1443, 4
        %1455 = vst [vmem:[#allocation2 + $0x4] sm:$0xf] %v1359
        %1456 = vst [vmem:[#allocation2 + $0x28] sm:$0xf] %v1369
        %1457 = vst [vmem:[#allocation2 + $0x4c] sm:$0xf] %v1379
        %1458 = vst [vmem:[#allocation2 + $0x70] sm:$0xf] %v1389
        %1459 = vst [vmem:[#allocation2 + $0x94] sm:$0xf] %v1399
        %1460 = vst [vmem:[#allocation2 + $0xb8] sm:$0xf] %v1409
        %1461 = vst [vmem:[#allocation2 + $0xdc] sm:$0xf] %v1419
        %1462 = vst [vmem:[#allocation2 + $0x100] sm:$0xf] %v1429
        %1463 = vst [vmem:[#allocation2 + $0x124] sm:$0xf] %v1439
        %1464 = vst [vmem:[#allocation2 + $0x148] sm:$0x7] %v1444
        %vm1465 = vcmask 1042432
        %vm1466 = vcmask 1046532
        %vm1467 = vmor %vm1465, %vm1466
        %v1468 = vrot.slane %v1313, 5
        %v1469 = vrot.slane %v1468, 4
        %v1470 = vrot.slane %v1314, 5
        %v1471 = vsel %vm1467, %v1469, %v1470
        %v1472 = vrot.slane %v1470, 4
        %v1473 = vrot.slane %v1315, 5
        %v1474 = vsel %vm1467, %v1472, %v1473
        %v1475 = vrot.slane %v1473, 4
        %v1476 = vrot.slane %v1316, 5
        %v1477 = vsel %vm1467, %v1475, %v1476
        %v1478 = vrot.slane %v1476, 4
        %v1479 = vrot.slane %v1317, 5
        %v1480 = vsel %vm1467, %v1478, %v1479
        %v1481 = vrot.slane %v1479, 4
        %v1482 = vrot.slane %v1318, 5
        %v1483 = vsel %vm1467, %v1481, %v1482
        %v1484 = vrot.slane %v1482, 4
        %v1485 = vrot.slane %v1319, 5
        %v1486 = vsel %vm1467, %v1484, %v1485
        %v1487 = vrot.slane %v1485, 4
        %v1488 = vrot.slane %v1320, 5
        %v1489 = vsel %vm1467, %v1487, %v1488
        %v1490 = vrot.slane %v1488, 4
        %v1491 = vrot.slane %v1321, 5
        %v1492 = vsel %vm1467, %v1490, %v1491
        %v1493 = vrot.slane %v1491, 4
        %v1494 = vrot.slane %v1322, 5
        %v1495 = vsel %vm1467, %v1493, %v1494
        %v1496 = vrot.slane %v1494, 4
        %1507 = vst [vmem:[#allocation2 + $0x8] sm:$0xf] %v1471
        %1508 = vst [vmem:[#allocation2 + $0x2c] sm:$0xf] %v1474
        %1509 = vst [vmem:[#allocation2 + $0x50] sm:$0xf] %v1477
        %1510 = vst [vmem:[#allocation2 + $0x74] sm:$0xf] %v1480
        %1511 = vst [vmem:[#allocation2 + $0x98] sm:$0xf] %v1483
        %1512 = vst [vmem:[#allocation2 + $0xbc] sm:$0xf] %v1486
        %1513 = vst [vmem:[#allocation2 + $0xe0] sm:$0xf] %v1489
        %1514 = vst [vmem:[#allocation2 + $0x104] sm:$0xf] %v1492
        %1515 = vst [vmem:[#allocation2 + $0x128] sm:$0xf] %v1495
        %1516 = vst [vmem:[#allocation2 + $0x14c] sm:$0x7] %v1496
        %v1517 = vpack.c.bf16 %v1248, %v1243
        %v1518 = vpack.c.bf16 %v1256, %v1251
        %v1519 = vpack.c.bf16 %v1264, %v1259
        %v1520 = vpack.c.bf16 %v1272, %v1267
        %v1521 = vpack.c.bf16 %v1280, %v1275
        %v1527 = vunpack.c.l.b16 %v1517
        %v1528 = vunpack.c.h.b16 %v1517
        %v1529 = vunpack.c.l.b16 %v1518
        %v1530 = vunpack.c.h.b16 %v1518
        %v1531 = vunpack.c.l.b16 %v1519
        %v1532 = vunpack.c.h.b16 %v1519
        %v1533 = vunpack.c.l.b16 %v1520
        %v1534 = vunpack.c.h.b16 %v1520
        %v1535 = vunpack.c.l.b16 %v1521
        %v1536 = vunpack.c.h.b16 %v1521
        %v1537 = vpack.c.b16 %v1527, %v1527
        %v1538 = vpack.c.b16 %v1528, %v1528
        %v1539 = vpack.c.b16 %v1529, %v1529
        %v1540 = vpack.c.b16 %v1530, %v1530
        %v1541 = vpack.c.b16 %v1531, %v1531
        %v1542 = vpack.c.b16 %v1532, %v1532
        %v1543 = vpack.c.b16 %v1533, %v1533
        %v1544 = vpack.c.b16 %v1534, %v1534
        %v1545 = vpack.c.b16 %v1535, %v1535
        %v1546 = vpack.c.b16 %v1536, %v1536
        %v1547 = vrot.slane %v1537, 5
        %v1548 = vrot.slane %v1547, 4
        %v1549 = vrot.slane %v1538, 5
        %v1550 = vsel %vm1467, %v1548, %v1549
        %v1551 = vrot.slane %v1549, 4
        %v1552 = vrot.slane %v1539, 5
        %v1553 = vsel %vm1467, %v1551, %v1552
        %v1554 = vrot.slane %v1552, 4
        %v1555 = vrot.slane %v1540, 5
        %v1556 = vsel %vm1467, %v1554, %v1555
        %v1557 = vrot.slane %v1555, 4
        %v1558 = vrot.slane %v1541, 5
        %v1559 = vsel %vm1467, %v1557, %v1558
        %v1560 = vrot.slane %v1558, 4
        %v1561 = vrot.slane %v1542, 5
        %v1562 = vsel %vm1467, %v1560, %v1561
        %v1563 = vrot.slane %v1561, 4
        %v1564 = vrot.slane %v1543, 5
        %v1565 = vsel %vm1467, %v1563, %v1564
        %v1566 = vrot.slane %v1564, 4
        %v1567 = vrot.slane %v1544, 5
        %v1568 = vsel %vm1467, %v1566, %v1567
        %v1569 = vrot.slane %v1567, 4
        %v1570 = vrot.slane %v1545, 5
        %v1571 = vsel %vm1467, %v1569, %v1570
        %v1572 = vrot.slane %v1570, 4
        %v1573 = vrot.slane %v1546, 5
        %v1574 = vsel %vm1467, %v1572, %v1573
        %v1575 = vrot.slane %v1573, 4
        %1586 = vst [vmem:[#allocation2 + $0xc] sm:$0xf] %v1550
        %1587 = vst [vmem:[#allocation2 + $0x30] sm:$0xf] %v1553
        %1588 = vst [vmem:[#allocation2 + $0x54] sm:$0xf] %v1556
        %1589 = vst [vmem:[#allocation2 + $0x78] sm:$0xf] %v1559
        %1590 = vst [vmem:[#allocation2 + $0x9c] sm:$0xf] %v1562
        %1591 = vst [vmem:[#allocation2 + $0xc0] sm:$0xf] %v1565
        %1592 = vst [vmem:[#allocation2 + $0xe4] sm:$0xf] %v1568
        %1593 = vst [vmem:[#allocation2 + $0x108] sm:$0xf] %v1571
        %1594 = vst [vmem:[#allocation2 + $0x12c] sm:$0xf] %v1574
        %1595 = vst [vmem:[#allocation2 + $0x150] sm:$0x7] %v1575
        %v1596 = vpack.c.bf16 %v1283, %v1283
        %v1598 = vunpack.c.l.b16 %v1596
        %v1599 = vpack.c.b16 %v1598, %v1598
        %vm1600 = vsmask.f32 2304
        %vm1601 = vsmask.f32 6416
        %vm1602 = vmor %vm1600, %vm1601
        %v1604 = vshrl.u32 %v1537, 16
        %v1606 = vrot.slane %v1604, 5
        %v1607 = vshll.u32 %v1537, 16
        %v1609 = vrot.slane %v1607, 6
        %v1610 = vor.u32 %v1606, %v1609
        %v1611 = vrot.slane %v1610, 4
        %v1613 = vshrl.u32 %v1538, 16
        %v1615 = vrot.slane %v1613, 5
        %v1616 = vshll.u32 %v1538, 16
        %v1618 = vrot.slane %v1616, 6
        %v1619 = vor.u32 %v1615, %v1618
        %v1620 = vsel %vm1602, %v1611, %v1619
        %v1621 = vrot.slane %v1619, 4
        %v1623 = vshrl.u32 %v1539, 16
        %v1625 = vrot.slane %v1623, 5
        %v1626 = vshll.u32 %v1539, 16
        %v1628 = vrot.slane %v1626, 6
        %v1629 = vor.u32 %v1625, %v1628
        %v1630 = vsel %vm1602, %v1621, %v1629
        %v1631 = vrot.slane %v1629, 4
        %v1633 = vshrl.u32 %v1540, 16
        %v1635 = vrot.slane %v1633, 5
        %v1636 = vshll.u32 %v1540, 16
        %v1638 = vrot.slane %v1636, 6
        %v1639 = vor.u32 %v1635, %v1638
        %v1640 = vsel %vm1602, %v1631, %v1639
        %v1641 = vrot.slane %v1639, 4
        %v1643 = vshrl.u32 %v1541, 16
        %v1645 = vrot.slane %v1643, 5
        %v1646 = vshll.u32 %v1541, 16
        %v1648 = vrot.slane %v1646, 6
        %v1649 = vor.u32 %v1645, %v1648
        %v1650 = vsel %vm1602, %v1641, %v1649
        %v1651 = vrot.slane %v1649, 4
        %v1653 = vshrl.u32 %v1542, 16
        %v1655 = vrot.slane %v1653, 5
        %v1656 = vshll.u32 %v1542, 16
        %v1658 = vrot.slane %v1656, 6
        %v1659 = vor.u32 %v1655, %v1658
        %v1660 = vsel %vm1602, %v1651, %v1659
        %v1661 = vrot.slane %v1659, 4
        %v1663 = vshrl.u32 %v1543, 16
        %v1665 = vrot.slane %v1663, 5
        %v1666 = vshll.u32 %v1543, 16
        %v1668 = vrot.slane %v1666, 6
        %v1669 = vor.u32 %v1665, %v1668
        %v1670 = vsel %vm1602, %v1661, %v1669
        %v1671 = vrot.slane %v1669, 4
        %v1673 = vshrl.u32 %v1544, 16
        %v1675 = vrot.slane %v1673, 5
        %v1676 = vshll.u32 %v1544, 16
        %v1678 = vrot.slane %v1676, 6
        %v1679 = vor.u32 %v1675, %v1678
        %v1680 = vsel %vm1602, %v1671, %v1679
        %v1681 = vrot.slane %v1679, 4
        %v1683 = vshrl.u32 %v1545, 16
        %v1685 = vrot.slane %v1683, 5
        %v1686 = vshll.u32 %v1545, 16
        %v1688 = vrot.slane %v1686, 6
        %v1689 = vor.u32 %v1685, %v1688
        %v1690 = vsel %vm1602, %v1681, %v1689
        %v1691 = vrot.slane %v1689, 4
        %v1693 = vshrl.u32 %v1546, 16
        %v1695 = vrot.slane %v1693, 5
        %v1696 = vshll.u32 %v1546, 16
        %v1698 = vrot.slane %v1696, 6
        %v1699 = vor.u32 %v1695, %v1698
        %v1700 = vsel %vm1602, %v1691, %v1699
        %v1701 = vrot.slane %v1699, 4
        %v1703 = vshll.u32 %v1599, 16
        %v1705 = vrot.slane %v1703, 6
        %v1706 = vsel %vm1602, %v1701, %v1705
        %1717 = vst [vmem:[#allocation2 + $0x10] sm:$0xf] %v1620
        %1718 = vst [vmem:[#allocation2 + $0x34] sm:$0xf] %v1630
        %1719 = vst [vmem:[#allocation2 + $0x58] sm:$0xf] %v1640
        %1720 = vst [vmem:[#allocation2 + $0x7c] sm:$0xf] %v1650
        %1721 = vst [vmem:[#allocation2 + $0xa0] sm:$0xf] %v1660
        %1722 = vst [vmem:[#allocation2 + $0xc4] sm:$0xf] %v1670
        %1723 = vst [vmem:[#allocation2 + $0xe8] sm:$0xf] %v1680
        %1724 = vst [vmem:[#allocation2 + $0x10c] sm:$0xf] %v1690
        %1725 = vst [vmem:[#allocation2 + $0x130] sm:$0xf] %v1700
        %1726 = vst [vmem:[#allocation2 + $0x154] sm:$0x7] %v1706
        %vm1727 = vcmask 1041408
        %vm1728 = vcmask 1045508
        %vm1729 = vmor %vm1727, %vm1728
        %v1730 = vrot.slane %v1537, 6
        %v1731 = vrot.slane %v1730, 4
        %v1732 = vrot.slane %v1538, 6
        %v1733 = vsel %vm1729, %v1731, %v1732
        %v1734 = vrot.slane %v1732, 4
        %v1735 = vrot.slane %v1539, 6
        %v1736 = vsel %vm1729, %v1734, %v1735
        %v1737 = vrot.slane %v1735, 4
        %v1738 = vrot.slane %v1540, 6
        %v1739 = vsel %vm1729, %v1737, %v1738
        %v1740 = vrot.slane %v1738, 4
        %v1741 = vrot.slane %v1541, 6
        %v1742 = vsel %vm1729, %v1740, %v1741
        %v1743 = vrot.slane %v1741, 4
        %v1744 = vrot.slane %v1542, 6
        %v1745 = vsel %vm1729, %v1743, %v1744
        %v1746 = vrot.slane %v1744, 4
        %v1747 = vrot.slane %v1543, 6
        %v1748 = vsel %vm1729, %v1746, %v1747
        %v1749 = vrot.slane %v1747, 4
        %v1750 = vrot.slane %v1544, 6
        %v1751 = vsel %vm1729, %v1749, %v1750
        %v1752 = vrot.slane %v1750, 4
        %v1753 = vrot.slane %v1545, 6
        %v1754 = vsel %vm1729, %v1752, %v1753
        %v1755 = vrot.slane %v1753, 4
        %v1756 = vrot.slane %v1546, 6
        %v1757 = vsel %vm1729, %v1755, %v1756
        %v1758 = vrot.slane %v1756, 4
        %v1759 = vrot.slane %v1599, 6
        %v1760 = vsel %vm1729, %v1758, %v1759
        %1771 = vst [vmem:[#allocation2 + $0x14] sm:$0xf] %v1733
        %1772 = vst [vmem:[#allocation2 + $0x38] sm:$0xf] %v1736
        %1773 = vst [vmem:[#allocation2 + $0x5c] sm:$0xf] %v1739
        %1774 = vst [vmem:[#allocation2 + $0x80] sm:$0xf] %v1742
        %1775 = vst [vmem:[#allocation2 + $0xa4] sm:$0xf] %v1745
        %1776 = vst [vmem:[#allocation2 + $0xc8] sm:$0xf] %v1748
        %1777 = vst [vmem:[#allocation2 + $0xec] sm:$0xf] %v1751
        %1778 = vst [vmem:[#allocation2 + $0x110] sm:$0xf] %v1754
        %1779 = vst [vmem:[#allocation2 + $0x134] sm:$0xf] %v1757
        %1780 = vst [vmem:[#allocation2 + $0x158] sm:$0x7] %v1760
        %v1781 = vpack.c.bf16 %v1283, %v1280
        %v1782 = vpack.c.bf16 %v1288, %v1288
        %v1785 = vunpack.c.l.b16 %v1781
        %v1786 = vunpack.c.h.b16 %v1781
        %v1787 = vunpack.c.l.b16 %v1782
        %v1788 = vpack.c.b16 %v1785, %v1785
        %v1789 = vpack.c.b16 %v1786, %v1786
        %v1790 = vpack.c.b16 %v1787, %v1787
        %v1791 = vrot.slane %v1315, 6
        %v1792 = vrot.slane %v1791, 4
        %v1793 = vrot.slane %v1316, 6
        %v1794 = vsel %vm1729, %v1792, %v1793
        %v1795 = vrot.slane %v1793, 4
        %v1796 = vrot.slane %v1317, 6
        %v1797 = vsel %vm1729, %v1795, %v1796
        %v1798 = vrot.slane %v1796, 4
        %v1799 = vrot.slane %v1318, 6
        %v1800 = vsel %vm1729, %v1798, %v1799
        %v1801 = vrot.slane %v1799, 4
        %v1802 = vrot.slane %v1319, 6
        %v1803 = vsel %vm1729, %v1801, %v1802
        %v1804 = vrot.slane %v1802, 4
        %v1805 = vrot.slane %v1320, 6
        %v1806 = vsel %vm1729, %v1804, %v1805
        %v1807 = vrot.slane %v1805, 4
        %v1808 = vrot.slane %v1321, 6
        %v1809 = vsel %vm1729, %v1807, %v1808
        %v1810 = vrot.slane %v1808, 4
        %v1811 = vrot.slane %v1322, 6
        %v1812 = vsel %vm1729, %v1810, %v1811
        %v1813 = vrot.slane %v1811, 4
        %v1814 = vrot.slane %v1788, 6
        %v1815 = vsel %vm1729, %v1813, %v1814
        %v1816 = vrot.slane %v1814, 4
        %v1817 = vrot.slane %v1789, 6
        %v1818 = vsel %vm1729, %v1816, %v1817
        %v1819 = vrot.slane %v1817, 4
        %v1820 = vrot.slane %v1790, 6
        %v1821 = vsel %vm1729, %v1819, %v1820
        %1832 = vst [vmem:[#allocation2 + $0x18] sm:$0xf] %v1794
        %1833 = vst [vmem:[#allocation2 + $0x3c] sm:$0xf] %v1797
        %1834 = vst [vmem:[#allocation2 + $0x60] sm:$0xf] %v1800
        %1835 = vst [vmem:[#allocation2 + $0x84] sm:$0xf] %v1803
        %1836 = vst [vmem:[#allocation2 + $0xa8] sm:$0xf] %v1806
        %1837 = vst [vmem:[#allocation2 + $0xcc] sm:$0xf] %v1809
        %1838 = vst [vmem:[#allocation2 + $0xf0] sm:$0xf] %v1812
        %1839 = vst [vmem:[#allocation2 + $0x114] sm:$0xf] %v1815
        %1840 = vst [vmem:[#allocation2 + $0x138] sm:$0xf] %v1818
        %1841 = vst [vmem:[#allocation2 + $0x15c] sm:$0x7] %v1821
        %vm1842 = vsmask.f32 1280
        %vm1843 = vsmask.f32 5392
        %vm1844 = vmor %vm1842, %vm1843
        %v1845 = vrot.slane %v1370, 6
        %v1846 = vrot.slane %v1366, 7
        %v1847 = vor.u32 %v1845, %v1846
        %v1848 = vrot.slane %v1847, 4
        %v1849 = vrot.slane %v1380, 6
        %v1850 = vrot.slane %v1376, 7
        %v1851 = vor.u32 %v1849, %v1850
        %v1852 = vsel %vm1844, %v1848, %v1851
        %v1853 = vrot.slane %v1851, 4
        %v1854 = vrot.slane %v1390, 6
        %v1855 = vrot.slane %v1386, 7
        %v1856 = vor.u32 %v1854, %v1855
        %v1857 = vsel %vm1844, %v1853, %v1856
        %v1858 = vrot.slane %v1856, 4
        %v1859 = vrot.slane %v1400, 6
        %v1860 = vrot.slane %v1396, 7
        %v1861 = vor.u32 %v1859, %v1860
        %v1862 = vsel %vm1844, %v1858, %v1861
        %v1863 = vrot.slane %v1861, 4
        %v1864 = vrot.slane %v1410, 6
        %v1865 = vrot.slane %v1406, 7
        %v1866 = vor.u32 %v1864, %v1865
        %v1867 = vsel %vm1844, %v1863, %v1866
        %v1868 = vrot.slane %v1866, 4
        %v1869 = vrot.slane %v1420, 6
        %v1870 = vrot.slane %v1416, 7
        %v1871 = vor.u32 %v1869, %v1870
        %v1872 = vsel %vm1844, %v1868, %v1871
        %v1873 = vrot.slane %v1871, 4
        %v1874 = vrot.slane %v1430, 6
        %v1875 = vrot.slane %v1426, 7
        %v1876 = vor.u32 %v1874, %v1875
        %v1877 = vsel %vm1844, %v1873, %v1876
        %v1878 = vrot.slane %v1876, 4
        %v1879 = vrot.slane %v1440, 6
        %v1880 = vrot.slane %v1436, 7
        %v1881 = vor.u32 %v1879, %v1880
        %v1882 = vsel %vm1844, %v1878, %v1881
        %v1883 = vrot.slane %v1881, 4
        %v1885 = vshrl.u32 %v1788, 16
        %v1887 = vrot.slane %v1885, 6
        %v1888 = vshll.u32 %v1788, 16
        %v1890 = vrot.slane %v1888, 7
        %v1891 = vor.u32 %v1887, %v1890
        %v1892 = vsel %vm1844, %v1883, %v1891
        %v1893 = vrot.slane %v1891, 4
        %v1895 = vshrl.u32 %v1789, 16
        %v1897 = vrot.slane %v1895, 6
        %v1898 = vshll.u32 %v1789, 16
        %v1900 = vrot.slane %v1898, 7
        %v1901 = vor.u32 %v1897, %v1900
        %v1902 = vsel %vm1844, %v1893, %v1901
        %v1903 = vrot.slane %v1901, 4
        %v1905 = vshrl.u32 %v1790, 16
        %v1907 = vrot.slane %v1905, 6
        %v1908 = vshll.u32 %v1790, 16
        %v1910 = vrot.slane %v1908, 7
        %v1911 = vor.u32 %v1907, %v1910
        %v1912 = vsel %vm1844, %v1903, %v1911
        %1923 = vst [vmem:[#allocation2 + $0x1c] sm:$0xf] %v1852
        %1924 = vst [vmem:[#allocation2 + $0x40] sm:$0xf] %v1857
        %1925 = vst [vmem:[#allocation2 + $0x64] sm:$0xf] %v1862
        %1926 = vst [vmem:[#allocation2 + $0x88] sm:$0xf] %v1867
        %1927 = vst [vmem:[#allocation2 + $0xac] sm:$0xf] %v1872
        %1928 = vst [vmem:[#allocation2 + $0xd0] sm:$0xf] %v1877
        %1929 = vst [vmem:[#allocation2 + $0xf4] sm:$0xf] %v1882
        %1930 = vst [vmem:[#allocation2 + $0x118] sm:$0xf] %v1892
        %1931 = vst [vmem:[#allocation2 + $0x13c] sm:$0xf] %v1902
        %1932 = vst [vmem:[#allocation2 + $0x160] sm:$0x7] %v1912
        %vm1933 = vcmask 1040384
        %vm1934 = vcmask 1044484
        %vm1935 = vmor %vm1933, %vm1934
        %v1936 = vrot.slane %v1315, 7
        %v1937 = vrot.slane %v1936, 4
        %v1938 = vrot.slane %v1316, 7
        %v1939 = vsel %vm1935, %v1937, %v1938
        %v1940 = vrot.slane %v1938, 4
        %v1941 = vrot.slane %v1317, 7
        %v1942 = vsel %vm1935, %v1940, %v1941
        %v1943 = vrot.slane %v1941, 4
        %v1944 = vrot.slane %v1318, 7
        %v1945 = vsel %vm1935, %v1943, %v1944
        %v1946 = vrot.slane %v1944, 4
        %v1947 = vrot.slane %v1319, 7
        %v1948 = vsel %vm1935, %v1946, %v1947
        %v1949 = vrot.slane %v1947, 4
        %v1950 = vrot.slane %v1320, 7
        %v1951 = vsel %vm1935, %v1949, %v1950
        %v1952 = vrot.slane %v1950, 4
        %v1953 = vrot.slane %v1321, 7
        %v1954 = vsel %vm1935, %v1952, %v1953
        %v1955 = vrot.slane %v1953, 4
        %v1956 = vrot.slane %v1322, 7
        %v1957 = vsel %vm1935, %v1955, %v1956
        %v1958 = vrot.slane %v1956, 4
        %v1959 = vrot.slane %v1788, 7
        %v1960 = vsel %vm1935, %v1958, %v1959
        %v1961 = vrot.slane %v1959, 4
        %v1962 = vrot.slane %v1789, 7
        %v1963 = vsel %vm1935, %v1961, %v1962
        %v1964 = vrot.slane %v1962, 4
        %v1965 = vrot.slane %v1790, 7
        %v1966 = vsel %vm1935, %v1964, %v1965
        %1977 = vst [vmem:[#allocation2 + $0x20] sm:$0xf] %v1939
        %1978 = vst [vmem:[#allocation2 + $0x44] sm:$0xf] %v1942
        %1979 = vst [vmem:[#allocation2 + $0x68] sm:$0xf] %v1945
        %1980 = vst [vmem:[#allocation2 + $0x8c] sm:$0xf] %v1948
        %1981 = vst [vmem:[#allocation2 + $0xb0] sm:$0xf] %v1951
        %1982 = vst [vmem:[#allocation2 + $0xd4] sm:$0xf] %v1954
        %1983 = vst [vmem:[#allocation2 + $0xf8] sm:$0xf] %v1957
        %1984 = vst [vmem:[#allocation2 + $0x11c] sm:$0xf] %v1960
        %1985 = vst [vmem:[#allocation2 + $0x140] sm:$0xf] %v1963
        %1986 = vst [vmem:[#allocation2 + $0x164] sm:$0x7] %v1966
        %v1987 = vld [vmem:[#allocation2] sm:$0xff]
        %v1988 = vld [vmem:[#allocation2 + $0x8] sm:$0xff]
        %v1989 = vld [vmem:[#allocation2 + $0x10] sm:$0xff]
        %v1990 = vld [vmem:[#allocation2 + $0x18] sm:$0xff]
        %v1991 = vld [vmem:[#allocation2 + $0x20] sm:$0xf]
        %v1992 = vld [vmem:[#allocation2 + $0x24] sm:$0xff]
        %v1993 = vld [vmem:[#allocation2 + $0x2c] sm:$0xff]
        %v1994 = vld [vmem:[#allocation2 + $0x34] sm:$0xff]
        %v1995 = vld [vmem:[#allocation2 + $0x3c] sm:$0xff]
        %v1996 = vld [vmem:[#allocation2 + $0x44] sm:$0xf]
        %v1997 = vld [vmem:[#allocation2 + $0x48] sm:$0xff]
        %v1998 = vld [vmem:[#allocation2 + $0x50] sm:$0xff]
        %v1999 = vld [vmem:[#allocation2 + $0x58] sm:$0xff]
        %v2000 = vld [vmem:[#allocation2 + $0x60] sm:$0xff]
        %v2001 = vld [vmem:[#allocation2 + $0x68] sm:$0xf]
        %v2002 = vld [vmem:[#allocation2 + $0x6c] sm:$0xff]
        %v2003 = vld [vmem:[#allocation2 + $0x74] sm:$0xff]
        %v2004 = vld [vmem:[#allocation2 + $0x7c] sm:$0xff]
        %v2005 = vld [vmem:[#allocation2 + $0x84] sm:$0xff]
        %v2006 = vld [vmem:[#allocation2 + $0x8c] sm:$0xf]
        %v2007 = vld [vmem:[#allocation2 + $0x90] sm:$0xff]
        %v2008 = vld [vmem:[#allocation2 + $0x98] sm:$0xff]
        %v2009 = vld [vmem:[#allocation2 + $0xa0] sm:$0xff]
        %v2010 = vld [vmem:[#allocation2 + $0xa8] sm:$0xff]
        %v2011 = vld [vmem:[#allocation2 + $0xb0] sm:$0xf]
        %v2012 = vld [vmem:[#allocation2 + $0xb4] sm:$0xff]
        %v2013 = vld [vmem:[#allocation2 + $0xbc] sm:$0xff]
        %v2014 = vld [vmem:[#allocation2 + $0xc4] sm:$0xff]
        %v2015 = vld [vmem:[#allocation2 + $0xcc] sm:$0xff]
        %v2016 = vld [vmem:[#allocation2 + $0xd4] sm:$0xf]
        %v2017 = vld [vmem:[#allocation2 + $0xd8] sm:$0xff]
        %v2018 = vld [vmem:[#allocation2 + $0xe0] sm:$0xff]
        %v2019 = vld [vmem:[#allocation2 + $0xe8] sm:$0xff]
        %v2020 = vld [vmem:[#allocation2 + $0xf0] sm:$0xff]
        %v2021 = vld [vmem:[#allocation2 + $0xf8] sm:$0xf]
        %v2022 = vld [vmem:[#allocation2 + $0xfc] sm:$0xff]
        %v2023 = vld [vmem:[#allocation2 + $0x104] sm:$0xff]
        %v2024 = vld [vmem:[#allocation2 + $0x10c] sm:$0xff]
        %v2025 = vld [vmem:[#allocation2 + $0x114] sm:$0xff]
        %v2026 = vld [vmem:[#allocation2 + $0x11c] sm:$0xf]
        %v2027 = vld [vmem:[#allocation2 + $0x120] sm:$0xff]
        %v2028 = vld [vmem:[#allocation2 + $0x128] sm:$0xff]
        %v2029 = vld [vmem:[#allocation2 + $0x130] sm:$0xff]
        %v2030 = vld [vmem:[#allocation2 + $0x138] sm:$0xff]
        %v2031 = vld [vmem:[#allocation2 + $0x140] sm:$0xf]
        %v2032 = vld [vmem:[#allocation2 + $0x144] sm:$0x77]
        %v2033 = vld [vmem:[#allocation2 + $0x14c] sm:$0x77]
        %v2034 = vld [vmem:[#allocation2 + $0x154] sm:$0x77]
        %v2035 = vld [vmem:[#allocation2 + $0x15c] sm:$0x77]
        %v2036 = vld [vmem:[#allocation2 + $0x164] sm:$0x7]
        %v2037 = vld [vmem:[#allocation7] sm:$0xf]
        %v2038 = vld [vmem:[#allocation7 + $0x4] sm:$0xf]
        %v2039 = vld [vmem:[#allocation7 + $0x8] sm:$0xf]
        %v2040 = vld [vmem:[#allocation7 + $0xc] sm:$0xf]
        %v2041 = vld [vmem:[#allocation7 + $0x10] sm:$0xf]
        %v2042 = vld [vmem:[#allocation7 + $0x14] sm:$0xf]
        %v2043 = vld [vmem:[#allocation7 + $0x18] sm:$0xf]
        %v2044 = vld [vmem:[#allocation7 + $0x1c] sm:$0xf]
        %v2045 = vld [vmem:[#allocation7 + $0x20] sm:$0xf]
        %v2046 = vld [vmem:[#allocation7 + $0x24] sm:$0xf]
        %v2047 = vld [vmem:[#allocation7 + $0x28] sm:$0xf]
        %v2048 = vld [vmem:[#allocation7 + $0x2c] sm:$0xf]
        %v2049 = vld [vmem:[#allocation7 + $0x30] sm:$0xf]
        %v2050 = vld [vmem:[#allocation7 + $0x34] sm:$0xf]
        %v2051 = vld [vmem:[#allocation7 + $0x38] sm:$0xf]
        %v2052 = vld [vmem:[#allocation7 + $0x3c] sm:$0xf]
        %v2053 = vld [vmem:[#allocation7 + $0x40] sm:$0xf]
        %v2054 = vld [vmem:[#allocation7 + $0x44] sm:$0xf]
        %v2055 = vld [vmem:[#allocation7 + $0x48] sm:$0xf]
        %v2056 = vld [vmem:[#allocation7 + $0x4c] sm:$0xf]
        %v2057 = vld [vmem:[#allocation7 + $0x50] sm:$0xf]
        %v2058 = vld [vmem:[#allocation7 + $0x54] sm:$0xf]
        %v2059 = vld [vmem:[#allocation7 + $0x58] sm:$0xf]
        %v2060 = vld [vmem:[#allocation7 + $0x5c] sm:$0xf]
        %v2061 = vld [vmem:[#allocation7 + $0x60] sm:$0xf]
        %v2062 = vld [vmem:[#allocation7 + $0x64] sm:$0xf]
        %v2063 = vld [vmem:[#allocation7 + $0x68] sm:$0xf]
        %v2064 = vld [vmem:[#allocation7 + $0x6c] sm:$0xf]
        %v2065 = vld [vmem:[#allocation7 + $0x70] sm:$0xf]
        %v2066 = vld [vmem:[#allocation7 + $0x74] sm:$0xf]
        %v2067 = vld [vmem:[#allocation7 + $0x78] sm:$0xf]
        %v2068 = vld [vmem:[#allocation7 + $0x7c] sm:$0xf]
        %v2069 = vld [vmem:[#allocation7 + $0x80] sm:$0xf]
        %v2070 = vld [vmem:[#allocation7 + $0x84] sm:$0xf]
        %v2071 = vld [vmem:[#allocation7 + $0x88] sm:$0xf]
        %v2072 = vld [vmem:[#allocation7 + $0x8c] sm:$0xf]
        %v2073 = vld [vmem:[#allocation7 + $0x90] sm:$0xf]
        %v2074 = vld [vmem:[#allocation7 + $0x94] sm:$0xf]
        %v2075 = vld [vmem:[#allocation7 + $0x98] sm:$0xf]
        %v2076 = vld [vmem:[#allocation7 + $0x9c] sm:$0xf]
        %v2077 = vld [vmem:[#allocation7 + $0xa0] sm:$0xf]
        %v2078 = vld [vmem:[#allocation7 + $0xa4] sm:$0xf]
        %v2079 = vld [vmem:[#allocation7 + $0xa8] sm:$0xf]
        %v2080 = vld [vmem:[#allocation7 + $0xac] sm:$0xf]
        %v2081 = vld [vmem:[#allocation7 + $0xb0] sm:$0xf]
        %v2082 = vld [vmem:[#allocation7 + $0xb4] sm:$0xf]
        %v2083 = vld [vmem:[#allocation7 + $0xb8] sm:$0xf]
        %v2084 = vld [vmem:[#allocation7 + $0xbc] sm:$0xf]
        %v2085 = vld [vmem:[#allocation7 + $0xc0] sm:$0xf]
        %v2086 = vld [vmem:[#allocation7 + $0xc4] sm:$0xf]
        %v2087 = vld [vmem:[#allocation7 + $0xc8] sm:$0xf]
        %v2088 = vld [vmem:[#allocation7 + $0xcc] sm:$0xf]
        %v2089 = vld [vmem:[#allocation7 + $0xd0] sm:$0xf]
        %v2090 = vld [vmem:[#allocation7 + $0xd4] sm:$0xf]
        %v2091 = vld [vmem:[#allocation7 + $0xd8] sm:$0xf]
        %v2092 = vld [vmem:[#allocation7 + $0xdc] sm:$0xf]
        %v2093 = vld [vmem:[#allocation7 + $0xe0] sm:$0xf]
        %v2094 = vld [vmem:[#allocation7 + $0xe4] sm:$0xf]
        %v2095 = vld [vmem:[#allocation7 + $0xe8] sm:$0xf]
        %v2096 = vld [vmem:[#allocation7 + $0xec] sm:$0xf]
        %v2097 = vld [vmem:[#allocation7 + $0xf0] sm:$0xf]
        %v2098 = vld [vmem:[#allocation7 + $0xf4] sm:$0xf]
        %v2099 = vld [vmem:[#allocation7 + $0xf8] sm:$0xf]
        %v2100 = vld [vmem:[#allocation7 + $0xfc] sm:$0xf]
        %v2101 = vld [vmem:[#allocation7 + $0x100] sm:$0xf]
        %v2102 = vld [vmem:[#allocation7 + $0x104] sm:$0xf]
        %v2103 = vld [vmem:[#allocation7 + $0x108] sm:$0xf]
        %v2104 = vld [vmem:[#allocation7 + $0x10c] sm:$0xf]
        %v2105 = vld [vmem:[#allocation7 + $0x110] sm:$0xf]
        %v2106 = vld [vmem:[#allocation7 + $0x114] sm:$0xf]
        %v2107 = vld [vmem:[#allocation7 + $0x118] sm:$0xf]
        %v2108 = vld [vmem:[#allocation7 + $0x11c] sm:$0xf]
        %v2109 = vld [vmem:[#allocation7 + $0x120] sm:$0xf]
        %v2110 = vld [vmem:[#allocation7 + $0x124] sm:$0xf]
        %v2111 = vld [vmem:[#allocation7 + $0x128] sm:$0xf]
        %v2112 = vld [vmem:[#allocation7 + $0x12c] sm:$0xf]
        %v2113 = vld [vmem:[#allocation7 + $0x130] sm:$0xf]
        %v2114 = vld [vmem:[#allocation7 + $0x134] sm:$0xf]
        %v2115 = vld [vmem:[#allocation7 + $0x138] sm:$0xf]
        %v2116 = vld [vmem:[#allocation7 + $0x13c] sm:$0xf]
        %v2117 = vld [vmem:[#allocation7 + $0x140] sm:$0xf]
        %v2118 = vld [vmem:[#allocation7 + $0x144] sm:$0xf]
        %v2119 = vld [vmem:[#allocation7 + $0x148] sm:$0xf]
        %v2120 = vld [vmem:[#allocation7 + $0x14c] sm:$0xf]
        %v2121 = vld [vmem:[#allocation7 + $0x150] sm:$0xf]
        %v2122 = vld [vmem:[#allocation7 + $0x154] sm:$0xf]
        %v2123 = vld [vmem:[#allocation7 + $0x158] sm:$0xf]
        %v2124 = vld [vmem:[#allocation7 + $0x15c] sm:$0xf]
        %v2125 = vld [vmem:[#allocation7 + $0x160] sm:$0xf]
        %v2126 = vld [vmem:[#allocation7 + $0x164] sm:$0xf]
        %v2127 = vld [vmem:[#allocation7 + $0x168] sm:$0xf]
        %v2128 = vld [vmem:[#allocation7 + $0x16c] sm:$0xf]
        %v2129 = vld [vmem:[#allocation7 + $0x170] sm:$0xf]
        %v2130 = vld [vmem:[#allocation7 + $0x174] sm:$0xf]
        %v2131 = vld [vmem:[#allocation7 + $0x178] sm:$0xf]
        %v2132 = vld [vmem:[#allocation7 + $0x17c] sm:$0xf]
        %v2133 = vld [vmem:[#allocation7 + $0x180] sm:$0xf]
        %v2134 = vld [vmem:[#allocation7 + $0x184] sm:$0xf]
        %v2135 = vld [vmem:[#allocation7 + $0x188] sm:$0xf]
        %v2136 = vld [vmem:[#allocation7 + $0x18c] sm:$0xf]
        %v2137 = vld [vmem:[#allocation7 + $0x190] sm:$0xf]
        %v2138 = vld [vmem:[#allocation7 + $0x194] sm:$0xf]
        %v2139 = vld [vmem:[#allocation7 + $0x198] sm:$0xf]
        %v2140 = vld [vmem:[#allocation7 + $0x19c] sm:$0xf]
        %v2141 = vld [vmem:[#allocation7 + $0x1a0] sm:$0xf]
        %v2142 = vld [vmem:[#allocation7 + $0x1a4] sm:$0xf]
        %v2143 = vld [vmem:[#allocation7 + $0x1a8] sm:$0xf]
        %v2144 = vld [vmem:[#allocation7 + $0x1ac] sm:$0xf]
        %v2145 = vld [vmem:[#allocation7 + $0x1b0] sm:$0xf]
        %v2146 = vld [vmem:[#allocation7 + $0x1b4] sm:$0xf]
        %v2147 = vld [vmem:[#allocation7 + $0x1b8] sm:$0xf]
        %v2148 = vld [vmem:[#allocation7 + $0x1bc] sm:$0xf]
        %v2149 = vld [vmem:[#allocation7 + $0x1c0] sm:$0xf]
        %v2150 = vld [vmem:[#allocation7 + $0x1c4] sm:$0xf]
        %v2151 = vld [vmem:[#allocation7 + $0x1c8] sm:$0xf]
        %v2152 = vld [vmem:[#allocation7 + $0x1cc] sm:$0xf]
        %v2153 = vld [vmem:[#allocation7 + $0x1d0] sm:$0xf]
        %v2154 = vld [vmem:[#allocation7 + $0x1d4] sm:$0xf]
        %v2155 = vld [vmem:[#allocation7 + $0x1d8] sm:$0xf]
        %v2156 = vld [vmem:[#allocation7 + $0x1dc] sm:$0xf]
        %v2157 = vld [vmem:[#allocation7 + $0x1e0] sm:$0xf]
        %v2158 = vld [vmem:[#allocation7 + $0x1e4] sm:$0xf]
        %v2159 = vld [vmem:[#allocation7 + $0x1e8] sm:$0xf]
        %v2160 = vld [vmem:[#allocation7 + $0x1ec] sm:$0xf]
        %v2161 = vld [vmem:[#allocation7 + $0x1f0] sm:$0xf]
        %v2162 = vld [vmem:[#allocation7 + $0x1f4] sm:$0xf]
        %v2163 = vld [vmem:[#allocation7 + $0x1f8] sm:$0xf]
        %v2164 = vld [vmem:[#allocation7 + $0x1fc] sm:$0xf]
        %v2165 = vld [vmem:[#allocation7 + $0x200] sm:$0xf]
        %v2166 = vld [vmem:[#allocation7 + $0x204] sm:$0xf]
        %v2167 = vld [vmem:[#allocation7 + $0x208] sm:$0xf]
        %v2168 = vld [vmem:[#allocation7 + $0x20c] sm:$0xf]
        %v2169 = vld [vmem:[#allocation7 + $0x210] sm:$0xf]
        %v2170 = vld [vmem:[#allocation7 + $0x214] sm:$0xf]
        %v2171 = vld [vmem:[#allocation7 + $0x218] sm:$0xf]
        %v2172 = vld [vmem:[#allocation7 + $0x21c] sm:$0xf]
        %v2173 = vld [vmem:[#allocation7 + $0x220] sm:$0xf]
        %v2174 = vld [vmem:[#allocation7 + $0x224] sm:$0xf]
        %v2175 = vld [vmem:[#allocation7 + $0x228] sm:$0xf]
        %v2176 = vld [vmem:[#allocation7 + $0x22c] sm:$0xf]
        %v2177 = vld [vmem:[#allocation7 + $0x230] sm:$0xf]
        %v2178 = vld [vmem:[#allocation7 + $0x234] sm:$0xf]
        %v2179 = vld [vmem:[#allocation7 + $0x238] sm:$0xf]
        %v2180 = vld [vmem:[#allocation7 + $0x23c] sm:$0xf]
        %v2231 = vunpack.c.l.b16 %v1987
        %v2232 = vunpack.c.h.b16 %v1987
        %v2233 = vunpack.c.l.b16 %v1988
        %v2234 = vunpack.c.h.b16 %v1988
        %v2235 = vunpack.c.l.b16 %v1989
        %v2236 = vunpack.c.h.b16 %v1989
        %v2237 = vunpack.c.l.b16 %v1990
        %v2238 = vunpack.c.h.b16 %v1990
        %v2239 = vunpack.c.l.b16 %v1991
        %v2240 = vunpack.c.l.b16 %v1992
        %v2241 = vunpack.c.h.b16 %v1992
        %v2242 = vunpack.c.l.b16 %v1993
        %v2243 = vunpack.c.h.b16 %v1993
        %v2244 = vunpack.c.l.b16 %v1994
        %v2245 = vunpack.c.h.b16 %v1994
        %v2246 = vunpack.c.l.b16 %v1995
        %v2247 = vunpack.c.h.b16 %v1995
        %v2248 = vunpack.c.l.b16 %v1996
        %v2249 = vunpack.c.l.b16 %v1997
        %v2250 = vunpack.c.h.b16 %v1997
        %v2251 = vunpack.c.l.b16 %v1998
        %v2252 = vunpack.c.h.b16 %v1998
        %v2253 = vunpack.c.l.b16 %v1999
        %v2254 = vunpack.c.h.b16 %v1999
        %v2255 = vunpack.c.l.b16 %v2000
        %v2256 = vunpack.c.h.b16 %v2000
        %v2257 = vunpack.c.l.b16 %v2001
        %v2258 = vunpack.c.l.b16 %v2002
        %v2259 = vunpack.c.h.b16 %v2002
        %v2260 = vunpack.c.l.b16 %v2003
        %v2261 = vunpack.c.h.b16 %v2003
        %v2262 = vunpack.c.l.b16 %v2004
        %v2263 = vunpack.c.h.b16 %v2004
        %v2264 = vunpack.c.l.b16 %v2005
        %v2265 = vunpack.c.h.b16 %v2005
        %v2266 = vunpack.c.l.b16 %v2006
        %v2267 = vunpack.c.l.b16 %v2007
        %v2268 = vunpack.c.h.b16 %v2007
        %v2269 = vunpack.c.l.b16 %v2008
        %v2270 = vunpack.c.h.b16 %v2008
        %v2271 = vunpack.c.l.b16 %v2009
        %v2272 = vunpack.c.h.b16 %v2009
        %v2273 = vunpack.c.l.b16 %v2010
        %v2274 = vunpack.c.h.b16 %v2010
        %v2275 = vunpack.c.l.b16 %v2011
        %v2276 = vunpack.c.l.b16 %v2012
        %v2277 = vunpack.c.h.b16 %v2012
        %v2278 = vunpack.c.l.b16 %v2013
        %v2279 = vunpack.c.h.b16 %v2013
        %v2280 = vunpack.c.l.b16 %v2014
        %v2281 = vunpack.c.h.b16 %v2014
        %v2282 = vunpack.c.l.b16 %v2015
        %v2283 = vunpack.c.h.b16 %v2015
        %v2284 = vunpack.c.l.b16 %v2016
        %v2285 = vunpack.c.l.b16 %v2017
        %v2286 = vunpack.c.h.b16 %v2017
        %v2287 = vunpack.c.l.b16 %v2018
        %v2288 = vunpack.c.h.b16 %v2018
        %v2289 = vunpack.c.l.b16 %v2019
        %v2290 = vunpack.c.h.b16 %v2019
        %v2291 = vunpack.c.l.b16 %v2020
        %v2292 = vunpack.c.h.b16 %v2020
        %v2293 = vunpack.c.l.b16 %v2021
        %v2294 = vunpack.c.l.b16 %v2022
        %v2295 = vunpack.c.h.b16 %v2022
        %v2296 = vunpack.c.l.b16 %v2023
        %v2297 = vunpack.c.h.b16 %v2023
        %v2298 = vunpack.c.l.b16 %v2024
        %v2299 = vunpack.c.h.b16 %v2024
        %v2300 = vunpack.c.l.b16 %v2025
        %v2301 = vunpack.c.h.b16 %v2025
        %v2302 = vunpack.c.l.b16 %v2026
        %v2303 = vunpack.c.l.b16 %v2027
        %v2304 = vunpack.c.h.b16 %v2027
        %v2305 = vunpack.c.l.b16 %v2028
        %v2306 = vunpack.c.h.b16 %v2028
        %v2307 = vunpack.c.l.b16 %v2029
        %v2308 = vunpack.c.h.b16 %v2029
        %v2309 = vunpack.c.l.b16 %v2030
        %v2310 = vunpack.c.h.b16 %v2030
        %v2311 = vunpack.c.l.b16 %v2031
        %v2312 = vunpack.c.l.b16 %v2032
        %v2313 = vunpack.c.h.b16 %v2032
        %v2314 = vunpack.c.l.b16 %v2033
        %v2315 = vunpack.c.h.b16 %v2033
        %v2316 = vunpack.c.l.b16 %v2034
        %v2317 = vunpack.c.h.b16 %v2034
        %v2318 = vunpack.c.l.b16 %v2035
        %v2319 = vunpack.c.h.b16 %v2035
        %v2320 = vunpack.c.l.b16 %v2036
        %v2321 = vpack.c.b16 %v2240, %v2231
        %v2322 = vpack.c.b16 %v2241, %v2232
        %v2323 = vpack.c.b16 %v2242, %v2233
        %v2324 = vpack.c.b16 %v2243, %v2234
        %v2325 = vpack.c.b16 %v2244, %v2235
        %v2326 = vpack.c.b16 %v2245, %v2236
        %v2327 = vpack.c.b16 %v2246, %v2237
        %v2328 = vpack.c.b16 %v2247, %v2238
        %v2329 = vpack.c.b16 %v2248, %v2239
        %v2330 = vpack.c.b16 %v2258, %v2249
        %v2331 = vpack.c.b16 %v2259, %v2250
        %v2332 = vpack.c.b16 %v2260, %v2251
        %v2333 = vpack.c.b16 %v2261, %v2252
        %v2334 = vpack.c.b16 %v2262, %v2253
        %v2335 = vpack.c.b16 %v2263, %v2254
        %v2336 = vpack.c.b16 %v2264, %v2255
        %v2337 = vpack.c.b16 %v2265, %v2256
        %v2338 = vpack.c.b16 %v2266, %v2257
        %v2339 = vpack.c.b16 %v2276, %v2267
        %v2340 = vpack.c.b16 %v2277, %v2268
        %v2341 = vpack.c.b16 %v2278, %v2269
        %v2342 = vpack.c.b16 %v2279, %v2270
        %v2343 = vpack.c.b16 %v2280, %v2271
        %v2344 = vpack.c.b16 %v2281, %v2272
        %v2345 = vpack.c.b16 %v2282, %v2273
        %v2346 = vpack.c.b16 %v2283, %v2274
        %v2347 = vpack.c.b16 %v2284, %v2275
        %v2348 = vpack.c.b16 %v2294, %v2285
        %v2349 = vpack.c.b16 %v2295, %v2286
        %v2350 = vpack.c.b16 %v2296, %v2287
        %v2351 = vpack.c.b16 %v2297, %v2288
        %v2352 = vpack.c.b16 %v2298, %v2289
        %v2353 = vpack.c.b16 %v2299, %v2290
        %v2354 = vpack.c.b16 %v2300, %v2291
        %v2355 = vpack.c.b16 %v2301, %v2292
        %v2356 = vpack.c.b16 %v2302, %v2293
        %v2357 = vpack.c.b16 %v2312, %v2303
        %v2358 = vpack.c.b16 %v2313, %v2304
        %v2359 = vpack.c.b16 %v2314, %v2305
        %v2360 = vpack.c.b16 %v2315, %v2306
        %v2361 = vpack.c.b16 %v2316, %v2307
        %v2362 = vpack.c.b16 %v2317, %v2308
        %v2363 = vpack.c.b16 %v2318, %v2309
        %v2364 = vpack.c.b16 %v2319, %v2310
        %v2365 = vpack.c.b16 %v2320, %v2311
        %v2555 = vunpack.c.l.b16 %v2037
        %v2556 = vunpack.c.l.b16 %v2038
        %v2557 = vunpack.c.l.b16 %v2039
        %v2558 = vunpack.c.l.b16 %v2040
        %v2559 = vunpack.c.l.b16 %v2041
        %v2560 = vunpack.c.l.b16 %v2042
        %v2561 = vunpack.c.l.b16 %v2043
        %v2562 = vunpack.c.l.b16 %v2044
        %v2563 = vunpack.c.l.b16 %v2045
        %v2564 = vunpack.c.l.b16 %v2046
        %v2565 = vunpack.c.l.b16 %v2047
        %v2566 = vunpack.c.l.b16 %v2048
        %v2567 = vunpack.c.l.b16 %v2049
        %v2568 = vunpack.c.l.b16 %v2050
        %v2569 = vunpack.c.l.b16 %v2051
        %v2570 = vunpack.c.l.b16 %v2052
        %v2571 = vunpack.c.l.b16 %v2053
        %v2572 = vunpack.c.l.b16 %v2054
        %v2573 = vunpack.c.l.b16 %v2055
        %v2574 = vunpack.c.l.b16 %v2056
        %v2575 = vunpack.c.l.b16 %v2057
        %v2576 = vunpack.c.l.b16 %v2058
        %v2577 = vunpack.c.l.b16 %v2059
        %v2578 = vunpack.c.l.b16 %v2060
        %v2579 = vunpack.c.l.b16 %v2061
        %v2580 = vunpack.c.l.b16 %v2062
        %v2581 = vunpack.c.l.b16 %v2063
        %v2582 = vunpack.c.l.b16 %v2064
        %v2583 = vunpack.c.l.b16 %v2065
        %v2584 = vunpack.c.l.b16 %v2066
        %v2585 = vunpack.c.l.b16 %v2067
        %v2586 = vunpack.c.l.b16 %v2068
        %v2587 = vunpack.c.l.b16 %v2069
        %v2588 = vunpack.c.l.b16 %v2070
        %v2589 = vunpack.c.l.b16 %v2071
        %v2590 = vunpack.c.l.b16 %v2072
        %v2591 = vunpack.c.l.b16 %v2073
        %v2592 = vunpack.c.l.b16 %v2074
        %v2593 = vunpack.c.l.b16 %v2075
        %v2594 = vunpack.c.l.b16 %v2076
        %v2595 = vunpack.c.l.b16 %v2077
        %v2596 = vunpack.c.l.b16 %v2078
        %v2597 = vunpack.c.l.b16 %v2079
        %v2598 = vunpack.c.l.b16 %v2080
        %v2599 = vunpack.c.l.b16 %v2081
        %v2600 = vunpack.c.l.b16 %v2082
        %v2601 = vunpack.c.l.b16 %v2083
        %v2602 = vunpack.c.l.b16 %v2084
        %v2603 = vunpack.c.l.b16 %v2085
        %v2604 = vunpack.c.l.b16 %v2086
        %v2605 = vunpack.c.l.b16 %v2087
        %v2606 = vunpack.c.l.b16 %v2088
        %v2607 = vunpack.c.l.b16 %v2089
        %v2608 = vunpack.c.l.b16 %v2090
        %v2609 = vunpack.c.l.b16 %v2091
        %v2610 = vunpack.c.l.b16 %v2092
        %v2611 = vunpack.c.l.b16 %v2093
        %v2612 = vunpack.c.l.b16 %v2094
        %v2613 = vunpack.c.l.b16 %v2095
        %v2614 = vunpack.c.l.b16 %v2096
        %v2615 = vunpack.c.l.b16 %v2097
        %v2616 = vunpack.c.l.b16 %v2098
        %v2617 = vunpack.c.l.b16 %v2099
        %v2618 = vunpack.c.l.b16 %v2100
        %v2619 = vunpack.c.l.b16 %v2101
        %v2620 = vunpack.c.l.b16 %v2102
        %v2621 = vunpack.c.l.b16 %v2103
        %v2622 = vunpack.c.l.b16 %v2104
        %v2623 = vunpack.c.l.b16 %v2105
        %v2624 = vunpack.c.l.b16 %v2106
        %v2625 = vunpack.c.l.b16 %v2107
        %v2626 = vunpack.c.l.b16 %v2108
        %v2627 = vunpack.c.l.b16 %v2109
        %v2628 = vunpack.c.l.b16 %v2110
        %v2629 = vunpack.c.l.b16 %v2111
        %v2630 = vunpack.c.l.b16 %v2112
        %v2631 = vunpack.c.l.b16 %v2113
        %v2632 = vunpack.c.l.b16 %v2114
        %v2633 = vunpack.c.l.b16 %v2115
        %v2634 = vunpack.c.l.b16 %v2116
        %v2635 = vunpack.c.l.b16 %v2117
        %v2636 = vunpack.c.l.b16 %v2118
        %v2637 = vunpack.c.l.b16 %v2119
        %v2638 = vunpack.c.l.b16 %v2120
        %v2639 = vunpack.c.l.b16 %v2121
        %v2640 = vunpack.c.l.b16 %v2122
        %v2641 = vunpack.c.l.b16 %v2123
        %v2642 = vunpack.c.l.b16 %v2124
        %v2643 = vunpack.c.l.b16 %v2125
        %v2644 = vunpack.c.l.b16 %v2126
        %v2645 = vunpack.c.l.b16 %v2127
        %v2646 = vunpack.c.l.b16 %v2128
        %v2647 = vunpack.c.l.b16 %v2129
        %v2648 = vunpack.c.l.b16 %v2130
        %v2649 = vunpack.c.l.b16 %v2131
        %v2650 = vunpack.c.l.b16 %v2132
        %v2651 = vunpack.c.l.b16 %v2133
        %v2652 = vunpack.c.l.b16 %v2134
        %v2653 = vunpack.c.l.b16 %v2135
        %v2654 = vunpack.c.l.b16 %v2136
        %v2655 = vunpack.c.l.b16 %v2137
        %v2656 = vunpack.c.l.b16 %v2138
        %v2657 = vunpack.c.l.b16 %v2139
        %v2658 = vunpack.c.l.b16 %v2140
        %v2659 = vunpack.c.l.b16 %v2141
        %v2660 = vunpack.c.l.b16 %v2142
        %v2661 = vunpack.c.l.b16 %v2143
        %v2662 = vunpack.c.l.b16 %v2144
        %v2663 = vunpack.c.l.b16 %v2145
        %v2664 = vunpack.c.l.b16 %v2146
        %v2665 = vunpack.c.l.b16 %v2147
        %v2666 = vunpack.c.l.b16 %v2148
        %v2667 = vunpack.c.l.b16 %v2149
        %v2668 = vunpack.c.l.b16 %v2150
        %v2669 = vunpack.c.l.b16 %v2151
        %v2670 = vunpack.c.l.b16 %v2152
        %v2671 = vunpack.c.l.b16 %v2153
        %v2672 = vunpack.c.l.b16 %v2154
        %v2673 = vunpack.c.l.b16 %v2155
        %v2674 = vunpack.c.l.b16 %v2156
        %v2675 = vunpack.c.l.b16 %v2157
        %v2676 = vunpack.c.l.b16 %v2158
        %v2677 = vunpack.c.l.b16 %v2159
        %v2678 = vunpack.c.l.b16 %v2160
        %v2679 = vunpack.c.l.b16 %v2161
        %v2680 = vunpack.c.l.b16 %v2162
        %v2681 = vunpack.c.l.b16 %v2163
        %v2682 = vunpack.c.l.b16 %v2164
        %v2683 = vunpack.c.l.b16 %v2165
        %v2684 = vunpack.c.l.b16 %v2166
        %v2685 = vunpack.c.l.b16 %v2167
        %v2686 = vunpack.c.l.b16 %v2168
        %v2687 = vunpack.c.l.b16 %v2169
        %v2688 = vunpack.c.l.b16 %v2170
        %v2689 = vunpack.c.l.b16 %v2171
        %v2690 = vunpack.c.l.b16 %v2172
        %v2691 = vunpack.c.l.b16 %v2173
        %v2692 = vunpack.c.l.b16 %v2174
        %v2693 = vunpack.c.l.b16 %v2175
        %v2694 = vunpack.c.l.b16 %v2176
        %v2695 = vunpack.c.l.b16 %v2177
        %v2696 = vunpack.c.l.b16 %v2178
        %v2697 = vunpack.c.l.b16 %v2179
        %v2698 = vunpack.c.l.b16 %v2180
        %v2699 = vpack.c.b16 %v2556, %v2555
        %v2700 = vpack.c.b16 %v2558, %v2557
        %v2701 = vpack.c.b16 %v2560, %v2559
        %v2702 = vpack.c.b16 %v2562, %v2561
        %v2703 = vpack.c.b16 %v2564, %v2563
        %v2704 = vpack.c.b16 %v2566, %v2565
        %v2705 = vpack.c.b16 %v2568, %v2567
        %v2706 = vpack.c.b16 %v2570, %v2569
        %v2707 = vpack.c.b16 %v2572, %v2571
        %v2708 = vpack.c.b16 %v2574, %v2573
        %v2709 = vpack.c.b16 %v2576, %v2575
        %v2710 = vpack.c.b16 %v2578, %v2577
        %v2711 = vpack.c.b16 %v2580, %v2579
        %v2712 = vpack.c.b16 %v2582, %v2581
        %v2713 = vpack.c.b16 %v2584, %v2583
        %v2714 = vpack.c.b16 %v2586, %v2585
        %v2715 = vpack.c.b16 %v2588, %v2587
        %v2716 = vpack.c.b16 %v2590, %v2589
        %v2717 = vpack.c.b16 %v2592, %v2591
        %v2718 = vpack.c.b16 %v2594, %v2593
        %v2719 = vpack.c.b16 %v2596, %v2595
        %v2720 = vpack.c.b16 %v2598, %v2597
        %v2721 = vpack.c.b16 %v2600, %v2599
        %v2722 = vpack.c.b16 %v2602, %v2601
        %v2723 = vpack.c.b16 %v2604, %v2603
        %v2724 = vpack.c.b16 %v2606, %v2605
        %v2725 = vpack.c.b16 %v2608, %v2607
        %v2726 = vpack.c.b16 %v2610, %v2609
        %v2727 = vpack.c.b16 %v2612, %v2611
        %v2728 = vpack.c.b16 %v2614, %v2613
        %v2729 = vpack.c.b16 %v2616, %v2615
        %v2730 = vpack.c.b16 %v2618, %v2617
        %v2731 = vpack.c.b16 %v2620, %v2619
        %v2732 = vpack.c.b16 %v2622, %v2621
        %v2733 = vpack.c.b16 %v2624, %v2623
        %v2734 = vpack.c.b16 %v2626, %v2625
        %v2735 = vpack.c.b16 %v2628, %v2627
        %v2736 = vpack.c.b16 %v2630, %v2629
        %v2737 = vpack.c.b16 %v2632, %v2631
        %v2738 = vpack.c.b16 %v2634, %v2633
        %v2739 = vpack.c.b16 %v2636, %v2635
        %v2740 = vpack.c.b16 %v2638, %v2637
        %v2741 = vpack.c.b16 %v2640, %v2639
        %v2742 = vpack.c.b16 %v2642, %v2641
        %v2743 = vpack.c.b16 %v2644, %v2643
        %v2744 = vpack.c.b16 %v2646, %v2645
        %v2745 = vpack.c.b16 %v2648, %v2647
        %v2746 = vpack.c.b16 %v2650, %v2649
        %v2747 = vpack.c.b16 %v2652, %v2651
        %v2748 = vpack.c.b16 %v2654, %v2653
        %v2749 = vpack.c.b16 %v2656, %v2655
        %v2750 = vpack.c.b16 %v2658, %v2657
        %v2751 = vpack.c.b16 %v2660, %v2659
        %v2752 = vpack.c.b16 %v2662, %v2661
        %v2753 = vpack.c.b16 %v2664, %v2663
        %v2754 = vpack.c.b16 %v2666, %v2665
        %v2755 = vpack.c.b16 %v2668, %v2667
        %v2756 = vpack.c.b16 %v2670, %v2669
        %v2757 = vpack.c.b16 %v2672, %v2671
        %v2758 = vpack.c.b16 %v2674, %v2673
        %v2759 = vpack.c.b16 %v2676, %v2675
        %v2760 = vpack.c.b16 %v2678, %v2677
        %v2761 = vpack.c.b16 %v2680, %v2679
        %v2762 = vpack.c.b16 %v2682, %v2681
        %v2763 = vpack.c.b16 %v2684, %v2683
        %v2764 = vpack.c.b16 %v2686, %v2685
        %v2765 = vpack.c.b16 %v2688, %v2687
        %v2766 = vpack.c.b16 %v2690, %v2689
        %v2767 = vpack.c.b16 %v2692, %v2691
        %v2768 = vpack.c.b16 %v2694, %v2693
        %v2769 = vpack.c.b16 %v2696, %v2695
        %v2770 = vpack.c.b16 %v2698, %v2697
        %2843 = vmatprep.subr.bf16.mxu0 0
        %2844 = vmatpush1.bf16.msra.mxu0 %v2699
        %2845 = vmatprep.subr.bf16.mxu0 0
        %2846 = vmatpush1.bf16.msra.mxu0 %v2700
        %2847 = vmatprep.subr.bf16.mxu0 0
        %2848 = vmatpush1.bf16.msra.mxu0 %v2701
        %2849 = vmatprep.subr.bf16.mxu0 0
        %2850 = vmatpush1.bf16.msra.mxu0 %v2702
        %2851 = vmatprep.subr.bf16.mxu0 0
        %2852 = vmatpush1.bf16.msra.mxu0 %v2703
        %2853 = vmatprep.subr.bf16.mxu0 0
        %2854 = vmatpush1.bf16.msra.mxu0 %v2704
        %2855 = vmatprep.subr.bf16.mxu0 0
        %2856 = vmatpush1.bf16.msra.mxu0 %v2705
        %2857 = vmatprep.subr.bf16.mxu0 0
        %2858 = vmatpush1.bf16.msra.mxu0 %v2706
        %2859 = vmatprep.subr.bf16.mxu0 0
        %2860 = vmatpush1.bf16.msra.mxu0 %v2707
        %2861 = vmatprep.subr.bf16.mxu0 0
        %2862 = vmatpush1.bf16.msra.mxu0 %v2708
        %2863 = vmatprep.subr.bf16.mxu0 0
        %2864 = vmatpush1.bf16.msra.mxu0 %v2709
        %2865 = vmatprep.subr.bf16.mxu0 0
        %2866 = vmatpush1.bf16.msra.mxu0 %v2710
        %2867 = vmatprep.subr.bf16.mxu0 0
        %2868 = vmatpush1.bf16.msra.mxu0 %v2711
        %2869 = vmatprep.subr.bf16.mxu0 0
        %2870 = vmatpush1.bf16.msra.mxu0 %v2712
        %2871 = vmatprep.subr.bf16.mxu0 0
        %2872 = vmatpush1.bf16.msra.mxu0 %v2713
        %2873 = vmatprep.subr.bf16.mxu0 0
        %2874 = vmatpush1.bf16.msra.mxu0 %v2714
        %2875 = vmatprep.mubr.bf16.mxu0 %v2322
        %2876 = vmatmul.mubr.bf16.gmra.mrb[0].mxu0 %v2321
        %v2877 = vpop.f32.mrb[0].mxu0
        %v2878 = vadd.f32 0.0, %v2877
        %v2879 = vpop.f32.mrb[0].mxu0
        %v2880 = vpop.f32.mrb[0].mxu0
        %v2881 = vadd.f32 0.0, %v2880
        %v2882 = vpop.f32.mrb[0].mxu0
        %2883 = vmatprep.mubr.bf16.mxu0 %v2331
        %2884 = vmatmul.mubr.bf16.gmra.mrb[0].mxu0 %v2330
        %v2885 = vpop.f32.mrb[0].mxu0
        %v2886 = vadd.f32 0.0, %v2885
        %v2887 = vpop.f32.mrb[0].mxu0
        %v2888 = vpop.f32.mrb[0].mxu0
        %v2889 = vadd.f32 0.0, %v2888
        %v2890 = vpop.f32.mrb[0].mxu0
        %2891 = vmatprep.mubr.bf16.mxu0 %v2340
        %2892 = vmatmul.mubr.bf16.gmra.mrb[0].mxu0 %v2339
        %v2893 = vpop.f32.mrb[0].mxu0
        %v2894 = vadd.f32 0.0, %v2893
        %v2895 = vpop.f32.mrb[0].mxu0
        %v2896 = vpop.f32.mrb[0].mxu0
        %v2897 = vadd.f32 0.0, %v2896
        %v2898 = vpop.f32.mrb[0].mxu0
        %2899 = vmatprep.mubr.bf16.mxu0 %v2349
        %2900 = vmatmul.mubr.bf16.gmra.mrb[0].mxu0 %v2348
        %v2901 = vpop.f32.mrb[0].mxu0
        %v2902 = vadd.f32 0.0, %v2901
        %v2903 = vpop.f32.mrb[0].mxu0
        %v2904 = vpop.f32.mrb[0].mxu0
        %v2905 = vadd.f32 0.0, %v2904
        %v2906 = vpop.f32.mrb[0].mxu0
        %2907 = vmatprep.mubr.bf16.mxu0 %v2358
        %2908 = vmatmul.mubr.bf16.gmra.mrb[0].mxu0 %v2357
        %v2909 = vpop.f32.mrb[0].mxu0
        %v2910 = vadd.f32 0.0, %v2909
        %v2911 = vpop.f32.mrb[0].mxu0
        %v2912 = vpop.f32.mrb[0].mxu0
        %v2913 = vadd.f32 0.0, %v2912
        %v2914 = vpop.f32.mrb[0].mxu0
        %2915 = vdwg.mxu0
        %2916 = vmatprep.subr.bf16.mxu0 0
        %2917 = vmatpush1.bf16.msra.mxu0 %v2715
        %2918 = vmatprep.subr.bf16.mxu0 0
        %2919 = vmatpush1.bf16.msra.mxu0 %v2716
        %2920 = vmatprep.subr.bf16.mxu0 0
        %2921 = vmatpush1.bf16.msra.mxu0 %v2717
        %2922 = vmatprep.subr.bf16.mxu0 0
        %2923 = vmatpush1.bf16.msra.mxu0 %v2718
        %2924 = vmatprep.subr.bf16.mxu0 0
        %2925 = vmatpush1.bf16.msra.mxu0 %v2719
        %2926 = vmatprep.subr.bf16.mxu0 0
        %2927 = vmatpush1.bf16.msra.mxu0 %v2720
        %2928 = vmatprep.subr.bf16.mxu0 0
        %2929 = vmatpush1.bf16.msra.mxu0 %v2721
        %2930 = vmatprep.subr.bf16.mxu0 0
        %2931 = vmatpush1.bf16.msra.mxu0 %v2722
        %2932 = vmatprep.subr.bf16.mxu0 0
        %2933 = vmatpush1.bf16.msra.mxu0 %v2723
        %2934 = vmatprep.subr.bf16.mxu0 0
        %2935 = vmatpush1.bf16.msra.mxu0 %v2724
        %2936 = vmatprep.subr.bf16.mxu0 0
        %2937 = vmatpush1.bf16.msra.mxu0 %v2725
        %2938 = vmatprep.subr.bf16.mxu0 0
        %2939 = vmatpush1.bf16.msra.mxu0 %v2726
        %2940 = vmatprep.subr.bf16.mxu0 0
        %2941 = vmatpush1.bf16.msra.mxu0 %v2727
        %2942 = vmatprep.subr.bf16.mxu0 0
        %2943 = vmatpush1.bf16.msra.mxu0 %v2728
        %2944 = vmatprep.subr.bf16.mxu0 0
        %2945 = vmatpush1.bf16.msra.mxu0 %v2729
        %2946 = vmatprep.subr.bf16.mxu0 0
        %2947 = vmatpush1.bf16.msra.mxu0 %v2730
        %2948 = vmatprep.mubr.bf16.mxu0 %v2324
        %2949 = vmatmul.mubr.bf16.gmra.mrb[0].mxu0 %v2323
        %v2950 = vpop.f32.mrb[0].mxu0
        %v2951 = vadd.f32 %v2878, %v2950
        %v2952 = vpop.f32.mrb[0].mxu0
        %v2953 = vpop.f32.mrb[0].mxu0
        %v2954 = vadd.f32 %v2881, %v2953
        %v2955 = vpop.f32.mrb[0].mxu0
        %2956 = vmatprep.mubr.bf16.mxu0 %v2333
        %2957 = vmatmul.mubr.bf16.gmra.mrb[0].mxu0 %v2332
        %v2958 = vpop.f32.mrb[0].mxu0
        %v2959 = vadd.f32 %v2886, %v2958
        %v2960 = vpop.f32.mrb[0].mxu0
        %v2961 = vpop.f32.mrb[0].mxu0
        %v2962 = vadd.f32 %v2889, %v2961
        %v2963 = vpop.f32.mrb[0].mxu0
        %2964 = vmatprep.mubr.bf16.mxu0 %v2342
        %2965 = vmatmul.mubr.bf16.gmra.mrb[0].mxu0 %v2341
        %v2966 = vpop.f32.mrb[0].mxu0
        %v2967 = vadd.f32 %v2894, %v2966
        %v2968 = vpop.f32.mrb[0].mxu0
        %v2969 = vpop.f32.mrb[0].mxu0
        %v2970 = vadd.f32 %v2897, %v2969
        %v2971 = vpop.f32.mrb[0].mxu0
        %2972 = vmatprep.mubr.bf16.mxu0 %v2351
        %2973 = vmatmul.mubr.bf16.gmra.mrb[0].mxu0 %v2350
        %v2974 = vpop.f32.mrb[0].mxu0
        %v2975 = vadd.f32 %v2902, %v2974
        %v2976 = vpop.f32.mrb[0].mxu0
        %v2977 = vpop.f32.mrb[0].mxu0
        %v2978 = vadd.f32 %v2905, %v2977
        %v2979 = vpop.f32.mrb[0].mxu0
        %2980 = vmatprep.mubr.bf16.mxu0 %v2360
        %2981 = vmatmul.mubr.bf16.gmra.mrb[0].mxu0 %v2359
        %v2982 = vpop.f32.mrb[0].mxu0
        %v2983 = vadd.f32 %v2910, %v2982
        %v2984 = vpop.f32.mrb[0].mxu0
        %v2985 = vpop.f32.mrb[0].mxu0
        %v2986 = vadd.f32 %v2913, %v2985
        %v2987 = vpop.f32.mrb[0].mxu0
        %2988 = vdwg.mxu0
        %2989 = vmatprep.subr.bf16.mxu0 0
        %2990 = vmatpush1.bf16.msra.mxu0 %v2731
        %2991 = vmatprep.subr.bf16.mxu0 0
        %2992 = vmatpush1.bf16.msra.mxu0 %v2732
        %2993 = vmatprep.subr.bf16.mxu0 0
        %2994 = vmatpush1.bf16.msra.mxu0 %v2733
        %2995 = vmatprep.subr.bf16.mxu0 0
        %2996 = vmatpush1.bf16.msra.mxu0 %v2734
        %2997 = vmatprep.subr.bf16.mxu0 0
        %2998 = vmatpush1.bf16.msra.mxu0 %v2735
        %2999 = vmatprep.subr.bf16.mxu0 0
        %3000 = vmatpush1.bf16.msra.mxu0 %v2736
        %3001 = vmatprep.subr.bf16.mxu0 0
        %3002 = vmatpush1.bf16.msra.mxu0 %v2737
        %3003 = vmatprep.subr.bf16.mxu0 0
        %3004 = vmatpush1.bf16.msra.mxu0 %v2738
        %3005 = vmatprep.subr.bf16.mxu0 0
        %3006 = vmatpush1.bf16.msra.mxu0 %v2739
        %3007 = vmatprep.subr.bf16.mxu0 0
        %3008 = vmatpush1.bf16.msra.mxu0 %v2740
        %3009 = vmatprep.subr.bf16.mxu0 0
        %3010 = vmatpush1.bf16.msra.mxu0 %v2741
        %3011 = vmatprep.subr.bf16.mxu0 0
        %3012 = vmatpush1.bf16.msra.mxu0 %v2742
        %3013 = vmatprep.subr.bf16.mxu0 0
        %3014 = vmatpush1.bf16.msra.mxu0 %v2743
        %3015 = vmatprep.subr.bf16.mxu0 0
        %3016 = vmatpush1.bf16.msra.mxu0 %v2744
        %3017 = vmatprep.subr.bf16.mxu0 0
        %3018 = vmatpush1.bf16.msra.mxu0 %v2745
        %3019 = vmatprep.subr.bf16.mxu0 0
        %3020 = vmatpush1.bf16.msra.mxu0 %v2746
        %3021 = vmatprep.mubr.bf16.mxu0 %v2326
        %3022 = vmatmul.mubr.bf16.gmra.mrb[0].mxu0 %v2325
        %v3023 = vpop.f32.mrb[0].mxu0
        %v3024 = vadd.f32 %v2951, %v3023
        %v3025 = vpop.f32.mrb[0].mxu0
        %v3026 = vpop.f32.mrb[0].mxu0
        %v3027 = vadd.f32 %v2954, %v3026
        %v3028 = vpop.f32.mrb[0].mxu0
        %3029 = vmatprep.mubr.bf16.mxu0 %v2335
        %3030 = vmatmul.mubr.bf16.gmra.mrb[0].mxu0 %v2334
        %v3031 = vpop.f32.mrb[0].mxu0
        %v3032 = vadd.f32 %v2959, %v3031
        %v3033 = vpop.f32.mrb[0].mxu0
        %v3034 = vpop.f32.mrb[0].mxu0
        %v3035 = vadd.f32 %v2962, %v3034
        %v3036 = vpop.f32.mrb[0].mxu0
        %3037 = vmatprep.mubr.bf16.mxu0 %v2344
        %3038 = vmatmul.mubr.bf16.gmra.mrb[0].mxu0 %v2343
        %v3039 = vpop.f32.mrb[0].mxu0
        %v3040 = vadd.f32 %v2967, %v3039
        %v3041 = vpop.f32.mrb[0].mxu0
        %v3042 = vpop.f32.mrb[0].mxu0
        %v3043 = vadd.f32 %v2970, %v3042
        %v3044 = vpop.f32.mrb[0].mxu0
        %3045 = vmatprep.mubr.bf16.mxu0 %v2353
        %3046 = vmatmul.mubr.bf16.gmra.mrb[0].mxu0 %v2352
        %v3047 = vpop.f32.mrb[0].mxu0
        %v3048 = vadd.f32 %v2975, %v3047
        %v3049 = vpop.f32.mrb[0].mxu0
        %v3050 = vpop.f32.mrb[0].mxu0
        %v3051 = vadd.f32 %v2978, %v3050
        %v3052 = vpop.f32.mrb[0].mxu0
        %3053 = vmatprep.mubr.bf16.mxu0 %v2362
        %3054 = vmatmul.mubr.bf16.gmra.mrb[0].mxu0 %v2361
        %v3055 = vpop.f32.mrb[0].mxu0
        %v3056 = vadd.f32 %v2983, %v3055
        %v3057 = vpop.f32.mrb[0].mxu0
        %v3058 = vpop.f32.mrb[0].mxu0
        %v3059 = vadd.f32 %v2986, %v3058
        %v3060 = vpop.f32.mrb[0].mxu0
        %3061 = vdwg.mxu0
        %3062 = vmatprep.subr.bf16.mxu0 0
        %3063 = vmatpush1.bf16.msra.mxu0 %v2747
        %3064 = vmatprep.subr.bf16.mxu0 0
        %3065 = vmatpush1.bf16.msra.mxu0 %v2748
        %3066 = vmatprep.subr.bf16.mxu0 0
        %3067 = vmatpush1.bf16.msra.mxu0 %v2749
        %3068 = vmatprep.subr.bf16.mxu0 0
        %3069 = vmatpush1.bf16.msra.mxu0 %v2750
        %3070 = vmatprep.subr.bf16.mxu0 0
        %3071 = vmatpush1.bf16.msra.mxu0 %v2751
        %3072 = vmatprep.subr.bf16.mxu0 0
        %3073 = vmatpush1.bf16.msra.mxu0 %v2752
        %3074 = vmatprep.subr.bf16.mxu0 0
        %3075 = vmatpush1.bf16.msra.mxu0 %v2753
        %3076 = vmatprep.subr.bf16.mxu0 0
        %3077 = vmatpush1.bf16.msra.mxu0 %v2754
        %3078 = vmatprep.subr.bf16.mxu0 0
        %3079 = vmatpush1.bf16.msra.mxu0 %v2755
        %3080 = vmatprep.subr.bf16.mxu0 0
        %3081 = vmatpush1.bf16.msra.mxu0 %v2756
        %3082 = vmatprep.subr.bf16.mxu0 0
        %3083 = vmatpush1.bf16.msra.mxu0 %v2757
        %3084 = vmatprep.subr.bf16.mxu0 0
        %3085 = vmatpush1.bf16.msra.mxu0 %v2758
        %3086 = vmatprep.subr.bf16.mxu0 0
        %3087 = vmatpush1.bf16.msra.mxu0 %v2759
        %3088 = vmatprep.subr.bf16.mxu0 0
        %3089 = vmatpush1.bf16.msra.mxu0 %v2760
        %3090 = vmatprep.subr.bf16.mxu0 0
        %3091 = vmatpush1.bf16.msra.mxu0 %v2761
        %3092 = vmatprep.subr.bf16.mxu0 0
        %3093 = vmatpush1.bf16.msra.mxu0 %v2762
        %3094 = vmatprep.mubr.bf16.mxu0 %v2328
        %3095 = vmatmul.mubr.bf16.gmra.mrb[0].mxu0 %v2327
        %v3096 = vpop.f32.mrb[0].mxu0
        %v3097 = vadd.f32 %v3024, %v3096
        %v3098 = vpop.f32.mrb[0].mxu0
        %v3099 = vpop.f32.mrb[0].mxu0
        %v3100 = vadd.f32 %v3027, %v3099
        %v3101 = vpop.f32.mrb[0].mxu0
        %3102 = vmatprep.mubr.bf16.mxu0 %v2337
        %3103 = vmatmul.mubr.bf16.gmra.mrb[0].mxu0 %v2336
        %v3104 = vpop.f32.mrb[0].mxu0
        %v3105 = vadd.f32 %v3032, %v3104
        %v3106 = vpop.f32.mrb[0].mxu0
        %v3107 = vpop.f32.mrb[0].mxu0
        %v3108 = vadd.f32 %v3035, %v3107
        %v3109 = vpop.f32.mrb[0].mxu0
        %3110 = vmatprep.mubr.bf16.mxu0 %v2346
        %3111 = vmatmul.mubr.bf16.gmra.mrb[0].mxu0 %v2345
        %v3112 = vpop.f32.mrb[0].mxu0
        %v3113 = vadd.f32 %v3040, %v3112
        %v3114 = vpop.f32.mrb[0].mxu0
        %v3115 = vpop.f32.mrb[0].mxu0
        %v3116 = vadd.f32 %v3043, %v3115
        %v3117 = vpop.f32.mrb[0].mxu0
        %3118 = vmatprep.mubr.bf16.mxu0 %v2355
        %3119 = vmatmul.mubr.bf16.gmra.mrb[0].mxu0 %v2354
        %v3120 = vpop.f32.mrb[0].mxu0
        %v3121 = vadd.f32 %v3048, %v3120
        %v3122 = vpop.f32.mrb[0].mxu0
        %v3123 = vpop.f32.mrb[0].mxu0
        %v3124 = vadd.f32 %v3051, %v3123
        %v3125 = vpop.f32.mrb[0].mxu0
        %3126 = vmatprep.mubr.bf16.mxu0 %v2364
        %3127 = vmatmul.mubr.bf16.gmra.mrb[0].mxu0 %v2363
        %v3128 = vpop.f32.mrb[0].mxu0
        %v3129 = vadd.f32 %v3056, %v3128
        %v3130 = vpop.f32.mrb[0].mxu0
        %v3131 = vpop.f32.mrb[0].mxu0
        %v3132 = vadd.f32 %v3059, %v3131
        %v3133 = vpop.f32.mrb[0].mxu0
        %3134 = vdwg.mxu0
        %3135 = vmatprep.subr.bf16.mxu0 0
        %3136 = vmatpush1.bf16.msra.mxu0 %v2763
        %3137 = vmatprep.subr.bf16.mxu0 0
        %3138 = vmatpush1.bf16.msra.mxu0 %v2764
        %3139 = vmatprep.subr.bf16.mxu0 0
        %3140 = vmatpush1.bf16.msra.mxu0 %v2765
        %3141 = vmatprep.subr.bf16.mxu0 0
        %3142 = vmatpush1.bf16.msra.mxu0 %v2766
        %3143 = vmatprep.subr.bf16.mxu0 0
        %3144 = vmatpush1.bf16.msra.mxu0 %v2767
        %3145 = vmatprep.subr.bf16.mxu0 0
        %3146 = vmatpush1.bf16.msra.mxu0 %v2768
        %3147 = vmatprep.subr.bf16.mxu0 0
        %3148 = vmatpush1.bf16.msra.mxu0 %v2769
        %3149 = vmatprep.subr.bf16.mxu0 0
        %3150 = vmatpush1.bf16.msra.mxu0 %v2770
        %3151 = vmatprep.subr.bf16.mxu0 0
        %3152 = vmatpush1.bf16.msra.mxu0 0
        %3153 = vmatprep.subr.bf16.mxu0 0
        %3154 = vmatpush1.bf16.msra.mxu0 0
        %3155 = vmatprep.subr.bf16.mxu0 0
        %3156 = vmatpush1.bf16.msra.mxu0 0
        %3157 = vmatprep.subr.bf16.mxu0 0
        %3158 = vmatpush1.bf16.msra.mxu0 0
        %3159 = vmatprep.subr.bf16.mxu0 0
        %3160 = vmatpush1.bf16.msra.mxu0 0
        %3161 = vmatprep.subr.bf16.mxu0 0
        %3162 = vmatpush1.bf16.msra.mxu0 0
        %3163 = vmatprep.subr.bf16.mxu0 0
        %3164 = vmatpush1.bf16.msra.mxu0 0
        %3165 = vmatprep.subr.bf16.mxu0 0
        %3166 = vmatpush1.bf16.msra.mxu0 0
        %3167 = vmatprep.mubr.bf16.mxu0 0
        %3168 = vmatmul.mubr.bf16.gmra.mrb[0].mxu0 %v2329
        %v3169 = vpop.f32.mrb[0].mxu0
        %v3170 = vadd.f32 %v3097, %v3169
        %v3171 = vpop.f32.mrb[0].mxu0
        %v3172 = vpop.f32.mrb[0].mxu0
        %v3173 = vadd.f32 %v3100, %v3172
        %v3174 = vpop.f32.mrb[0].mxu0
        %3175 = vmatprep.mubr.bf16.mxu0 0
        %3176 = vmatmul.mubr.bf16.gmra.mrb[0].mxu0 %v2338
        %v3177 = vpop.f32.mrb[0].mxu0
        %v3178 = vadd.f32 %v3105, %v3177
        %v3179 = vpop.f32.mrb[0].mxu0
        %v3180 = vpop.f32.mrb[0].mxu0
        %v3181 = vadd.f32 %v3108, %v3180
        %v3182 = vpop.f32.mrb[0].mxu0
        %3183 = vmatprep.mubr.bf16.mxu0 0
        %3184 = vmatmul.mubr.bf16.gmra.mrb[0].mxu0 %v2347
        %v3185 = vpop.f32.mrb[0].mxu0
        %v3186 = vadd.f32 %v3113, %v3185
        %v3187 = vpop.f32.mrb[0].mxu0
        %v3188 = vpop.f32.mrb[0].mxu0
        %v3189 = vadd.f32 %v3116, %v3188
        %v3190 = vpop.f32.mrb[0].mxu0
        %3191 = vmatprep.mubr.bf16.mxu0 0
        %3192 = vmatmul.mubr.bf16.gmra.mrb[0].mxu0 %v2356
        %v3193 = vpop.f32.mrb[0].mxu0
        %v3194 = vadd.f32 %v3121, %v3193
        %v3195 = vpop.f32.mrb[0].mxu0
        %v3196 = vpop.f32.mrb[0].mxu0
        %v3197 = vadd.f32 %v3124, %v3196
        %v3198 = vpop.f32.mrb[0].mxu0
        %3199 = vmatprep.mubr.bf16.mxu0 0
        %3200 = vmatmul.mubr.bf16.gmra.mrb[0].mxu0 %v2365
        %v3201 = vpop.f32.mrb[0].mxu0
        %v3202 = vadd.f32 %v3129, %v3201
        %v3203 = vpop.f32.mrb[0].mxu0
        %v3204 = vpop.f32.mrb[0].mxu0
        %v3205 = vadd.f32 %v3132, %v3204
        %v3206 = vpop.f32.mrb[0].mxu0
        %3207 = vdwg.mxu0
        %v3208 = vmax.f32 %v3170, 0.0
        %v3209 = vmax.f32 %v3173, 0.0
        %v3210 = vmax.f32 %v3178, 0.0
        %v3211 = vmax.f32 %v3181, 0.0
        %v3212 = vmax.f32 %v3186, 0.0
        %v3213 = vmax.f32 %v3189, 0.0
        %v3214 = vmax.f32 %v3194, 0.0
        %v3215 = vmax.f32 %v3197, 0.0
        %v3216 = vmax.f32 %v3202, 0.0
        %v3217 = vmax.f32 %v3205, 0.0
        %v3228 = vrot.slane %v3208, 1
        %v3229 = vrot.slane %v3209, 1
        %v3230 = vsel %vm931, %v3228, %v3229
        %v3231 = vrot.slane %v3210, 1
        %v3232 = vsel %vm931, %v3229, %v3231
        %v3233 = vrot.slane %v3211, 1
        %v3234 = vsel %vm931, %v3231, %v3233
        %v3235 = vrot.slane %v3212, 1
        %v3236 = vsel %vm931, %v3233, %v3235
        %v3237 = vrot.slane %v3213, 1
        %v3238 = vsel %vm931, %v3235, %v3237
        %v3239 = vrot.slane %v3214, 1
        %v3240 = vsel %vm931, %v3237, %v3239
        %v3241 = vrot.slane %v3215, 1
        %v3242 = vsel %vm931, %v3239, %v3241
        %v3243 = vrot.slane %v3216, 1
        %v3244 = vsel %vm931, %v3241, %v3243
        %v3245 = vrot.slane %v3217, 1
        %v3246 = vsel %vm931, %v3243, %v3245
        %v3257 = vmax.f32 %v3208, %v3230
        %v3258 = vmax.f32 %v3209, %v3232
        %v3259 = vmax.f32 %v3210, %v3234
        %v3260 = vmax.f32 %v3211, %v3236
        %v3261 = vmax.f32 %v3212, %v3238
        %v3262 = vmax.f32 %v3213, %v3240
        %v3263 = vmax.f32 %v3214, %v3242
        %v3264 = vmax.f32 %v3215, %v3244
        %v3265 = vmax.f32 %v3216, %v3246
        %v3266 = vmax.f32 %v3217, %v3245
        %vm3276 = vcmask 1045504
        %v3277 = vrot.slane %v3258, 2
        %v3278 = vrot.slane %v3259, 2
        %v3279 = vsel %vm3276, %v3277, %v3278
        %v3280 = vrot.slane %v3260, 2
        %v3281 = vsel %vm3276, %v3278, %v3280
        %v3282 = vrot.slane %v3261, 2
        %v3283 = vsel %vm3276, %v3280, %v3282
        %v3284 = vrot.slane %v3262, 2
        %v3285 = vsel %vm3276, %v3282, %v3284
        %v3286 = vrot.slane %v3263, 2
        %v3287 = vsel %vm3276, %v3284, %v3286
        %v3288 = vrot.slane %v3264, 2
        %v3289 = vsel %vm3276, %v3286, %v3288
        %v3290 = vrot.slane %v3265, 2
        %v3291 = vsel %vm3276, %v3288, %v3290
        %v3292 = vrot.slane %v3266, 2
        %v3293 = vsel %vm3276, %v3290, %v3292
        %v3303 = vmax.f32 %v3257, %v3279
        %v3304 = vmax.f32 %v3258, %v3281
        %v3305 = vmax.f32 %v3259, %v3283
        %v3306 = vmax.f32 %v3260, %v3285
        %v3307 = vmax.f32 %v3261, %v3287
        %v3308 = vmax.f32 %v3262, %v3289
        %v3309 = vmax.f32 %v3263, %v3291
        %v3310 = vmax.f32 %v3264, %v3293
        %v3311 = vmax.f32 %v3265, %v3292
        %v3312 = vld [vmem:[#allocation10] sm:$0xf]
        %v3313 = vld [vmem:[#allocation10 + $0x4] sm:$0xf]
        %v3314 = vld [vmem:[#allocation10 + $0x8] sm:$0xf]
        %v3315 = vld [vmem:[#allocation10 + $0xc] sm:$0xf]
        %v3316 = vld [vmem:[#allocation10 + $0x10] sm:$0x3]
        %v3317 = vpack.c.bf16 %v3304, %v3303
        %v3318 = vpack.c.bf16 %v3306, %v3305
        %v3319 = vpack.c.bf16 %v3308, %v3307
        %v3320 = vpack.c.bf16 %v3310, %v3309
        %v3321 = vpack.c.bf16 %v3311, %v3311
        %v3327 = vunpack.c.l.b16 %v3312
        %v3328 = vunpack.c.l.b16 %v3313
        %v3329 = vunpack.c.l.b16 %v3314
        %v3330 = vunpack.c.l.b16 %v3315
        %v3331 = vunpack.c.l.b16 %v3316
        %v3332 = vpack.c.b16 %v3328, %v3327
        %v3333 = vpack.c.b16 %v3330, %v3329
        %v3334 = vpack.c.b16 %v3331, %v3331
        %vm3335 = vcmask 547840
        %v3337 = vsel %vm3335, %v3332, 0
        %v3340 = vsel %vm3335, %v3333, 0
        %v3343 = vsel %vm3335, %v3334, 0
        %vm3345 = vcmask 1040384
        %v3346 = vsel %vm3345, 4294967295, 65535
        %v3347 = vsel %vm702, %v3346, 0
        %v3349 = vand.u32 %v3321, %v3347
        %3351 = vmatprep.subr.bf16.mxu0 0
        %3352 = vmatpush1.bf16.msra.mxu0 %v3317
        %3353 = vmatprep.subr.bf16.mxu0 0
        %3354 = vmatpush1.bf16.msra.mxu0 %v3318
        %3355 = vmatprep.subr.bf16.mxu0 0
        %3356 = vmatpush1.bf16.msra.mxu0 %v3319
        %3357 = vmatprep.subr.bf16.mxu0 0
        %3358 = vmatpush1.bf16.msra.mxu0 %v3320
        %3359 = vmatprep.subr.bf16.mxu0 0
        %3360 = vmatpush1.bf16.msra.mxu0 %v3349
        %3361 = vmatprep.subr.bf16.mxu0 0
        %3362 = vmatpush1.bf16.msra.mxu0 0
        %3363 = vmatprep.subr.bf16.mxu0 0
        %3364 = vmatpush1.bf16.msra.mxu0 0
        %3365 = vmatprep.subr.bf16.mxu0 0
        %3366 = vmatpush1.bf16.msra.mxu0 0
        %3367 = vmatprep.subr.bf16.mxu0 0
        %3368 = vmatpush1.bf16.msra.mxu0 0
        %3369 = vmatprep.subr.bf16.mxu0 0
        %3370 = vmatpush1.bf16.msra.mxu0 0
        %3371 = vmatprep.subr.bf16.mxu0 0
        %3372 = vmatpush1.bf16.msra.mxu0 0
        %3373 = vmatprep.subr.bf16.mxu0 0
        %3374 = vmatpush1.bf16.msra.mxu0 0
        %3375 = vmatprep.subr.bf16.mxu0 0
        %3376 = vmatpush1.bf16.msra.mxu0 0
        %3377 = vmatprep.subr.bf16.mxu0 0
        %3378 = vmatpush1.bf16.msra.mxu0 0
        %3379 = vmatprep.subr.bf16.mxu0 0
        %3380 = vmatpush1.bf16.msra.mxu0 0
        %3381 = vmatprep.subr.bf16.mxu0 0
        %3382 = vmatpush1.bf16.msra.mxu0 0
        %3383 = vmatprep.mubr.bf16.mxu0 0
        %3384 = vmatmul.mubr.bf16.gmra.mrb[0].mxu0 %v3337
        %v3385 = vpop.f32.mrb[0].mxu0
        %v3386 = vadd.f32 0.0, %v3385
        %v3387 = vpop.f32.mrb[0].mxu0
        %v3388 = vpop.f32.mrb[0].mxu0
        %v3389 = vadd.f32 0.0, %v3388
        %v3390 = vpop.f32.mrb[0].mxu0
        %3391 = vmatprep.mubr.bf16.mxu0 0
        %3392 = vmatmul.mubr.bf16.gmra.mrb[0].mxu0 %v3340
        %v3393 = vpop.f32.mrb[0].mxu0
        %v3394 = vadd.f32 0.0, %v3393
        %v3395 = vpop.f32.mrb[0].mxu0
        %v3396 = vpop.f32.mrb[0].mxu0
        %v3397 = vadd.f32 0.0, %v3396
        %v3398 = vpop.f32.mrb[0].mxu0
        %3399 = vmatprep.mubr.bf16.mxu0 0
        %3400 = vmatmul.mubr.bf16.gmra.mrb[0].mxu0 %v3343
        %v3401 = vpop.f32.mrb[0].mxu0
        %v3402 = vadd.f32 0.0, %v3401
        %v3403 = vpop.f32.mrb[0].mxu0
        %v3404 = vpop.f32.mrb[0].mxu0
        %v3405 = vpop.f32.mrb[0].mxu0
        %3406 = vdwg.mxu0
        %v3407 = vpack.c.bf16 %v3389, %v3386
        %v3408 = vpack.c.bf16 %v3394, %v3394
        %v3411 = vunpack.c.l.b16 %v3407
        %v3412 = vunpack.c.h.b16 %v3407
        %v3413 = vunpack.c.l.b16 %v3408
        %v3414 = vpack.c.b16 %v3411, %v3411
        %v3415 = vpack.c.b16 %v3412, %v3412
        %v3416 = vpack.c.b16 %v3413, %v3413
        %3420 = vst [vmem:[#allocation3] sm:$0xf] %v3414
        %3421 = vst [vmem:[#allocation3 + $0x24] sm:$0xf] %v3415
        %3422 = vst [vmem:[#allocation3 + $0x48] sm:$0x7] %v3416
        %v3424 = vshrl.u32 %v3414, 16
        %v3426 = vrot.slane %v3424, 4
        %v3427 = vshll.u32 %v3414, 16
        %v3429 = vrot.slane %v3427, 5
        %v3430 = vor.u32 %v3426, %v3429
        %v3431 = vrot.slane %v3430, 4
        %v3433 = vshll.u32 %v3415, 16
        %v3435 = vrot.slane %v3433, 5
        %v3436 = vsel %vm1345, %v3431, %v3435
        %v3437 = vshrl.u32 %v3415, 16
        %v3439 = vrot.slane %v3437, 4
        %v3440 = vor.u32 %v3439, %v3435
        %v3441 = vrot.slane %v3440, 4
        %v3443 = vshll.u32 %v3416, 16
        %v3445 = vrot.slane %v3443, 5
        %v3446 = vsel %vm1345, %v3441, %v3445
        %v3447 = vshrl.u32 %v3416, 16
        %v3449 = vrot.slane %v3447, 4
        %v3450 = vor.u32 %v3449, %v3445
        %v3451 = vrot.slane %v3450, 4
        %3455 = vst [vmem:[#allocation3 + $0x4] sm:$0xf] %v3436
        %3456 = vst [vmem:[#allocation3 + $0x28] sm:$0xf] %v3446
        %3457 = vst [vmem:[#allocation3 + $0x4c] sm:$0x7] %v3451
        %v3458 = vrot.slane %v3414, 5
        %v3459 = vrot.slane %v3458, 4
        %v3460 = vrot.slane %v3415, 5
        %v3461 = vsel %vm1467, %v3459, %v3460
        %v3462 = vrot.slane %v3460, 4
        %v3463 = vrot.slane %v3416, 5
        %v3464 = vsel %vm1467, %v3462, %v3463
        %v3465 = vrot.slane %v3463, 4
        %3469 = vst [vmem:[#allocation3 + $0x8] sm:$0xf] %v3461
        %3470 = vst [vmem:[#allocation3 + $0x2c] sm:$0xf] %v3464
        %3471 = vst [vmem:[#allocation3 + $0x50] sm:$0x7] %v3465
        %v3472 = vpack.c.bf16 %v3397, %v3394
        %v3474 = vunpack.c.l.b16 %v3472
        %v3475 = vunpack.c.h.b16 %v3472
        %v3476 = vpack.c.b16 %v3474, %v3474
        %v3477 = vpack.c.b16 %v3475, %v3475
        %v3478 = vrot.slane %v3414, 7
        %v3479 = vrot.slane %v3478, 4
        %v3480 = vrot.slane %v3415, 7
        %v3481 = vsel %vm1935, %v3479, %v3480
        %v3482 = vrot.slane %v3480, 4
        %v3483 = vrot.slane %v3476, 7
        %v3484 = vsel %vm1935, %v3482, %v3483
        %v3485 = vrot.slane %v3483, 4
        %v3486 = vrot.slane %v3477, 7
        %v3487 = vsel %vm1935, %v3485, %v3486
        %3491 = vst [vmem:[#allocation3 + $0xc] sm:$0xf] %v3481
        %3492 = vst [vmem:[#allocation3 + $0x30] sm:$0xf] %v3484
        %3493 = vst [vmem:[#allocation3 + $0x54] sm:$0x7] %v3487
        %vm3494 = vsmask.f32 256
        %vm3495 = vsmask.f32 4368
        %vm3496 = vmor %vm3494, %vm3495
        %v3497 = vrot.slane %v3424, 7
        %v3498 = vrot.slane %v3497, 4
        %v3499 = vrot.slane %v3437, 7
        %v3500 = vor.u32 %v3499, %v3433
        %v3501 = vsel %vm3496, %v3498, %v3500
        %v3502 = vrot.slane %v3499, 4
        %v3504 = vshrl.u32 %v3476, 16
        %v3506 = vrot.slane %v3504, 7
        %v3507 = vshll.u32 %v3476, 16
        %v3509 = vor.u32 %v3506, %v3507
        %v3510 = vsel %vm3496, %v3502, %v3509
        %v3511 = vrot.slane %v3506, 4
        %v3513 = vshrl.u32 %v3477, 16
        %v3515 = vrot.slane %v3513, 7
        %v3516 = vshll.u32 %v3477, 16
        %v3518 = vor.u32 %v3515, %v3516
        %v3519 = vsel %vm3496, %v3511, %v3518
        %3523 = vst [vmem:[#allocation3 + $0x10] sm:$0xf] %v3501
        %3524 = vst [vmem:[#allocation3 + $0x34] sm:$0xf] %v3510
        %3525 = vst [vmem:[#allocation3 + $0x58] sm:$0x7] %v3519
        %v3526 = vpack.c.bf16 %v3394, %v3389
        %v3527 = vpack.c.bf16 %v3397, %v3397
        %v3530 = vunpack.c.l.b16 %v3526
        %v3531 = vunpack.c.h.b16 %v3526
        %v3532 = vunpack.c.l.b16 %v3527
        %v3533 = vpack.c.b16 %v3530, %v3530
        %v3534 = vpack.c.b16 %v3531, %v3531
        %v3535 = vpack.c.b16 %v3532, %v3532
        %3539 = vst [vmem:[#allocation3 + $0x14] sm:$0xf] %v3533
        %3540 = vst [vmem:[#allocation3 + $0x38] sm:$0xf] %v3534
        %3541 = vst [vmem:[#allocation3 + $0x5c] sm:$0x7] %v3535
        %v3542 = vpack.c.bf16 %v3402, %v3397
        %v3544 = vunpack.c.l.b16 %v3542
        %v3545 = vunpack.c.h.b16 %v3542
        %v3546 = vpack.c.b16 %v3544, %v3544
        %v3547 = vpack.c.b16 %v3545, %v3545
        %v3548 = vrot.slane %v3533, 6
        %v3549 = vrot.slane %v3548, 4
        %v3550 = vrot.slane %v3534, 6
        %v3551 = vsel %vm1729, %v3549, %v3550
        %v3552 = vrot.slane %v3550, 4
        %v3553 = vrot.slane %v3546, 6
        %v3554 = vsel %vm1729, %v3552, %v3553
        %v3555 = vrot.slane %v3553, 4
        %v3556 = vrot.slane %v3547, 6
        %v3557 = vsel %vm1729, %v3555, %v3556
        %3561 = vst [vmem:[#allocation3 + $0x18] sm:$0xf] %v3551
        %3562 = vst [vmem:[#allocation3 + $0x3c] sm:$0xf] %v3554
        %3563 = vst [vmem:[#allocation3 + $0x60] sm:$0x7] %v3557
        %v3565 = vshrl.u32 %v3533, 16
        %v3567 = vrot.slane %v3565, 6
        %v3568 = vshll.u32 %v3533, 16
        %v3570 = vrot.slane %v3568, 7
        %v3571 = vor.u32 %v3567, %v3570
        %v3572 = vrot.slane %v3571, 4
        %v3574 = vshrl.u32 %v3534, 16
        %v3576 = vrot.slane %v3574, 6
        %v3577 = vshll.u32 %v3534, 16
        %v3579 = vrot.slane %v3577, 7
        %v3580 = vor.u32 %v3576, %v3579
        %v3581 = vsel %vm1844, %v3572, %v3580
        %v3582 = vrot.slane %v3580, 4
        %v3584 = vshrl.u32 %v3546, 16
        %v3586 = vrot.slane %v3584, 6
        %v3587 = vshll.u32 %v3546, 16
        %v3589 = vrot.slane %v3587, 7
        %v3590 = vor.u32 %v3586, %v3589
        %v3591 = vsel %vm1844, %v3582, %v3590
        %v3592 = vrot.slane %v3590, 4
        %v3594 = vshrl.u32 %v3547, 16
        %v3596 = vrot.slane %v3594, 6
        %v3597 = vshll.u32 %v3547, 16
        %v3599 = vrot.slane %v3597, 7
        %v3600 = vor.u32 %v3596, %v3599
        %v3601 = vsel %vm1844, %v3592, %v3600
        %3605 = vst [vmem:[#allocation3 + $0x1c] sm:$0xf] %v3581
        %3606 = vst [vmem:[#allocation3 + $0x40] sm:$0xf] %v3591
        %3607 = vst [vmem:[#allocation3 + $0x64] sm:$0x7] %v3601
        %v3608 = vrot.slane %v3533, 7
        %v3609 = vrot.slane %v3608, 4
        %v3610 = vrot.slane %v3534, 7
        %v3611 = vsel %vm1935, %v3609, %v3610
        %v3612 = vrot.slane %v3610, 4
        %v3613 = vrot.slane %v3546, 7
        %v3614 = vsel %vm1935, %v3612, %v3613
        %v3615 = vrot.slane %v3613, 4
        %v3616 = vrot.slane %v3547, 7
        %v3617 = vsel %vm1935, %v3615, %v3616
        %3621 = vst [vmem:[#allocation3 + $0x20] sm:$0xf] %v3611
        %3622 = vst [vmem:[#allocation3 + $0x44] sm:$0xf] %v3614
        %3623 = vst [vmem:[#allocation3 + $0x68] sm:$0x7] %v3617
        %v3624 = vld [vmem:[#allocation3] sm:$0xff]
        %v3625 = vld [vmem:[#allocation3 + $0x8] sm:$0xff]
        %v3626 = vld [vmem:[#allocation3 + $0x10] sm:$0xff]
        %v3627 = vld [vmem:[#allocation3 + $0x18] sm:$0xff]
        %v3628 = vld [vmem:[#allocation3 + $0x20] sm:$0xf]
        %v3629 = vld [vmem:[#allocation3 + $0x24] sm:$0xff]
        %v3630 = vld [vmem:[#allocation3 + $0x2c] sm:$0xff]
        %v3631 = vld [vmem:[#allocation3 + $0x34] sm:$0xff]
        %v3632 = vld [vmem:[#allocation3 + $0x3c] sm:$0xff]
        %v3633 = vld [vmem:[#allocation3 + $0x44] sm:$0xf]
        %v3634 = vld [vmem:[#allocation3 + $0x48] sm:$0x77]
        %v3635 = vld [vmem:[#allocation3 + $0x50] sm:$0x77]
        %v3636 = vld [vmem:[#allocation3 + $0x58] sm:$0x77]
        %v3637 = vld [vmem:[#allocation3 + $0x60] sm:$0x77]
        %v3638 = vld [vmem:[#allocation3 + $0x68] sm:$0x7]
        %v3639 = vld [vmem:[%s4] sm:$0xff]
        %v3640 = vld [vmem:[%s4 + $0x8] sm:$0xff]
        %v3641 = vld [vmem:[%s4 + $0x10] sm:$0xff]
        %v3642 = vld [vmem:[%s4 + $0x18] sm:$0xff]
        %v3643 = vld [vmem:[%s4 + $0x20] sm:$0xff]
        %v3644 = vld [vmem:[%s4 + $0x28] sm:$0xff]
        %v3645 = vld [vmem:[%s4 + $0x30] sm:$0xff]
        %v3646 = vld [vmem:[%s4 + $0x38] sm:$0xff]
        %v3647 = vld [vmem:[%s4 + $0x40] sm:$0xff]
        %v3648 = vld [vmem:[%s4 + $0x48] sm:$0xff]
        %v3649 = vld [vmem:[%s4 + $0x50] sm:$0xff]
        %v3650 = vld [vmem:[%s4 + $0x58] sm:$0xff]
        %v3651 = vld [vmem:[%s4 + $0x60] sm:$0xff]
        %v3652 = vld [vmem:[%s4 + $0x68] sm:$0xff]
        %v3653 = vld [vmem:[%s4 + $0x70] sm:$0xff]
        %v3654 = vld [vmem:[%s4 + $0x78] sm:$0xff]
        %v3655 = vld [vmem:[%s4 + $0x80] sm:$0xff]
        %v3656 = vld [vmem:[%s4 + $0x88] sm:$0xff]
        %v3657 = vld [vmem:[%s4 + $0x90] sm:$0xff]
        %v3658 = vld [vmem:[%s4 + $0x98] sm:$0xff]
        %v3659 = vld [vmem:[%s4 + $0xa0] sm:$0xff]
        %v3660 = vld [vmem:[%s4 + $0xa8] sm:$0xff]
        %v3661 = vld [vmem:[%s4 + $0xb0] sm:$0xff]
        %v3662 = vld [vmem:[%s4 + $0xb8] sm:$0xff]
        %v3663 = vld [vmem:[%s4 + $0xc0] sm:$0xff]
        %v3664 = vld [vmem:[%s4 + $0xc8] sm:$0xff]
        %v3665 = vld [vmem:[%s4 + $0xd0] sm:$0xff]
        %v3666 = vld [vmem:[%s4 + $0xd8] sm:$0xff]
        %v3667 = vld [vmem:[%s4 + $0xe0] sm:$0xff]
        %v3668 = vld [vmem:[%s4 + $0xe8] sm:$0xff]
        %v3669 = vld [vmem:[%s4 + $0xf0] sm:$0xff]
        %v3670 = vld [vmem:[%s4 + $0xf8] sm:$0xff]
        %v3671 = vld [vmem:[%s4 + $0x100] sm:$0xff]
        %v3672 = vld [vmem:[%s4 + $0x108] sm:$0xff]
        %v3673 = vld [vmem:[%s4 + $0x110] sm:$0xff]
        %v3674 = vld [vmem:[%s4 + $0x118] sm:$0xff]
        %v3675 = vld [vmem:[%s4 + $0x120] sm:$0xff]
        %v3676 = vld [vmem:[%s4 + $0x128] sm:$0xff]
        %v3677 = vld [vmem:[%s4 + $0x130] sm:$0xff]
        %v3678 = vld [vmem:[%s4 + $0x138] sm:$0xff]
        %v3679 = vld [vmem:[%s4 + $0x140] sm:$0xff]
        %v3680 = vld [vmem:[%s4 + $0x148] sm:$0xff]
        %v3681 = vld [vmem:[%s4 + $0x150] sm:$0xff]
        %v3682 = vld [vmem:[%s4 + $0x158] sm:$0xff]
        %v3683 = vld [vmem:[%s4 + $0x160] sm:$0xff]
        %v3684 = vld [vmem:[%s4 + $0x168] sm:$0xff]
        %v3685 = vld [vmem:[%s4 + $0x170] sm:$0xff]
        %v3686 = vld [vmem:[%s4 + $0x178] sm:$0xff]
        %v3687 = vld [vmem:[%s4 + $0x180] sm:$0xff]
        %v3688 = vld [vmem:[%s4 + $0x188] sm:$0xff]
        %v3689 = vld [vmem:[%s4 + $0x190] sm:$0xff]
        %v3690 = vld [vmem:[%s4 + $0x198] sm:$0xff]
        %v3691 = vld [vmem:[%s4 + $0x1a0] sm:$0xff]
        %v3692 = vld [vmem:[%s4 + $0x1a8] sm:$0xff]
        %v3693 = vld [vmem:[%s4 + $0x1b0] sm:$0xff]
        %v3694 = vld [vmem:[%s4 + $0x1b8] sm:$0xff]
        %v3695 = vld [vmem:[%s4 + $0x1c0] sm:$0xff]
        %v3696 = vld [vmem:[%s4 + $0x1c8] sm:$0xff]
        %v3697 = vld [vmem:[%s4 + $0x1d0] sm:$0xff]
        %v3698 = vld [vmem:[%s4 + $0x1d8] sm:$0xff]
        %v3699 = vld [vmem:[%s4 + $0x1e0] sm:$0xff]
        %v3700 = vld [vmem:[%s4 + $0x1e8] sm:$0xff]
        %v3701 = vld [vmem:[%s4 + $0x1f0] sm:$0xff]
        %v3702 = vld [vmem:[%s4 + $0x1f8] sm:$0xff]
        %v3703 = vld [vmem:[%s4 + $0x200] sm:$0xff]
        %v3704 = vld [vmem:[%s4 + $0x208] sm:$0xff]
        %v3705 = vld [vmem:[%s4 + $0x210] sm:$0xff]
        %v3706 = vld [vmem:[%s4 + $0x218] sm:$0xff]
        %v3707 = vld [vmem:[%s4 + $0x220] sm:$0xff]
        %v3708 = vld [vmem:[%s4 + $0x228] sm:$0xff]
        %v3709 = vld [vmem:[%s4 + $0x230] sm:$0xff]
        %v3710 = vld [vmem:[%s4 + $0x238] sm:$0xff]
        %v3711 = vld [vmem:[%s4 + $0x240] sm:$0xff]
        %v3712 = vld [vmem:[%s4 + $0x248] sm:$0xff]
        %v3713 = vld [vmem:[%s4 + $0x250] sm:$0xff]
        %v3714 = vld [vmem:[%s4 + $0x258] sm:$0xff]
        %v3715 = vld [vmem:[%s4 + $0x260] sm:$0xff]
        %v3716 = vld [vmem:[%s4 + $0x268] sm:$0xff]
        %v3717 = vld [vmem:[%s4 + $0x270] sm:$0xff]
        %v3718 = vld [vmem:[%s4 + $0x278] sm:$0xff]
        %v3719 = vld [vmem:[%s4 + $0x280] sm:$0xff]
        %v3720 = vld [vmem:[%s4 + $0x288] sm:$0xff]
        %v3721 = vld [vmem:[%s4 + $0x290] sm:$0xff]
        %v3722 = vld [vmem:[%s4 + $0x298] sm:$0xff]
        %v3723 = vld [vmem:[%s4 + $0x2a0] sm:$0xff]
        %v3724 = vld [vmem:[%s4 + $0x2a8] sm:$0xff]
        %v3725 = vld [vmem:[%s4 + $0x2b0] sm:$0xff]
        %v3726 = vld [vmem:[%s4 + $0x2b8] sm:$0xff]
        %v3727 = vld [vmem:[%s4 + $0x2c0] sm:$0xff]
        %v3728 = vld [vmem:[%s4 + $0x2c8] sm:$0xff]
        %v3729 = vld [vmem:[%s4 + $0x2d0] sm:$0xff]
        %v3730 = vld [vmem:[%s4 + $0x2d8] sm:$0xff]
        %v3731 = vld [vmem:[%s4 + $0x2e0] sm:$0xff]
        %v3732 = vld [vmem:[%s4 + $0x2e8] sm:$0xff]
        %v3733 = vld [vmem:[%s4 + $0x2f0] sm:$0xff]
        %v3734 = vld [vmem:[%s4 + $0x2f8] sm:$0xff]
        %v3735 = vld [vmem:[%s4 + $0x300] sm:$0xff]
        %v3736 = vld [vmem:[%s4 + $0x308] sm:$0xff]
        %v3737 = vld [vmem:[%s4 + $0x310] sm:$0xff]
        %v3738 = vld [vmem:[%s4 + $0x318] sm:$0xff]
        %v3739 = vld [vmem:[%s4 + $0x320] sm:$0xff]
        %v3740 = vld [vmem:[%s4 + $0x328] sm:$0xff]
        %v3741 = vld [vmem:[%s4 + $0x330] sm:$0xff]
        %v3742 = vld [vmem:[%s4 + $0x338] sm:$0xff]
        %v3743 = vld [vmem:[%s4 + $0x340] sm:$0xff]
        %v3744 = vld [vmem:[%s4 + $0x348] sm:$0xff]
        %v3745 = vld [vmem:[%s4 + $0x350] sm:$0xff]
        %v3746 = vld [vmem:[%s4 + $0x358] sm:$0xff]
        %v3747 = vld [vmem:[%s4 + $0x360] sm:$0xff]
        %v3748 = vld [vmem:[%s4 + $0x368] sm:$0xff]
        %v3749 = vld [vmem:[%s4 + $0x370] sm:$0xff]
        %v3750 = vld [vmem:[%s4 + $0x378] sm:$0xff]
        %v3751 = vld [vmem:[%s4 + $0x380] sm:$0xff]
        %v3752 = vld [vmem:[%s4 + $0x388] sm:$0xff]
        %v3753 = vld [vmem:[%s4 + $0x390] sm:$0xff]
        %v3754 = vld [vmem:[%s4 + $0x398] sm:$0xff]
        %v3755 = vld [vmem:[%s4 + $0x3a0] sm:$0xff]
        %v3756 = vld [vmem:[%s4 + $0x3a8] sm:$0xff]
        %v3757 = vld [vmem:[%s4 + $0x3b0] sm:$0xff]
        %v3758 = vld [vmem:[%s4 + $0x3b8] sm:$0xff]
        %v3759 = vld [vmem:[%s4 + $0x3c0] sm:$0xff]
        %v3760 = vld [vmem:[%s4 + $0x3c8] sm:$0xff]
        %v3761 = vld [vmem:[%s4 + $0x3d0] sm:$0xff]
        %v3762 = vld [vmem:[%s4 + $0x3d8] sm:$0xff]
        %v3763 = vld [vmem:[%s4 + $0x3e0] sm:$0xff]
        %v3764 = vld [vmem:[%s4 + $0x3e8] sm:$0xff]
        %v3765 = vld [vmem:[%s4 + $0x3f0] sm:$0xff]
        %v3766 = vld [vmem:[%s4 + $0x3f8] sm:$0xff]
        %v3767 = vld [vmem:[%s4 + $0x400] sm:$0xff]
        %v3768 = vld [vmem:[%s4 + $0x408] sm:$0xff]
        %v3769 = vld [vmem:[%s4 + $0x410] sm:$0xff]
        %v3770 = vld [vmem:[%s4 + $0x418] sm:$0xff]
        %v3771 = vld [vmem:[%s4 + $0x420] sm:$0xff]
        %v3772 = vld [vmem:[%s4 + $0x428] sm:$0xff]
        %v3773 = vld [vmem:[%s4 + $0x430] sm:$0xff]
        %v3774 = vld [vmem:[%s4 + $0x438] sm:$0xff]
        %v3775 = vld [vmem:[%s4 + $0x440] sm:$0xff]
        %v3776 = vld [vmem:[%s4 + $0x448] sm:$0xff]
        %v3777 = vld [vmem:[%s4 + $0x450] sm:$0xff]
        %v3778 = vld [vmem:[%s4 + $0x458] sm:$0xff]
        %v3779 = vld [vmem:[%s4 + $0x460] sm:$0xff]
        %v3780 = vld [vmem:[%s4 + $0x468] sm:$0xff]
        %v3781 = vld [vmem:[%s4 + $0x470] sm:$0xff]
        %v3782 = vld [vmem:[%s4 + $0x478] sm:$0xff]
        %v3798 = vunpack.c.l.b16 %v3624
        %v3799 = vunpack.c.h.b16 %v3624
        %v3800 = vunpack.c.l.b16 %v3625
        %v3801 = vunpack.c.h.b16 %v3625
        %v3802 = vunpack.c.l.b16 %v3626
        %v3803 = vunpack.c.h.b16 %v3626
        %v3804 = vunpack.c.l.b16 %v3627
        %v3805 = vunpack.c.h.b16 %v3627
        %v3806 = vunpack.c.l.b16 %v3628
        %v3807 = vunpack.c.l.b16 %v3629
        %v3808 = vunpack.c.h.b16 %v3629
        %v3809 = vunpack.c.l.b16 %v3630
        %v3810 = vunpack.c.h.b16 %v3630
        %v3811 = vunpack.c.l.b16 %v3631
        %v3812 = vunpack.c.h.b16 %v3631
        %v3813 = vunpack.c.l.b16 %v3632
        %v3814 = vunpack.c.h.b16 %v3632
        %v3815 = vunpack.c.l.b16 %v3633
        %v3816 = vunpack.c.l.b16 %v3634
        %v3817 = vunpack.c.h.b16 %v3634
        %v3818 = vunpack.c.l.b16 %v3635
        %v3819 = vunpack.c.h.b16 %v3635
        %v3820 = vunpack.c.l.b16 %v3636
        %v3821 = vunpack.c.h.b16 %v3636
        %v3822 = vunpack.c.l.b16 %v3637
        %v3823 = vunpack.c.h.b16 %v3637
        %v3824 = vunpack.c.l.b16 %v3638
        %v3825 = vpack.c.b16 %v3807, %v3798
        %v3826 = vpack.c.b16 %v3808, %v3799
        %v3827 = vpack.c.b16 %v3809, %v3800
        %v3828 = vpack.c.b16 %v3810, %v3801
        %v3829 = vpack.c.b16 %v3811, %v3802
        %v3830 = vpack.c.b16 %v3812, %v3803
        %v3831 = vpack.c.b16 %v3813, %v3804
        %v3832 = vpack.c.b16 %v3814, %v3805
        %v3833 = vpack.c.b16 %v3815, %v3806
        %v3834 = vpack.c.b16 %v3816, %v3816
        %v3835 = vpack.c.b16 %v3817, %v3817
        %v3836 = vpack.c.b16 %v3818, %v3818
        %v3837 = vpack.c.b16 %v3819, %v3819
        %v3838 = vpack.c.b16 %v3820, %v3820
        %v3839 = vpack.c.b16 %v3821, %v3821
        %v3840 = vpack.c.b16 %v3822, %v3822
        %v3841 = vpack.c.b16 %v3823, %v3823
        %v3842 = vpack.c.b16 %v3824, %v3824
        %v4005 = vunpack.c.l.b16 %v3639
        %v4006 = vunpack.c.h.b16 %v3639
        %v4007 = vunpack.c.l.b16 %v3640
        %v4008 = vunpack.c.h.b16 %v3640
        %v4009 = vunpack.c.l.b16 %v3641
        %v4010 = vunpack.c.h.b16 %v3641
        %v4011 = vunpack.c.l.b16 %v3642
        %v4012 = vunpack.c.h.b16 %v3642
        %v4013 = vunpack.c.l.b16 %v3643
        %v4014 = vunpack.c.h.b16 %v3643
        %v4015 = vunpack.c.l.b16 %v3644
        %v4016 = vunpack.c.h.b16 %v3644
        %v4017 = vunpack.c.l.b16 %v3645
        %v4018 = vunpack.c.h.b16 %v3645
        %v4019 = vunpack.c.l.b16 %v3646
        %v4020 = vunpack.c.h.b16 %v3646
        %v4021 = vunpack.c.l.b16 %v3647
        %v4022 = vunpack.c.h.b16 %v3647
        %v4023 = vunpack.c.l.b16 %v3648
        %v4024 = vunpack.c.h.b16 %v3648
        %v4025 = vunpack.c.l.b16 %v3649
        %v4026 = vunpack.c.h.b16 %v3649
        %v4027 = vunpack.c.l.b16 %v3650
        %v4028 = vunpack.c.h.b16 %v3650
        %v4029 = vunpack.c.l.b16 %v3651
        %v4030 = vunpack.c.h.b16 %v3651
        %v4031 = vunpack.c.l.b16 %v3652
        %v4032 = vunpack.c.h.b16 %v3652
        %v4033 = vunpack.c.l.b16 %v3653
        %v4034 = vunpack.c.h.b16 %v3653
        %v4035 = vunpack.c.l.b16 %v3654
        %v4036 = vunpack.c.h.b16 %v3654
        %v4037 = vunpack.c.l.b16 %v3655
        %v4038 = vunpack.c.h.b16 %v3655
        %v4039 = vunpack.c.l.b16 %v3656
        %v4040 = vunpack.c.h.b16 %v3656
        %v4041 = vunpack.c.l.b16 %v3657
        %v4042 = vunpack.c.h.b16 %v3657
        %v4043 = vunpack.c.l.b16 %v3658
        %v4044 = vunpack.c.h.b16 %v3658
        %v4045 = vunpack.c.l.b16 %v3659
        %v4046 = vunpack.c.h.b16 %v3659
        %v4047 = vunpack.c.l.b16 %v3660
        %v4048 = vunpack.c.h.b16 %v3660
        %v4049 = vunpack.c.l.b16 %v3661
        %v4050 = vunpack.c.h.b16 %v3661
        %v4051 = vunpack.c.l.b16 %v3662
        %v4052 = vunpack.c.h.b16 %v3662
        %v4053 = vunpack.c.l.b16 %v3663
        %v4054 = vunpack.c.h.b16 %v3663
        %v4055 = vunpack.c.l.b16 %v3664
        %v4056 = vunpack.c.h.b16 %v3664
        %v4057 = vunpack.c.l.b16 %v3665
        %v4058 = vunpack.c.h.b16 %v3665
        %v4059 = vunpack.c.l.b16 %v3666
        %v4060 = vunpack.c.h.b16 %v3666
        %v4061 = vunpack.c.l.b16 %v3667
        %v4062 = vunpack.c.h.b16 %v3667
        %v4063 = vunpack.c.l.b16 %v3668
        %v4064 = vunpack.c.h.b16 %v3668
        %v4065 = vunpack.c.l.b16 %v3669
        %v4066 = vunpack.c.h.b16 %v3669
        %v4067 = vunpack.c.l.b16 %v3670
        %v4068 = vunpack.c.h.b16 %v3670
        %v4069 = vunpack.c.l.b16 %v3671
        %v4070 = vunpack.c.h.b16 %v3671
        %v4071 = vunpack.c.l.b16 %v3672
        %v4072 = vunpack.c.h.b16 %v3672
        %v4073 = vunpack.c.l.b16 %v3673
        %v4074 = vunpack.c.h.b16 %v3673
        %v4075 = vunpack.c.l.b16 %v3674
        %v4076 = vunpack.c.h.b16 %v3674
        %v4077 = vunpack.c.l.b16 %v3675
        %v4078 = vunpack.c.h.b16 %v3675
        %v4079 = vunpack.c.l.b16 %v3676
        %v4080 = vunpack.c.h.b16 %v3676
        %v4081 = vunpack.c.l.b16 %v3677
        %v4082 = vunpack.c.h.b16 %v3677
        %v4083 = vunpack.c.l.b16 %v3678
        %v4084 = vunpack.c.h.b16 %v3678
        %v4085 = vunpack.c.l.b16 %v3679
        %v4086 = vunpack.c.h.b16 %v3679
        %v4087 = vunpack.c.l.b16 %v3680
        %v4088 = vunpack.c.h.b16 %v3680
        %v4089 = vunpack.c.l.b16 %v3681
        %v4090 = vunpack.c.h.b16 %v3681
        %v4091 = vunpack.c.l.b16 %v3682
        %v4092 = vunpack.c.h.b16 %v3682
        %v4093 = vunpack.c.l.b16 %v3683
        %v4094 = vunpack.c.h.b16 %v3683
        %v4095 = vunpack.c.l.b16 %v3684
        %v4096 = vunpack.c.h.b16 %v3684
        %v4097 = vunpack.c.l.b16 %v3685
        %v4098 = vunpack.c.h.b16 %v3685
        %v4099 = vunpack.c.l.b16 %v3686
        %v4100 = vunpack.c.h.b16 %v3686
        %v4101 = vunpack.c.l.b16 %v3687
        %v4102 = vunpack.c.h.b16 %v3687
        %v4103 = vunpack.c.l.b16 %v3688
        %v4104 = vunpack.c.h.b16 %v3688
        %v4105 = vunpack.c.l.b16 %v3689
        %v4106 = vunpack.c.h.b16 %v3689
        %v4107 = vunpack.c.l.b16 %v3690
        %v4108 = vunpack.c.h.b16 %v3690
        %v4109 = vunpack.c.l.b16 %v3691
        %v4110 = vunpack.c.h.b16 %v3691
        %v4111 = vunpack.c.l.b16 %v3692
        %v4112 = vunpack.c.h.b16 %v3692
        %v4113 = vunpack.c.l.b16 %v3693
        %v4114 = vunpack.c.h.b16 %v3693
        %v4115 = vunpack.c.l.b16 %v3694
        %v4116 = vunpack.c.h.b16 %v3694
        %v4117 = vunpack.c.l.b16 %v3695
        %v4118 = vunpack.c.h.b16 %v3695
        %v4119 = vunpack.c.l.b16 %v3696
        %v4120 = vunpack.c.h.b16 %v3696
        %v4121 = vunpack.c.l.b16 %v3697
        %v4122 = vunpack.c.h.b16 %v3697
        %v4123 = vunpack.c.l.b16 %v3698
        %v4124 = vunpack.c.h.b16 %v3698
        %v4125 = vunpack.c.l.b16 %v3699
        %v4126 = vunpack.c.h.b16 %v3699
        %v4127 = vunpack.c.l.b16 %v3700
        %v4128 = vunpack.c.h.b16 %v3700
        %v4129 = vunpack.c.l.b16 %v3701
        %v4130 = vunpack.c.h.b16 %v3701
        %v4131 = vunpack.c.l.b16 %v3702
        %v4132 = vunpack.c.h.b16 %v3702
        %v4133 = vunpack.c.l.b16 %v3703
        %v4134 = vunpack.c.h.b16 %v3703
        %v4135 = vunpack.c.l.b16 %v3704
        %v4136 = vunpack.c.h.b16 %v3704
        %v4137 = vunpack.c.l.b16 %v3705
        %v4138 = vunpack.c.h.b16 %v3705
        %v4139 = vunpack.c.l.b16 %v3706
        %v4140 = vunpack.c.h.b16 %v3706
        %v4141 = vunpack.c.l.b16 %v3707
        %v4142 = vunpack.c.h.b16 %v3707
        %v4143 = vunpack.c.l.b16 %v3708
        %v4144 = vunpack.c.h.b16 %v3708
        %v4145 = vunpack.c.l.b16 %v3709
        %v4146 = vunpack.c.h.b16 %v3709
        %v4147 = vunpack.c.l.b16 %v3710
        %v4148 = vunpack.c.h.b16 %v3710
        %v4149 = vunpack.c.l.b16 %v3711
        %v4150 = vunpack.c.h.b16 %v3711
        %v4151 = vunpack.c.l.b16 %v3712
        %v4152 = vunpack.c.h.b16 %v3712
        %v4153 = vunpack.c.l.b16 %v3713
        %v4154 = vunpack.c.h.b16 %v3713
        %v4155 = vunpack.c.l.b16 %v3714
        %v4156 = vunpack.c.h.b16 %v3714
        %v4157 = vunpack.c.l.b16 %v3715
        %v4158 = vunpack.c.h.b16 %v3715
        %v4159 = vunpack.c.l.b16 %v3716
        %v4160 = vunpack.c.h.b16 %v3716
        %v4161 = vunpack.c.l.b16 %v3717
        %v4162 = vunpack.c.h.b16 %v3717
        %v4163 = vunpack.c.l.b16 %v3718
        %v4164 = vunpack.c.h.b16 %v3718
        %v4165 = vunpack.c.l.b16 %v3719
        %v4166 = vunpack.c.h.b16 %v3719
        %v4167 = vunpack.c.l.b16 %v3720
        %v4168 = vunpack.c.h.b16 %v3720
        %v4169 = vunpack.c.l.b16 %v3721
        %v4170 = vunpack.c.h.b16 %v3721
        %v4171 = vunpack.c.l.b16 %v3722
        %v4172 = vunpack.c.h.b16 %v3722
        %v4173 = vunpack.c.l.b16 %v3723
        %v4174 = vunpack.c.h.b16 %v3723
        %v4175 = vunpack.c.l.b16 %v3724
        %v4176 = vunpack.c.h.b16 %v3724
        %v4177 = vunpack.c.l.b16 %v3725
        %v4178 = vunpack.c.h.b16 %v3725
        %v4179 = vunpack.c.l.b16 %v3726
        %v4180 = vunpack.c.h.b16 %v3726
        %v4181 = vunpack.c.l.b16 %v3727
        %v4182 = vunpack.c.h.b16 %v3727
        %v4183 = vunpack.c.l.b16 %v3728
        %v4184 = vunpack.c.h.b16 %v3728
        %v4185 = vunpack.c.l.b16 %v3729
        %v4186 = vunpack.c.h.b16 %v3729
        %v4187 = vunpack.c.l.b16 %v3730
        %v4188 = vunpack.c.h.b16 %v3730
        %v4189 = vunpack.c.l.b16 %v3731
        %v4190 = vunpack.c.h.b16 %v3731
        %v4191 = vunpack.c.l.b16 %v3732
        %v4192 = vunpack.c.h.b16 %v3732
        %v4193 = vunpack.c.l.b16 %v3733
        %v4194 = vunpack.c.h.b16 %v3733
        %v4195 = vunpack.c.l.b16 %v3734
        %v4196 = vunpack.c.h.b16 %v3734
        %v4197 = vunpack.c.l.b16 %v3735
        %v4198 = vunpack.c.h.b16 %v3735
        %v4199 = vunpack.c.l.b16 %v3736
        %v4200 = vunpack.c.h.b16 %v3736
        %v4201 = vunpack.c.l.b16 %v3737
        %v4202 = vunpack.c.h.b16 %v3737
        %v4203 = vunpack.c.l.b16 %v3738
        %v4204 = vunpack.c.h.b16 %v3738
        %v4205 = vunpack.c.l.b16 %v3739
        %v4206 = vunpack.c.h.b16 %v3739
        %v4207 = vunpack.c.l.b16 %v3740
        %v4208 = vunpack.c.h.b16 %v3740
        %v4209 = vunpack.c.l.b16 %v3741
        %v4210 = vunpack.c.h.b16 %v3741
        %v4211 = vunpack.c.l.b16 %v3742
        %v4212 = vunpack.c.h.b16 %v3742
        %v4213 = vunpack.c.l.b16 %v3743
        %v4214 = vunpack.c.h.b16 %v3743
        %v4215 = vunpack.c.l.b16 %v3744
        %v4216 = vunpack.c.h.b16 %v3744
        %v4217 = vunpack.c.l.b16 %v3745
        %v4218 = vunpack.c.h.b16 %v3745
        %v4219 = vunpack.c.l.b16 %v3746
        %v4220 = vunpack.c.h.b16 %v3746
        %v4221 = vunpack.c.l.b16 %v3747
        %v4222 = vunpack.c.h.b16 %v3747
        %v4223 = vunpack.c.l.b16 %v3748
        %v4224 = vunpack.c.h.b16 %v3748
        %v4225 = vunpack.c.l.b16 %v3749
        %v4226 = vunpack.c.h.b16 %v3749
        %v4227 = vunpack.c.l.b16 %v3750
        %v4228 = vunpack.c.h.b16 %v3750
        %v4229 = vunpack.c.l.b16 %v3751
        %v4230 = vunpack.c.h.b16 %v3751
        %v4231 = vunpack.c.l.b16 %v3752
        %v4232 = vunpack.c.h.b16 %v3752
        %v4233 = vunpack.c.l.b16 %v3753
        %v4234 = vunpack.c.h.b16 %v3753
        %v4235 = vunpack.c.l.b16 %v3754
        %v4236 = vunpack.c.h.b16 %v3754
        %v4237 = vunpack.c.l.b16 %v3755
        %v4238 = vunpack.c.h.b16 %v3755
        %v4239 = vunpack.c.l.b16 %v3756
        %v4240 = vunpack.c.h.b16 %v3756
        %v4241 = vunpack.c.l.b16 %v3757
        %v4242 = vunpack.c.h.b16 %v3757
        %v4243 = vunpack.c.l.b16 %v3758
        %v4244 = vunpack.c.h.b16 %v3758
        %v4245 = vunpack.c.l.b16 %v3759
        %v4246 = vunpack.c.h.b16 %v3759
        %v4247 = vunpack.c.l.b16 %v3760
        %v4248 = vunpack.c.h.b16 %v3760
        %v4249 = vunpack.c.l.b16 %v3761
        %v4250 = vunpack.c.h.b16 %v3761
        %v4251 = vunpack.c.l.b16 %v3762
        %v4252 = vunpack.c.h.b16 %v3762
        %v4253 = vunpack.c.l.b16 %v3763
        %v4254 = vunpack.c.h.b16 %v3763
        %v4255 = vunpack.c.l.b16 %v3764
        %v4256 = vunpack.c.h.b16 %v3764
        %v4257 = vunpack.c.l.b16 %v3765
        %v4258 = vunpack.c.h.b16 %v3765
        %v4259 = vunpack.c.l.b16 %v3766
        %v4260 = vunpack.c.h.b16 %v3766
        %v4261 = vunpack.c.l.b16 %v3767
        %v4262 = vunpack.c.h.b16 %v3767
        %v4263 = vunpack.c.l.b16 %v3768
        %v4264 = vunpack.c.h.b16 %v3768
        %v4265 = vunpack.c.l.b16 %v3769
        %v4266 = vunpack.c.h.b16 %v3769
        %v4267 = vunpack.c.l.b16 %v3770
        %v4268 = vunpack.c.h.b16 %v3770
        %v4269 = vunpack.c.l.b16 %v3771
        %v4270 = vunpack.c.h.b16 %v3771
        %v4271 = vunpack.c.l.b16 %v3772
        %v4272 = vunpack.c.h.b16 %v3772
        %v4273 = vunpack.c.l.b16 %v3773
        %v4274 = vunpack.c.h.b16 %v3773
        %v4275 = vunpack.c.l.b16 %v3774
        %v4276 = vunpack.c.h.b16 %v3774
        %v4277 = vunpack.c.l.b16 %v3775
        %v4278 = vunpack.c.h.b16 %v3775
        %v4279 = vunpack.c.l.b16 %v3776
        %v4280 = vunpack.c.h.b16 %v3776
        %v4281 = vunpack.c.l.b16 %v3777
        %v4282 = vunpack.c.h.b16 %v3777
        %v4283 = vunpack.c.l.b16 %v3778
        %v4284 = vunpack.c.h.b16 %v3778
        %v4285 = vunpack.c.l.b16 %v3779
        %v4286 = vunpack.c.h.b16 %v3779
        %v4287 = vunpack.c.l.b16 %v3780
        %v4288 = vunpack.c.h.b16 %v3780
        %v4289 = vunpack.c.l.b16 %v3781
        %v4290 = vunpack.c.h.b16 %v3781
        %v4291 = vunpack.c.l.b16 %v3782
        %v4292 = vunpack.c.h.b16 %v3782
        %v4293 = vpack.c.b16 %v4007, %v4005
        %v4294 = vpack.c.b16 %v4008, %v4006
        %v4295 = vpack.c.b16 %v4011, %v4009
        %v4296 = vpack.c.b16 %v4012, %v4010
        %v4297 = vpack.c.b16 %v4015, %v4013
        %v4298 = vpack.c.b16 %v4016, %v4014
        %v4299 = vpack.c.b16 %v4019, %v4017
        %v4300 = vpack.c.b16 %v4020, %v4018
        %v4301 = vpack.c.b16 %v4023, %v4021
        %v4302 = vpack.c.b16 %v4024, %v4022
        %v4303 = vpack.c.b16 %v4027, %v4025
        %v4304 = vpack.c.b16 %v4028, %v4026
        %v4305 = vpack.c.b16 %v4031, %v4029
        %v4306 = vpack.c.b16 %v4032, %v4030
        %v4307 = vpack.c.b16 %v4035, %v4033
        %v4308 = vpack.c.b16 %v4036, %v4034
        %v4309 = vpack.c.b16 %v4039, %v4037
        %v4310 = vpack.c.b16 %v4040, %v4038
        %v4311 = vpack.c.b16 %v4043, %v4041
        %v4312 = vpack.c.b16 %v4044, %v4042
        %v4313 = vpack.c.b16 %v4047, %v4045
        %v4314 = vpack.c.b16 %v4048, %v4046
        %v4315 = vpack.c.b16 %v4051, %v4049
        %v4316 = vpack.c.b16 %v4052, %v4050
        %v4317 = vpack.c.b16 %v4055, %v4053
        %v4318 = vpack.c.b16 %v4056, %v4054
        %v4319 = vpack.c.b16 %v4059, %v4057
        %v4320 = vpack.c.b16 %v4060, %v4058
        %v4321 = vpack.c.b16 %v4063, %v4061
        %v4322 = vpack.c.b16 %v4064, %v4062
        %v4323 = vpack.c.b16 %v4067, %v4065
        %v4324 = vpack.c.b16 %v4068, %v4066
        %v4325 = vpack.c.b16 %v4071, %v4069
        %v4326 = vpack.c.b16 %v4072, %v4070
        %v4327 = vpack.c.b16 %v4075, %v4073
        %v4328 = vpack.c.b16 %v4076, %v4074
        %v4329 = vpack.c.b16 %v4079, %v4077
        %v4330 = vpack.c.b16 %v4080, %v4078
        %v4331 = vpack.c.b16 %v4083, %v4081
        %v4332 = vpack.c.b16 %v4084, %v4082
        %v4333 = vpack.c.b16 %v4087, %v4085
        %v4334 = vpack.c.b16 %v4088, %v4086
        %v4335 = vpack.c.b16 %v4091, %v4089
        %v4336 = vpack.c.b16 %v4092, %v4090
        %v4337 = vpack.c.b16 %v4095, %v4093
        %v4338 = vpack.c.b16 %v4096, %v4094
        %v4339 = vpack.c.b16 %v4099, %v4097
        %v4340 = vpack.c.b16 %v4100, %v4098
        %v4341 = vpack.c.b16 %v4103, %v4101
        %v4342 = vpack.c.b16 %v4104, %v4102
        %v4343 = vpack.c.b16 %v4107, %v4105
        %v4344 = vpack.c.b16 %v4108, %v4106
        %v4345 = vpack.c.b16 %v4111, %v4109
        %v4346 = vpack.c.b16 %v4112, %v4110
        %v4347 = vpack.c.b16 %v4115, %v4113
        %v4348 = vpack.c.b16 %v4116, %v4114
        %v4349 = vpack.c.b16 %v4119, %v4117
        %v4350 = vpack.c.b16 %v4120, %v4118
        %v4351 = vpack.c.b16 %v4123, %v4121
        %v4352 = vpack.c.b16 %v4124, %v4122
        %v4353 = vpack.c.b16 %v4127, %v4125
        %v4354 = vpack.c.b16 %v4128, %v4126
        %v4355 = vpack.c.b16 %v4131, %v4129
        %v4356 = vpack.c.b16 %v4132, %v4130
        %v4357 = vpack.c.b16 %v4135, %v4133
        %v4358 = vpack.c.b16 %v4136, %v4134
        %v4359 = vpack.c.b16 %v4139, %v4137
        %v4360 = vpack.c.b16 %v4140, %v4138
        %v4361 = vpack.c.b16 %v4143, %v4141
        %v4362 = vpack.c.b16 %v4144, %v4142
        %v4363 = vpack.c.b16 %v4147, %v4145
        %v4364 = vpack.c.b16 %v4148, %v4146
        %v4365 = vpack.c.b16 %v4151, %v4149
        %v4366 = vpack.c.b16 %v4152, %v4150
        %v4367 = vpack.c.b16 %v4155, %v4153
        %v4368 = vpack.c.b16 %v4156, %v4154
        %v4369 = vpack.c.b16 %v4159, %v4157
        %v4370 = vpack.c.b16 %v4160, %v4158
        %v4371 = vpack.c.b16 %v4163, %v4161
        %v4372 = vpack.c.b16 %v4164, %v4162
        %v4373 = vpack.c.b16 %v4167, %v4165
        %v4374 = vpack.c.b16 %v4168, %v4166
        %v4375 = vpack.c.b16 %v4171, %v4169
        %v4376 = vpack.c.b16 %v4172, %v4170
        %v4377 = vpack.c.b16 %v4175, %v4173
        %v4378 = vpack.c.b16 %v4176, %v4174
        %v4379 = vpack.c.b16 %v4179, %v4177
        %v4380 = vpack.c.b16 %v4180, %v4178
        %v4381 = vpack.c.b16 %v4183, %v4181
        %v4382 = vpack.c.b16 %v4184, %v4182
        %v4383 = vpack.c.b16 %v4187, %v4185
        %v4384 = vpack.c.b16 %v4188, %v4186
        %v4385 = vpack.c.b16 %v4191, %v4189
        %v4386 = vpack.c.b16 %v4192, %v4190
        %v4387 = vpack.c.b16 %v4195, %v4193
        %v4388 = vpack.c.b16 %v4196, %v4194
        %v4389 = vpack.c.b16 %v4199, %v4197
        %v4390 = vpack.c.b16 %v4200, %v4198
        %v4391 = vpack.c.b16 %v4203, %v4201
        %v4392 = vpack.c.b16 %v4204, %v4202
        %v4393 = vpack.c.b16 %v4207, %v4205
        %v4394 = vpack.c.b16 %v4208, %v4206
        %v4395 = vpack.c.b16 %v4211, %v4209
        %v4396 = vpack.c.b16 %v4212, %v4210
        %v4397 = vpack.c.b16 %v4215, %v4213
        %v4398 = vpack.c.b16 %v4216, %v4214
        %v4399 = vpack.c.b16 %v4219, %v4217
        %v4400 = vpack.c.b16 %v4220, %v4218
        %v4401 = vpack.c.b16 %v4223, %v4221
        %v4402 = vpack.c.b16 %v4224, %v4222
        %v4403 = vpack.c.b16 %v4227, %v4225
        %v4404 = vpack.c.b16 %v4228, %v4226
        %v4405 = vpack.c.b16 %v4231, %v4229
        %v4406 = vpack.c.b16 %v4232, %v4230
        %v4407 = vpack.c.b16 %v4235, %v4233
        %v4408 = vpack.c.b16 %v4236, %v4234
        %v4409 = vpack.c.b16 %v4239, %v4237
        %v4410 = vpack.c.b16 %v4240, %v4238
        %v4411 = vpack.c.b16 %v4243, %v4241
        %v4412 = vpack.c.b16 %v4244, %v4242
        %v4413 = vpack.c.b16 %v4247, %v4245
        %v4414 = vpack.c.b16 %v4248, %v4246
        %v4415 = vpack.c.b16 %v4251, %v4249
        %v4416 = vpack.c.b16 %v4252, %v4250
        %v4417 = vpack.c.b16 %v4255, %v4253
        %v4418 = vpack.c.b16 %v4256, %v4254
        %v4419 = vpack.c.b16 %v4259, %v4257
        %v4420 = vpack.c.b16 %v4260, %v4258
        %v4421 = vpack.c.b16 %v4263, %v4261
        %v4422 = vpack.c.b16 %v4264, %v4262
        %v4423 = vpack.c.b16 %v4267, %v4265
        %v4424 = vpack.c.b16 %v4268, %v4266
        %v4425 = vpack.c.b16 %v4271, %v4269
        %v4426 = vpack.c.b16 %v4272, %v4270
        %v4427 = vpack.c.b16 %v4275, %v4273
        %v4428 = vpack.c.b16 %v4276, %v4274
        %v4429 = vpack.c.b16 %v4279, %v4277
        %v4430 = vpack.c.b16 %v4280, %v4278
        %v4431 = vpack.c.b16 %v4283, %v4281
        %v4432 = vpack.c.b16 %v4284, %v4282
        %v4433 = vpack.c.b16 %v4287, %v4285
        %v4434 = vpack.c.b16 %v4288, %v4286
        %v4435 = vpack.c.b16 %v4291, %v4289
        %v4436 = vpack.c.b16 %v4292, %v4290
        %4581 = vmatprep.subr.bf16.mxu0 %v4294
        %4582 = vmatpush1.bf16.msra.mxu0 %v4293
        %4583 = vmatprep.subr.bf16.mxu0 %v4296
        %4584 = vmatpush1.bf16.msra.mxu0 %v4295
        %4585 = vmatprep.subr.bf16.mxu0 %v4298
        %4586 = vmatpush1.bf16.msra.mxu0 %v4297
        %4587 = vmatprep.subr.bf16.mxu0 %v4300
        %4588 = vmatpush1.bf16.msra.mxu0 %v4299
        %4589 = vmatprep.subr.bf16.mxu0 %v4302
        %4590 = vmatpush1.bf16.msra.mxu0 %v4301
        %4591 = vmatprep.subr.bf16.mxu0 %v4304
        %4592 = vmatpush1.bf16.msra.mxu0 %v4303
        %4593 = vmatprep.subr.bf16.mxu0 %v4306
        %4594 = vmatpush1.bf16.msra.mxu0 %v4305
        %4595 = vmatprep.subr.bf16.mxu0 %v4308
        %4596 = vmatpush1.bf16.msra.mxu0 %v4307
        %4597 = vmatprep.subr.bf16.mxu0 %v4310
        %4598 = vmatpush1.bf16.msra.mxu0 %v4309
        %4599 = vmatprep.subr.bf16.mxu0 %v4312
        %4600 = vmatpush1.bf16.msra.mxu0 %v4311
        %4601 = vmatprep.subr.bf16.mxu0 %v4314
        %4602 = vmatpush1.bf16.msra.mxu0 %v4313
        %4603 = vmatprep.subr.bf16.mxu0 %v4316
        %4604 = vmatpush1.bf16.msra.mxu0 %v4315
        %4605 = vmatprep.subr.bf16.mxu0 %v4318
        %4606 = vmatpush1.bf16.msra.mxu0 %v4317
        %4607 = vmatprep.subr.bf16.mxu0 %v4320
        %4608 = vmatpush1.bf16.msra.mxu0 %v4319
        %4609 = vmatprep.subr.bf16.mxu0 %v4322
        %4610 = vmatpush1.bf16.msra.mxu0 %v4321
        %4611 = vmatprep.subr.bf16.mxu0 %v4324
        %4612 = vmatpush1.bf16.msra.mxu0 %v4323
        %4613 = vmatprep.mubr.bf16.mxu0 %v3826
        %4614 = vmatmul.mubr.bf16.gmra.mrb[0].mxu0 %v3825
        %v4615 = vpop.f32.mrb[0].mxu0
        %v4616 = vadd.f32 0.0, %v4615
        %v4617 = vpop.f32.mrb[0].mxu0
        %v4618 = vadd.f32 0.0, %v4617
        %v4619 = vpop.f32.mrb[0].mxu0
        %v4620 = vadd.f32 0.0, %v4619
        %v4621 = vpop.f32.mrb[0].mxu0
        %v4622 = vadd.f32 0.0, %v4621
        %4623 = vmatprep.mubr.bf16.mxu0 %v3835
        %4624 = vmatmul.mubr.bf16.gmra.mrb[0].mxu0 %v3834
        %v4625 = vpop.f32.mrb[0].mxu0
        %v4626 = vadd.f32 0.0, %v4625
        %v4627 = vpop.f32.mrb[0].mxu0
        %v4628 = vadd.f32 0.0, %v4627
        %v4629 = vpop.f32.mrb[0].mxu0
        %v4630 = vpop.f32.mrb[0].mxu0
        %4631 = vdwg.mxu0
        %4632 = vmatprep.subr.bf16.mxu0 %v4326
        %4633 = vmatpush1.bf16.msra.mxu0 %v4325
        %4634 = vmatprep.subr.bf16.mxu0 %v4328
        %4635 = vmatpush1.bf16.msra.mxu0 %v4327
        %4636 = vmatprep.subr.bf16.mxu0 %v4330
        %4637 = vmatpush1.bf16.msra.mxu0 %v4329
        %4638 = vmatprep.subr.bf16.mxu0 %v4332
        %4639 = vmatpush1.bf16.msra.mxu0 %v4331
        %4640 = vmatprep.subr.bf16.mxu0 %v4334
        %4641 = vmatpush1.bf16.msra.mxu0 %v4333
        %4642 = vmatprep.subr.bf16.mxu0 %v4336
        %4643 = vmatpush1.bf16.msra.mxu0 %v4335
        %4644 = vmatprep.subr.bf16.mxu0 %v4338
        %4645 = vmatpush1.bf16.msra.mxu0 %v4337
        %4646 = vmatprep.subr.bf16.mxu0 %v4340
        %4647 = vmatpush1.bf16.msra.mxu0 %v4339
        %4648 = vmatprep.subr.bf16.mxu0 %v4342
        %4649 = vmatpush1.bf16.msra.mxu0 %v4341
        %4650 = vmatprep.subr.bf16.mxu0 %v4344
        %4651 = vmatpush1.bf16.msra.mxu0 %v4343
        %4652 = vmatprep.subr.bf16.mxu0 %v4346
        %4653 = vmatpush1.bf16.msra.mxu0 %v4345
        %4654 = vmatprep.subr.bf16.mxu0 %v4348
        %4655 = vmatpush1.bf16.msra.mxu0 %v4347
        %4656 = vmatprep.subr.bf16.mxu0 %v4350
        %4657 = vmatpush1.bf16.msra.mxu0 %v4349
        %4658 = vmatprep.subr.bf16.mxu0 %v4352
        %4659 = vmatpush1.bf16.msra.mxu0 %v4351
        %4660 = vmatprep.subr.bf16.mxu0 %v4354
        %4661 = vmatpush1.bf16.msra.mxu0 %v4353
        %4662 = vmatprep.subr.bf16.mxu0 %v4356
        %4663 = vmatpush1.bf16.msra.mxu0 %v4355
        %4664 = vmatprep.mubr.bf16.mxu0 %v3828
        %4665 = vmatmul.mubr.bf16.gmra.mrb[0].mxu0 %v3827
        %v4666 = vpop.f32.mrb[0].mxu0
        %v4667 = vadd.f32 %v4616, %v4666
        %v4668 = vpop.f32.mrb[0].mxu0
        %v4669 = vadd.f32 %v4618, %v4668
        %v4670 = vpop.f32.mrb[0].mxu0
        %v4671 = vadd.f32 %v4620, %v4670
        %v4672 = vpop.f32.mrb[0].mxu0
        %v4673 = vadd.f32 %v4622, %v4672
        %4674 = vmatprep.mubr.bf16.mxu0 %v3837
        %4675 = vmatmul.mubr.bf16.gmra.mrb[0].mxu0 %v3836
        %v4676 = vpop.f32.mrb[0].mxu0
        %v4677 = vadd.f32 %v4626, %v4676
        %v4678 = vpop.f32.mrb[0].mxu0
        %v4679 = vadd.f32 %v4628, %v4678
        %v4680 = vpop.f32.mrb[0].mxu0
        %v4681 = vpop.f32.mrb[0].mxu0
        %4682 = vdwg.mxu0
        %4683 = vmatprep.subr.bf16.mxu0 %v4358
        %4684 = vmatpush1.bf16.msra.mxu0 %v4357
        %4685 = vmatprep.subr.bf16.mxu0 %v4360
        %4686 = vmatpush1.bf16.msra.mxu0 %v4359
        %4687 = vmatprep.subr.bf16.mxu0 %v4362
        %4688 = vmatpush1.bf16.msra.mxu0 %v4361
        %4689 = vmatprep.subr.bf16.mxu0 %v4364
        %4690 = vmatpush1.bf16.msra.mxu0 %v4363
        %4691 = vmatprep.subr.bf16.mxu0 %v4366
        %4692 = vmatpush1.bf16.msra.mxu0 %v4365
        %4693 = vmatprep.subr.bf16.mxu0 %v4368
        %4694 = vmatpush1.bf16.msra.mxu0 %v4367
        %4695 = vmatprep.subr.bf16.mxu0 %v4370
        %4696 = vmatpush1.bf16.msra.mxu0 %v4369
        %4697 = vmatprep.subr.bf16.mxu0 %v4372
        %4698 = vmatpush1.bf16.msra.mxu0 %v4371
        %4699 = vmatprep.subr.bf16.mxu0 %v4374
        %4700 = vmatpush1.bf16.msra.mxu0 %v4373
        %4701 = vmatprep.subr.bf16.mxu0 %v4376
        %4702 = vmatpush1.bf16.msra.mxu0 %v4375
        %4703 = vmatprep.subr.bf16.mxu0 %v4378
        %4704 = vmatpush1.bf16.msra.mxu0 %v4377
        %4705 = vmatprep.subr.bf16.mxu0 %v4380
        %4706 = vmatpush1.bf16.msra.mxu0 %v4379
        %4707 = vmatprep.subr.bf16.mxu0 %v4382
        %4708 = vmatpush1.bf16.msra.mxu0 %v4381
        %4709 = vmatprep.subr.bf16.mxu0 %v4384
        %4710 = vmatpush1.bf16.msra.mxu0 %v4383
        %4711 = vmatprep.subr.bf16.mxu0 %v4386
        %4712 = vmatpush1.bf16.msra.mxu0 %v4385
        %4713 = vmatprep.subr.bf16.mxu0 %v4388
        %4714 = vmatpush1.bf16.msra.mxu0 %v4387
        %4715 = vmatprep.mubr.bf16.mxu0 %v3830
        %4716 = vmatmul.mubr.bf16.gmra.mrb[0].mxu0 %v3829
        %v4717 = vpop.f32.mrb[0].mxu0
        %v4718 = vadd.f32 %v4667, %v4717
        %v4719 = vpop.f32.mrb[0].mxu0
        %v4720 = vadd.f32 %v4669, %v4719
        %v4721 = vpop.f32.mrb[0].mxu0
        %v4722 = vadd.f32 %v4671, %v4721
        %v4723 = vpop.f32.mrb[0].mxu0
        %v4724 = vadd.f32 %v4673, %v4723
        %4725 = vmatprep.mubr.bf16.mxu0 %v3839
        %4726 = vmatmul.mubr.bf16.gmra.mrb[0].mxu0 %v3838
        %v4727 = vpop.f32.mrb[0].mxu0
        %v4728 = vadd.f32 %v4677, %v4727
        %v4729 = vpop.f32.mrb[0].mxu0
        %v4730 = vadd.f32 %v4679, %v4729
        %v4731 = vpop.f32.mrb[0].mxu0
        %v4732 = vpop.f32.mrb[0].mxu0
        %4733 = vdwg.mxu0
        %4734 = vmatprep.subr.bf16.mxu0 %v4390
        %4735 = vmatpush1.bf16.msra.mxu0 %v4389
        %4736 = vmatprep.subr.bf16.mxu0 %v4392
        %4737 = vmatpush1.bf16.msra.mxu0 %v4391
        %4738 = vmatprep.subr.bf16.mxu0 %v4394
        %4739 = vmatpush1.bf16.msra.mxu0 %v4393
        %4740 = vmatprep.subr.bf16.mxu0 %v4396
        %4741 = vmatpush1.bf16.msra.mxu0 %v4395
        %4742 = vmatprep.subr.bf16.mxu0 %v4398
        %4743 = vmatpush1.bf16.msra.mxu0 %v4397
        %4744 = vmatprep.subr.bf16.mxu0 %v4400
        %4745 = vmatpush1.bf16.msra.mxu0 %v4399
        %4746 = vmatprep.subr.bf16.mxu0 %v4402
        %4747 = vmatpush1.bf16.msra.mxu0 %v4401
        %4748 = vmatprep.subr.bf16.mxu0 %v4404
        %4749 = vmatpush1.bf16.msra.mxu0 %v4403
        %4750 = vmatprep.subr.bf16.mxu0 %v4406
        %4751 = vmatpush1.bf16.msra.mxu0 %v4405
        %4752 = vmatprep.subr.bf16.mxu0 %v4408
        %4753 = vmatpush1.bf16.msra.mxu0 %v4407
        %4754 = vmatprep.subr.bf16.mxu0 %v4410
        %4755 = vmatpush1.bf16.msra.mxu0 %v4409
        %4756 = vmatprep.subr.bf16.mxu0 %v4412
        %4757 = vmatpush1.bf16.msra.mxu0 %v4411
        %4758 = vmatprep.subr.bf16.mxu0 %v4414
        %4759 = vmatpush1.bf16.msra.mxu0 %v4413
        %4760 = vmatprep.subr.bf16.mxu0 %v4416
        %4761 = vmatpush1.bf16.msra.mxu0 %v4415
        %4762 = vmatprep.subr.bf16.mxu0 %v4418
        %4763 = vmatpush1.bf16.msra.mxu0 %v4417
        %4764 = vmatprep.subr.bf16.mxu0 %v4420
        %4765 = vmatpush1.bf16.msra.mxu0 %v4419
        %4766 = vmatprep.mubr.bf16.mxu0 %v3832
        %4767 = vmatmul.mubr.bf16.gmra.mrb[0].mxu0 %v3831
        %v4768 = vpop.f32.mrb[0].mxu0
        %v4769 = vadd.f32 %v4718, %v4768
        %v4770 = vpop.f32.mrb[0].mxu0
        %v4771 = vadd.f32 %v4720, %v4770
        %v4772 = vpop.f32.mrb[0].mxu0
        %v4773 = vadd.f32 %v4722, %v4772
        %v4774 = vpop.f32.mrb[0].mxu0
        %v4775 = vadd.f32 %v4724, %v4774
        %4776 = vmatprep.mubr.bf16.mxu0 %v3841
        %4777 = vmatmul.mubr.bf16.gmra.mrb[0].mxu0 %v3840
        %v4778 = vpop.f32.mrb[0].mxu0
        %v4779 = vadd.f32 %v4728, %v4778
        %v4780 = vpop.f32.mrb[0].mxu0
        %v4781 = vadd.f32 %v4730, %v4780
        %v4782 = vpop.f32.mrb[0].mxu0
        %v4783 = vpop.f32.mrb[0].mxu0
        %4784 = vdwg.mxu0
        %4785 = vmatprep.subr.bf16.mxu0 %v4422
        %4786 = vmatpush1.bf16.msra.mxu0 %v4421
        %4787 = vmatprep.subr.bf16.mxu0 %v4424
        %4788 = vmatpush1.bf16.msra.mxu0 %v4423
        %4789 = vmatprep.subr.bf16.mxu0 %v4426
        %4790 = vmatpush1.bf16.msra.mxu0 %v4425
        %4791 = vmatprep.subr.bf16.mxu0 %v4428
        %4792 = vmatpush1.bf16.msra.mxu0 %v4427
        %4793 = vmatprep.subr.bf16.mxu0 %v4430
        %4794 = vmatpush1.bf16.msra.mxu0 %v4429
        %4795 = vmatprep.subr.bf16.mxu0 %v4432
        %4796 = vmatpush1.bf16.msra.mxu0 %v4431
        %4797 = vmatprep.subr.bf16.mxu0 %v4434
        %4798 = vmatpush1.bf16.msra.mxu0 %v4433
        %4799 = vmatprep.subr.bf16.mxu0 %v4436
        %4800 = vmatpush1.bf16.msra.mxu0 %v4435
        %4801 = vmatprep.subr.bf16.mxu0 0
        %4802 = vmatpush1.bf16.msra.mxu0 0
        %4803 = vmatprep.subr.bf16.mxu0 0
        %4804 = vmatpush1.bf16.msra.mxu0 0
        %4805 = vmatprep.subr.bf16.mxu0 0
        %4806 = vmatpush1.bf16.msra.mxu0 0
        %4807 = vmatprep.subr.bf16.mxu0 0
        %4808 = vmatpush1.bf16.msra.mxu0 0
        %4809 = vmatprep.subr.bf16.mxu0 0
        %4810 = vmatpush1.bf16.msra.mxu0 0
        %4811 = vmatprep.subr.bf16.mxu0 0
        %4812 = vmatpush1.bf16.msra.mxu0 0
        %4813 = vmatprep.subr.bf16.mxu0 0
        %4814 = vmatpush1.bf16.msra.mxu0 0
        %4815 = vmatprep.subr.bf16.mxu0 0
        %4816 = vmatpush1.bf16.msra.mxu0 0
        %4817 = vmatprep.mubr.bf16.mxu0 0
        %4818 = vmatmul.mubr.bf16.gmra.mrb[0].mxu0 %v3833
        %v4819 = vpop.f32.mrb[0].mxu0
        %v4820 = vadd.f32 %v4769, %v4819
        %v4821 = vpop.f32.mrb[0].mxu0
        %v4822 = vadd.f32 %v4771, %v4821
        %v4823 = vpop.f32.mrb[0].mxu0
        %v4824 = vadd.f32 %v4773, %v4823
        %v4825 = vpop.f32.mrb[0].mxu0
        %v4826 = vadd.f32 %v4775, %v4825
        %4827 = vmatprep.mubr.bf16.mxu0 0
        %4828 = vmatmul.mubr.bf16.gmra.mrb[0].mxu0 %v3842
        %v4829 = vpop.f32.mrb[0].mxu0
        %v4830 = vadd.f32 %v4779, %v4829
        %v4831 = vpop.f32.mrb[0].mxu0
        %v4832 = vadd.f32 %v4781, %v4831
        %v4833 = vpop.f32.mrb[0].mxu0
        %v4834 = vpop.f32.mrb[0].mxu0
        %4835 = vdwg.mxu0
        %v4836 = vmax.f32 %v4820, 0.0
        %v4837 = vmax.f32 %v4822, 0.0
        %v4838 = vmax.f32 %v4824, 0.0
        %v4839 = vmax.f32 %v4826, 0.0
        %v4840 = vmax.f32 %v4830, 0.0
        %v4841 = vmax.f32 %v4832, 0.0
        %v4848 = vrot.slane %v4836, 1
        %v4849 = vrot.slane %v4838, 1
        %v4850 = vsel %vm931, %v4848, %v4849
        %v4851 = vrot.slane %v4837, 1
        %v4852 = vrot.slane %v4839, 1
        %v4853 = vsel %vm931, %v4851, %v4852
        %v4854 = vrot.slane %v4840, 1
        %v4855 = vsel %vm931, %v4849, %v4854
        %v4856 = vrot.slane %v4841, 1
        %v4857 = vsel %vm931, %v4852, %v4856
        %v4864 = vmax.f32 %v4836, %v4850
        %v4865 = vmax.f32 %v4837, %v4853
        %v4866 = vmax.f32 %v4838, %v4855
        %v4867 = vmax.f32 %v4839, %v4857
        %v4868 = vmax.f32 %v4840, %v4854
        %v4869 = vmax.f32 %v4841, %v4856
        %v4876 = vrot.slane %v4864, 6
        %v4877 = vrot.slane %v4866, 6
        %v4878 = vsel %vm702, %v4876, %v4877
        %v4879 = vrot.slane %v4865, 6
        %v4880 = vrot.slane %v4867, 6
        %v4881 = vsel %vm702, %v4879, %v4880
        %v4882 = vrot.slane %v4868, 6
        %v4883 = vsel %vm702, %v4877, %v4882
        %v4884 = vrot.slane %v4869, 6
        %v4885 = vsel %vm702, %v4880, %v4884
        %v4890 = vmax.f32 %v4864, %v4878
        %v4891 = vmax.f32 %v4865, %v4881
        %v4892 = vmax.f32 %v4866, %v4883
        %v4893 = vmax.f32 %v4867, %v4885
        %v4894 = vld [vmem:[%s8] sm:$0xf]
        %v4895 = vld [vmem:[%s8 + $0x4] sm:$0xf]
        %v4896 = vpack.c.bf16 %v4892, %v4890
        %v4897 = vpack.c.bf16 %v4893, %v4891
        %v4900 = vunpack.c.l.b16 %v4894
        %v4901 = vunpack.c.l.b16 %v4895
        %v4902 = vpack.c.b16 %v4901, %v4900
        %vm4903 = vcmask 121856
        %v4905 = vsel %vm4903, %v4902, 0
        %v4908 = vand.u32 %v4896, %v1201
        %v4911 = vand.u32 %v4897, %v1201
        %4913 = vmatprep.subr.bf16.mxu0 %v4911
        %4914 = vmatpush1.bf16.msra.mxu0 %v4908
        %4915 = vmatprep.subr.bf16.mxu0 0
        %4916 = vmatpush1.bf16.msra.mxu0 0
        %4917 = vmatprep.subr.bf16.mxu0 0
        %4918 = vmatpush1.bf16.msra.mxu0 0
        %4919 = vmatprep.subr.bf16.mxu0 0
        %4920 = vmatpush1.bf16.msra.mxu0 0
        %4921 = vmatprep.subr.bf16.mxu0 0
        %4922 = vmatpush1.bf16.msra.mxu0 0
        %4923 = vmatprep.subr.bf16.mxu0 0
        %4924 = vmatpush1.bf16.msra.mxu0 0
        %4925 = vmatprep.subr.bf16.mxu0 0
        %4926 = vmatpush1.bf16.msra.mxu0 0
        %4927 = vmatprep.subr.bf16.mxu0 0
        %4928 = vmatpush1.bf16.msra.mxu0 0
        %4929 = vmatprep.subr.bf16.mxu0 0
        %4930 = vmatpush1.bf16.msra.mxu0 0
        %4931 = vmatprep.subr.bf16.mxu0 0
        %4932 = vmatpush1.bf16.msra.mxu0 0
        %4933 = vmatprep.subr.bf16.mxu0 0
        %4934 = vmatpush1.bf16.msra.mxu0 0
        %4935 = vmatprep.subr.bf16.mxu0 0
        %4936 = vmatpush1.bf16.msra.mxu0 0
        %4937 = vmatprep.subr.bf16.mxu0 0
        %4938 = vmatpush1.bf16.msra.mxu0 0
        %4939 = vmatprep.subr.bf16.mxu0 0
        %4940 = vmatpush1.bf16.msra.mxu0 0
        %4941 = vmatprep.subr.bf16.mxu0 0
        %4942 = vmatpush1.bf16.msra.mxu0 0
        %4943 = vmatprep.subr.bf16.mxu0 0
        %4944 = vmatpush1.bf16.msra.mxu0 0
        %4945 = vmatprep.mubr.bf16.mxu0 0
        %4946 = vmatmul.mubr.bf16.gmra.mrb[0].mxu0 %v4905
        %v4947 = vpop.f32.mrb[0].mxu0
        %v4948 = vadd.f32 0.0, %v4947
        %v4949 = vpop.f32.mrb[0].mxu0
        %v4950 = vadd.f32 0.0, %v4949
        %v4951 = vpop.f32.mrb[0].mxu0
        %v4952 = vadd.f32 0.0, %v4951
        %v4953 = vpop.f32.mrb[0].mxu0
        %v4954 = vadd.f32 0.0, %v4953
        %4955 = vdwg.mxu0
        %v4956 = vpack.c.bf16 %v4948, %v4948
        %v4957 = vpack.c.bf16 %v4950, %v4950
        %v4960 = vunpack.c.l.b16 %v4956
        %v4961 = vunpack.c.l.b16 %v4957
        %v4962 = vpack.c.b16 %v4961, %v4960
        %4964 = vst [vmem:[#allocation4] sm:$0x77] %v4962
        %v4966 = vshrl.u32 %v4962, 16
        %v4968 = vrot.slane %v4966, 4
        %v4969 = vshll.u32 %v4962, 16
        %v4971 = vrot.slane %v4969, 5
        %v4972 = vor.u32 %v4968, %v4971
        %v4973 = vrot.slane %v4972, 4
        %4975 = vst [vmem:[#allocation4 + $0x8] sm:$0x77] %v4973
        %v4976 = vrot.slane %v4962, 5
        %v4977 = vrot.slane %v4976, 4
        %4979 = vst [vmem:[#allocation4 + $0x10] sm:$0x77] %v4977
        %v4980 = vpack.c.bf16 %v4952, %v4948
        %v4981 = vpack.c.bf16 %v4954, %v4950
        %v4984 = vunpack.c.l.b16 %v4980
        %v4985 = vunpack.c.l.b16 %v4981
        %v4986 = vunpack.c.h.b16 %v4980
        %v4987 = vunpack.c.h.b16 %v4981
        %v4988 = vpack.c.b16 %v4985, %v4984
        %v4989 = vpack.c.b16 %v4987, %v4986
        %v4990 = vrot.slane %v4988, 6
        %v4991 = vrot.slane %v4990, 4
        %v4992 = vrot.slane %v4989, 6
        %v4993 = vsel %vm1729, %v4991, %v4992
        %4995 = vst [vmem:[#allocation4 + $0x18] sm:$0x77] %v4993
        %v4997 = vshrl.u32 %v4988, 16
        %v4999 = vrot.slane %v4997, 6
        %v5000 = vshll.u32 %v4988, 16
        %v5002 = vrot.slane %v5000, 7
        %v5003 = vor.u32 %v4999, %v5002
        %v5004 = vrot.slane %v5003, 4
        %v5006 = vshrl.u32 %v4989, 16
        %v5008 = vrot.slane %v5006, 6
        %v5009 = vshll.u32 %v4989, 16
        %v5011 = vrot.slane %v5009, 7
        %v5012 = vor.u32 %v5008, %v5011
        %v5013 = vsel %vm1844, %v5004, %v5012
        %5015 = vst [vmem:[#allocation4 + $0x20] sm:$0x77] %v5013
        %v5016 = vrot.slane %v4988, 7
        %v5017 = vrot.slane %v5016, 4
        %v5018 = vrot.slane %v4989, 7
        %v5019 = vsel %vm1935, %v5017, %v5018
        %5021 = vst [vmem:[#allocation4 + $0x28] sm:$0x77] %v5019
        %v5022 = vpack.c.bf16 %v4952, %v4952
        %v5023 = vpack.c.bf16 %v4954, %v4954
        %v5026 = vunpack.c.l.b16 %v5022
        %v5027 = vunpack.c.l.b16 %v5023
        %v5028 = vpack.c.b16 %v5027, %v5026
        %5030 = vst [vmem:[#allocation4 + $0x30] sm:$0x77] %v5028
        %v5032 = vshrl.u32 %v5028, 16
        %v5034 = vrot.slane %v5032, 4
        %v5035 = vshll.u32 %v5028, 16
        %v5037 = vrot.slane %v5035, 5
        %v5038 = vor.u32 %v5034, %v5037
        %v5039 = vrot.slane %v5038, 4
        %5041 = vst [vmem:[#allocation4 + $0x38] sm:$0x77] %v5039
        %v5042 = vrot.slane %v5028, 5
        %v5043 = vrot.slane %v5042, 4
        %5045 = vst [vmem:[#allocation4 + $0x40] sm:$0x77] %v5043
        %v5046 = vld [vmem:[#allocation4] sm:$0x77]
        %v5047 = vld [vmem:[#allocation4 + $0x8] sm:$0x77]
        %v5048 = vld [vmem:[#allocation4 + $0x10] sm:$0x77]
        %v5049 = vld [vmem:[#allocation4 + $0x18] sm:$0x77]
        %v5050 = vld [vmem:[#allocation4 + $0x20] sm:$0x77]
        %v5051 = vld [vmem:[#allocation4 + $0x28] sm:$0x77]
        %v5052 = vld [vmem:[#allocation4 + $0x30] sm:$0x77]
        %v5053 = vld [vmem:[#allocation4 + $0x38] sm:$0x77]
        %v5054 = vld [vmem:[#allocation4 + $0x40] sm:$0x77]
        %v5055 = vld [vmem:[%s5] sm:$0xff]
        %v5056 = vld [vmem:[%s5 + $0x8] sm:$0xff]
        %v5057 = vld [vmem:[%s5 + $0x10] sm:$0xff]
        %v5058 = vld [vmem:[%s5 + $0x18] sm:$0xff]
        %v5059 = vld [vmem:[%s5 + $0x20] sm:$0xff]
        %v5060 = vld [vmem:[%s5 + $0x28] sm:$0xff]
        %v5061 = vld [vmem:[%s5 + $0x30] sm:$0xff]
        %v5062 = vld [vmem:[%s5 + $0x38] sm:$0xff]
        %v5063 = vld [vmem:[%s5 + $0x40] sm:$0xff]
        %v5064 = vld [vmem:[%s5 + $0x48] sm:$0xff]
        %v5065 = vld [vmem:[%s5 + $0x50] sm:$0xff]
        %v5066 = vld [vmem:[%s5 + $0x58] sm:$0xff]
        %v5067 = vld [vmem:[%s5 + $0x60] sm:$0xff]
        %v5068 = vld [vmem:[%s5 + $0x68] sm:$0xff]
        %v5069 = vld [vmem:[%s5 + $0x70] sm:$0xff]
        %v5070 = vld [vmem:[%s5 + $0x78] sm:$0xff]
        %v5071 = vld [vmem:[%s5 + $0x80] sm:$0xff]
        %v5072 = vld [vmem:[%s5 + $0x88] sm:$0xff]
        %v5073 = vld [vmem:[%s5 + $0x90] sm:$0xff]
        %v5074 = vld [vmem:[%s5 + $0x98] sm:$0xff]
        %v5075 = vld [vmem:[%s5 + $0xa0] sm:$0xff]
        %v5076 = vld [vmem:[%s5 + $0xa8] sm:$0xff]
        %v5077 = vld [vmem:[%s5 + $0xb0] sm:$0xff]
        %v5078 = vld [vmem:[%s5 + $0xb8] sm:$0xff]
        %v5079 = vld [vmem:[%s5 + $0xc0] sm:$0xff]
        %v5080 = vld [vmem:[%s5 + $0xc8] sm:$0xff]
        %v5081 = vld [vmem:[%s5 + $0xd0] sm:$0xff]
        %v5082 = vld [vmem:[%s5 + $0xd8] sm:$0xff]
        %v5083 = vld [vmem:[%s5 + $0xe0] sm:$0xff]
        %v5084 = vld [vmem:[%s5 + $0xe8] sm:$0xff]
        %v5085 = vld [vmem:[%s5 + $0xf0] sm:$0xff]
        %v5086 = vld [vmem:[%s5 + $0xf8] sm:$0xff]
        %v5087 = vld [vmem:[%s5 + $0x100] sm:$0xff]
        %v5088 = vld [vmem:[%s5 + $0x108] sm:$0xff]
        %v5089 = vld [vmem:[%s5 + $0x110] sm:$0xff]
        %v5090 = vld [vmem:[%s5 + $0x118] sm:$0xff]
        %v5091 = vld [vmem:[%s5 + $0x120] sm:$0xff]
        %v5092 = vld [vmem:[%s5 + $0x128] sm:$0xff]
        %v5093 = vld [vmem:[%s5 + $0x130] sm:$0xff]
        %v5094 = vld [vmem:[%s5 + $0x138] sm:$0xff]
        %v5095 = vld [vmem:[%s5 + $0x140] sm:$0xff]
        %v5096 = vld [vmem:[%s5 + $0x148] sm:$0xff]
        %v5097 = vld [vmem:[%s5 + $0x150] sm:$0xff]
        %v5098 = vld [vmem:[%s5 + $0x158] sm:$0xff]
        %v5099 = vld [vmem:[%s5 + $0x160] sm:$0xff]
        %v5100 = vld [vmem:[%s5 + $0x168] sm:$0xff]
        %v5101 = vld [vmem:[%s5 + $0x170] sm:$0xff]
        %v5102 = vld [vmem:[%s5 + $0x178] sm:$0xff]
        %v5103 = vld [vmem:[%s5 + $0x180] sm:$0xff]
        %v5104 = vld [vmem:[%s5 + $0x188] sm:$0xff]
        %v5105 = vld [vmem:[%s5 + $0x190] sm:$0xff]
        %v5106 = vld [vmem:[%s5 + $0x198] sm:$0xff]
        %v5107 = vld [vmem:[%s5 + $0x1a0] sm:$0xff]
        %v5108 = vld [vmem:[%s5 + $0x1a8] sm:$0xff]
        %v5109 = vld [vmem:[%s5 + $0x1b0] sm:$0xff]
        %v5110 = vld [vmem:[%s5 + $0x1b8] sm:$0xff]
        %v5111 = vld [vmem:[%s5 + $0x1c0] sm:$0xff]
        %v5112 = vld [vmem:[%s5 + $0x1c8] sm:$0xff]
        %v5113 = vld [vmem:[%s5 + $0x1d0] sm:$0xff]
        %v5114 = vld [vmem:[%s5 + $0x1d8] sm:$0xff]
        %v5115 = vld [vmem:[%s5 + $0x1e0] sm:$0xff]
        %v5116 = vld [vmem:[%s5 + $0x1e8] sm:$0xff]
        %v5117 = vld [vmem:[%s5 + $0x1f0] sm:$0xff]
        %v5118 = vld [vmem:[%s5 + $0x1f8] sm:$0xff]
        %v5119 = vld [vmem:[%s5 + $0x200] sm:$0xff]
        %v5120 = vld [vmem:[%s5 + $0x208] sm:$0xff]
        %v5121 = vld [vmem:[%s5 + $0x210] sm:$0xff]
        %v5122 = vld [vmem:[%s5 + $0x218] sm:$0xff]
        %v5123 = vld [vmem:[%s5 + $0x220] sm:$0xff]
        %v5124 = vld [vmem:[%s5 + $0x228] sm:$0xff]
        %v5125 = vld [vmem:[%s5 + $0x230] sm:$0xff]
        %v5126 = vld [vmem:[%s5 + $0x238] sm:$0xff]
        %v5127 = vld [vmem:[%s5 + $0x240] sm:$0xff]
        %v5128 = vld [vmem:[%s5 + $0x248] sm:$0xff]
        %v5129 = vld [vmem:[%s5 + $0x250] sm:$0xff]
        %v5130 = vld [vmem:[%s5 + $0x258] sm:$0xff]
        %v5131 = vld [vmem:[%s5 + $0x260] sm:$0xff]
        %v5132 = vld [vmem:[%s5 + $0x268] sm:$0xff]
        %v5133 = vld [vmem:[%s5 + $0x270] sm:$0xff]
        %v5134 = vld [vmem:[%s5 + $0x278] sm:$0xff]
        %v5135 = vld [vmem:[%s5 + $0x280] sm:$0xff]
        %v5136 = vld [vmem:[%s5 + $0x288] sm:$0xff]
        %v5137 = vld [vmem:[%s5 + $0x290] sm:$0xff]
        %v5138 = vld [vmem:[%s5 + $0x298] sm:$0xff]
        %v5139 = vld [vmem:[%s5 + $0x2a0] sm:$0xff]
        %v5140 = vld [vmem:[%s5 + $0x2a8] sm:$0xff]
        %v5141 = vld [vmem:[%s5 + $0x2b0] sm:$0xff]
        %v5142 = vld [vmem:[%s5 + $0x2b8] sm:$0xff]
        %v5143 = vld [vmem:[%s5 + $0x2c0] sm:$0xff]
        %v5144 = vld [vmem:[%s5 + $0x2c8] sm:$0xff]
        %v5145 = vld [vmem:[%s5 + $0x2d0] sm:$0xff]
        %v5146 = vld [vmem:[%s5 + $0x2d8] sm:$0xff]
        %v5147 = vld [vmem:[%s5 + $0x2e0] sm:$0xff]
        %v5148 = vld [vmem:[%s5 + $0x2e8] sm:$0xff]
        %v5149 = vld [vmem:[%s5 + $0x2f0] sm:$0xff]
        %v5150 = vld [vmem:[%s5 + $0x2f8] sm:$0xff]
        %v5151 = vld [vmem:[%s5 + $0x300] sm:$0xff]
        %v5152 = vld [vmem:[%s5 + $0x308] sm:$0xff]
        %v5153 = vld [vmem:[%s5 + $0x310] sm:$0xff]
        %v5154 = vld [vmem:[%s5 + $0x318] sm:$0xff]
        %v5155 = vld [vmem:[%s5 + $0x320] sm:$0xff]
        %v5156 = vld [vmem:[%s5 + $0x328] sm:$0xff]
        %v5157 = vld [vmem:[%s5 + $0x330] sm:$0xff]
        %v5158 = vld [vmem:[%s5 + $0x338] sm:$0xff]
        %v5159 = vld [vmem:[%s5 + $0x340] sm:$0xff]
        %v5160 = vld [vmem:[%s5 + $0x348] sm:$0xff]
        %v5161 = vld [vmem:[%s5 + $0x350] sm:$0xff]
        %v5162 = vld [vmem:[%s5 + $0x358] sm:$0xff]
        %v5163 = vld [vmem:[%s5 + $0x360] sm:$0xff]
        %v5164 = vld [vmem:[%s5 + $0x368] sm:$0xff]
        %v5165 = vld [vmem:[%s5 + $0x370] sm:$0xff]
        %v5166 = vld [vmem:[%s5 + $0x378] sm:$0xff]
        %v5167 = vld [vmem:[%s5 + $0x380] sm:$0xff]
        %v5168 = vld [vmem:[%s5 + $0x388] sm:$0xff]
        %v5169 = vld [vmem:[%s5 + $0x390] sm:$0xff]
        %v5170 = vld [vmem:[%s5 + $0x398] sm:$0xff]
        %v5171 = vld [vmem:[%s5 + $0x3a0] sm:$0xff]
        %v5172 = vld [vmem:[%s5 + $0x3a8] sm:$0xff]
        %v5173 = vld [vmem:[%s5 + $0x3b0] sm:$0xff]
        %v5174 = vld [vmem:[%s5 + $0x3b8] sm:$0xff]
        %v5175 = vld [vmem:[%s5 + $0x3c0] sm:$0xff]
        %v5176 = vld [vmem:[%s5 + $0x3c8] sm:$0xff]
        %v5177 = vld [vmem:[%s5 + $0x3d0] sm:$0xff]
        %v5178 = vld [vmem:[%s5 + $0x3d8] sm:$0xff]
        %v5179 = vld [vmem:[%s5 + $0x3e0] sm:$0xff]
        %v5180 = vld [vmem:[%s5 + $0x3e8] sm:$0xff]
        %v5181 = vld [vmem:[%s5 + $0x3f0] sm:$0xff]
        %v5182 = vld [vmem:[%s5 + $0x3f8] sm:$0xff]
        %v5183 = vld [vmem:[%s5 + $0x400] sm:$0xff]
        %v5184 = vld [vmem:[%s5 + $0x408] sm:$0xff]
        %v5185 = vld [vmem:[%s5 + $0x410] sm:$0xff]
        %v5186 = vld [vmem:[%s5 + $0x418] sm:$0xff]
        %v5187 = vld [vmem:[%s5 + $0x420] sm:$0xff]
        %v5188 = vld [vmem:[%s5 + $0x428] sm:$0xff]
        %v5189 = vld [vmem:[%s5 + $0x430] sm:$0xff]
        %v5190 = vld [vmem:[%s5 + $0x438] sm:$0xff]
        %v5191 = vld [vmem:[%s5 + $0x440] sm:$0xff]
        %v5192 = vld [vmem:[%s5 + $0x448] sm:$0xff]
        %v5193 = vld [vmem:[%s5 + $0x450] sm:$0xff]
        %v5194 = vld [vmem:[%s5 + $0x458] sm:$0xff]
        %v5195 = vld [vmem:[%s5 + $0x460] sm:$0xff]
        %v5196 = vld [vmem:[%s5 + $0x468] sm:$0xff]
        %v5197 = vld [vmem:[%s5 + $0x470] sm:$0xff]
        %v5198 = vld [vmem:[%s5 + $0x478] sm:$0xff]
        %v5199 = vld [vmem:[%s5 + $0x480] sm:$0xff]
        %v5200 = vld [vmem:[%s5 + $0x488] sm:$0xff]
        %v5201 = vld [vmem:[%s5 + $0x490] sm:$0xff]
        %v5202 = vld [vmem:[%s5 + $0x498] sm:$0xff]
        %v5203 = vld [vmem:[%s5 + $0x4a0] sm:$0xff]
        %v5204 = vld [vmem:[%s5 + $0x4a8] sm:$0xff]
        %v5205 = vld [vmem:[%s5 + $0x4b0] sm:$0xff]
        %v5206 = vld [vmem:[%s5 + $0x4b8] sm:$0xff]
        %v5207 = vld [vmem:[%s5 + $0x4c0] sm:$0xff]
        %v5208 = vld [vmem:[%s5 + $0x4c8] sm:$0xff]
        %v5209 = vld [vmem:[%s5 + $0x4d0] sm:$0xff]
        %v5210 = vld [vmem:[%s5 + $0x4d8] sm:$0xff]
        %v5211 = vld [vmem:[%s5 + $0x4e0] sm:$0xff]
        %v5212 = vld [vmem:[%s5 + $0x4e8] sm:$0xff]
        %v5213 = vld [vmem:[%s5 + $0x4f0] sm:$0xff]
        %v5214 = vld [vmem:[%s5 + $0x4f8] sm:$0xff]
        %v5215 = vld [vmem:[%s5 + $0x500] sm:$0xff]
        %v5216 = vld [vmem:[%s5 + $0x508] sm:$0xff]
        %v5217 = vld [vmem:[%s5 + $0x510] sm:$0xff]
        %v5218 = vld [vmem:[%s5 + $0x518] sm:$0xff]
        %v5219 = vld [vmem:[%s5 + $0x520] sm:$0xff]
        %v5220 = vld [vmem:[%s5 + $0x528] sm:$0xff]
        %v5221 = vld [vmem:[%s5 + $0x530] sm:$0xff]
        %v5222 = vld [vmem:[%s5 + $0x538] sm:$0xff]
        %v5223 = vld [vmem:[%s5 + $0x540] sm:$0xff]
        %v5224 = vld [vmem:[%s5 + $0x548] sm:$0xff]
        %v5225 = vld [vmem:[%s5 + $0x550] sm:$0xff]
        %v5226 = vld [vmem:[%s5 + $0x558] sm:$0xff]
        %v5227 = vld [vmem:[%s5 + $0x560] sm:$0xff]
        %v5228 = vld [vmem:[%s5 + $0x568] sm:$0xff]
        %v5229 = vld [vmem:[%s5 + $0x570] sm:$0xff]
        %v5230 = vld [vmem:[%s5 + $0x578] sm:$0xff]
        %v5231 = vld [vmem:[%s5 + $0x580] sm:$0xff]
        %v5232 = vld [vmem:[%s5 + $0x588] sm:$0xff]
        %v5233 = vld [vmem:[%s5 + $0x590] sm:$0xff]
        %v5234 = vld [vmem:[%s5 + $0x598] sm:$0xff]
        %v5235 = vld [vmem:[%s5 + $0x5a0] sm:$0xff]
        %v5236 = vld [vmem:[%s5 + $0x5a8] sm:$0xff]
        %v5237 = vld [vmem:[%s5 + $0x5b0] sm:$0xff]
        %v5238 = vld [vmem:[%s5 + $0x5b8] sm:$0xff]
        %v5239 = vld [vmem:[%s5 + $0x5c0] sm:$0xff]
        %v5240 = vld [vmem:[%s5 + $0x5c8] sm:$0xff]
        %v5241 = vld [vmem:[%s5 + $0x5d0] sm:$0xff]
        %v5242 = vld [vmem:[%s5 + $0x5d8] sm:$0xff]
        %v5243 = vld [vmem:[%s5 + $0x5e0] sm:$0xff]
        %v5244 = vld [vmem:[%s5 + $0x5e8] sm:$0xff]
        %v5245 = vld [vmem:[%s5 + $0x5f0] sm:$0xff]
        %v5246 = vld [vmem:[%s5 + $0x5f8] sm:$0xff]
        %v5247 = vld [vmem:[%s5 + $0x600] sm:$0xff]
        %v5248 = vld [vmem:[%s5 + $0x608] sm:$0xff]
        %v5249 = vld [vmem:[%s5 + $0x610] sm:$0xff]
        %v5250 = vld [vmem:[%s5 + $0x618] sm:$0xff]
        %v5251 = vld [vmem:[%s5 + $0x620] sm:$0xff]
        %v5252 = vld [vmem:[%s5 + $0x628] sm:$0xff]
        %v5253 = vld [vmem:[%s5 + $0x630] sm:$0xff]
        %v5254 = vld [vmem:[%s5 + $0x638] sm:$0xff]
        %v5255 = vld [vmem:[%s5 + $0x640] sm:$0xff]
        %v5256 = vld [vmem:[%s5 + $0x648] sm:$0xff]
        %v5257 = vld [vmem:[%s5 + $0x650] sm:$0xff]
        %v5258 = vld [vmem:[%s5 + $0x658] sm:$0xff]
        %v5259 = vld [vmem:[%s5 + $0x660] sm:$0xff]
        %v5260 = vld [vmem:[%s5 + $0x668] sm:$0xff]
        %v5261 = vld [vmem:[%s5 + $0x670] sm:$0xff]
        %v5262 = vld [vmem:[%s5 + $0x678] sm:$0xff]
        %v5263 = vld [vmem:[%s5 + $0x680] sm:$0xff]
        %v5264 = vld [vmem:[%s5 + $0x688] sm:$0xff]
        %v5265 = vld [vmem:[%s5 + $0x690] sm:$0xff]
        %v5266 = vld [vmem:[%s5 + $0x698] sm:$0xff]
        %v5267 = vld [vmem:[%s5 + $0x6a0] sm:$0xff]
        %v5268 = vld [vmem:[%s5 + $0x6a8] sm:$0xff]
        %v5269 = vld [vmem:[%s5 + $0x6b0] sm:$0xff]
        %v5270 = vld [vmem:[%s5 + $0x6b8] sm:$0xff]
        %v5271 = vld [vmem:[%s5 + $0x6c0] sm:$0xff]
        %v5272 = vld [vmem:[%s5 + $0x6c8] sm:$0xff]
        %v5273 = vld [vmem:[%s5 + $0x6d0] sm:$0xff]
        %v5274 = vld [vmem:[%s5 + $0x6d8] sm:$0xff]
        %v5275 = vld [vmem:[%s5 + $0x6e0] sm:$0xff]
        %v5276 = vld [vmem:[%s5 + $0x6e8] sm:$0xff]
        %v5277 = vld [vmem:[%s5 + $0x6f0] sm:$0xff]
        %v5278 = vld [vmem:[%s5 + $0x6f8] sm:$0xff]
        %v5279 = vld [vmem:[%s5 + $0x700] sm:$0xff]
        %v5280 = vld [vmem:[%s5 + $0x708] sm:$0xff]
        %v5281 = vld [vmem:[%s5 + $0x710] sm:$0xff]
        %v5282 = vld [vmem:[%s5 + $0x718] sm:$0xff]
        %v5283 = vld [vmem:[%s5 + $0x720] sm:$0xff]
        %v5284 = vld [vmem:[%s5 + $0x728] sm:$0xff]
        %v5285 = vld [vmem:[%s5 + $0x730] sm:$0xff]
        %v5286 = vld [vmem:[%s5 + $0x738] sm:$0xff]
        %v5287 = vld [vmem:[%s5 + $0x740] sm:$0xff]
        %v5288 = vld [vmem:[%s5 + $0x748] sm:$0xff]
        %v5289 = vld [vmem:[%s5 + $0x750] sm:$0xff]
        %v5290 = vld [vmem:[%s5 + $0x758] sm:$0xff]
        %v5291 = vld [vmem:[%s5 + $0x760] sm:$0xff]
        %v5292 = vld [vmem:[%s5 + $0x768] sm:$0xff]
        %v5293 = vld [vmem:[%s5 + $0x770] sm:$0xff]
        %v5294 = vld [vmem:[%s5 + $0x778] sm:$0xff]
        %v5295 = vld [vmem:[%s5 + $0x780] sm:$0xff]
        %v5296 = vld [vmem:[%s5 + $0x788] sm:$0xff]
        %v5297 = vld [vmem:[%s5 + $0x790] sm:$0xff]
        %v5298 = vld [vmem:[%s5 + $0x798] sm:$0xff]
        %v5299 = vld [vmem:[%s5 + $0x7a0] sm:$0xff]
        %v5300 = vld [vmem:[%s5 + $0x7a8] sm:$0xff]
        %v5301 = vld [vmem:[%s5 + $0x7b0] sm:$0xff]
        %v5302 = vld [vmem:[%s5 + $0x7b8] sm:$0xff]
        %v5303 = vld [vmem:[%s5 + $0x7c0] sm:$0xff]
        %v5304 = vld [vmem:[%s5 + $0x7c8] sm:$0xff]
        %v5305 = vld [vmem:[%s5 + $0x7d0] sm:$0xff]
        %v5306 = vld [vmem:[%s5 + $0x7d8] sm:$0xff]
        %v5307 = vld [vmem:[%s5 + $0x7e0] sm:$0xff]
        %v5308 = vld [vmem:[%s5 + $0x7e8] sm:$0xff]
        %v5309 = vld [vmem:[%s5 + $0x7f0] sm:$0xff]
        %v5310 = vld [vmem:[%s5 + $0x7f8] sm:$0xff]
        %v5311 = vld [vmem:[%s5 + $0x800] sm:$0xff]
        %v5312 = vld [vmem:[%s5 + $0x808] sm:$0xff]
        %v5313 = vld [vmem:[%s5 + $0x810] sm:$0xff]
        %v5314 = vld [vmem:[%s5 + $0x818] sm:$0xff]
        %v5315 = vld [vmem:[%s5 + $0x820] sm:$0xff]
        %v5316 = vld [vmem:[%s5 + $0x828] sm:$0xff]
        %v5317 = vld [vmem:[%s5 + $0x830] sm:$0xff]
        %v5318 = vld [vmem:[%s5 + $0x838] sm:$0xff]
        %v5319 = vld [vmem:[%s5 + $0x840] sm:$0xff]
        %v5320 = vld [vmem:[%s5 + $0x848] sm:$0xff]
        %v5321 = vld [vmem:[%s5 + $0x850] sm:$0xff]
        %v5322 = vld [vmem:[%s5 + $0x858] sm:$0xff]
        %v5323 = vld [vmem:[%s5 + $0x860] sm:$0xff]
        %v5324 = vld [vmem:[%s5 + $0x868] sm:$0xff]
        %v5325 = vld [vmem:[%s5 + $0x870] sm:$0xff]
        %v5326 = vld [vmem:[%s5 + $0x878] sm:$0xff]
        %v5327 = vld [vmem:[%s5 + $0x880] sm:$0xff]
        %v5328 = vld [vmem:[%s5 + $0x888] sm:$0xff]
        %v5329 = vld [vmem:[%s5 + $0x890] sm:$0xff]
        %v5330 = vld [vmem:[%s5 + $0x898] sm:$0xff]
        %v5331 = vld [vmem:[%s5 + $0x8a0] sm:$0xff]
        %v5332 = vld [vmem:[%s5 + $0x8a8] sm:$0xff]
        %v5333 = vld [vmem:[%s5 + $0x8b0] sm:$0xff]
        %v5334 = vld [vmem:[%s5 + $0x8b8] sm:$0xff]
        %v5335 = vld [vmem:[%s5 + $0x8c0] sm:$0xff]
        %v5336 = vld [vmem:[%s5 + $0x8c8] sm:$0xff]
        %v5337 = vld [vmem:[%s5 + $0x8d0] sm:$0xff]
        %v5338 = vld [vmem:[%s5 + $0x8d8] sm:$0xff]
        %v5339 = vld [vmem:[%s5 + $0x8e0] sm:$0xff]
        %v5340 = vld [vmem:[%s5 + $0x8e8] sm:$0xff]
        %v5341 = vld [vmem:[%s5 + $0x8f0] sm:$0xff]
        %v5342 = vld [vmem:[%s5 + $0x8f8] sm:$0xff]
        %v5343 = vld [vmem:[%s5 + $0x900] sm:$0xff]
        %v5344 = vld [vmem:[%s5 + $0x908] sm:$0xff]
        %v5345 = vld [vmem:[%s5 + $0x910] sm:$0xff]
        %v5346 = vld [vmem:[%s5 + $0x918] sm:$0xff]
        %v5347 = vld [vmem:[%s5 + $0x920] sm:$0xff]
        %v5348 = vld [vmem:[%s5 + $0x928] sm:$0xff]
        %v5349 = vld [vmem:[%s5 + $0x930] sm:$0xff]
        %v5350 = vld [vmem:[%s5 + $0x938] sm:$0xff]
        %v5351 = vld [vmem:[%s5 + $0x940] sm:$0xff]
        %v5352 = vld [vmem:[%s5 + $0x948] sm:$0xff]
        %v5353 = vld [vmem:[%s5 + $0x950] sm:$0xff]
        %v5354 = vld [vmem:[%s5 + $0x958] sm:$0xff]
        %v5355 = vld [vmem:[%s5 + $0x960] sm:$0xff]
        %v5356 = vld [vmem:[%s5 + $0x968] sm:$0xff]
        %v5357 = vld [vmem:[%s5 + $0x970] sm:$0xff]
        %v5358 = vld [vmem:[%s5 + $0x978] sm:$0xff]
        %v5359 = vld [vmem:[%s5 + $0x980] sm:$0xff]
        %v5360 = vld [vmem:[%s5 + $0x988] sm:$0xff]
        %v5361 = vld [vmem:[%s5 + $0x990] sm:$0xff]
        %v5362 = vld [vmem:[%s5 + $0x998] sm:$0xff]
        %v5363 = vld [vmem:[%s5 + $0x9a0] sm:$0xff]
        %v5364 = vld [vmem:[%s5 + $0x9a8] sm:$0xff]
        %v5365 = vld [vmem:[%s5 + $0x9b0] sm:$0xff]
        %v5366 = vld [vmem:[%s5 + $0x9b8] sm:$0xff]
        %v5367 = vld [vmem:[%s5 + $0x9c0] sm:$0xff]
        %v5368 = vld [vmem:[%s5 + $0x9c8] sm:$0xff]
        %v5369 = vld [vmem:[%s5 + $0x9d0] sm:$0xff]
        %v5370 = vld [vmem:[%s5 + $0x9d8] sm:$0xff]
        %v5371 = vld [vmem:[%s5 + $0x9e0] sm:$0xff]
        %v5372 = vld [vmem:[%s5 + $0x9e8] sm:$0xff]
        %v5373 = vld [vmem:[%s5 + $0x9f0] sm:$0xff]
        %v5374 = vld [vmem:[%s5 + $0x9f8] sm:$0xff]
        %v5375 = vld [vmem:[%s5 + $0xa00] sm:$0xff]
        %v5376 = vld [vmem:[%s5 + $0xa08] sm:$0xff]
        %v5377 = vld [vmem:[%s5 + $0xa10] sm:$0xff]
        %v5378 = vld [vmem:[%s5 + $0xa18] sm:$0xff]
        %v5379 = vld [vmem:[%s5 + $0xa20] sm:$0xff]
        %v5380 = vld [vmem:[%s5 + $0xa28] sm:$0xff]
        %v5381 = vld [vmem:[%s5 + $0xa30] sm:$0xff]
        %v5382 = vld [vmem:[%s5 + $0xa38] sm:$0xff]
        %v5383 = vld [vmem:[%s5 + $0xa40] sm:$0xff]
        %v5384 = vld [vmem:[%s5 + $0xa48] sm:$0xff]
        %v5385 = vld [vmem:[%s5 + $0xa50] sm:$0xff]
        %v5386 = vld [vmem:[%s5 + $0xa58] sm:$0xff]
        %v5387 = vld [vmem:[%s5 + $0xa60] sm:$0xff]
        %v5388 = vld [vmem:[%s5 + $0xa68] sm:$0xff]
        %v5389 = vld [vmem:[%s5 + $0xa70] sm:$0xff]
        %v5390 = vld [vmem:[%s5 + $0xa78] sm:$0xff]
        %v5391 = vld [vmem:[%s5 + $0xa80] sm:$0xff]
        %v5392 = vld [vmem:[%s5 + $0xa88] sm:$0xff]
        %v5393 = vld [vmem:[%s5 + $0xa90] sm:$0xff]
        %v5394 = vld [vmem:[%s5 + $0xa98] sm:$0xff]
        %v5395 = vld [vmem:[%s5 + $0xaa0] sm:$0xff]
        %v5396 = vld [vmem:[%s5 + $0xaa8] sm:$0xff]
        %v5397 = vld [vmem:[%s5 + $0xab0] sm:$0xff]
        %v5398 = vld [vmem:[%s5 + $0xab8] sm:$0xff]
        %v5399 = vld [vmem:[%s5 + $0xac0] sm:$0xff]
        %v5400 = vld [vmem:[%s5 + $0xac8] sm:$0xff]
        %v5401 = vld [vmem:[%s5 + $0xad0] sm:$0xff]
        %v5402 = vld [vmem:[%s5 + $0xad8] sm:$0xff]
        %v5403 = vld [vmem:[%s5 + $0xae0] sm:$0xff]
        %v5404 = vld [vmem:[%s5 + $0xae8] sm:$0xff]
        %v5405 = vld [vmem:[%s5 + $0xaf0] sm:$0xff]
        %v5406 = vld [vmem:[%s5 + $0xaf8] sm:$0xff]
        %v5407 = vld [vmem:[%s5 + $0xb00] sm:$0xff]
        %v5408 = vld [vmem:[%s5 + $0xb08] sm:$0xff]
        %v5409 = vld [vmem:[%s5 + $0xb10] sm:$0xff]
        %v5410 = vld [vmem:[%s5 + $0xb18] sm:$0xff]
        %v5411 = vld [vmem:[%s5 + $0xb20] sm:$0xff]
        %v5412 = vld [vmem:[%s5 + $0xb28] sm:$0xff]
        %v5413 = vld [vmem:[%s5 + $0xb30] sm:$0xff]
        %v5414 = vld [vmem:[%s5 + $0xb38] sm:$0xff]
        %v5415 = vld [vmem:[%s5 + $0xb40] sm:$0xff]
        %v5416 = vld [vmem:[%s5 + $0xb48] sm:$0xff]
        %v5417 = vld [vmem:[%s5 + $0xb50] sm:$0xff]
        %v5418 = vld [vmem:[%s5 + $0xb58] sm:$0xff]
        %v5419 = vld [vmem:[%s5 + $0xb60] sm:$0xff]
        %v5420 = vld [vmem:[%s5 + $0xb68] sm:$0xff]
        %v5421 = vld [vmem:[%s5 + $0xb70] sm:$0xff]
        %v5422 = vld [vmem:[%s5 + $0xb78] sm:$0xff]
        %v5423 = vld [vmem:[%s5 + $0xb80] sm:$0xff]
        %v5424 = vld [vmem:[%s5 + $0xb88] sm:$0xff]
        %v5425 = vld [vmem:[%s5 + $0xb90] sm:$0xff]
        %v5426 = vld [vmem:[%s5 + $0xb98] sm:$0xff]
        %v5427 = vld [vmem:[%s5 + $0xba0] sm:$0xff]
        %v5428 = vld [vmem:[%s5 + $0xba8] sm:$0xff]
        %v5429 = vld [vmem:[%s5 + $0xbb0] sm:$0xff]
        %v5430 = vld [vmem:[%s5 + $0xbb8] sm:$0xff]
        %v5431 = vld [vmem:[%s5 + $0xbc0] sm:$0xff]
        %v5432 = vld [vmem:[%s5 + $0xbc8] sm:$0xff]
        %v5433 = vld [vmem:[%s5 + $0xbd0] sm:$0xff]
        %v5434 = vld [vmem:[%s5 + $0xbd8] sm:$0xff]
        %v5435 = vld [vmem:[%s5 + $0xbe0] sm:$0xff]
        %v5436 = vld [vmem:[%s5 + $0xbe8] sm:$0xff]
        %v5437 = vld [vmem:[%s5 + $0xbf0] sm:$0xff]
        %v5438 = vld [vmem:[%s5 + $0xbf8] sm:$0xff]
        %v5439 = vld [vmem:[%s5 + $0xc00] sm:$0xff]
        %v5440 = vld [vmem:[%s5 + $0xc08] sm:$0xff]
        %v5441 = vld [vmem:[%s5 + $0xc10] sm:$0xff]
        %v5442 = vld [vmem:[%s5 + $0xc18] sm:$0xff]
        %v5443 = vld [vmem:[%s5 + $0xc20] sm:$0xff]
        %v5444 = vld [vmem:[%s5 + $0xc28] sm:$0xff]
        %v5445 = vld [vmem:[%s5 + $0xc30] sm:$0xff]
        %v5446 = vld [vmem:[%s5 + $0xc38] sm:$0xff]
        %v5447 = vld [vmem:[%s5 + $0xc40] sm:$0xff]
        %v5448 = vld [vmem:[%s5 + $0xc48] sm:$0xff]
        %v5449 = vld [vmem:[%s5 + $0xc50] sm:$0xff]
        %v5450 = vld [vmem:[%s5 + $0xc58] sm:$0xff]
        %v5451 = vld [vmem:[%s5 + $0xc60] sm:$0xff]
        %v5452 = vld [vmem:[%s5 + $0xc68] sm:$0xff]
        %v5453 = vld [vmem:[%s5 + $0xc70] sm:$0xff]
        %v5454 = vld [vmem:[%s5 + $0xc78] sm:$0xff]
        %v5455 = vld [vmem:[%s5 + $0xc80] sm:$0xff]
        %v5456 = vld [vmem:[%s5 + $0xc88] sm:$0xff]
        %v5457 = vld [vmem:[%s5 + $0xc90] sm:$0xff]
        %v5458 = vld [vmem:[%s5 + $0xc98] sm:$0xff]
        %v5459 = vld [vmem:[%s5 + $0xca0] sm:$0xff]
        %v5460 = vld [vmem:[%s5 + $0xca8] sm:$0xff]
        %v5461 = vld [vmem:[%s5 + $0xcb0] sm:$0xff]
        %v5462 = vld [vmem:[%s5 + $0xcb8] sm:$0xff]
        %v5463 = vld [vmem:[%s5 + $0xcc0] sm:$0xff]
        %v5464 = vld [vmem:[%s5 + $0xcc8] sm:$0xff]
        %v5465 = vld [vmem:[%s5 + $0xcd0] sm:$0xff]
        %v5466 = vld [vmem:[%s5 + $0xcd8] sm:$0xff]
        %v5467 = vld [vmem:[%s5 + $0xce0] sm:$0xff]
        %v5468 = vld [vmem:[%s5 + $0xce8] sm:$0xff]
        %v5469 = vld [vmem:[%s5 + $0xcf0] sm:$0xff]
        %v5470 = vld [vmem:[%s5 + $0xcf8] sm:$0xff]
        %v5471 = vld [vmem:[%s5 + $0xd00] sm:$0xff]
        %v5472 = vld [vmem:[%s5 + $0xd08] sm:$0xff]
        %v5473 = vld [vmem:[%s5 + $0xd10] sm:$0xff]
        %v5474 = vld [vmem:[%s5 + $0xd18] sm:$0xff]
        %v5475 = vld [vmem:[%s5 + $0xd20] sm:$0xff]
        %v5476 = vld [vmem:[%s5 + $0xd28] sm:$0xff]
        %v5477 = vld [vmem:[%s5 + $0xd30] sm:$0xff]
        %v5478 = vld [vmem:[%s5 + $0xd38] sm:$0xff]
        %v5479 = vld [vmem:[%s5 + $0xd40] sm:$0xff]
        %v5480 = vld [vmem:[%s5 + $0xd48] sm:$0xff]
        %v5481 = vld [vmem:[%s5 + $0xd50] sm:$0xff]
        %v5482 = vld [vmem:[%s5 + $0xd58] sm:$0xff]
        %v5483 = vld [vmem:[%s5 + $0xd60] sm:$0xff]
        %v5484 = vld [vmem:[%s5 + $0xd68] sm:$0xff]
        %v5485 = vld [vmem:[%s5 + $0xd70] sm:$0xff]
        %v5486 = vld [vmem:[%s5 + $0xd78] sm:$0xff]
        %v5487 = vld [vmem:[%s5 + $0xd80] sm:$0xff]
        %v5488 = vld [vmem:[%s5 + $0xd88] sm:$0xff]
        %v5489 = vld [vmem:[%s5 + $0xd90] sm:$0xff]
        %v5490 = vld [vmem:[%s5 + $0xd98] sm:$0xff]
        %v5491 = vld [vmem:[%s5 + $0xda0] sm:$0xff]
        %v5492 = vld [vmem:[%s5 + $0xda8] sm:$0xff]
        %v5493 = vld [vmem:[%s5 + $0xdb0] sm:$0xff]
        %v5494 = vld [vmem:[%s5 + $0xdb8] sm:$0xff]
        %v5495 = vld [vmem:[%s5 + $0xdc0] sm:$0xff]
        %v5496 = vld [vmem:[%s5 + $0xdc8] sm:$0xff]
        %v5497 = vld [vmem:[%s5 + $0xdd0] sm:$0xff]
        %v5498 = vld [vmem:[%s5 + $0xdd8] sm:$0xff]
        %v5499 = vld [vmem:[%s5 + $0xde0] sm:$0xff]
        %v5500 = vld [vmem:[%s5 + $0xde8] sm:$0xff]
        %v5501 = vld [vmem:[%s5 + $0xdf0] sm:$0xff]
        %v5502 = vld [vmem:[%s5 + $0xdf8] sm:$0xff]
        %v5503 = vld [vmem:[%s5 + $0xe00] sm:$0xff]
        %v5504 = vld [vmem:[%s5 + $0xe08] sm:$0xff]
        %v5505 = vld [vmem:[%s5 + $0xe10] sm:$0xff]
        %v5506 = vld [vmem:[%s5 + $0xe18] sm:$0xff]
        %v5507 = vld [vmem:[%s5 + $0xe20] sm:$0xff]
        %v5508 = vld [vmem:[%s5 + $0xe28] sm:$0xff]
        %v5509 = vld [vmem:[%s5 + $0xe30] sm:$0xff]
        %v5510 = vld [vmem:[%s5 + $0xe38] sm:$0xff]
        %v5511 = vld [vmem:[%s5 + $0xe40] sm:$0xff]
        %v5512 = vld [vmem:[%s5 + $0xe48] sm:$0xff]
        %v5513 = vld [vmem:[%s5 + $0xe50] sm:$0xff]
        %v5514 = vld [vmem:[%s5 + $0xe58] sm:$0xff]
        %v5515 = vld [vmem:[%s5 + $0xe60] sm:$0xff]
        %v5516 = vld [vmem:[%s5 + $0xe68] sm:$0xff]
        %v5517 = vld [vmem:[%s5 + $0xe70] sm:$0xff]
        %v5518 = vld [vmem:[%s5 + $0xe78] sm:$0xff]
        %v5519 = vld [vmem:[%s5 + $0xe80] sm:$0xff]
        %v5520 = vld [vmem:[%s5 + $0xe88] sm:$0xff]
        %v5521 = vld [vmem:[%s5 + $0xe90] sm:$0xff]
        %v5522 = vld [vmem:[%s5 + $0xe98] sm:$0xff]
        %v5523 = vld [vmem:[%s5 + $0xea0] sm:$0xff]
        %v5524 = vld [vmem:[%s5 + $0xea8] sm:$0xff]
        %v5525 = vld [vmem:[%s5 + $0xeb0] sm:$0xff]
        %v5526 = vld [vmem:[%s5 + $0xeb8] sm:$0xff]
        %v5527 = vld [vmem:[%s5 + $0xec0] sm:$0xff]
        %v5528 = vld [vmem:[%s5 + $0xec8] sm:$0xff]
        %v5529 = vld [vmem:[%s5 + $0xed0] sm:$0xff]
        %v5530 = vld [vmem:[%s5 + $0xed8] sm:$0xff]
        %v5531 = vld [vmem:[%s5 + $0xee0] sm:$0xff]
        %v5532 = vld [vmem:[%s5 + $0xee8] sm:$0xff]
        %v5533 = vld [vmem:[%s5 + $0xef0] sm:$0xff]
        %v5534 = vld [vmem:[%s5 + $0xef8] sm:$0xff]
        %v5535 = vld [vmem:[%s5 + $0xf00] sm:$0xff]
        %v5536 = vld [vmem:[%s5 + $0xf08] sm:$0xff]
        %v5537 = vld [vmem:[%s5 + $0xf10] sm:$0xff]
        %v5538 = vld [vmem:[%s5 + $0xf18] sm:$0xff]
        %v5539 = vld [vmem:[%s5 + $0xf20] sm:$0xff]
        %v5540 = vld [vmem:[%s5 + $0xf28] sm:$0xff]
        %v5541 = vld [vmem:[%s5 + $0xf30] sm:$0xff]
        %v5542 = vld [vmem:[%s5 + $0xf38] sm:$0xff]
        %v5543 = vld [vmem:[%s5 + $0xf40] sm:$0xff]
        %v5544 = vld [vmem:[%s5 + $0xf48] sm:$0xff]
        %v5545 = vld [vmem:[%s5 + $0xf50] sm:$0xff]
        %v5546 = vld [vmem:[%s5 + $0xf58] sm:$0xff]
        %v5547 = vld [vmem:[%s5 + $0xf60] sm:$0xff]
        %v5548 = vld [vmem:[%s5 + $0xf68] sm:$0xff]
        %v5549 = vld [vmem:[%s5 + $0xf70] sm:$0xff]
        %v5550 = vld [vmem:[%s5 + $0xf78] sm:$0xff]
        %v5551 = vld [vmem:[%s5 + $0xf80] sm:$0xff]
        %v5552 = vld [vmem:[%s5 + $0xf88] sm:$0xff]
        %v5553 = vld [vmem:[%s5 + $0xf90] sm:$0xff]
        %v5554 = vld [vmem:[%s5 + $0xf98] sm:$0xff]
        %v5555 = vld [vmem:[%s5 + $0xfa0] sm:$0xff]
        %v5556 = vld [vmem:[%s5 + $0xfa8] sm:$0xff]
        %v5557 = vld [vmem:[%s5 + $0xfb0] sm:$0xff]
        %v5558 = vld [vmem:[%s5 + $0xfb8] sm:$0xff]
        %v5559 = vld [vmem:[%s5 + $0xfc0] sm:$0xff]
        %v5560 = vld [vmem:[%s5 + $0xfc8] sm:$0xff]
        %v5561 = vld [vmem:[%s5 + $0xfd0] sm:$0xff]
        %v5562 = vld [vmem:[%s5 + $0xfd8] sm:$0xff]
        %v5563 = vld [vmem:[%s5 + $0xfe0] sm:$0xff]
        %v5564 = vld [vmem:[%s5 + $0xfe8] sm:$0xff]
        %v5565 = vld [vmem:[%s5 + $0xff0] sm:$0xff]
        %v5566 = vld [vmem:[%s5 + $0xff8] sm:$0xff]
        %v5567 = vld [vmem:[%s5 + $0x1000] sm:$0xff]
        %v5568 = vld [vmem:[%s5 + $0x1008] sm:$0xff]
        %v5569 = vld [vmem:[%s5 + $0x1010] sm:$0xff]
        %v5570 = vld [vmem:[%s5 + $0x1018] sm:$0xff]
        %v5571 = vld [vmem:[%s5 + $0x1020] sm:$0xff]
        %v5572 = vld [vmem:[%s5 + $0x1028] sm:$0xff]
        %v5573 = vld [vmem:[%s5 + $0x1030] sm:$0xff]
        %v5574 = vld [vmem:[%s5 + $0x1038] sm:$0xff]
        %v5575 = vld [vmem:[%s5 + $0x1040] sm:$0xff]
        %v5576 = vld [vmem:[%s5 + $0x1048] sm:$0xff]
        %v5577 = vld [vmem:[%s5 + $0x1050] sm:$0xff]
        %v5578 = vld [vmem:[%s5 + $0x1058] sm:$0xff]
        %v5579 = vld [vmem:[%s5 + $0x1060] sm:$0xff]
        %v5580 = vld [vmem:[%s5 + $0x1068] sm:$0xff]
        %v5581 = vld [vmem:[%s5 + $0x1070] sm:$0xff]
        %v5582 = vld [vmem:[%s5 + $0x1078] sm:$0xff]
        %v5583 = vld [vmem:[%s5 + $0x1080] sm:$0xff]
        %v5584 = vld [vmem:[%s5 + $0x1088] sm:$0xff]
        %v5585 = vld [vmem:[%s5 + $0x1090] sm:$0xff]
        %v5586 = vld [vmem:[%s5 + $0x1098] sm:$0xff]
        %v5587 = vld [vmem:[%s5 + $0x10a0] sm:$0xff]
        %v5588 = vld [vmem:[%s5 + $0x10a8] sm:$0xff]
        %v5589 = vld [vmem:[%s5 + $0x10b0] sm:$0xff]
        %v5590 = vld [vmem:[%s5 + $0x10b8] sm:$0xff]
        %v5591 = vld [vmem:[%s5 + $0x10c0] sm:$0xff]
        %v5592 = vld [vmem:[%s5 + $0x10c8] sm:$0xff]
        %v5593 = vld [vmem:[%s5 + $0x10d0] sm:$0xff]
        %v5594 = vld [vmem:[%s5 + $0x10d8] sm:$0xff]
        %v5595 = vld [vmem:[%s5 + $0x10e0] sm:$0xff]
        %v5596 = vld [vmem:[%s5 + $0x10e8] sm:$0xff]
        %v5597 = vld [vmem:[%s5 + $0x10f0] sm:$0xff]
        %v5598 = vld [vmem:[%s5 + $0x10f8] sm:$0xff]
        %v5599 = vld [vmem:[%s5 + $0x1100] sm:$0xff]
        %v5600 = vld [vmem:[%s5 + $0x1108] sm:$0xff]
        %v5601 = vld [vmem:[%s5 + $0x1110] sm:$0xff]
        %v5602 = vld [vmem:[%s5 + $0x1118] sm:$0xff]
        %v5603 = vld [vmem:[%s5 + $0x1120] sm:$0xff]
        %v5604 = vld [vmem:[%s5 + $0x1128] sm:$0xff]
        %v5605 = vld [vmem:[%s5 + $0x1130] sm:$0xff]
        %v5606 = vld [vmem:[%s5 + $0x1138] sm:$0xff]
        %v5607 = vld [vmem:[%s5 + $0x1140] sm:$0xff]
        %v5608 = vld [vmem:[%s5 + $0x1148] sm:$0xff]
        %v5609 = vld [vmem:[%s5 + $0x1150] sm:$0xff]
        %v5610 = vld [vmem:[%s5 + $0x1158] sm:$0xff]
        %v5611 = vld [vmem:[%s5 + $0x1160] sm:$0xff]
        %v5612 = vld [vmem:[%s5 + $0x1168] sm:$0xff]
        %v5613 = vld [vmem:[%s5 + $0x1170] sm:$0xff]
        %v5614 = vld [vmem:[%s5 + $0x1178] sm:$0xff]
        %v5615 = vld [vmem:[%s5 + $0x1180] sm:$0xff]
        %v5616 = vld [vmem:[%s5 + $0x1188] sm:$0xff]
        %v5617 = vld [vmem:[%s5 + $0x1190] sm:$0xff]
        %v5618 = vld [vmem:[%s5 + $0x1198] sm:$0xff]
        %v5619 = vld [vmem:[%s5 + $0x11a0] sm:$0xff]
        %v5620 = vld [vmem:[%s5 + $0x11a8] sm:$0xff]
        %v5621 = vld [vmem:[%s5 + $0x11b0] sm:$0xff]
        %v5622 = vld [vmem:[%s5 + $0x11b8] sm:$0xff]
        %v5623 = vld [vmem:[%s5 + $0x11c0] sm:$0xff]
        %v5624 = vld [vmem:[%s5 + $0x11c8] sm:$0xff]
        %v5625 = vld [vmem:[%s5 + $0x11d0] sm:$0xff]
        %v5626 = vld [vmem:[%s5 + $0x11d8] sm:$0xff]
        %v5627 = vld [vmem:[%s5 + $0x11e0] sm:$0xff]
        %v5628 = vld [vmem:[%s5 + $0x11e8] sm:$0xff]
        %v5629 = vld [vmem:[%s5 + $0x11f0] sm:$0xff]
        %v5630 = vld [vmem:[%s5 + $0x11f8] sm:$0xff]
        %v5640 = vunpack.c.l.b16 %v5046
        %v5641 = vunpack.c.h.b16 %v5046
        %v5642 = vunpack.c.l.b16 %v5047
        %v5643 = vunpack.c.h.b16 %v5047
        %v5644 = vunpack.c.l.b16 %v5048
        %v5645 = vunpack.c.h.b16 %v5048
        %v5646 = vunpack.c.l.b16 %v5049
        %v5647 = vunpack.c.h.b16 %v5049
        %v5648 = vunpack.c.l.b16 %v5050
        %v5649 = vunpack.c.h.b16 %v5050
        %v5650 = vunpack.c.l.b16 %v5051
        %v5651 = vunpack.c.h.b16 %v5051
        %v5652 = vunpack.c.l.b16 %v5052
        %v5653 = vunpack.c.h.b16 %v5052
        %v5654 = vunpack.c.l.b16 %v5053
        %v5655 = vunpack.c.h.b16 %v5053
        %v5656 = vunpack.c.l.b16 %v5054
        %v5657 = vunpack.c.h.b16 %v5054
        %v5658 = vpack.c.b16 %v5640, %v5640
        %v5659 = vpack.c.b16 %v5641, %v5641
        %v5660 = vpack.c.b16 %v5642, %v5642
        %v5661 = vpack.c.b16 %v5643, %v5643
        %v5662 = vpack.c.b16 %v5644, %v5644
        %v5663 = vpack.c.b16 %v5645, %v5645
        %v5664 = vpack.c.b16 %v5646, %v5646
        %v5665 = vpack.c.b16 %v5647, %v5647
        %v5666 = vpack.c.b16 %v5648, %v5648
        %v5667 = vpack.c.b16 %v5649, %v5649
        %v5668 = vpack.c.b16 %v5650, %v5650
        %v5669 = vpack.c.b16 %v5651, %v5651
        %v5670 = vpack.c.b16 %v5652, %v5652
        %v5671 = vpack.c.b16 %v5653, %v5653
        %v5672 = vpack.c.b16 %v5654, %v5654
        %v5673 = vpack.c.b16 %v5655, %v5655
        %v5674 = vpack.c.b16 %v5656, %v5656
        %v5675 = vpack.c.b16 %v5657, %v5657
        %v6270 = vunpack.c.l.b16 %v5055
        %v6271 = vunpack.c.h.b16 %v5055
        %v6272 = vunpack.c.l.b16 %v5056
        %v6273 = vunpack.c.h.b16 %v5056
        %v6274 = vunpack.c.l.b16 %v5057
        %v6275 = vunpack.c.h.b16 %v5057
        %v6276 = vunpack.c.l.b16 %v5058
        %v6277 = vunpack.c.h.b16 %v5058
        %v6278 = vunpack.c.l.b16 %v5059
        %v6279 = vunpack.c.h.b16 %v5059
        %v6280 = vunpack.c.l.b16 %v5060
        %v6281 = vunpack.c.h.b16 %v5060
        %v6282 = vunpack.c.l.b16 %v5061
        %v6283 = vunpack.c.h.b16 %v5061
        %v6284 = vunpack.c.l.b16 %v5062
        %v6285 = vunpack.c.h.b16 %v5062
        %v6286 = vunpack.c.l.b16 %v5063
        %v6287 = vunpack.c.h.b16 %v5063
        %v6288 = vunpack.c.l.b16 %v5064
        %v6289 = vunpack.c.h.b16 %v5064
        %v6290 = vunpack.c.l.b16 %v5065
        %v6291 = vunpack.c.h.b16 %v5065
        %v6292 = vunpack.c.l.b16 %v5066
        %v6293 = vunpack.c.h.b16 %v5066
        %v6294 = vunpack.c.l.b16 %v5067
        %v6295 = vunpack.c.h.b16 %v5067
        %v6296 = vunpack.c.l.b16 %v5068
        %v6297 = vunpack.c.h.b16 %v5068
        %v6298 = vunpack.c.l.b16 %v5069
        %v6299 = vunpack.c.h.b16 %v5069
        %v6300 = vunpack.c.l.b16 %v5070
        %v6301 = vunpack.c.h.b16 %v5070
        %v6302 = vunpack.c.l.b16 %v5071
        %v6303 = vunpack.c.h.b16 %v5071
        %v6304 = vunpack.c.l.b16 %v5072
        %v6305 = vunpack.c.h.b16 %v5072
        %v6306 = vunpack.c.l.b16 %v5073
        %v6307 = vunpack.c.h.b16 %v5073
        %v6308 = vunpack.c.l.b16 %v5074
        %v6309 = vunpack.c.h.b16 %v5074
        %v6310 = vunpack.c.l.b16 %v5075
        %v6311 = vunpack.c.h.b16 %v5075
        %v6312 = vunpack.c.l.b16 %v5076
        %v6313 = vunpack.c.h.b16 %v5076
        %v6314 = vunpack.c.l.b16 %v5077
        %v6315 = vunpack.c.h.b16 %v5077
        %v6316 = vunpack.c.l.b16 %v5078
        %v6317 = vunpack.c.h.b16 %v5078
        %v6318 = vunpack.c.l.b16 %v5079
        %v6319 = vunpack.c.h.b16 %v5079
        %v6320 = vunpack.c.l.b16 %v5080
        %v6321 = vunpack.c.h.b16 %v5080
        %v6322 = vunpack.c.l.b16 %v5081
        %v6323 = vunpack.c.h.b16 %v5081
        %v6324 = vunpack.c.l.b16 %v5082
        %v6325 = vunpack.c.h.b16 %v5082
        %v6326 = vunpack.c.l.b16 %v5083
        %v6327 = vunpack.c.h.b16 %v5083
        %v6328 = vunpack.c.l.b16 %v5084
        %v6329 = vunpack.c.h.b16 %v5084
        %v6330 = vunpack.c.l.b16 %v5085
        %v6331 = vunpack.c.h.b16 %v5085
        %v6332 = vunpack.c.l.b16 %v5086
        %v6333 = vunpack.c.h.b16 %v5086
        %v6334 = vunpack.c.l.b16 %v5087
        %v6335 = vunpack.c.h.b16 %v5087
        %v6336 = vunpack.c.l.b16 %v5088
        %v6337 = vunpack.c.h.b16 %v5088
        %v6338 = vunpack.c.l.b16 %v5089
        %v6339 = vunpack.c.h.b16 %v5089
        %v6340 = vunpack.c.l.b16 %v5090
        %v6341 = vunpack.c.h.b16 %v5090
        %v6342 = vunpack.c.l.b16 %v5091
        %v6343 = vunpack.c.h.b16 %v5091
        %v6344 = vunpack.c.l.b16 %v5092
        %v6345 = vunpack.c.h.b16 %v5092
        %v6346 = vunpack.c.l.b16 %v5093
        %v6347 = vunpack.c.h.b16 %v5093
        %v6348 = vunpack.c.l.b16 %v5094
        %v6349 = vunpack.c.h.b16 %v5094
        %v6350 = vunpack.c.l.b16 %v5095
        %v6351 = vunpack.c.h.b16 %v5095
        %v6352 = vunpack.c.l.b16 %v5096
        %v6353 = vunpack.c.h.b16 %v5096
        %v6354 = vunpack.c.l.b16 %v5097
        %v6355 = vunpack.c.h.b16 %v5097
        %v6356 = vunpack.c.l.b16 %v5098
        %v6357 = vunpack.c.h.b16 %v5098
        %v6358 = vunpack.c.l.b16 %v5099
        %v6359 = vunpack.c.h.b16 %v5099
        %v6360 = vunpack.c.l.b16 %v5100
        %v6361 = vunpack.c.h.b16 %v5100
        %v6362 = vunpack.c.l.b16 %v5101
        %v6363 = vunpack.c.h.b16 %v5101
        %v6364 = vunpack.c.l.b16 %v5102
        %v6365 = vunpack.c.h.b16 %v5102
        %v6366 = vunpack.c.l.b16 %v5103
        %v6367 = vunpack.c.h.b16 %v5103
        %v6368 = vunpack.c.l.b16 %v5104
        %v6369 = vunpack.c.h.b16 %v5104
        %v6370 = vunpack.c.l.b16 %v5105
        %v6371 = vunpack.c.h.b16 %v5105
        %v6372 = vunpack.c.l.b16 %v5106
        %v6373 = vunpack.c.h.b16 %v5106
        %v6374 = vunpack.c.l.b16 %v5107
        %v6375 = vunpack.c.h.b16 %v5107
        %v6376 = vunpack.c.l.b16 %v5108
        %v6377 = vunpack.c.h.b16 %v5108
        %v6378 = vunpack.c.l.b16 %v5109
        %v6379 = vunpack.c.h.b16 %v5109
        %v6380 = vunpack.c.l.b16 %v5110
        %v6381 = vunpack.c.h.b16 %v5110
        %v6382 = vunpack.c.l.b16 %v5111
        %v6383 = vunpack.c.h.b16 %v5111
        %v6384 = vunpack.c.l.b16 %v5112
        %v6385 = vunpack.c.h.b16 %v5112
        %v6386 = vunpack.c.l.b16 %v5113
        %v6387 = vunpack.c.h.b16 %v5113
        %v6388 = vunpack.c.l.b16 %v5114
        %v6389 = vunpack.c.h.b16 %v5114
        %v6390 = vunpack.c.l.b16 %v5115
        %v6391 = vunpack.c.h.b16 %v5115
        %v6392 = vunpack.c.l.b16 %v5116
        %v6393 = vunpack.c.h.b16 %v5116
        %v6394 = vunpack.c.l.b16 %v5117
        %v6395 = vunpack.c.h.b16 %v5117
        %v6396 = vunpack.c.l.b16 %v5118
        %v6397 = vunpack.c.h.b16 %v5118
        %v6398 = vunpack.c.l.b16 %v5119
        %v6399 = vunpack.c.h.b16 %v5119
        %v6400 = vunpack.c.l.b16 %v5120
        %v6401 = vunpack.c.h.b16 %v5120
        %v6402 = vunpack.c.l.b16 %v5121
        %v6403 = vunpack.c.h.b16 %v5121
        %v6404 = vunpack.c.l.b16 %v5122
        %v6405 = vunpack.c.h.b16 %v5122
        %v6406 = vunpack.c.l.b16 %v5123
        %v6407 = vunpack.c.h.b16 %v5123
        %v6408 = vunpack.c.l.b16 %v5124
        %v6409 = vunpack.c.h.b16 %v5124
        %v6410 = vunpack.c.l.b16 %v5125
        %v6411 = vunpack.c.h.b16 %v5125
        %v6412 = vunpack.c.l.b16 %v5126
        %v6413 = vunpack.c.h.b16 %v5126
        %v6414 = vunpack.c.l.b16 %v5127
        %v6415 = vunpack.c.h.b16 %v5127
        %v6416 = vunpack.c.l.b16 %v5128
        %v6417 = vunpack.c.h.b16 %v5128
        %v6418 = vunpack.c.l.b16 %v5129
        %v6419 = vunpack.c.h.b16 %v5129
        %v6420 = vunpack.c.l.b16 %v5130
        %v6421 = vunpack.c.h.b16 %v5130
        %v6422 = vunpack.c.l.b16 %v5131
        %v6423 = vunpack.c.h.b16 %v5131
        %v6424 = vunpack.c.l.b16 %v5132
        %v6425 = vunpack.c.h.b16 %v5132
        %v6426 = vunpack.c.l.b16 %v5133
        %v6427 = vunpack.c.h.b16 %v5133
        %v6428 = vunpack.c.l.b16 %v5134
        %v6429 = vunpack.c.h.b16 %v5134
        %v6430 = vunpack.c.l.b16 %v5135
        %v6431 = vunpack.c.h.b16 %v5135
        %v6432 = vunpack.c.l.b16 %v5136
        %v6433 = vunpack.c.h.b16 %v5136
        %v6434 = vunpack.c.l.b16 %v5137
        %v6435 = vunpack.c.h.b16 %v5137
        %v6436 = vunpack.c.l.b16 %v5138
        %v6437 = vunpack.c.h.b16 %v5138
        %v6438 = vunpack.c.l.b16 %v5139
        %v6439 = vunpack.c.h.b16 %v5139
        %v6440 = vunpack.c.l.b16 %v5140
        %v6441 = vunpack.c.h.b16 %v5140
        %v6442 = vunpack.c.l.b16 %v5141
        %v6443 = vunpack.c.h.b16 %v5141
        %v6444 = vunpack.c.l.b16 %v5142
        %v6445 = vunpack.c.h.b16 %v5142
        %v6446 = vunpack.c.l.b16 %v5143
        %v6447 = vunpack.c.h.b16 %v5143
        %v6448 = vunpack.c.l.b16 %v5144
        %v6449 = vunpack.c.h.b16 %v5144
        %v6450 = vunpack.c.l.b16 %v5145
        %v6451 = vunpack.c.h.b16 %v5145
        %v6452 = vunpack.c.l.b16 %v5146
        %v6453 = vunpack.c.h.b16 %v5146
        %v6454 = vunpack.c.l.b16 %v5147
        %v6455 = vunpack.c.h.b16 %v5147
        %v6456 = vunpack.c.l.b16 %v5148
        %v6457 = vunpack.c.h.b16 %v5148
        %v6458 = vunpack.c.l.b16 %v5149
        %v6459 = vunpack.c.h.b16 %v5149
        %v6460 = vunpack.c.l.b16 %v5150
        %v6461 = vunpack.c.h.b16 %v5150
        %v6462 = vunpack.c.l.b16 %v5151
        %v6463 = vunpack.c.h.b16 %v5151
        %v6464 = vunpack.c.l.b16 %v5152
        %v6465 = vunpack.c.h.b16 %v5152
        %v6466 = vunpack.c.l.b16 %v5153
        %v6467 = vunpack.c.h.b16 %v5153
        %v6468 = vunpack.c.l.b16 %v5154
        %v6469 = vunpack.c.h.b16 %v5154
        %v6470 = vunpack.c.l.b16 %v5155
        %v6471 = vunpack.c.h.b16 %v5155
        %v6472 = vunpack.c.l.b16 %v5156
        %v6473 = vunpack.c.h.b16 %v5156
        %v6474 = vunpack.c.l.b16 %v5157
        %v6475 = vunpack.c.h.b16 %v5157
        %v6476 = vunpack.c.l.b16 %v5158
        %v6477 = vunpack.c.h.b16 %v5158
        %v6478 = vunpack.c.l.b16 %v5159
        %v6479 = vunpack.c.h.b16 %v5159
        %v6480 = vunpack.c.l.b16 %v5160
        %v6481 = vunpack.c.h.b16 %v5160
        %v6482 = vunpack.c.l.b16 %v5161
        %v6483 = vunpack.c.h.b16 %v5161
        %v6484 = vunpack.c.l.b16 %v5162
        %v6485 = vunpack.c.h.b16 %v5162
        %v6486 = vunpack.c.l.b16 %v5163
        %v6487 = vunpack.c.h.b16 %v5163
        %v6488 = vunpack.c.l.b16 %v5164
        %v6489 = vunpack.c.h.b16 %v5164
        %v6490 = vunpack.c.l.b16 %v5165
        %v6491 = vunpack.c.h.b16 %v5165
        %v6492 = vunpack.c.l.b16 %v5166
        %v6493 = vunpack.c.h.b16 %v5166
        %v6494 = vunpack.c.l.b16 %v5167
        %v6495 = vunpack.c.h.b16 %v5167
        %v6496 = vunpack.c.l.b16 %v5168
        %v6497 = vunpack.c.h.b16 %v5168
        %v6498 = vunpack.c.l.b16 %v5169
        %v6499 = vunpack.c.h.b16 %v5169
        %v6500 = vunpack.c.l.b16 %v5170
        %v6501 = vunpack.c.h.b16 %v5170
        %v6502 = vunpack.c.l.b16 %v5171
        %v6503 = vunpack.c.h.b16 %v5171
        %v6504 = vunpack.c.l.b16 %v5172
        %v6505 = vunpack.c.h.b16 %v5172
        %v6506 = vunpack.c.l.b16 %v5173
        %v6507 = vunpack.c.h.b16 %v5173
        %v6508 = vunpack.c.l.b16 %v5174
        %v6509 = vunpack.c.h.b16 %v5174
        %v6510 = vunpack.c.l.b16 %v5175
        %v6511 = vunpack.c.h.b16 %v5175
        %v6512 = vunpack.c.l.b16 %v5176
        %v6513 = vunpack.c.h.b16 %v5176
        %v6514 = vunpack.c.l.b16 %v5177
        %v6515 = vunpack.c.h.b16 %v5177
        %v6516 = vunpack.c.l.b16 %v5178
        %v6517 = vunpack.c.h.b16 %v5178
        %v6518 = vunpack.c.l.b16 %v5179
        %v6519 = vunpack.c.h.b16 %v5179
        %v6520 = vunpack.c.l.b16 %v5180
        %v6521 = vunpack.c.h.b16 %v5180
        %v6522 = vunpack.c.l.b16 %v5181
        %v6523 = vunpack.c.h.b16 %v5181
        %v6524 = vunpack.c.l.b16 %v5182
        %v6525 = vunpack.c.h.b16 %v5182
        %v6526 = vunpack.c.l.b16 %v5183
        %v6527 = vunpack.c.h.b16 %v5183
        %v6528 = vunpack.c.l.b16 %v5184
        %v6529 = vunpack.c.h.b16 %v5184
        %v6530 = vunpack.c.l.b16 %v5185
        %v6531 = vunpack.c.h.b16 %v5185
        %v6532 = vunpack.c.l.b16 %v5186
        %v6533 = vunpack.c.h.b16 %v5186
        %v6534 = vunpack.c.l.b16 %v5187
        %v6535 = vunpack.c.h.b16 %v5187
        %v6536 = vunpack.c.l.b16 %v5188
        %v6537 = vunpack.c.h.b16 %v5188
        %v6538 = vunpack.c.l.b16 %v5189
        %v6539 = vunpack.c.h.b16 %v5189
        %v6540 = vunpack.c.l.b16 %v5190
        %v6541 = vunpack.c.h.b16 %v5190
        %v6542 = vunpack.c.l.b16 %v5191
        %v6543 = vunpack.c.h.b16 %v5191
        %v6544 = vunpack.c.l.b16 %v5192
        %v6545 = vunpack.c.h.b16 %v5192
        %v6546 = vunpack.c.l.b16 %v5193
        %v6547 = vunpack.c.h.b16 %v5193
        %v6548 = vunpack.c.l.b16 %v5194
        %v6549 = vunpack.c.h.b16 %v5194
        %v6550 = vunpack.c.l.b16 %v5195
        %v6551 = vunpack.c.h.b16 %v5195
        %v6552 = vunpack.c.l.b16 %v5196
        %v6553 = vunpack.c.h.b16 %v5196
        %v6554 = vunpack.c.l.b16 %v5197
        %v6555 = vunpack.c.h.b16 %v5197
        %v6556 = vunpack.c.l.b16 %v5198
        %v6557 = vunpack.c.h.b16 %v5198
        %v6558 = vunpack.c.l.b16 %v5199
        %v6559 = vunpack.c.h.b16 %v5199
        %v6560 = vunpack.c.l.b16 %v5200
        %v6561 = vunpack.c.h.b16 %v5200
        %v6562 = vunpack.c.l.b16 %v5201
        %v6563 = vunpack.c.h.b16 %v5201
        %v6564 = vunpack.c.l.b16 %v5202
        %v6565 = vunpack.c.h.b16 %v5202
        %v6566 = vunpack.c.l.b16 %v5203
        %v6567 = vunpack.c.h.b16 %v5203
        %v6568 = vunpack.c.l.b16 %v5204
        %v6569 = vunpack.c.h.b16 %v5204
        %v6570 = vunpack.c.l.b16 %v5205
        %v6571 = vunpack.c.h.b16 %v5205
        %v6572 = vunpack.c.l.b16 %v5206
        %v6573 = vunpack.c.h.b16 %v5206
        %v6574 = vunpack.c.l.b16 %v5207
        %v6575 = vunpack.c.h.b16 %v5207
        %v6576 = vunpack.c.l.b16 %v5208
        %v6577 = vunpack.c.h.b16 %v5208
        %v6578 = vunpack.c.l.b16 %v5209
        %v6579 = vunpack.c.h.b16 %v5209
        %v6580 = vunpack.c.l.b16 %v5210
        %v6581 = vunpack.c.h.b16 %v5210
        %v6582 = vunpack.c.l.b16 %v5211
        %v6583 = vunpack.c.h.b16 %v5211
        %v6584 = vunpack.c.l.b16 %v5212
        %v6585 = vunpack.c.h.b16 %v5212
        %v6586 = vunpack.c.l.b16 %v5213
        %v6587 = vunpack.c.h.b16 %v5213
        %v6588 = vunpack.c.l.b16 %v5214
        %v6589 = vunpack.c.h.b16 %v5214
        %v6590 = vunpack.c.l.b16 %v5215
        %v6591 = vunpack.c.h.b16 %v5215
        %v6592 = vunpack.c.l.b16 %v5216
        %v6593 = vunpack.c.h.b16 %v5216
        %v6594 = vunpack.c.l.b16 %v5217
        %v6595 = vunpack.c.h.b16 %v5217
        %v6596 = vunpack.c.l.b16 %v5218
        %v6597 = vunpack.c.h.b16 %v5218
        %v6598 = vunpack.c.l.b16 %v5219
        %v6599 = vunpack.c.h.b16 %v5219
        %v6600 = vunpack.c.l.b16 %v5220
        %v6601 = vunpack.c.h.b16 %v5220
        %v6602 = vunpack.c.l.b16 %v5221
        %v6603 = vunpack.c.h.b16 %v5221
        %v6604 = vunpack.c.l.b16 %v5222
        %v6605 = vunpack.c.h.b16 %v5222
        %v6606 = vunpack.c.l.b16 %v5223
        %v6607 = vunpack.c.h.b16 %v5223
        %v6608 = vunpack.c.l.b16 %v5224
        %v6609 = vunpack.c.h.b16 %v5224
        %v6610 = vunpack.c.l.b16 %v5225
        %v6611 = vunpack.c.h.b16 %v5225
        %v6612 = vunpack.c.l.b16 %v5226
        %v6613 = vunpack.c.h.b16 %v5226
        %v6614 = vunpack.c.l.b16 %v5227
        %v6615 = vunpack.c.h.b16 %v5227
        %v6616 = vunpack.c.l.b16 %v5228
        %v6617 = vunpack.c.h.b16 %v5228
        %v6618 = vunpack.c.l.b16 %v5229
        %v6619 = vunpack.c.h.b16 %v5229
        %v6620 = vunpack.c.l.b16 %v5230
        %v6621 = vunpack.c.h.b16 %v5230
        %v6622 = vunpack.c.l.b16 %v5231
        %v6623 = vunpack.c.h.b16 %v5231
        %v6624 = vunpack.c.l.b16 %v5232
        %v6625 = vunpack.c.h.b16 %v5232
        %v6626 = vunpack.c.l.b16 %v5233
        %v6627 = vunpack.c.h.b16 %v5233
        %v6628 = vunpack.c.l.b16 %v5234
        %v6629 = vunpack.c.h.b16 %v5234
        %v6630 = vunpack.c.l.b16 %v5235
        %v6631 = vunpack.c.h.b16 %v5235
        %v6632 = vunpack.c.l.b16 %v5236
        %v6633 = vunpack.c.h.b16 %v5236
        %v6634 = vunpack.c.l.b16 %v5237
        %v6635 = vunpack.c.h.b16 %v5237
        %v6636 = vunpack.c.l.b16 %v5238
        %v6637 = vunpack.c.h.b16 %v5238
        %v6638 = vunpack.c.l.b16 %v5239
        %v6639 = vunpack.c.h.b16 %v5239
        %v6640 = vunpack.c.l.b16 %v5240
        %v6641 = vunpack.c.h.b16 %v5240
        %v6642 = vunpack.c.l.b16 %v5241
        %v6643 = vunpack.c.h.b16 %v5241
        %v6644 = vunpack.c.l.b16 %v5242
        %v6645 = vunpack.c.h.b16 %v5242
        %v6646 = vunpack.c.l.b16 %v5243
        %v6647 = vunpack.c.h.b16 %v5243
        %v6648 = vunpack.c.l.b16 %v5244
        %v6649 = vunpack.c.h.b16 %v5244
        %v6650 = vunpack.c.l.b16 %v5245
        %v6651 = vunpack.c.h.b16 %v5245
        %v6652 = vunpack.c.l.b16 %v5246
        %v6653 = vunpack.c.h.b16 %v5246
        %v6654 = vunpack.c.l.b16 %v5247
        %v6655 = vunpack.c.h.b16 %v5247
        %v6656 = vunpack.c.l.b16 %v5248
        %v6657 = vunpack.c.h.b16 %v5248
        %v6658 = vunpack.c.l.b16 %v5249
        %v6659 = vunpack.c.h.b16 %v5249
        %v6660 = vunpack.c.l.b16 %v5250
        %v6661 = vunpack.c.h.b16 %v5250
        %v6662 = vunpack.c.l.b16 %v5251
        %v6663 = vunpack.c.h.b16 %v5251
        %v6664 = vunpack.c.l.b16 %v5252
        %v6665 = vunpack.c.h.b16 %v5252
        %v6666 = vunpack.c.l.b16 %v5253
        %v6667 = vunpack.c.h.b16 %v5253
        %v6668 = vunpack.c.l.b16 %v5254
        %v6669 = vunpack.c.h.b16 %v5254
        %v6670 = vunpack.c.l.b16 %v5255
        %v6671 = vunpack.c.h.b16 %v5255
        %v6672 = vunpack.c.l.b16 %v5256
        %v6673 = vunpack.c.h.b16 %v5256
        %v6674 = vunpack.c.l.b16 %v5257
        %v6675 = vunpack.c.h.b16 %v5257
        %v6676 = vunpack.c.l.b16 %v5258
        %v6677 = vunpack.c.h.b16 %v5258
        %v6678 = vunpack.c.l.b16 %v5259
        %v6679 = vunpack.c.h.b16 %v5259
        %v6680 = vunpack.c.l.b16 %v5260
        %v6681 = vunpack.c.h.b16 %v5260
        %v6682 = vunpack.c.l.b16 %v5261
        %v6683 = vunpack.c.h.b16 %v5261
        %v6684 = vunpack.c.l.b16 %v5262
        %v6685 = vunpack.c.h.b16 %v5262
        %v6686 = vunpack.c.l.b16 %v5263
        %v6687 = vunpack.c.h.b16 %v5263
        %v6688 = vunpack.c.l.b16 %v5264
        %v6689 = vunpack.c.h.b16 %v5264
        %v6690 = vunpack.c.l.b16 %v5265
        %v6691 = vunpack.c.h.b16 %v5265
        %v6692 = vunpack.c.l.b16 %v5266
        %v6693 = vunpack.c.h.b16 %v5266
        %v6694 = vunpack.c.l.b16 %v5267
        %v6695 = vunpack.c.h.b16 %v5267
        %v6696 = vunpack.c.l.b16 %v5268
        %v6697 = vunpack.c.h.b16 %v5268
        %v6698 = vunpack.c.l.b16 %v5269
        %v6699 = vunpack.c.h.b16 %v5269
        %v6700 = vunpack.c.l.b16 %v5270
        %v6701 = vunpack.c.h.b16 %v5270
        %v6702 = vunpack.c.l.b16 %v5271
        %v6703 = vunpack.c.h.b16 %v5271
        %v6704 = vunpack.c.l.b16 %v5272
        %v6705 = vunpack.c.h.b16 %v5272
        %v6706 = vunpack.c.l.b16 %v5273
        %v6707 = vunpack.c.h.b16 %v5273
        %v6708 = vunpack.c.l.b16 %v5274
        %v6709 = vunpack.c.h.b16 %v5274
        %v6710 = vunpack.c.l.b16 %v5275
        %v6711 = vunpack.c.h.b16 %v5275
        %v6712 = vunpack.c.l.b16 %v5276
        %v6713 = vunpack.c.h.b16 %v5276
        %v6714 = vunpack.c.l.b16 %v5277
        %v6715 = vunpack.c.h.b16 %v5277
        %v6716 = vunpack.c.l.b16 %v5278
        %v6717 = vunpack.c.h.b16 %v5278
        %v6718 = vunpack.c.l.b16 %v5279
        %v6719 = vunpack.c.h.b16 %v5279
        %v6720 = vunpack.c.l.b16 %v5280
        %v6721 = vunpack.c.h.b16 %v5280
        %v6722 = vunpack.c.l.b16 %v5281
        %v6723 = vunpack.c.h.b16 %v5281
        %v6724 = vunpack.c.l.b16 %v5282
        %v6725 = vunpack.c.h.b16 %v5282
        %v6726 = vunpack.c.l.b16 %v5283
        %v6727 = vunpack.c.h.b16 %v5283
        %v6728 = vunpack.c.l.b16 %v5284
        %v6729 = vunpack.c.h.b16 %v5284
        %v6730 = vunpack.c.l.b16 %v5285
        %v6731 = vunpack.c.h.b16 %v5285
        %v6732 = vunpack.c.l.b16 %v5286
        %v6733 = vunpack.c.h.b16 %v5286
        %v6734 = vunpack.c.l.b16 %v5287
        %v6735 = vunpack.c.h.b16 %v5287
        %v6736 = vunpack.c.l.b16 %v5288
        %v6737 = vunpack.c.h.b16 %v5288
        %v6738 = vunpack.c.l.b16 %v5289
        %v6739 = vunpack.c.h.b16 %v5289
        %v6740 = vunpack.c.l.b16 %v5290
        %v6741 = vunpack.c.h.b16 %v5290
        %v6742 = vunpack.c.l.b16 %v5291
        %v6743 = vunpack.c.h.b16 %v5291
        %v6744 = vunpack.c.l.b16 %v5292
        %v6745 = vunpack.c.h.b16 %v5292
        %v6746 = vunpack.c.l.b16 %v5293
        %v6747 = vunpack.c.h.b16 %v5293
        %v6748 = vunpack.c.l.b16 %v5294
        %v6749 = vunpack.c.h.b16 %v5294
        %v6750 = vunpack.c.l.b16 %v5295
        %v6751 = vunpack.c.h.b16 %v5295
        %v6752 = vunpack.c.l.b16 %v5296
        %v6753 = vunpack.c.h.b16 %v5296
        %v6754 = vunpack.c.l.b16 %v5297
        %v6755 = vunpack.c.h.b16 %v5297
        %v6756 = vunpack.c.l.b16 %v5298
        %v6757 = vunpack.c.h.b16 %v5298
        %v6758 = vunpack.c.l.b16 %v5299
        %v6759 = vunpack.c.h.b16 %v5299
        %v6760 = vunpack.c.l.b16 %v5300
        %v6761 = vunpack.c.h.b16 %v5300
        %v6762 = vunpack.c.l.b16 %v5301
        %v6763 = vunpack.c.h.b16 %v5301
        %v6764 = vunpack.c.l.b16 %v5302
        %v6765 = vunpack.c.h.b16 %v5302
        %v6766 = vunpack.c.l.b16 %v5303
        %v6767 = vunpack.c.h.b16 %v5303
        %v6768 = vunpack.c.l.b16 %v5304
        %v6769 = vunpack.c.h.b16 %v5304
        %v6770 = vunpack.c.l.b16 %v5305
        %v6771 = vunpack.c.h.b16 %v5305
        %v6772 = vunpack.c.l.b16 %v5306
        %v6773 = vunpack.c.h.b16 %v5306
        %v6774 = vunpack.c.l.b16 %v5307
        %v6775 = vunpack.c.h.b16 %v5307
        %v6776 = vunpack.c.l.b16 %v5308
        %v6777 = vunpack.c.h.b16 %v5308
        %v6778 = vunpack.c.l.b16 %v5309
        %v6779 = vunpack.c.h.b16 %v5309
        %v6780 = vunpack.c.l.b16 %v5310
        %v6781 = vunpack.c.h.b16 %v5310
        %v6782 = vunpack.c.l.b16 %v5311
        %v6783 = vunpack.c.h.b16 %v5311
        %v6784 = vunpack.c.l.b16 %v5312
        %v6785 = vunpack.c.h.b16 %v5312
        %v6786 = vunpack.c.l.b16 %v5313
        %v6787 = vunpack.c.h.b16 %v5313
        %v6788 = vunpack.c.l.b16 %v5314
        %v6789 = vunpack.c.h.b16 %v5314
        %v6790 = vunpack.c.l.b16 %v5315
        %v6791 = vunpack.c.h.b16 %v5315
        %v6792 = vunpack.c.l.b16 %v5316
        %v6793 = vunpack.c.h.b16 %v5316
        %v6794 = vunpack.c.l.b16 %v5317
        %v6795 = vunpack.c.h.b16 %v5317
        %v6796 = vunpack.c.l.b16 %v5318
        %v6797 = vunpack.c.h.b16 %v5318
        %v6798 = vunpack.c.l.b16 %v5319
        %v6799 = vunpack.c.h.b16 %v5319
        %v6800 = vunpack.c.l.b16 %v5320
        %v6801 = vunpack.c.h.b16 %v5320
        %v6802 = vunpack.c.l.b16 %v5321
        %v6803 = vunpack.c.h.b16 %v5321
        %v6804 = vunpack.c.l.b16 %v5322
        %v6805 = vunpack.c.h.b16 %v5322
        %v6806 = vunpack.c.l.b16 %v5323
        %v6807 = vunpack.c.h.b16 %v5323
        %v6808 = vunpack.c.l.b16 %v5324
        %v6809 = vunpack.c.h.b16 %v5324
        %v6810 = vunpack.c.l.b16 %v5325
        %v6811 = vunpack.c.h.b16 %v5325
        %v6812 = vunpack.c.l.b16 %v5326
        %v6813 = vunpack.c.h.b16 %v5326
        %v6814 = vunpack.c.l.b16 %v5327
        %v6815 = vunpack.c.h.b16 %v5327
        %v6816 = vunpack.c.l.b16 %v5328
        %v6817 = vunpack.c.h.b16 %v5328
        %v6818 = vunpack.c.l.b16 %v5329
        %v6819 = vunpack.c.h.b16 %v5329
        %v6820 = vunpack.c.l.b16 %v5330
        %v6821 = vunpack.c.h.b16 %v5330
        %v6822 = vunpack.c.l.b16 %v5331
        %v6823 = vunpack.c.h.b16 %v5331
        %v6824 = vunpack.c.l.b16 %v5332
        %v6825 = vunpack.c.h.b16 %v5332
        %v6826 = vunpack.c.l.b16 %v5333
        %v6827 = vunpack.c.h.b16 %v5333
        %v6828 = vunpack.c.l.b16 %v5334
        %v6829 = vunpack.c.h.b16 %v5334
        %v6830 = vunpack.c.l.b16 %v5335
        %v6831 = vunpack.c.h.b16 %v5335
        %v6832 = vunpack.c.l.b16 %v5336
        %v6833 = vunpack.c.h.b16 %v5336
        %v6834 = vunpack.c.l.b16 %v5337
        %v6835 = vunpack.c.h.b16 %v5337
        %v6836 = vunpack.c.l.b16 %v5338
        %v6837 = vunpack.c.h.b16 %v5338
        %v6838 = vunpack.c.l.b16 %v5339
        %v6839 = vunpack.c.h.b16 %v5339
        %v6840 = vunpack.c.l.b16 %v5340
        %v6841 = vunpack.c.h.b16 %v5340
        %v6842 = vunpack.c.l.b16 %v5341
        %v6843 = vunpack.c.h.b16 %v5341
        %v6844 = vunpack.c.l.b16 %v5342
        %v6845 = vunpack.c.h.b16 %v5342
        %v6846 = vunpack.c.l.b16 %v5343
        %v6847 = vunpack.c.h.b16 %v5343
        %v6848 = vunpack.c.l.b16 %v5344
        %v6849 = vunpack.c.h.b16 %v5344
        %v6850 = vunpack.c.l.b16 %v5345
        %v6851 = vunpack.c.h.b16 %v5345
        %v6852 = vunpack.c.l.b16 %v5346
        %v6853 = vunpack.c.h.b16 %v5346
        %v6854 = vunpack.c.l.b16 %v5347
        %v6855 = vunpack.c.h.b16 %v5347
        %v6856 = vunpack.c.l.b16 %v5348
        %v6857 = vunpack.c.h.b16 %v5348
        %v6858 = vunpack.c.l.b16 %v5349
        %v6859 = vunpack.c.h.b16 %v5349
        %v6860 = vunpack.c.l.b16 %v5350
        %v6861 = vunpack.c.h.b16 %v5350
        %v6862 = vunpack.c.l.b16 %v5351
        %v6863 = vunpack.c.h.b16 %v5351
        %v6864 = vunpack.c.l.b16 %v5352
        %v6865 = vunpack.c.h.b16 %v5352
        %v6866 = vunpack.c.l.b16 %v5353
        %v6867 = vunpack.c.h.b16 %v5353
        %v6868 = vunpack.c.l.b16 %v5354
        %v6869 = vunpack.c.h.b16 %v5354
        %v6870 = vunpack.c.l.b16 %v5355
        %v6871 = vunpack.c.h.b16 %v5355
        %v6872 = vunpack.c.l.b16 %v5356
        %v6873 = vunpack.c.h.b16 %v5356
        %v6874 = vunpack.c.l.b16 %v5357
        %v6875 = vunpack.c.h.b16 %v5357
        %v6876 = vunpack.c.l.b16 %v5358
        %v6877 = vunpack.c.h.b16 %v5358
        %v6878 = vunpack.c.l.b16 %v5359
        %v6879 = vunpack.c.h.b16 %v5359
        %v6880 = vunpack.c.l.b16 %v5360
        %v6881 = vunpack.c.h.b16 %v5360
        %v6882 = vunpack.c.l.b16 %v5361
        %v6883 = vunpack.c.h.b16 %v5361
        %v6884 = vunpack.c.l.b16 %v5362
        %v6885 = vunpack.c.h.b16 %v5362
        %v6886 = vunpack.c.l.b16 %v5363
        %v6887 = vunpack.c.h.b16 %v5363
        %v6888 = vunpack.c.l.b16 %v5364
        %v6889 = vunpack.c.h.b16 %v5364
        %v6890 = vunpack.c.l.b16 %v5365
        %v6891 = vunpack.c.h.b16 %v5365
        %v6892 = vunpack.c.l.b16 %v5366
        %v6893 = vunpack.c.h.b16 %v5366
        %v6894 = vunpack.c.l.b16 %v5367
        %v6895 = vunpack.c.h.b16 %v5367
        %v6896 = vunpack.c.l.b16 %v5368
        %v6897 = vunpack.c.h.b16 %v5368
        %v6898 = vunpack.c.l.b16 %v5369
        %v6899 = vunpack.c.h.b16 %v5369
        %v6900 = vunpack.c.l.b16 %v5370
        %v6901 = vunpack.c.h.b16 %v5370
        %v6902 = vunpack.c.l.b16 %v5371
        %v6903 = vunpack.c.h.b16 %v5371
        %v6904 = vunpack.c.l.b16 %v5372
        %v6905 = vunpack.c.h.b16 %v5372
        %v6906 = vunpack.c.l.b16 %v5373
        %v6907 = vunpack.c.h.b16 %v5373
        %v6908 = vunpack.c.l.b16 %v5374
        %v6909 = vunpack.c.h.b16 %v5374
        %v6910 = vunpack.c.l.b16 %v5375
        %v6911 = vunpack.c.h.b16 %v5375
        %v6912 = vunpack.c.l.b16 %v5376
        %v6913 = vunpack.c.h.b16 %v5376
        %v6914 = vunpack.c.l.b16 %v5377
        %v6915 = vunpack.c.h.b16 %v5377
        %v6916 = vunpack.c.l.b16 %v5378
        %v6917 = vunpack.c.h.b16 %v5378
        %v6918 = vunpack.c.l.b16 %v5379
        %v6919 = vunpack.c.h.b16 %v5379
        %v6920 = vunpack.c.l.b16 %v5380
        %v6921 = vunpack.c.h.b16 %v5380
        %v6922 = vunpack.c.l.b16 %v5381
        %v6923 = vunpack.c.h.b16 %v5381
        %v6924 = vunpack.c.l.b16 %v5382
        %v6925 = vunpack.c.h.b16 %v5382
        %v6926 = vunpack.c.l.b16 %v5383
        %v6927 = vunpack.c.h.b16 %v5383
        %v6928 = vunpack.c.l.b16 %v5384
        %v6929 = vunpack.c.h.b16 %v5384
        %v6930 = vunpack.c.l.b16 %v5385
        %v6931 = vunpack.c.h.b16 %v5385
        %v6932 = vunpack.c.l.b16 %v5386
        %v6933 = vunpack.c.h.b16 %v5386
        %v6934 = vunpack.c.l.b16 %v5387
        %v6935 = vunpack.c.h.b16 %v5387
        %v6936 = vunpack.c.l.b16 %v5388
        %v6937 = vunpack.c.h.b16 %v5388
        %v6938 = vunpack.c.l.b16 %v5389
        %v6939 = vunpack.c.h.b16 %v5389
        %v6940 = vunpack.c.l.b16 %v5390
        %v6941 = vunpack.c.h.b16 %v5390
        %v6942 = vunpack.c.l.b16 %v5391
        %v6943 = vunpack.c.h.b16 %v5391
        %v6944 = vunpack.c.l.b16 %v5392
        %v6945 = vunpack.c.h.b16 %v5392
        %v6946 = vunpack.c.l.b16 %v5393
        %v6947 = vunpack.c.h.b16 %v5393
        %v6948 = vunpack.c.l.b16 %v5394
        %v6949 = vunpack.c.h.b16 %v5394
        %v6950 = vunpack.c.l.b16 %v5395
        %v6951 = vunpack.c.h.b16 %v5395
        %v6952 = vunpack.c.l.b16 %v5396
        %v6953 = vunpack.c.h.b16 %v5396
        %v6954 = vunpack.c.l.b16 %v5397
        %v6955 = vunpack.c.h.b16 %v5397
        %v6956 = vunpack.c.l.b16 %v5398
        %v6957 = vunpack.c.h.b16 %v5398
        %v6958 = vunpack.c.l.b16 %v5399
        %v6959 = vunpack.c.h.b16 %v5399
        %v6960 = vunpack.c.l.b16 %v5400
        %v6961 = vunpack.c.h.b16 %v5400
        %v6962 = vunpack.c.l.b16 %v5401
        %v6963 = vunpack.c.h.b16 %v5401
        %v6964 = vunpack.c.l.b16 %v5402
        %v6965 = vunpack.c.h.b16 %v5402
        %v6966 = vunpack.c.l.b16 %v5403
        %v6967 = vunpack.c.h.b16 %v5403
        %v6968 = vunpack.c.l.b16 %v5404
        %v6969 = vunpack.c.h.b16 %v5404
        %v6970 = vunpack.c.l.b16 %v5405
        %v6971 = vunpack.c.h.b16 %v5405
        %v6972 = vunpack.c.l.b16 %v5406
        %v6973 = vunpack.c.h.b16 %v5406
        %v6974 = vunpack.c.l.b16 %v5407
        %v6975 = vunpack.c.h.b16 %v5407
        %v6976 = vunpack.c.l.b16 %v5408
        %v6977 = vunpack.c.h.b16 %v5408
        %v6978 = vunpack.c.l.b16 %v5409
        %v6979 = vunpack.c.h.b16 %v5409
        %v6980 = vunpack.c.l.b16 %v5410
        %v6981 = vunpack.c.h.b16 %v5410
        %v6982 = vunpack.c.l.b16 %v5411
        %v6983 = vunpack.c.h.b16 %v5411
        %v6984 = vunpack.c.l.b16 %v5412
        %v6985 = vunpack.c.h.b16 %v5412
        %v6986 = vunpack.c.l.b16 %v5413
        %v6987 = vunpack.c.h.b16 %v5413
        %v6988 = vunpack.c.l.b16 %v5414
        %v6989 = vunpack.c.h.b16 %v5414
        %v6990 = vunpack.c.l.b16 %v5415
        %v6991 = vunpack.c.h.b16 %v5415
        %v6992 = vunpack.c.l.b16 %v5416
        %v6993 = vunpack.c.h.b16 %v5416
        %v6994 = vunpack.c.l.b16 %v5417
        %v6995 = vunpack.c.h.b16 %v5417
        %v6996 = vunpack.c.l.b16 %v5418
        %v6997 = vunpack.c.h.b16 %v5418
        %v6998 = vunpack.c.l.b16 %v5419
        %v6999 = vunpack.c.h.b16 %v5419
        %v7000 = vunpack.c.l.b16 %v5420
        %v7001 = vunpack.c.h.b16 %v5420
        %v7002 = vunpack.c.l.b16 %v5421
        %v7003 = vunpack.c.h.b16 %v5421
        %v7004 = vunpack.c.l.b16 %v5422
        %v7005 = vunpack.c.h.b16 %v5422
        %v7006 = vunpack.c.l.b16 %v5423
        %v7007 = vunpack.c.h.b16 %v5423
        %v7008 = vunpack.c.l.b16 %v5424
        %v7009 = vunpack.c.h.b16 %v5424
        %v7010 = vunpack.c.l.b16 %v5425
        %v7011 = vunpack.c.h.b16 %v5425
        %v7012 = vunpack.c.l.b16 %v5426
        %v7013 = vunpack.c.h.b16 %v5426
        %v7014 = vunpack.c.l.b16 %v5427
        %v7015 = vunpack.c.h.b16 %v5427
        %v7016 = vunpack.c.l.b16 %v5428
        %v7017 = vunpack.c.h.b16 %v5428
        %v7018 = vunpack.c.l.b16 %v5429
        %v7019 = vunpack.c.h.b16 %v5429
        %v7020 = vunpack.c.l.b16 %v5430
        %v7021 = vunpack.c.h.b16 %v5430
        %v7022 = vunpack.c.l.b16 %v5431
        %v7023 = vunpack.c.h.b16 %v5431
        %v7024 = vunpack.c.l.b16 %v5432
        %v7025 = vunpack.c.h.b16 %v5432
        %v7026 = vunpack.c.l.b16 %v5433
        %v7027 = vunpack.c.h.b16 %v5433
        %v7028 = vunpack.c.l.b16 %v5434
        %v7029 = vunpack.c.h.b16 %v5434
        %v7030 = vunpack.c.l.b16 %v5435
        %v7031 = vunpack.c.h.b16 %v5435
        %v7032 = vunpack.c.l.b16 %v5436
        %v7033 = vunpack.c.h.b16 %v5436
        %v7034 = vunpack.c.l.b16 %v5437
        %v7035 = vunpack.c.h.b16 %v5437
        %v7036 = vunpack.c.l.b16 %v5438
        %v7037 = vunpack.c.h.b16 %v5438
        %v7038 = vunpack.c.l.b16 %v5439
        %v7039 = vunpack.c.h.b16 %v5439
        %v7040 = vunpack.c.l.b16 %v5440
        %v7041 = vunpack.c.h.b16 %v5440
        %v7042 = vunpack.c.l.b16 %v5441
        %v7043 = vunpack.c.h.b16 %v5441
        %v7044 = vunpack.c.l.b16 %v5442
        %v7045 = vunpack.c.h.b16 %v5442
        %v7046 = vunpack.c.l.b16 %v5443
        %v7047 = vunpack.c.h.b16 %v5443
        %v7048 = vunpack.c.l.b16 %v5444
        %v7049 = vunpack.c.h.b16 %v5444
        %v7050 = vunpack.c.l.b16 %v5445
        %v7051 = vunpack.c.h.b16 %v5445
        %v7052 = vunpack.c.l.b16 %v5446
        %v7053 = vunpack.c.h.b16 %v5446
        %v7054 = vunpack.c.l.b16 %v5447
        %v7055 = vunpack.c.h.b16 %v5447
        %v7056 = vunpack.c.l.b16 %v5448
        %v7057 = vunpack.c.h.b16 %v5448
        %v7058 = vunpack.c.l.b16 %v5449
        %v7059 = vunpack.c.h.b16 %v5449
        %v7060 = vunpack.c.l.b16 %v5450
        %v7061 = vunpack.c.h.b16 %v5450
        %v7062 = vunpack.c.l.b16 %v5451
        %v7063 = vunpack.c.h.b16 %v5451
        %v7064 = vunpack.c.l.b16 %v5452
        %v7065 = vunpack.c.h.b16 %v5452
        %v7066 = vunpack.c.l.b16 %v5453
        %v7067 = vunpack.c.h.b16 %v5453
        %v7068 = vunpack.c.l.b16 %v5454
        %v7069 = vunpack.c.h.b16 %v5454
        %v7070 = vunpack.c.l.b16 %v5455
        %v7071 = vunpack.c.h.b16 %v5455
        %v7072 = vunpack.c.l.b16 %v5456
        %v7073 = vunpack.c.h.b16 %v5456
        %v7074 = vunpack.c.l.b16 %v5457
        %v7075 = vunpack.c.h.b16 %v5457
        %v7076 = vunpack.c.l.b16 %v5458
        %v7077 = vunpack.c.h.b16 %v5458
        %v7078 = vunpack.c.l.b16 %v5459
        %v7079 = vunpack.c.h.b16 %v5459
        %v7080 = vunpack.c.l.b16 %v5460
        %v7081 = vunpack.c.h.b16 %v5460
        %v7082 = vunpack.c.l.b16 %v5461
        %v7083 = vunpack.c.h.b16 %v5461
        %v7084 = vunpack.c.l.b16 %v5462
        %v7085 = vunpack.c.h.b16 %v5462
        %v7086 = vunpack.c.l.b16 %v5463
        %v7087 = vunpack.c.h.b16 %v5463
        %v7088 = vunpack.c.l.b16 %v5464
        %v7089 = vunpack.c.h.b16 %v5464
        %v7090 = vunpack.c.l.b16 %v5465
        %v7091 = vunpack.c.h.b16 %v5465
        %v7092 = vunpack.c.l.b16 %v5466
        %v7093 = vunpack.c.h.b16 %v5466
        %v7094 = vunpack.c.l.b16 %v5467
        %v7095 = vunpack.c.h.b16 %v5467
        %v7096 = vunpack.c.l.b16 %v5468
        %v7097 = vunpack.c.h.b16 %v5468
        %v7098 = vunpack.c.l.b16 %v5469
        %v7099 = vunpack.c.h.b16 %v5469
        %v7100 = vunpack.c.l.b16 %v5470
        %v7101 = vunpack.c.h.b16 %v5470
        %v7102 = vunpack.c.l.b16 %v5471
        %v7103 = vunpack.c.h.b16 %v5471
        %v7104 = vunpack.c.l.b16 %v5472
        %v7105 = vunpack.c.h.b16 %v5472
        %v7106 = vunpack.c.l.b16 %v5473
        %v7107 = vunpack.c.h.b16 %v5473
        %v7108 = vunpack.c.l.b16 %v5474
        %v7109 = vunpack.c.h.b16 %v5474
        %v7110 = vunpack.c.l.b16 %v5475
        %v7111 = vunpack.c.h.b16 %v5475
        %v7112 = vunpack.c.l.b16 %v5476
        %v7113 = vunpack.c.h.b16 %v5476
        %v7114 = vunpack.c.l.b16 %v5477
        %v7115 = vunpack.c.h.b16 %v5477
        %v7116 = vunpack.c.l.b16 %v5478
        %v7117 = vunpack.c.h.b16 %v5478
        %v7118 = vunpack.c.l.b16 %v5479
        %v7119 = vunpack.c.h.b16 %v5479
        %v7120 = vunpack.c.l.b16 %v5480
        %v7121 = vunpack.c.h.b16 %v5480
        %v7122 = vunpack.c.l.b16 %v5481
        %v7123 = vunpack.c.h.b16 %v5481
        %v7124 = vunpack.c.l.b16 %v5482
        %v7125 = vunpack.c.h.b16 %v5482
        %v7126 = vunpack.c.l.b16 %v5483
        %v7127 = vunpack.c.h.b16 %v5483
        %v7128 = vunpack.c.l.b16 %v5484
        %v7129 = vunpack.c.h.b16 %v5484
        %v7130 = vunpack.c.l.b16 %v5485
        %v7131 = vunpack.c.h.b16 %v5485
        %v7132 = vunpack.c.l.b16 %v5486
        %v7133 = vunpack.c.h.b16 %v5486
        %v7134 = vunpack.c.l.b16 %v5487
        %v7135 = vunpack.c.h.b16 %v5487
        %v7136 = vunpack.c.l.b16 %v5488
        %v7137 = vunpack.c.h.b16 %v5488
        %v7138 = vunpack.c.l.b16 %v5489
        %v7139 = vunpack.c.h.b16 %v5489
        %v7140 = vunpack.c.l.b16 %v5490
        %v7141 = vunpack.c.h.b16 %v5490
        %v7142 = vunpack.c.l.b16 %v5491
        %v7143 = vunpack.c.h.b16 %v5491
        %v7144 = vunpack.c.l.b16 %v5492
        %v7145 = vunpack.c.h.b16 %v5492
        %v7146 = vunpack.c.l.b16 %v5493
        %v7147 = vunpack.c.h.b16 %v5493
        %v7148 = vunpack.c.l.b16 %v5494
        %v7149 = vunpack.c.h.b16 %v5494
        %v7150 = vunpack.c.l.b16 %v5495
        %v7151 = vunpack.c.h.b16 %v5495
        %v7152 = vunpack.c.l.b16 %v5496
        %v7153 = vunpack.c.h.b16 %v5496
        %v7154 = vunpack.c.l.b16 %v5497
        %v7155 = vunpack.c.h.b16 %v5497
        %v7156 = vunpack.c.l.b16 %v5498
        %v7157 = vunpack.c.h.b16 %v5498
        %v7158 = vunpack.c.l.b16 %v5499
        %v7159 = vunpack.c.h.b16 %v5499
        %v7160 = vunpack.c.l.b16 %v5500
        %v7161 = vunpack.c.h.b16 %v5500
        %v7162 = vunpack.c.l.b16 %v5501
        %v7163 = vunpack.c.h.b16 %v5501
        %v7164 = vunpack.c.l.b16 %v5502
        %v7165 = vunpack.c.h.b16 %v5502
        %v7166 = vunpack.c.l.b16 %v5503
        %v7167 = vunpack.c.h.b16 %v5503
        %v7168 = vunpack.c.l.b16 %v5504
        %v7169 = vunpack.c.h.b16 %v5504
        %v7170 = vunpack.c.l.b16 %v5505
        %v7171 = vunpack.c.h.b16 %v5505
        %v7172 = vunpack.c.l.b16 %v5506
        %v7173 = vunpack.c.h.b16 %v5506
        %v7174 = vunpack.c.l.b16 %v5507
        %v7175 = vunpack.c.h.b16 %v5507
        %v7176 = vunpack.c.l.b16 %v5508
        %v7177 = vunpack.c.h.b16 %v5508
        %v7178 = vunpack.c.l.b16 %v5509
        %v7179 = vunpack.c.h.b16 %v5509
        %v7180 = vunpack.c.l.b16 %v5510
        %v7181 = vunpack.c.h.b16 %v5510
        %v7182 = vunpack.c.l.b16 %v5511
        %v7183 = vunpack.c.h.b16 %v5511
        %v7184 = vunpack.c.l.b16 %v5512
        %v7185 = vunpack.c.h.b16 %v5512
        %v7186 = vunpack.c.l.b16 %v5513
        %v7187 = vunpack.c.h.b16 %v5513
        %v7188 = vunpack.c.l.b16 %v5514
        %v7189 = vunpack.c.h.b16 %v5514
        %v7190 = vunpack.c.l.b16 %v5515
        %v7191 = vunpack.c.h.b16 %v5515
        %v7192 = vunpack.c.l.b16 %v5516
        %v7193 = vunpack.c.h.b16 %v5516
        %v7194 = vunpack.c.l.b16 %v5517
        %v7195 = vunpack.c.h.b16 %v5517
        %v7196 = vunpack.c.l.b16 %v5518
        %v7197 = vunpack.c.h.b16 %v5518
        %v7198 = vunpack.c.l.b16 %v5519
        %v7199 = vunpack.c.h.b16 %v5519
        %v7200 = vunpack.c.l.b16 %v5520
        %v7201 = vunpack.c.h.b16 %v5520
        %v7202 = vunpack.c.l.b16 %v5521
        %v7203 = vunpack.c.h.b16 %v5521
        %v7204 = vunpack.c.l.b16 %v5522
        %v7205 = vunpack.c.h.b16 %v5522
        %v7206 = vunpack.c.l.b16 %v5523
        %v7207 = vunpack.c.h.b16 %v5523
        %v7208 = vunpack.c.l.b16 %v5524
        %v7209 = vunpack.c.h.b16 %v5524
        %v7210 = vunpack.c.l.b16 %v5525
        %v7211 = vunpack.c.h.b16 %v5525
        %v7212 = vunpack.c.l.b16 %v5526
        %v7213 = vunpack.c.h.b16 %v5526
        %v7214 = vunpack.c.l.b16 %v5527
        %v7215 = vunpack.c.h.b16 %v5527
        %v7216 = vunpack.c.l.b16 %v5528
        %v7217 = vunpack.c.h.b16 %v5528
        %v7218 = vunpack.c.l.b16 %v5529
        %v7219 = vunpack.c.h.b16 %v5529
        %v7220 = vunpack.c.l.b16 %v5530
        %v7221 = vunpack.c.h.b16 %v5530
        %v7222 = vunpack.c.l.b16 %v5531
        %v7223 = vunpack.c.h.b16 %v5531
        %v7224 = vunpack.c.l.b16 %v5532
        %v7225 = vunpack.c.h.b16 %v5532
        %v7226 = vunpack.c.l.b16 %v5533
        %v7227 = vunpack.c.h.b16 %v5533
        %v7228 = vunpack.c.l.b16 %v5534
        %v7229 = vunpack.c.h.b16 %v5534
        %v7230 = vunpack.c.l.b16 %v5535
        %v7231 = vunpack.c.h.b16 %v5535
        %v7232 = vunpack.c.l.b16 %v5536
        %v7233 = vunpack.c.h.b16 %v5536
        %v7234 = vunpack.c.l.b16 %v5537
        %v7235 = vunpack.c.h.b16 %v5537
        %v7236 = vunpack.c.l.b16 %v5538
        %v7237 = vunpack.c.h.b16 %v5538
        %v7238 = vunpack.c.l.b16 %v5539
        %v7239 = vunpack.c.h.b16 %v5539
        %v7240 = vunpack.c.l.b16 %v5540
        %v7241 = vunpack.c.h.b16 %v5540
        %v7242 = vunpack.c.l.b16 %v5541
        %v7243 = vunpack.c.h.b16 %v5541
        %v7244 = vunpack.c.l.b16 %v5542
        %v7245 = vunpack.c.h.b16 %v5542
        %v7246 = vunpack.c.l.b16 %v5543
        %v7247 = vunpack.c.h.b16 %v5543
        %v7248 = vunpack.c.l.b16 %v5544
        %v7249 = vunpack.c.h.b16 %v5544
        %v7250 = vunpack.c.l.b16 %v5545
        %v7251 = vunpack.c.h.b16 %v5545
        %v7252 = vunpack.c.l.b16 %v5546
        %v7253 = vunpack.c.h.b16 %v5546
        %v7254 = vunpack.c.l.b16 %v5547
        %v7255 = vunpack.c.h.b16 %v5547
        %v7256 = vunpack.c.l.b16 %v5548
        %v7257 = vunpack.c.h.b16 %v5548
        %v7258 = vunpack.c.l.b16 %v5549
        %v7259 = vunpack.c.h.b16 %v5549
        %v7260 = vunpack.c.l.b16 %v5550
        %v7261 = vunpack.c.h.b16 %v5550
        %v7262 = vunpack.c.l.b16 %v5551
        %v7263 = vunpack.c.h.b16 %v5551
        %v7264 = vunpack.c.l.b16 %v5552
        %v7265 = vunpack.c.h.b16 %v5552
        %v7266 = vunpack.c.l.b16 %v5553
        %v7267 = vunpack.c.h.b16 %v5553
        %v7268 = vunpack.c.l.b16 %v5554
        %v7269 = vunpack.c.h.b16 %v5554
        %v7270 = vunpack.c.l.b16 %v5555
        %v7271 = vunpack.c.h.b16 %v5555
        %v7272 = vunpack.c.l.b16 %v5556
        %v7273 = vunpack.c.h.b16 %v5556
        %v7274 = vunpack.c.l.b16 %v5557
        %v7275 = vunpack.c.h.b16 %v5557
        %v7276 = vunpack.c.l.b16 %v5558
        %v7277 = vunpack.c.h.b16 %v5558
        %v7278 = vunpack.c.l.b16 %v5559
        %v7279 = vunpack.c.h.b16 %v5559
        %v7280 = vunpack.c.l.b16 %v5560
        %v7281 = vunpack.c.h.b16 %v5560
        %v7282 = vunpack.c.l.b16 %v5561
        %v7283 = vunpack.c.h.b16 %v5561
        %v7284 = vunpack.c.l.b16 %v5562
        %v7285 = vunpack.c.h.b16 %v5562
        %v7286 = vunpack.c.l.b16 %v5563
        %v7287 = vunpack.c.h.b16 %v5563
        %v7288 = vunpack.c.l.b16 %v5564
        %v7289 = vunpack.c.h.b16 %v5564
        %v7290 = vunpack.c.l.b16 %v5565
        %v7291 = vunpack.c.h.b16 %v5565
        %v7292 = vunpack.c.l.b16 %v5566
        %v7293 = vunpack.c.h.b16 %v5566
        %v7294 = vunpack.c.l.b16 %v5567
        %v7295 = vunpack.c.h.b16 %v5567
        %v7296 = vunpack.c.l.b16 %v5568
        %v7297 = vunpack.c.h.b16 %v5568
        %v7298 = vunpack.c.l.b16 %v5569
        %v7299 = vunpack.c.h.b16 %v5569
        %v7300 = vunpack.c.l.b16 %v5570
        %v7301 = vunpack.c.h.b16 %v5570
        %v7302 = vunpack.c.l.b16 %v5571
        %v7303 = vunpack.c.h.b16 %v5571
        %v7304 = vunpack.c.l.b16 %v5572
        %v7305 = vunpack.c.h.b16 %v5572
        %v7306 = vunpack.c.l.b16 %v5573
        %v7307 = vunpack.c.h.b16 %v5573
        %v7308 = vunpack.c.l.b16 %v5574
        %v7309 = vunpack.c.h.b16 %v5574
        %v7310 = vunpack.c.l.b16 %v5575
        %v7311 = vunpack.c.h.b16 %v5575
        %v7312 = vunpack.c.l.b16 %v5576
        %v7313 = vunpack.c.h.b16 %v5576
        %v7314 = vunpack.c.l.b16 %v5577
        %v7315 = vunpack.c.h.b16 %v5577
        %v7316 = vunpack.c.l.b16 %v5578
        %v7317 = vunpack.c.h.b16 %v5578
        %v7318 = vunpack.c.l.b16 %v5579
        %v7319 = vunpack.c.h.b16 %v5579
        %v7320 = vunpack.c.l.b16 %v5580
        %v7321 = vunpack.c.h.b16 %v5580
        %v7322 = vunpack.c.l.b16 %v5581
        %v7323 = vunpack.c.h.b16 %v5581
        %v7324 = vunpack.c.l.b16 %v5582
        %v7325 = vunpack.c.h.b16 %v5582
        %v7326 = vunpack.c.l.b16 %v5583
        %v7327 = vunpack.c.h.b16 %v5583
        %v7328 = vunpack.c.l.b16 %v5584
        %v7329 = vunpack.c.h.b16 %v5584
        %v7330 = vunpack.c.l.b16 %v5585
        %v7331 = vunpack.c.h.b16 %v5585
        %v7332 = vunpack.c.l.b16 %v5586
        %v7333 = vunpack.c.h.b16 %v5586
        %v7334 = vunpack.c.l.b16 %v5587
        %v7335 = vunpack.c.h.b16 %v5587
        %v7336 = vunpack.c.l.b16 %v5588
        %v7337 = vunpack.c.h.b16 %v5588
        %v7338 = vunpack.c.l.b16 %v5589
        %v7339 = vunpack.c.h.b16 %v5589
        %v7340 = vunpack.c.l.b16 %v5590
        %v7341 = vunpack.c.h.b16 %v5590
        %v7342 = vunpack.c.l.b16 %v5591
        %v7343 = vunpack.c.h.b16 %v5591
        %v7344 = vunpack.c.l.b16 %v5592
        %v7345 = vunpack.c.h.b16 %v5592
        %v7346 = vunpack.c.l.b16 %v5593
        %v7347 = vunpack.c.h.b16 %v5593
        %v7348 = vunpack.c.l.b16 %v5594
        %v7349 = vunpack.c.h.b16 %v5594
        %v7350 = vunpack.c.l.b16 %v5595
        %v7351 = vunpack.c.h.b16 %v5595
        %v7352 = vunpack.c.l.b16 %v5596
        %v7353 = vunpack.c.h.b16 %v5596
        %v7354 = vunpack.c.l.b16 %v5597
        %v7355 = vunpack.c.h.b16 %v5597
        %v7356 = vunpack.c.l.b16 %v5598
        %v7357 = vunpack.c.h.b16 %v5598
        %v7358 = vunpack.c.l.b16 %v5599
        %v7359 = vunpack.c.h.b16 %v5599
        %v7360 = vunpack.c.l.b16 %v5600
        %v7361 = vunpack.c.h.b16 %v5600
        %v7362 = vunpack.c.l.b16 %v5601
        %v7363 = vunpack.c.h.b16 %v5601
        %v7364 = vunpack.c.l.b16 %v5602
        %v7365 = vunpack.c.h.b16 %v5602
        %v7366 = vunpack.c.l.b16 %v5603
        %v7367 = vunpack.c.h.b16 %v5603
        %v7368 = vunpack.c.l.b16 %v5604
        %v7369 = vunpack.c.h.b16 %v5604
        %v7370 = vunpack.c.l.b16 %v5605
        %v7371 = vunpack.c.h.b16 %v5605
        %v7372 = vunpack.c.l.b16 %v5606
        %v7373 = vunpack.c.h.b16 %v5606
        %v7374 = vunpack.c.l.b16 %v5607
        %v7375 = vunpack.c.h.b16 %v5607
        %v7376 = vunpack.c.l.b16 %v5608
        %v7377 = vunpack.c.h.b16 %v5608
        %v7378 = vunpack.c.l.b16 %v5609
        %v7379 = vunpack.c.h.b16 %v5609
        %v7380 = vunpack.c.l.b16 %v5610
        %v7381 = vunpack.c.h.b16 %v5610
        %v7382 = vunpack.c.l.b16 %v5611
        %v7383 = vunpack.c.h.b16 %v5611
        %v7384 = vunpack.c.l.b16 %v5612
        %v7385 = vunpack.c.h.b16 %v5612
        %v7386 = vunpack.c.l.b16 %v5613
        %v7387 = vunpack.c.h.b16 %v5613
        %v7388 = vunpack.c.l.b16 %v5614
        %v7389 = vunpack.c.h.b16 %v5614
        %v7390 = vunpack.c.l.b16 %v5615
        %v7391 = vunpack.c.h.b16 %v5615
        %v7392 = vunpack.c.l.b16 %v5616
        %v7393 = vunpack.c.h.b16 %v5616
        %v7394 = vunpack.c.l.b16 %v5617
        %v7395 = vunpack.c.h.b16 %v5617
        %v7396 = vunpack.c.l.b16 %v5618
        %v7397 = vunpack.c.h.b16 %v5618
        %v7398 = vunpack.c.l.b16 %v5619
        %v7399 = vunpack.c.h.b16 %v5619
        %v7400 = vunpack.c.l.b16 %v5620
        %v7401 = vunpack.c.h.b16 %v5620
        %v7402 = vunpack.c.l.b16 %v5621
        %v7403 = vunpack.c.h.b16 %v5621
        %v7404 = vunpack.c.l.b16 %v5622
        %v7405 = vunpack.c.h.b16 %v5622
        %v7406 = vunpack.c.l.b16 %v5623
        %v7407 = vunpack.c.h.b16 %v5623
        %v7408 = vunpack.c.l.b16 %v5624
        %v7409 = vunpack.c.h.b16 %v5624
        %v7410 = vunpack.c.l.b16 %v5625
        %v7411 = vunpack.c.h.b16 %v5625
        %v7412 = vunpack.c.l.b16 %v5626
        %v7413 = vunpack.c.h.b16 %v5626
        %v7414 = vunpack.c.l.b16 %v5627
        %v7415 = vunpack.c.h.b16 %v5627
        %v7416 = vunpack.c.l.b16 %v5628
        %v7417 = vunpack.c.h.b16 %v5628
        %v7418 = vunpack.c.l.b16 %v5629
        %v7419 = vunpack.c.h.b16 %v5629
        %v7420 = vunpack.c.l.b16 %v5630
        %v7421 = vunpack.c.h.b16 %v5630
        %v7422 = vpack.c.b16 %v6274, %v6270
        %v7423 = vpack.c.b16 %v6275, %v6271
        %v7424 = vpack.c.b16 %v6276, %v6272
        %v7425 = vpack.c.b16 %v6277, %v6273
        %v7426 = vpack.c.b16 %v6282, %v6278
        %v7427 = vpack.c.b16 %v6283, %v6279
        %v7428 = vpack.c.b16 %v6284, %v6280
        %v7429 = vpack.c.b16 %v6285, %v6281
        %v7430 = vpack.c.b16 %v6290, %v6286
        %v7431 = vpack.c.b16 %v6291, %v6287
        %v7432 = vpack.c.b16 %v6292, %v6288
        %v7433 = vpack.c.b16 %v6293, %v6289
        %v7434 = vpack.c.b16 %v6298, %v6294
        %v7435 = vpack.c.b16 %v6299, %v6295
        %v7436 = vpack.c.b16 %v6300, %v6296
        %v7437 = vpack.c.b16 %v6301, %v6297
        %v7438 = vpack.c.b16 %v6306, %v6302
        %v7439 = vpack.c.b16 %v6307, %v6303
        %v7440 = vpack.c.b16 %v6308, %v6304
        %v7441 = vpack.c.b16 %v6309, %v6305
        %v7442 = vpack.c.b16 %v6314, %v6310
        %v7443 = vpack.c.b16 %v6315, %v6311
        %v7444 = vpack.c.b16 %v6316, %v6312
        %v7445 = vpack.c.b16 %v6317, %v6313
        %v7446 = vpack.c.b16 %v6322, %v6318
        %v7447 = vpack.c.b16 %v6323, %v6319
        %v7448 = vpack.c.b16 %v6324, %v6320
        %v7449 = vpack.c.b16 %v6325, %v6321
        %v7450 = vpack.c.b16 %v6330, %v6326
        %v7451 = vpack.c.b16 %v6331, %v6327
        %v7452 = vpack.c.b16 %v6332, %v6328
        %v7453 = vpack.c.b16 %v6333, %v6329
        %v7454 = vpack.c.b16 %v6338, %v6334
        %v7455 = vpack.c.b16 %v6339, %v6335
        %v7456 = vpack.c.b16 %v6340, %v6336
        %v7457 = vpack.c.b16 %v6341, %v6337
        %v7458 = vpack.c.b16 %v6346, %v6342
        %v7459 = vpack.c.b16 %v6347, %v6343
        %v7460 = vpack.c.b16 %v6348, %v6344
        %v7461 = vpack.c.b16 %v6349, %v6345
        %v7462 = vpack.c.b16 %v6354, %v6350
        %v7463 = vpack.c.b16 %v6355, %v6351
        %v7464 = vpack.c.b16 %v6356, %v6352
        %v7465 = vpack.c.b16 %v6357, %v6353
        %v7466 = vpack.c.b16 %v6362, %v6358
        %v7467 = vpack.c.b16 %v6363, %v6359
        %v7468 = vpack.c.b16 %v6364, %v6360
        %v7469 = vpack.c.b16 %v6365, %v6361
        %v7470 = vpack.c.b16 %v6370, %v6366
        %v7471 = vpack.c.b16 %v6371, %v6367
        %v7472 = vpack.c.b16 %v6372, %v6368
        %v7473 = vpack.c.b16 %v6373, %v6369
        %v7474 = vpack.c.b16 %v6378, %v6374
        %v7475 = vpack.c.b16 %v6379, %v6375
        %v7476 = vpack.c.b16 %v6380, %v6376
        %v7477 = vpack.c.b16 %v6381, %v6377
        %v7478 = vpack.c.b16 %v6386, %v6382
        %v7479 = vpack.c.b16 %v6387, %v6383
        %v7480 = vpack.c.b16 %v6388, %v6384
        %v7481 = vpack.c.b16 %v6389, %v6385
        %v7482 = vpack.c.b16 %v6394, %v6390
        %v7483 = vpack.c.b16 %v6395, %v6391
        %v7484 = vpack.c.b16 %v6396, %v6392
        %v7485 = vpack.c.b16 %v6397, %v6393
        %v7486 = vpack.c.b16 %v6402, %v6398
        %v7487 = vpack.c.b16 %v6403, %v6399
        %v7488 = vpack.c.b16 %v6404, %v6400
        %v7489 = vpack.c.b16 %v6405, %v6401
        %v7490 = vpack.c.b16 %v6410, %v6406
        %v7491 = vpack.c.b16 %v6411, %v6407
        %v7492 = vpack.c.b16 %v6412, %v6408
        %v7493 = vpack.c.b16 %v6413, %v6409
        %v7494 = vpack.c.b16 %v6418, %v6414
        %v7495 = vpack.c.b16 %v6419, %v6415
        %v7496 = vpack.c.b16 %v6420, %v6416
        %v7497 = vpack.c.b16 %v6421, %v6417
        %v7498 = vpack.c.b16 %v6426, %v6422
        %v7499 = vpack.c.b16 %v6427, %v6423
        %v7500 = vpack.c.b16 %v6428, %v6424
        %v7501 = vpack.c.b16 %v6429, %v6425
        %v7502 = vpack.c.b16 %v6434, %v6430
        %v7503 = vpack.c.b16 %v6435, %v6431
        %v7504 = vpack.c.b16 %v6436, %v6432
        %v7505 = vpack.c.b16 %v6437, %v6433
        %v7506 = vpack.c.b16 %v6442, %v6438
        %v7507 = vpack.c.b16 %v6443, %v6439
        %v7508 = vpack.c.b16 %v6444, %v6440
        %v7509 = vpack.c.b16 %v6445, %v6441
        %v7510 = vpack.c.b16 %v6450, %v6446
        %v7511 = vpack.c.b16 %v6451, %v6447
        %v7512 = vpack.c.b16 %v6452, %v6448
        %v7513 = vpack.c.b16 %v6453, %v6449
        %v7514 = vpack.c.b16 %v6458, %v6454
        %v7515 = vpack.c.b16 %v6459, %v6455
        %v7516 = vpack.c.b16 %v6460, %v6456
        %v7517 = vpack.c.b16 %v6461, %v6457
        %v7518 = vpack.c.b16 %v6466, %v6462
        %v7519 = vpack.c.b16 %v6467, %v6463
        %v7520 = vpack.c.b16 %v6468, %v6464
        %v7521 = vpack.c.b16 %v6469, %v6465
        %v7522 = vpack.c.b16 %v6474, %v6470
        %v7523 = vpack.c.b16 %v6475, %v6471
        %v7524 = vpack.c.b16 %v6476, %v6472
        %v7525 = vpack.c.b16 %v6477, %v6473
        %v7526 = vpack.c.b16 %v6482, %v6478
        %v7527 = vpack.c.b16 %v6483, %v6479
        %v7528 = vpack.c.b16 %v6484, %v6480
        %v7529 = vpack.c.b16 %v6485, %v6481
        %v7530 = vpack.c.b16 %v6490, %v6486
        %v7531 = vpack.c.b16 %v6491, %v6487
        %v7532 = vpack.c.b16 %v6492, %v6488
        %v7533 = vpack.c.b16 %v6493, %v6489
        %v7534 = vpack.c.b16 %v6498, %v6494
        %v7535 = vpack.c.b16 %v6499, %v6495
        %v7536 = vpack.c.b16 %v6500, %v6496
        %v7537 = vpack.c.b16 %v6501, %v6497
        %v7538 = vpack.c.b16 %v6506, %v6502
        %v7539 = vpack.c.b16 %v6507, %v6503
        %v7540 = vpack.c.b16 %v6508, %v6504
        %v7541 = vpack.c.b16 %v6509, %v6505
        %v7542 = vpack.c.b16 %v6514, %v6510
        %v7543 = vpack.c.b16 %v6515, %v6511
        %v7544 = vpack.c.b16 %v6516, %v6512
        %v7545 = vpack.c.b16 %v6517, %v6513
        %v7546 = vpack.c.b16 %v6522, %v6518
        %v7547 = vpack.c.b16 %v6523, %v6519
        %v7548 = vpack.c.b16 %v6524, %v6520
        %v7549 = vpack.c.b16 %v6525, %v6521
        %v7550 = vpack.c.b16 %v6530, %v6526
        %v7551 = vpack.c.b16 %v6531, %v6527
        %v7552 = vpack.c.b16 %v6532, %v6528
        %v7553 = vpack.c.b16 %v6533, %v6529
        %v7554 = vpack.c.b16 %v6538, %v6534
        %v7555 = vpack.c.b16 %v6539, %v6535
        %v7556 = vpack.c.b16 %v6540, %v6536
        %v7557 = vpack.c.b16 %v6541, %v6537
        %v7558 = vpack.c.b16 %v6546, %v6542
        %v7559 = vpack.c.b16 %v6547, %v6543
        %v7560 = vpack.c.b16 %v6548, %v6544
        %v7561 = vpack.c.b16 %v6549, %v6545
        %v7562 = vpack.c.b16 %v6554, %v6550
        %v7563 = vpack.c.b16 %v6555, %v6551
        %v7564 = vpack.c.b16 %v6556, %v6552
        %v7565 = vpack.c.b16 %v6557, %v6553
        %v7566 = vpack.c.b16 %v6562, %v6558
        %v7567 = vpack.c.b16 %v6563, %v6559
        %v7568 = vpack.c.b16 %v6564, %v6560
        %v7569 = vpack.c.b16 %v6565, %v6561
        %v7570 = vpack.c.b16 %v6570, %v6566
        %v7571 = vpack.c.b16 %v6571, %v6567
        %v7572 = vpack.c.b16 %v6572, %v6568
        %v7573 = vpack.c.b16 %v6573, %v6569
        %v7574 = vpack.c.b16 %v6578, %v6574
        %v7575 = vpack.c.b16 %v6579, %v6575
        %v7576 = vpack.c.b16 %v6580, %v6576
        %v7577 = vpack.c.b16 %v6581, %v6577
        %v7578 = vpack.c.b16 %v6586, %v6582
        %v7579 = vpack.c.b16 %v6587, %v6583
        %v7580 = vpack.c.b16 %v6588, %v6584
        %v7581 = vpack.c.b16 %v6589, %v6585
        %v7582 = vpack.c.b16 %v6594, %v6590
        %v7583 = vpack.c.b16 %v6595, %v6591
        %v7584 = vpack.c.b16 %v6596, %v6592
        %v7585 = vpack.c.b16 %v6597, %v6593
        %v7586 = vpack.c.b16 %v6602, %v6598
        %v7587 = vpack.c.b16 %v6603, %v6599
        %v7588 = vpack.c.b16 %v6604, %v6600
        %v7589 = vpack.c.b16 %v6605, %v6601
        %v7590 = vpack.c.b16 %v6610, %v6606
        %v7591 = vpack.c.b16 %v6611, %v6607
        %v7592 = vpack.c.b16 %v6612, %v6608
        %v7593 = vpack.c.b16 %v6613, %v6609
        %v7594 = vpack.c.b16 %v6618, %v6614
        %v7595 = vpack.c.b16 %v6619, %v6615
        %v7596 = vpack.c.b16 %v6620, %v6616
        %v7597 = vpack.c.b16 %v6621, %v6617
        %v7598 = vpack.c.b16 %v6626, %v6622
        %v7599 = vpack.c.b16 %v6627, %v6623
        %v7600 = vpack.c.b16 %v6628, %v6624
        %v7601 = vpack.c.b16 %v6629, %v6625
        %v7602 = vpack.c.b16 %v6634, %v6630
        %v7603 = vpack.c.b16 %v6635, %v6631
        %v7604 = vpack.c.b16 %v6636, %v6632
        %v7605 = vpack.c.b16 %v6637, %v6633
        %v7606 = vpack.c.b16 %v6642, %v6638
        %v7607 = vpack.c.b16 %v6643, %v6639
        %v7608 = vpack.c.b16 %v6644, %v6640
        %v7609 = vpack.c.b16 %v6645, %v6641
        %v7610 = vpack.c.b16 %v6650, %v6646
        %v7611 = vpack.c.b16 %v6651, %v6647
        %v7612 = vpack.c.b16 %v6652, %v6648
        %v7613 = vpack.c.b16 %v6653, %v6649
        %v7614 = vpack.c.b16 %v6658, %v6654
        %v7615 = vpack.c.b16 %v6659, %v6655
        %v7616 = vpack.c.b16 %v6660, %v6656
        %v7617 = vpack.c.b16 %v6661, %v6657
        %v7618 = vpack.c.b16 %v6666, %v6662
        %v7619 = vpack.c.b16 %v6667, %v6663
        %v7620 = vpack.c.b16 %v6668, %v6664
        %v7621 = vpack.c.b16 %v6669, %v6665
        %v7622 = vpack.c.b16 %v6674, %v6670
        %v7623 = vpack.c.b16 %v6675, %v6671
        %v7624 = vpack.c.b16 %v6676, %v6672
        %v7625 = vpack.c.b16 %v6677, %v6673
        %v7626 = vpack.c.b16 %v6682, %v6678
        %v7627 = vpack.c.b16 %v6683, %v6679
        %v7628 = vpack.c.b16 %v6684, %v6680
        %v7629 = vpack.c.b16 %v6685, %v6681
        %v7630 = vpack.c.b16 %v6690, %v6686
        %v7631 = vpack.c.b16 %v6691, %v6687
        %v7632 = vpack.c.b16 %v6692, %v6688
        %v7633 = vpack.c.b16 %v6693, %v6689
        %v7634 = vpack.c.b16 %v6698, %v6694
        %v7635 = vpack.c.b16 %v6699, %v6695
        %v7636 = vpack.c.b16 %v6700, %v6696
        %v7637 = vpack.c.b16 %v6701, %v6697
        %v7638 = vpack.c.b16 %v6706, %v6702
        %v7639 = vpack.c.b16 %v6707, %v6703
        %v7640 = vpack.c.b16 %v6708, %v6704
        %v7641 = vpack.c.b16 %v6709, %v6705
        %v7642 = vpack.c.b16 %v6714, %v6710
        %v7643 = vpack.c.b16 %v6715, %v6711
        %v7644 = vpack.c.b16 %v6716, %v6712
        %v7645 = vpack.c.b16 %v6717, %v6713
        %v7646 = vpack.c.b16 %v6722, %v6718
        %v7647 = vpack.c.b16 %v6723, %v6719
        %v7648 = vpack.c.b16 %v6724, %v6720
        %v7649 = vpack.c.b16 %v6725, %v6721
        %v7650 = vpack.c.b16 %v6730, %v6726
        %v7651 = vpack.c.b16 %v6731, %v6727
        %v7652 = vpack.c.b16 %v6732, %v6728
        %v7653 = vpack.c.b16 %v6733, %v6729
        %v7654 = vpack.c.b16 %v6738, %v6734
        %v7655 = vpack.c.b16 %v6739, %v6735
        %v7656 = vpack.c.b16 %v6740, %v6736
        %v7657 = vpack.c.b16 %v6741, %v6737
        %v7658 = vpack.c.b16 %v6746, %v6742
        %v7659 = vpack.c.b16 %v6747, %v6743
        %v7660 = vpack.c.b16 %v6748, %v6744
        %v7661 = vpack.c.b16 %v6749, %v6745
        %v7662 = vpack.c.b16 %v6754, %v6750
        %v7663 = vpack.c.b16 %v6755, %v6751
        %v7664 = vpack.c.b16 %v6756, %v6752
        %v7665 = vpack.c.b16 %v6757, %v6753
        %v7666 = vpack.c.b16 %v6762, %v6758
        %v7667 = vpack.c.b16 %v6763, %v6759
        %v7668 = vpack.c.b16 %v6764, %v6760
        %v7669 = vpack.c.b16 %v6765, %v6761
        %v7670 = vpack.c.b16 %v6770, %v6766
        %v7671 = vpack.c.b16 %v6771, %v6767
        %v7672 = vpack.c.b16 %v6772, %v6768
        %v7673 = vpack.c.b16 %v6773, %v6769
        %v7674 = vpack.c.b16 %v6778, %v6774
        %v7675 = vpack.c.b16 %v6779, %v6775
        %v7676 = vpack.c.b16 %v6780, %v6776
        %v7677 = vpack.c.b16 %v6781, %v6777
        %v7678 = vpack.c.b16 %v6786, %v6782
        %v7679 = vpack.c.b16 %v6787, %v6783
        %v7680 = vpack.c.b16 %v6788, %v6784
        %v7681 = vpack.c.b16 %v6789, %v6785
        %v7682 = vpack.c.b16 %v6794, %v6790
        %v7683 = vpack.c.b16 %v6795, %v6791
        %v7684 = vpack.c.b16 %v6796, %v6792
        %v7685 = vpack.c.b16 %v6797, %v6793
        %v7686 = vpack.c.b16 %v6802, %v6798
        %v7687 = vpack.c.b16 %v6803, %v6799
        %v7688 = vpack.c.b16 %v6804, %v6800
        %v7689 = vpack.c.b16 %v6805, %v6801
        %v7690 = vpack.c.b16 %v6810, %v6806
        %v7691 = vpack.c.b16 %v6811, %v6807
        %v7692 = vpack.c.b16 %v6812, %v6808
        %v7693 = vpack.c.b16 %v6813, %v6809
        %v7694 = vpack.c.b16 %v6818, %v6814
        %v7695 = vpack.c.b16 %v6819, %v6815
        %v7696 = vpack.c.b16 %v6820, %v6816
        %v7697 = vpack.c.b16 %v6821, %v6817
        %v7698 = vpack.c.b16 %v6826, %v6822
        %v7699 = vpack.c.b16 %v6827, %v6823
        %v7700 = vpack.c.b16 %v6828, %v6824
        %v7701 = vpack.c.b16 %v6829, %v6825
        %v7702 = vpack.c.b16 %v6834, %v6830
        %v7703 = vpack.c.b16 %v6835, %v6831
        %v7704 = vpack.c.b16 %v6836, %v6832
        %v7705 = vpack.c.b16 %v6837, %v6833
        %v7706 = vpack.c.b16 %v6842, %v6838
        %v7707 = vpack.c.b16 %v6843, %v6839
        %v7708 = vpack.c.b16 %v6844, %v6840
        %v7709 = vpack.c.b16 %v6845, %v6841
        %v7710 = vpack.c.b16 %v6850, %v6846
        %v7711 = vpack.c.b16 %v6851, %v6847
        %v7712 = vpack.c.b16 %v6852, %v6848
        %v7713 = vpack.c.b16 %v6853, %v6849
        %v7714 = vpack.c.b16 %v6858, %v6854
        %v7715 = vpack.c.b16 %v6859, %v6855
        %v7716 = vpack.c.b16 %v6860, %v6856
        %v7717 = vpack.c.b16 %v6861, %v6857
        %v7718 = vpack.c.b16 %v6866, %v6862
        %v7719 = vpack.c.b16 %v6867, %v6863
        %v7720 = vpack.c.b16 %v6868, %v6864
        %v7721 = vpack.c.b16 %v6869, %v6865
        %v7722 = vpack.c.b16 %v6874, %v6870
        %v7723 = vpack.c.b16 %v6875, %v6871
        %v7724 = vpack.c.b16 %v6876, %v6872
        %v7725 = vpack.c.b16 %v6877, %v6873
        %v7726 = vpack.c.b16 %v6882, %v6878
        %v7727 = vpack.c.b16 %v6883, %v6879
        %v7728 = vpack.c.b16 %v6884, %v6880
        %v7729 = vpack.c.b16 %v6885, %v6881
        %v7730 = vpack.c.b16 %v6890, %v6886
        %v7731 = vpack.c.b16 %v6891, %v6887
        %v7732 = vpack.c.b16 %v6892, %v6888
        %v7733 = vpack.c.b16 %v6893, %v6889
        %v7734 = vpack.c.b16 %v6898, %v6894
        %v7735 = vpack.c.b16 %v6899, %v6895
        %v7736 = vpack.c.b16 %v6900, %v6896
        %v7737 = vpack.c.b16 %v6901, %v6897
        %v7738 = vpack.c.b16 %v6906, %v6902
        %v7739 = vpack.c.b16 %v6907, %v6903
        %v7740 = vpack.c.b16 %v6908, %v6904
        %v7741 = vpack.c.b16 %v6909, %v6905
        %v7742 = vpack.c.b16 %v6914, %v6910
        %v7743 = vpack.c.b16 %v6915, %v6911
        %v7744 = vpack.c.b16 %v6916, %v6912
        %v7745 = vpack.c.b16 %v6917, %v6913
        %v7746 = vpack.c.b16 %v6922, %v6918
        %v7747 = vpack.c.b16 %v6923, %v6919
        %v7748 = vpack.c.b16 %v6924, %v6920
        %v7749 = vpack.c.b16 %v6925, %v6921
        %v7750 = vpack.c.b16 %v6930, %v6926
        %v7751 = vpack.c.b16 %v6931, %v6927
        %v7752 = vpack.c.b16 %v6932, %v6928
        %v7753 = vpack.c.b16 %v6933, %v6929
        %v7754 = vpack.c.b16 %v6938, %v6934
        %v7755 = vpack.c.b16 %v6939, %v6935
        %v7756 = vpack.c.b16 %v6940, %v6936
        %v7757 = vpack.c.b16 %v6941, %v6937
        %v7758 = vpack.c.b16 %v6946, %v6942
        %v7759 = vpack.c.b16 %v6947, %v6943
        %v7760 = vpack.c.b16 %v6948, %v6944
        %v7761 = vpack.c.b16 %v6949, %v6945
        %v7762 = vpack.c.b16 %v6954, %v6950
        %v7763 = vpack.c.b16 %v6955, %v6951
        %v7764 = vpack.c.b16 %v6956, %v6952
        %v7765 = vpack.c.b16 %v6957, %v6953
        %v7766 = vpack.c.b16 %v6962, %v6958
        %v7767 = vpack.c.b16 %v6963, %v6959
        %v7768 = vpack.c.b16 %v6964, %v6960
        %v7769 = vpack.c.b16 %v6965, %v6961
        %v7770 = vpack.c.b16 %v6970, %v6966
        %v7771 = vpack.c.b16 %v6971, %v6967
        %v7772 = vpack.c.b16 %v6972, %v6968
        %v7773 = vpack.c.b16 %v6973, %v6969
        %v7774 = vpack.c.b16 %v6978, %v6974
        %v7775 = vpack.c.b16 %v6979, %v6975
        %v7776 = vpack.c.b16 %v6980, %v6976
        %v7777 = vpack.c.b16 %v6981, %v6977
        %v7778 = vpack.c.b16 %v6986, %v6982
        %v7779 = vpack.c.b16 %v6987, %v6983
        %v7780 = vpack.c.b16 %v6988, %v6984
        %v7781 = vpack.c.b16 %v6989, %v6985
        %v7782 = vpack.c.b16 %v6994, %v6990
        %v7783 = vpack.c.b16 %v6995, %v6991
        %v7784 = vpack.c.b16 %v6996, %v6992
        %v7785 = vpack.c.b16 %v6997, %v6993
        %v7786 = vpack.c.b16 %v7002, %v6998
        %v7787 = vpack.c.b16 %v7003, %v6999
        %v7788 = vpack.c.b16 %v7004, %v7000
        %v7789 = vpack.c.b16 %v7005, %v7001
        %v7790 = vpack.c.b16 %v7010, %v7006
        %v7791 = vpack.c.b16 %v7011, %v7007
        %v7792 = vpack.c.b16 %v7012, %v7008
        %v7793 = vpack.c.b16 %v7013, %v7009
        %v7794 = vpack.c.b16 %v7018, %v7014
        %v7795 = vpack.c.b16 %v7019, %v7015
        %v7796 = vpack.c.b16 %v7020, %v7016
        %v7797 = vpack.c.b16 %v7021, %v7017
        %v7798 = vpack.c.b16 %v7026, %v7022
        %v7799 = vpack.c.b16 %v7027, %v7023
        %v7800 = vpack.c.b16 %v7028, %v7024
        %v7801 = vpack.c.b16 %v7029, %v7025
        %v7802 = vpack.c.b16 %v7034, %v7030
        %v7803 = vpack.c.b16 %v7035, %v7031
        %v7804 = vpack.c.b16 %v7036, %v7032
        %v7805 = vpack.c.b16 %v7037, %v7033
        %v7806 = vpack.c.b16 %v7042, %v7038
        %v7807 = vpack.c.b16 %v7043, %v7039
        %v7808 = vpack.c.b16 %v7044, %v7040
        %v7809 = vpack.c.b16 %v7045, %v7041
        %v7810 = vpack.c.b16 %v7050, %v7046
        %v7811 = vpack.c.b16 %v7051, %v7047
        %v7812 = vpack.c.b16 %v7052, %v7048
        %v7813 = vpack.c.b16 %v7053, %v7049
        %v7814 = vpack.c.b16 %v7058, %v7054
        %v7815 = vpack.c.b16 %v7059, %v7055
        %v7816 = vpack.c.b16 %v7060, %v7056
        %v7817 = vpack.c.b16 %v7061, %v7057
        %v7818 = vpack.c.b16 %v7066, %v7062
        %v7819 = vpack.c.b16 %v7067, %v7063
        %v7820 = vpack.c.b16 %v7068, %v7064
        %v7821 = vpack.c.b16 %v7069, %v7065
        %v7822 = vpack.c.b16 %v7074, %v7070
        %v7823 = vpack.c.b16 %v7075, %v7071
        %v7824 = vpack.c.b16 %v7076, %v7072
        %v7825 = vpack.c.b16 %v7077, %v7073
        %v7826 = vpack.c.b16 %v7082, %v7078
        %v7827 = vpack.c.b16 %v7083, %v7079
        %v7828 = vpack.c.b16 %v7084, %v7080
        %v7829 = vpack.c.b16 %v7085, %v7081
        %v7830 = vpack.c.b16 %v7090, %v7086
        %v7831 = vpack.c.b16 %v7091, %v7087
        %v7832 = vpack.c.b16 %v7092, %v7088
        %v7833 = vpack.c.b16 %v7093, %v7089
        %v7834 = vpack.c.b16 %v7098, %v7094
        %v7835 = vpack.c.b16 %v7099, %v7095
        %v7836 = vpack.c.b16 %v7100, %v7096
        %v7837 = vpack.c.b16 %v7101, %v7097
        %v7838 = vpack.c.b16 %v7106, %v7102
        %v7839 = vpack.c.b16 %v7107, %v7103
        %v7840 = vpack.c.b16 %v7108, %v7104
        %v7841 = vpack.c.b16 %v7109, %v7105
        %v7842 = vpack.c.b16 %v7114, %v7110
        %v7843 = vpack.c.b16 %v7115, %v7111
        %v7844 = vpack.c.b16 %v7116, %v7112
        %v7845 = vpack.c.b16 %v7117, %v7113
        %v7846 = vpack.c.b16 %v7122, %v7118
        %v7847 = vpack.c.b16 %v7123, %v7119
        %v7848 = vpack.c.b16 %v7124, %v7120
        %v7849 = vpack.c.b16 %v7125, %v7121
        %v7850 = vpack.c.b16 %v7130, %v7126
        %v7851 = vpack.c.b16 %v7131, %v7127
        %v7852 = vpack.c.b16 %v7132, %v7128
        %v7853 = vpack.c.b16 %v7133, %v7129
        %v7854 = vpack.c.b16 %v7138, %v7134
        %v7855 = vpack.c.b16 %v7139, %v7135
        %v7856 = vpack.c.b16 %v7140, %v7136
        %v7857 = vpack.c.b16 %v7141, %v7137
        %v7858 = vpack.c.b16 %v7146, %v7142
        %v7859 = vpack.c.b16 %v7147, %v7143
        %v7860 = vpack.c.b16 %v7148, %v7144
        %v7861 = vpack.c.b16 %v7149, %v7145
        %v7862 = vpack.c.b16 %v7154, %v7150
        %v7863 = vpack.c.b16 %v7155, %v7151
        %v7864 = vpack.c.b16 %v7156, %v7152
        %v7865 = vpack.c.b16 %v7157, %v7153
        %v7866 = vpack.c.b16 %v7162, %v7158
        %v7867 = vpack.c.b16 %v7163, %v7159
        %v7868 = vpack.c.b16 %v7164, %v7160
        %v7869 = vpack.c.b16 %v7165, %v7161
        %v7870 = vpack.c.b16 %v7170, %v7166
        %v7871 = vpack.c.b16 %v7171, %v7167
        %v7872 = vpack.c.b16 %v7172, %v7168
        %v7873 = vpack.c.b16 %v7173, %v7169
        %v7874 = vpack.c.b16 %v7178, %v7174
        %v7875 = vpack.c.b16 %v7179, %v7175
        %v7876 = vpack.c.b16 %v7180, %v7176
        %v7877 = vpack.c.b16 %v7181, %v7177
        %v7878 = vpack.c.b16 %v7186, %v7182
        %v7879 = vpack.c.b16 %v7187, %v7183
        %v7880 = vpack.c.b16 %v7188, %v7184
        %v7881 = vpack.c.b16 %v7189, %v7185
        %v7882 = vpack.c.b16 %v7194, %v7190
        %v7883 = vpack.c.b16 %v7195, %v7191
        %v7884 = vpack.c.b16 %v7196, %v7192
        %v7885 = vpack.c.b16 %v7197, %v7193
        %v7886 = vpack.c.b16 %v7202, %v7198
        %v7887 = vpack.c.b16 %v7203, %v7199
        %v7888 = vpack.c.b16 %v7204, %v7200
        %v7889 = vpack.c.b16 %v7205, %v7201
        %v7890 = vpack.c.b16 %v7210, %v7206
        %v7891 = vpack.c.b16 %v7211, %v7207
        %v7892 = vpack.c.b16 %v7212, %v7208
        %v7893 = vpack.c.b16 %v7213, %v7209
        %v7894 = vpack.c.b16 %v7218, %v7214
        %v7895 = vpack.c.b16 %v7219, %v7215
        %v7896 = vpack.c.b16 %v7220, %v7216
        %v7897 = vpack.c.b16 %v7221, %v7217
        %v7898 = vpack.c.b16 %v7226, %v7222
        %v7899 = vpack.c.b16 %v7227, %v7223
        %v7900 = vpack.c.b16 %v7228, %v7224
        %v7901 = vpack.c.b16 %v7229, %v7225
        %v7902 = vpack.c.b16 %v7234, %v7230
        %v7903 = vpack.c.b16 %v7235, %v7231
        %v7904 = vpack.c.b16 %v7236, %v7232
        %v7905 = vpack.c.b16 %v7237, %v7233
        %v7906 = vpack.c.b16 %v7242, %v7238
        %v7907 = vpack.c.b16 %v7243, %v7239
        %v7908 = vpack.c.b16 %v7244, %v7240
        %v7909 = vpack.c.b16 %v7245, %v7241
        %v7910 = vpack.c.b16 %v7250, %v7246
        %v7911 = vpack.c.b16 %v7251, %v7247
        %v7912 = vpack.c.b16 %v7252, %v7248
        %v7913 = vpack.c.b16 %v7253, %v7249
        %v7914 = vpack.c.b16 %v7258, %v7254
        %v7915 = vpack.c.b16 %v7259, %v7255
        %v7916 = vpack.c.b16 %v7260, %v7256
        %v7917 = vpack.c.b16 %v7261, %v7257
        %v7918 = vpack.c.b16 %v7266, %v7262
        %v7919 = vpack.c.b16 %v7267, %v7263
        %v7920 = vpack.c.b16 %v7268, %v7264
        %v7921 = vpack.c.b16 %v7269, %v7265
        %v7922 = vpack.c.b16 %v7274, %v7270
        %v7923 = vpack.c.b16 %v7275, %v7271
        %v7924 = vpack.c.b16 %v7276, %v7272
        %v7925 = vpack.c.b16 %v7277, %v7273
        %v7926 = vpack.c.b16 %v7282, %v7278
        %v7927 = vpack.c.b16 %v7283, %v7279
        %v7928 = vpack.c.b16 %v7284, %v7280
        %v7929 = vpack.c.b16 %v7285, %v7281
        %v7930 = vpack.c.b16 %v7290, %v7286
        %v7931 = vpack.c.b16 %v7291, %v7287
        %v7932 = vpack.c.b16 %v7292, %v7288
        %v7933 = vpack.c.b16 %v7293, %v7289
        %v7934 = vpack.c.b16 %v7298, %v7294
        %v7935 = vpack.c.b16 %v7299, %v7295
        %v7936 = vpack.c.b16 %v7300, %v7296
        %v7937 = vpack.c.b16 %v7301, %v7297
        %v7938 = vpack.c.b16 %v7306, %v7302
        %v7939 = vpack.c.b16 %v7307, %v7303
        %v7940 = vpack.c.b16 %v7308, %v7304
        %v7941 = vpack.c.b16 %v7309, %v7305
        %v7942 = vpack.c.b16 %v7314, %v7310
        %v7943 = vpack.c.b16 %v7315, %v7311
        %v7944 = vpack.c.b16 %v7316, %v7312
        %v7945 = vpack.c.b16 %v7317, %v7313
        %v7946 = vpack.c.b16 %v7322, %v7318
        %v7947 = vpack.c.b16 %v7323, %v7319
        %v7948 = vpack.c.b16 %v7324, %v7320
        %v7949 = vpack.c.b16 %v7325, %v7321
        %v7950 = vpack.c.b16 %v7330, %v7326
        %v7951 = vpack.c.b16 %v7331, %v7327
        %v7952 = vpack.c.b16 %v7332, %v7328
        %v7953 = vpack.c.b16 %v7333, %v7329
        %v7954 = vpack.c.b16 %v7338, %v7334
        %v7955 = vpack.c.b16 %v7339, %v7335
        %v7956 = vpack.c.b16 %v7340, %v7336
        %v7957 = vpack.c.b16 %v7341, %v7337
        %v7958 = vpack.c.b16 %v7346, %v7342
        %v7959 = vpack.c.b16 %v7347, %v7343
        %v7960 = vpack.c.b16 %v7348, %v7344
        %v7961 = vpack.c.b16 %v7349, %v7345
        %v7962 = vpack.c.b16 %v7354, %v7350
        %v7963 = vpack.c.b16 %v7355, %v7351
        %v7964 = vpack.c.b16 %v7356, %v7352
        %v7965 = vpack.c.b16 %v7357, %v7353
        %v7966 = vpack.c.b16 %v7362, %v7358
        %v7967 = vpack.c.b16 %v7363, %v7359
        %v7968 = vpack.c.b16 %v7364, %v7360
        %v7969 = vpack.c.b16 %v7365, %v7361
        %v7970 = vpack.c.b16 %v7370, %v7366
        %v7971 = vpack.c.b16 %v7371, %v7367
        %v7972 = vpack.c.b16 %v7372, %v7368
        %v7973 = vpack.c.b16 %v7373, %v7369
        %v7974 = vpack.c.b16 %v7378, %v7374
        %v7975 = vpack.c.b16 %v7379, %v7375
        %v7976 = vpack.c.b16 %v7380, %v7376
        %v7977 = vpack.c.b16 %v7381, %v7377
        %v7978 = vpack.c.b16 %v7386, %v7382
        %v7979 = vpack.c.b16 %v7387, %v7383
        %v7980 = vpack.c.b16 %v7388, %v7384
        %v7981 = vpack.c.b16 %v7389, %v7385
        %v7982 = vpack.c.b16 %v7394, %v7390
        %v7983 = vpack.c.b16 %v7395, %v7391
        %v7984 = vpack.c.b16 %v7396, %v7392
        %v7985 = vpack.c.b16 %v7397, %v7393
        %v7986 = vpack.c.b16 %v7402, %v7398
        %v7987 = vpack.c.b16 %v7403, %v7399
        %v7988 = vpack.c.b16 %v7404, %v7400
        %v7989 = vpack.c.b16 %v7405, %v7401
        %v7990 = vpack.c.b16 %v7410, %v7406
        %v7991 = vpack.c.b16 %v7411, %v7407
        %v7992 = vpack.c.b16 %v7412, %v7408
        %v7993 = vpack.c.b16 %v7413, %v7409
        %v7994 = vpack.c.b16 %v7418, %v7414
        %v7995 = vpack.c.b16 %v7419, %v7415
        %v7996 = vpack.c.b16 %v7420, %v7416
        %v7997 = vpack.c.b16 %v7421, %v7417
        %8574 = vmatprep.subr.bf16.mxu0 %v7423
        %8575 = vmatpush1.bf16.msra.mxu0 %v7422
        %8576 = vmatprep.subr.bf16.mxu0 %v7427
        %8577 = vmatpush1.bf16.msra.mxu0 %v7426
        %8578 = vmatprep.subr.bf16.mxu0 %v7431
        %8579 = vmatpush1.bf16.msra.mxu0 %v7430
        %8580 = vmatprep.subr.bf16.mxu0 %v7435
        %8581 = vmatpush1.bf16.msra.mxu0 %v7434
        %8582 = vmatprep.subr.bf16.mxu0 %v7439
        %8583 = vmatpush1.bf16.msra.mxu0 %v7438
        %8584 = vmatprep.subr.bf16.mxu0 %v7443
        %8585 = vmatpush1.bf16.msra.mxu0 %v7442
        %8586 = vmatprep.subr.bf16.mxu0 %v7447
        %8587 = vmatpush1.bf16.msra.mxu0 %v7446
        %8588 = vmatprep.subr.bf16.mxu0 %v7451
        %8589 = vmatpush1.bf16.msra.mxu0 %v7450
        %8590 = vmatprep.subr.bf16.mxu0 %v7455
        %8591 = vmatpush1.bf16.msra.mxu0 %v7454
        %8592 = vmatprep.subr.bf16.mxu0 %v7459
        %8593 = vmatpush1.bf16.msra.mxu0 %v7458
        %8594 = vmatprep.subr.bf16.mxu0 %v7463
        %8595 = vmatpush1.bf16.msra.mxu0 %v7462
        %8596 = vmatprep.subr.bf16.mxu0 %v7467
        %8597 = vmatpush1.bf16.msra.mxu0 %v7466
        %8598 = vmatprep.subr.bf16.mxu0 %v7471
        %8599 = vmatpush1.bf16.msra.mxu0 %v7470
        %8600 = vmatprep.subr.bf16.mxu0 %v7475
        %8601 = vmatpush1.bf16.msra.mxu0 %v7474
        %8602 = vmatprep.subr.bf16.mxu0 %v7479
        %8603 = vmatpush1.bf16.msra.mxu0 %v7478
        %8604 = vmatprep.subr.bf16.mxu0 %v7483
        %8605 = vmatpush1.bf16.msra.mxu0 %v7482
        %8606 = vmatprep.mubr.bf16.mxu0 %v5659
        %8607 = vmatmul.mubr.bf16.gmra.mrb[0].mxu0 %v5658
        %v8608 = vpop.f32.mrb[0].mxu0
        %v8609 = vadd.f32 0.0, %v8608
        %v8610 = vpop.f32.mrb[0].mxu0
        %v8611 = vadd.f32 0.0, %v8610
        %v8612 = vpop.f32.mrb[0].mxu0
        %v8613 = vpop.f32.mrb[0].mxu0
        %8614 = vdwg.mxu0
        %8615 = vmatprep.subr.bf16.mxu0 %v7487
        %8616 = vmatpush1.bf16.msra.mxu0 %v7486
        %8617 = vmatprep.subr.bf16.mxu0 %v7491
        %8618 = vmatpush1.bf16.msra.mxu0 %v7490
        %8619 = vmatprep.subr.bf16.mxu0 %v7495
        %8620 = vmatpush1.bf16.msra.mxu0 %v7494
        %8621 = vmatprep.subr.bf16.mxu0 %v7499
        %8622 = vmatpush1.bf16.msra.mxu0 %v7498
        %8623 = vmatprep.subr.bf16.mxu0 %v7503
        %8624 = vmatpush1.bf16.msra.mxu0 %v7502
        %8625 = vmatprep.subr.bf16.mxu0 %v7507
        %8626 = vmatpush1.bf16.msra.mxu0 %v7506
        %8627 = vmatprep.subr.bf16.mxu0 %v7511
        %8628 = vmatpush1.bf16.msra.mxu0 %v7510
        %8629 = vmatprep.subr.bf16.mxu0 %v7515
        %8630 = vmatpush1.bf16.msra.mxu0 %v7514
        %8631 = vmatprep.subr.bf16.mxu0 %v7519
        %8632 = vmatpush1.bf16.msra.mxu0 %v7518
        %8633 = vmatprep.subr.bf16.mxu0 %v7523
        %8634 = vmatpush1.bf16.msra.mxu0 %v7522
        %8635 = vmatprep.subr.bf16.mxu0 %v7527
        %8636 = vmatpush1.bf16.msra.mxu0 %v7526
        %8637 = vmatprep.subr.bf16.mxu0 %v7531
        %8638 = vmatpush1.bf16.msra.mxu0 %v7530
        %8639 = vmatprep.subr.bf16.mxu0 %v7535
        %8640 = vmatpush1.bf16.msra.mxu0 %v7534
        %8641 = vmatprep.subr.bf16.mxu0 %v7539
        %8642 = vmatpush1.bf16.msra.mxu0 %v7538
        %8643 = vmatprep.subr.bf16.mxu0 %v7543
        %8644 = vmatpush1.bf16.msra.mxu0 %v7542
        %8645 = vmatprep.subr.bf16.mxu0 %v7547
        %8646 = vmatpush1.bf16.msra.mxu0 %v7546
        %8647 = vmatprep.mubr.bf16.mxu0 %v5661
        %8648 = vmatmul.mubr.bf16.gmra.mrb[0].mxu0 %v5660
        %v8649 = vpop.f32.mrb[0].mxu0
        %v8650 = vadd.f32 %v8609, %v8649
        %v8651 = vpop.f32.mrb[0].mxu0
        %v8652 = vadd.f32 %v8611, %v8651
        %v8653 = vpop.f32.mrb[0].mxu0
        %v8654 = vpop.f32.mrb[0].mxu0
        %8655 = vdwg.mxu0
        %8656 = vmatprep.subr.bf16.mxu0 %v7551
        %8657 = vmatpush1.bf16.msra.mxu0 %v7550
        %8658 = vmatprep.subr.bf16.mxu0 %v7555
        %8659 = vmatpush1.bf16.msra.mxu0 %v7554
        %8660 = vmatprep.subr.bf16.mxu0 %v7559
        %8661 = vmatpush1.bf16.msra.mxu0 %v7558
        %8662 = vmatprep.subr.bf16.mxu0 %v7563
        %8663 = vmatpush1.bf16.msra.mxu0 %v7562
        %8664 = vmatprep.subr.bf16.mxu0 %v7567
        %8665 = vmatpush1.bf16.msra.mxu0 %v7566
        %8666 = vmatprep.subr.bf16.mxu0 %v7571
        %8667 = vmatpush1.bf16.msra.mxu0 %v7570
        %8668 = vmatprep.subr.bf16.mxu0 %v7575
        %8669 = vmatpush1.bf16.msra.mxu0 %v7574
        %8670 = vmatprep.subr.bf16.mxu0 %v7579
        %8671 = vmatpush1.bf16.msra.mxu0 %v7578
        %8672 = vmatprep.subr.bf16.mxu0 %v7583
        %8673 = vmatpush1.bf16.msra.mxu0 %v7582
        %8674 = vmatprep.subr.bf16.mxu0 %v7587
        %8675 = vmatpush1.bf16.msra.mxu0 %v7586
        %8676 = vmatprep.subr.bf16.mxu0 %v7591
        %8677 = vmatpush1.bf16.msra.mxu0 %v7590
        %8678 = vmatprep.subr.bf16.mxu0 %v7595
        %8679 = vmatpush1.bf16.msra.mxu0 %v7594
        %8680 = vmatprep.subr.bf16.mxu0 %v7599
        %8681 = vmatpush1.bf16.msra.mxu0 %v7598
        %8682 = vmatprep.subr.bf16.mxu0 %v7603
        %8683 = vmatpush1.bf16.msra.mxu0 %v7602
        %8684 = vmatprep.subr.bf16.mxu0 %v7607
        %8685 = vmatpush1.bf16.msra.mxu0 %v7606
        %8686 = vmatprep.subr.bf16.mxu0 %v7611
        %8687 = vmatpush1.bf16.msra.mxu0 %v7610
        %8688 = vmatprep.mubr.bf16.mxu0 %v5663
        %8689 = vmatmul.mubr.bf16.gmra.mrb[0].mxu0 %v5662
        %v8690 = vpop.f32.mrb[0].mxu0
        %v8691 = vadd.f32 %v8650, %v8690
        %v8692 = vpop.f32.mrb[0].mxu0
        %v8693 = vadd.f32 %v8652, %v8692
        %v8694 = vpop.f32.mrb[0].mxu0
        %v8695 = vpop.f32.mrb[0].mxu0
        %8696 = vdwg.mxu0
        %8697 = vmatprep.subr.bf16.mxu0 %v7615
        %8698 = vmatpush1.bf16.msra.mxu0 %v7614
        %8699 = vmatprep.subr.bf16.mxu0 %v7619
        %8700 = vmatpush1.bf16.msra.mxu0 %v7618
        %8701 = vmatprep.subr.bf16.mxu0 %v7623
        %8702 = vmatpush1.bf16.msra.mxu0 %v7622
        %8703 = vmatprep.subr.bf16.mxu0 %v7627
        %8704 = vmatpush1.bf16.msra.mxu0 %v7626
        %8705 = vmatprep.subr.bf16.mxu0 %v7631
        %8706 = vmatpush1.bf16.msra.mxu0 %v7630
        %8707 = vmatprep.subr.bf16.mxu0 %v7635
        %8708 = vmatpush1.bf16.msra.mxu0 %v7634
        %8709 = vmatprep.subr.bf16.mxu0 %v7639
        %8710 = vmatpush1.bf16.msra.mxu0 %v7638
        %8711 = vmatprep.subr.bf16.mxu0 %v7643
        %8712 = vmatpush1.bf16.msra.mxu0 %v7642
        %8713 = vmatprep.subr.bf16.mxu0 %v7647
        %8714 = vmatpush1.bf16.msra.mxu0 %v7646
        %8715 = vmatprep.subr.bf16.mxu0 %v7651
        %8716 = vmatpush1.bf16.msra.mxu0 %v7650
        %8717 = vmatprep.subr.bf16.mxu0 %v7655
        %8718 = vmatpush1.bf16.msra.mxu0 %v7654
        %8719 = vmatprep.subr.bf16.mxu0 %v7659
        %8720 = vmatpush1.bf16.msra.mxu0 %v7658
        %8721 = vmatprep.subr.bf16.mxu0 %v7663
        %8722 = vmatpush1.bf16.msra.mxu0 %v7662
        %8723 = vmatprep.subr.bf16.mxu0 %v7667
        %8724 = vmatpush1.bf16.msra.mxu0 %v7666
        %8725 = vmatprep.subr.bf16.mxu0 %v7671
        %8726 = vmatpush1.bf16.msra.mxu0 %v7670
        %8727 = vmatprep.subr.bf16.mxu0 %v7675
        %8728 = vmatpush1.bf16.msra.mxu0 %v7674
        %8729 = vmatprep.mubr.bf16.mxu0 %v5665
        %8730 = vmatmul.mubr.bf16.gmra.mrb[0].mxu0 %v5664
        %v8731 = vpop.f32.mrb[0].mxu0
        %v8732 = vadd.f32 %v8691, %v8731
        %v8733 = vpop.f32.mrb[0].mxu0
        %v8734 = vadd.f32 %v8693, %v8733
        %v8735 = vpop.f32.mrb[0].mxu0
        %v8736 = vpop.f32.mrb[0].mxu0
        %8737 = vdwg.mxu0
        %8738 = vmatprep.subr.bf16.mxu0 %v7679
        %8739 = vmatpush1.bf16.msra.mxu0 %v7678
        %8740 = vmatprep.subr.bf16.mxu0 %v7683
        %8741 = vmatpush1.bf16.msra.mxu0 %v7682
        %8742 = vmatprep.subr.bf16.mxu0 %v7687
        %8743 = vmatpush1.bf16.msra.mxu0 %v7686
        %8744 = vmatprep.subr.bf16.mxu0 %v7691
        %8745 = vmatpush1.bf16.msra.mxu0 %v7690
        %8746 = vmatprep.subr.bf16.mxu0 %v7695
        %8747 = vmatpush1.bf16.msra.mxu0 %v7694
        %8748 = vmatprep.subr.bf16.mxu0 %v7699
        %8749 = vmatpush1.bf16.msra.mxu0 %v7698
        %8750 = vmatprep.subr.bf16.mxu0 %v7703
        %8751 = vmatpush1.bf16.msra.mxu0 %v7702
        %8752 = vmatprep.subr.bf16.mxu0 %v7707
        %8753 = vmatpush1.bf16.msra.mxu0 %v7706
        %8754 = vmatprep.subr.bf16.mxu0 %v7711
        %8755 = vmatpush1.bf16.msra.mxu0 %v7710
        %8756 = vmatprep.subr.bf16.mxu0 %v7715
        %8757 = vmatpush1.bf16.msra.mxu0 %v7714
        %8758 = vmatprep.subr.bf16.mxu0 %v7719
        %8759 = vmatpush1.bf16.msra.mxu0 %v7718
        %8760 = vmatprep.subr.bf16.mxu0 %v7723
        %8761 = vmatpush1.bf16.msra.mxu0 %v7722
        %8762 = vmatprep.subr.bf16.mxu0 %v7727
        %8763 = vmatpush1.bf16.msra.mxu0 %v7726
        %8764 = vmatprep.subr.bf16.mxu0 %v7731
        %8765 = vmatpush1.bf16.msra.mxu0 %v7730
        %8766 = vmatprep.subr.bf16.mxu0 %v7735
        %8767 = vmatpush1.bf16.msra.mxu0 %v7734
        %8768 = vmatprep.subr.bf16.mxu0 %v7739
        %8769 = vmatpush1.bf16.msra.mxu0 %v7738
        %8770 = vmatprep.mubr.bf16.mxu0 %v5667
        %8771 = vmatmul.mubr.bf16.gmra.mrb[0].mxu0 %v5666
        %v8772 = vpop.f32.mrb[0].mxu0
        %v8773 = vadd.f32 %v8732, %v8772
        %v8774 = vpop.f32.mrb[0].mxu0
        %v8775 = vadd.f32 %v8734, %v8774
        %v8776 = vpop.f32.mrb[0].mxu0
        %v8777 = vpop.f32.mrb[0].mxu0
        %8778 = vdwg.mxu0
        %8779 = vmatprep.subr.bf16.mxu0 %v7743
        %8780 = vmatpush1.bf16.msra.mxu0 %v7742
        %8781 = vmatprep.subr.bf16.mxu0 %v7747
        %8782 = vmatpush1.bf16.msra.mxu0 %v7746
        %8783 = vmatprep.subr.bf16.mxu0 %v7751
        %8784 = vmatpush1.bf16.msra.mxu0 %v7750
        %8785 = vmatprep.subr.bf16.mxu0 %v7755
        %8786 = vmatpush1.bf16.msra.mxu0 %v7754
        %8787 = vmatprep.subr.bf16.mxu0 %v7759
        %8788 = vmatpush1.bf16.msra.mxu0 %v7758
        %8789 = vmatprep.subr.bf16.mxu0 %v7763
        %8790 = vmatpush1.bf16.msra.mxu0 %v7762
        %8791 = vmatprep.subr.bf16.mxu0 %v7767
        %8792 = vmatpush1.bf16.msra.mxu0 %v7766
        %8793 = vmatprep.subr.bf16.mxu0 %v7771
        %8794 = vmatpush1.bf16.msra.mxu0 %v7770
        %8795 = vmatprep.subr.bf16.mxu0 %v7775
        %8796 = vmatpush1.bf16.msra.mxu0 %v7774
        %8797 = vmatprep.subr.bf16.mxu0 %v7779
        %8798 = vmatpush1.bf16.msra.mxu0 %v7778
        %8799 = vmatprep.subr.bf16.mxu0 %v7783
        %8800 = vmatpush1.bf16.msra.mxu0 %v7782
        %8801 = vmatprep.subr.bf16.mxu0 %v7787
        %8802 = vmatpush1.bf16.msra.mxu0 %v7786
        %8803 = vmatprep.subr.bf16.mxu0 %v7791
        %8804 = vmatpush1.bf16.msra.mxu0 %v7790
        %8805 = vmatprep.subr.bf16.mxu0 %v7795
        %8806 = vmatpush1.bf16.msra.mxu0 %v7794
        %8807 = vmatprep.subr.bf16.mxu0 %v7799
        %8808 = vmatpush1.bf16.msra.mxu0 %v7798
        %8809 = vmatprep.subr.bf16.mxu0 %v7803
        %8810 = vmatpush1.bf16.msra.mxu0 %v7802
        %8811 = vmatprep.mubr.bf16.mxu0 %v5669
        %8812 = vmatmul.mubr.bf16.gmra.mrb[0].mxu0 %v5668
        %v8813 = vpop.f32.mrb[0].mxu0
        %v8814 = vadd.f32 %v8773, %v8813
        %v8815 = vpop.f32.mrb[0].mxu0
        %v8816 = vadd.f32 %v8775, %v8815
        %v8817 = vpop.f32.mrb[0].mxu0
        %v8818 = vpop.f32.mrb[0].mxu0
        %8819 = vdwg.mxu0
        %8820 = vmatprep.subr.bf16.mxu0 %v7807
        %8821 = vmatpush1.bf16.msra.mxu0 %v7806
        %8822 = vmatprep.subr.bf16.mxu0 %v7811
        %8823 = vmatpush1.bf16.msra.mxu0 %v7810
        %8824 = vmatprep.subr.bf16.mxu0 %v7815
        %8825 = vmatpush1.bf16.msra.mxu0 %v7814
        %8826 = vmatprep.subr.bf16.mxu0 %v7819
        %8827 = vmatpush1.bf16.msra.mxu0 %v7818
        %8828 = vmatprep.subr.bf16.mxu0 %v7823
        %8829 = vmatpush1.bf16.msra.mxu0 %v7822
        %8830 = vmatprep.subr.bf16.mxu0 %v7827
        %8831 = vmatpush1.bf16.msra.mxu0 %v7826
        %8832 = vmatprep.subr.bf16.mxu0 %v7831
        %8833 = vmatpush1.bf16.msra.mxu0 %v7830
        %8834 = vmatprep.subr.bf16.mxu0 %v7835
        %8835 = vmatpush1.bf16.msra.mxu0 %v7834
        %8836 = vmatprep.subr.bf16.mxu0 %v7839
        %8837 = vmatpush1.bf16.msra.mxu0 %v7838
        %8838 = vmatprep.subr.bf16.mxu0 %v7843
        %8839 = vmatpush1.bf16.msra.mxu0 %v7842
        %8840 = vmatprep.subr.bf16.mxu0 %v7847
        %8841 = vmatpush1.bf16.msra.mxu0 %v7846
        %8842 = vmatprep.subr.bf16.mxu0 %v7851
        %8843 = vmatpush1.bf16.msra.mxu0 %v7850
        %8844 = vmatprep.subr.bf16.mxu0 %v7855
        %8845 = vmatpush1.bf16.msra.mxu0 %v7854
        %8846 = vmatprep.subr.bf16.mxu0 %v7859
        %8847 = vmatpush1.bf16.msra.mxu0 %v7858
        %8848 = vmatprep.subr.bf16.mxu0 %v7863
        %8849 = vmatpush1.bf16.msra.mxu0 %v7862
        %8850 = vmatprep.subr.bf16.mxu0 %v7867
        %8851 = vmatpush1.bf16.msra.mxu0 %v7866
        %8852 = vmatprep.mubr.bf16.mxu0 %v5671
        %8853 = vmatmul.mubr.bf16.gmra.mrb[0].mxu0 %v5670
        %v8854 = vpop.f32.mrb[0].mxu0
        %v8855 = vadd.f32 %v8814, %v8854
        %v8856 = vpop.f32.mrb[0].mxu0
        %v8857 = vadd.f32 %v8816, %v8856
        %v8858 = vpop.f32.mrb[0].mxu0
        %v8859 = vpop.f32.mrb[0].mxu0
        %8860 = vdwg.mxu0
        %8861 = vmatprep.subr.bf16.mxu0 %v7871
        %8862 = vmatpush1.bf16.msra.mxu0 %v7870
        %8863 = vmatprep.subr.bf16.mxu0 %v7875
        %8864 = vmatpush1.bf16.msra.mxu0 %v7874
        %8865 = vmatprep.subr.bf16.mxu0 %v7879
        %8866 = vmatpush1.bf16.msra.mxu0 %v7878
        %8867 = vmatprep.subr.bf16.mxu0 %v7883
        %8868 = vmatpush1.bf16.msra.mxu0 %v7882
        %8869 = vmatprep.subr.bf16.mxu0 %v7887
        %8870 = vmatpush1.bf16.msra.mxu0 %v7886
        %8871 = vmatprep.subr.bf16.mxu0 %v7891
        %8872 = vmatpush1.bf16.msra.mxu0 %v7890
        %8873 = vmatprep.subr.bf16.mxu0 %v7895
        %8874 = vmatpush1.bf16.msra.mxu0 %v7894
        %8875 = vmatprep.subr.bf16.mxu0 %v7899
        %8876 = vmatpush1.bf16.msra.mxu0 %v7898
        %8877 = vmatprep.subr.bf16.mxu0 %v7903
        %8878 = vmatpush1.bf16.msra.mxu0 %v7902
        %8879 = vmatprep.subr.bf16.mxu0 %v7907
        %8880 = vmatpush1.bf16.msra.mxu0 %v7906
        %8881 = vmatprep.subr.bf16.mxu0 %v7911
        %8882 = vmatpush1.bf16.msra.mxu0 %v7910
        %8883 = vmatprep.subr.bf16.mxu0 %v7915
        %8884 = vmatpush1.bf16.msra.mxu0 %v7914
        %8885 = vmatprep.subr.bf16.mxu0 %v7919
        %8886 = vmatpush1.bf16.msra.mxu0 %v7918
        %8887 = vmatprep.subr.bf16.mxu0 %v7923
        %8888 = vmatpush1.bf16.msra.mxu0 %v7922
        %8889 = vmatprep.subr.bf16.mxu0 %v7927
        %8890 = vmatpush1.bf16.msra.mxu0 %v7926
        %8891 = vmatprep.subr.bf16.mxu0 %v7931
        %8892 = vmatpush1.bf16.msra.mxu0 %v7930
        %8893 = vmatprep.mubr.bf16.mxu0 %v5673
        %8894 = vmatmul.mubr.bf16.gmra.mrb[0].mxu0 %v5672
        %v8895 = vpop.f32.mrb[0].mxu0
        %v8896 = vadd.f32 %v8855, %v8895
        %v8897 = vpop.f32.mrb[0].mxu0
        %v8898 = vadd.f32 %v8857, %v8897
        %v8899 = vpop.f32.mrb[0].mxu0
        %v8900 = vpop.f32.mrb[0].mxu0
        %8901 = vdwg.mxu0
        %8902 = vmatprep.subr.bf16.mxu0 %v7935
        %8903 = vmatpush1.bf16.msra.mxu0 %v7934
        %8904 = vmatprep.subr.bf16.mxu0 %v7939
        %8905 = vmatpush1.bf16.msra.mxu0 %v7938
        %8906 = vmatprep.subr.bf16.mxu0 %v7943
        %8907 = vmatpush1.bf16.msra.mxu0 %v7942
        %8908 = vmatprep.subr.bf16.mxu0 %v7947
        %8909 = vmatpush1.bf16.msra.mxu0 %v7946
        %8910 = vmatprep.subr.bf16.mxu0 %v7951
        %8911 = vmatpush1.bf16.msra.mxu0 %v7950
        %8912 = vmatprep.subr.bf16.mxu0 %v7955
        %8913 = vmatpush1.bf16.msra.mxu0 %v7954
        %8914 = vmatprep.subr.bf16.mxu0 %v7959
        %8915 = vmatpush1.bf16.msra.mxu0 %v7958
        %8916 = vmatprep.subr.bf16.mxu0 %v7963
        %8917 = vmatpush1.bf16.msra.mxu0 %v7962
        %8918 = vmatprep.subr.bf16.mxu0 %v7967
        %8919 = vmatpush1.bf16.msra.mxu0 %v7966
        %8920 = vmatprep.subr.bf16.mxu0 %v7971
        %8921 = vmatpush1.bf16.msra.mxu0 %v7970
        %8922 = vmatprep.subr.bf16.mxu0 %v7975
        %8923 = vmatpush1.bf16.msra.mxu0 %v7974
        %8924 = vmatprep.subr.bf16.mxu0 %v7979
        %8925 = vmatpush1.bf16.msra.mxu0 %v7978
        %8926 = vmatprep.subr.bf16.mxu0 %v7983
        %8927 = vmatpush1.bf16.msra.mxu0 %v7982
        %8928 = vmatprep.subr.bf16.mxu0 %v7987
        %8929 = vmatpush1.bf16.msra.mxu0 %v7986
        %8930 = vmatprep.subr.bf16.mxu0 %v7991
        %8931 = vmatpush1.bf16.msra.mxu0 %v7990
        %8932 = vmatprep.subr.bf16.mxu0 %v7995
        %8933 = vmatpush1.bf16.msra.mxu0 %v7994
        %8934 = vmatprep.mubr.bf16.mxu0 %v5675
        %8935 = vmatmul.mubr.bf16.gmra.mrb[0].mxu0 %v5674
        %v8936 = vpop.f32.mrb[0].mxu0
        %v8937 = vadd.f32 %v8896, %v8936
        %v8938 = vpop.f32.mrb[0].mxu0
        %v8939 = vadd.f32 %v8898, %v8938
        %v8940 = vpop.f32.mrb[0].mxu0
        %v8941 = vpop.f32.mrb[0].mxu0
        %8942 = vdwg.mxu0
        %8943 = vmatprep.subr.bf16.mxu0 %v7425
        %8944 = vmatpush1.bf16.msra.mxu0 %v7424
        %8945 = vmatprep.subr.bf16.mxu0 %v7429
        %8946 = vmatpush1.bf16.msra.mxu0 %v7428
        %8947 = vmatprep.subr.bf16.mxu0 %v7433
        %8948 = vmatpush1.bf16.msra.mxu0 %v7432
        %8949 = vmatprep.subr.bf16.mxu0 %v7437
        %8950 = vmatpush1.bf16.msra.mxu0 %v7436
        %8951 = vmatprep.subr.bf16.mxu0 %v7441
        %8952 = vmatpush1.bf16.msra.mxu0 %v7440
        %8953 = vmatprep.subr.bf16.mxu0 %v7445
        %8954 = vmatpush1.bf16.msra.mxu0 %v7444
        %8955 = vmatprep.subr.bf16.mxu0 %v7449
        %8956 = vmatpush1.bf16.msra.mxu0 %v7448
        %8957 = vmatprep.subr.bf16.mxu0 %v7453
        %8958 = vmatpush1.bf16.msra.mxu0 %v7452
        %8959 = vmatprep.subr.bf16.mxu0 %v7457
        %8960 = vmatpush1.bf16.msra.mxu0 %v7456
        %8961 = vmatprep.subr.bf16.mxu0 %v7461
        %8962 = vmatpush1.bf16.msra.mxu0 %v7460
        %8963 = vmatprep.subr.bf16.mxu0 %v7465
        %8964 = vmatpush1.bf16.msra.mxu0 %v7464
        %8965 = vmatprep.subr.bf16.mxu0 %v7469
        %8966 = vmatpush1.bf16.msra.mxu0 %v7468
        %8967 = vmatprep.subr.bf16.mxu0 %v7473
        %8968 = vmatpush1.bf16.msra.mxu0 %v7472
        %8969 = vmatprep.subr.bf16.mxu0 %v7477
        %8970 = vmatpush1.bf16.msra.mxu0 %v7476
        %8971 = vmatprep.subr.bf16.mxu0 %v7481
        %8972 = vmatpush1.bf16.msra.mxu0 %v7480
        %8973 = vmatprep.subr.bf16.mxu0 %v7485
        %8974 = vmatpush1.bf16.msra.mxu0 %v7484
        %8975 = vmatprep.mubr.bf16.mxu0 %v5659
        %8976 = vmatmul.mubr.bf16.gmra.mrb[0].mxu0 %v5658
        %v8977 = vpop.f32.mrb[0].mxu0
        %v8978 = vadd.f32 0.0, %v8977
        %v8979 = vpop.f32.mrb[0].mxu0
        %v8980 = vadd.f32 0.0, %v8979
        %v8981 = vpop.f32.mrb[0].mxu0
        %v8982 = vpop.f32.mrb[0].mxu0
        %8983 = vdwg.mxu0
        %8984 = vmatprep.subr.bf16.mxu0 %v7489
        %8985 = vmatpush1.bf16.msra.mxu0 %v7488
        %8986 = vmatprep.subr.bf16.mxu0 %v7493
        %8987 = vmatpush1.bf16.msra.mxu0 %v7492
        %8988 = vmatprep.subr.bf16.mxu0 %v7497
        %8989 = vmatpush1.bf16.msra.mxu0 %v7496
        %8990 = vmatprep.subr.bf16.mxu0 %v7501
        %8991 = vmatpush1.bf16.msra.mxu0 %v7500
        %8992 = vmatprep.subr.bf16.mxu0 %v7505
        %8993 = vmatpush1.bf16.msra.mxu0 %v7504
        %8994 = vmatprep.subr.bf16.mxu0 %v7509
        %8995 = vmatpush1.bf16.msra.mxu0 %v7508
        %8996 = vmatprep.subr.bf16.mxu0 %v7513
        %8997 = vmatpush1.bf16.msra.mxu0 %v7512
        %8998 = vmatprep.subr.bf16.mxu0 %v7517
        %8999 = vmatpush1.bf16.msra.mxu0 %v7516
        %9000 = vmatprep.subr.bf16.mxu0 %v7521
        %9001 = vmatpush1.bf16.msra.mxu0 %v7520
        %9002 = vmatprep.subr.bf16.mxu0 %v7525
        %9003 = vmatpush1.bf16.msra.mxu0 %v7524
        %9004 = vmatprep.subr.bf16.mxu0 %v7529
        %9005 = vmatpush1.bf16.msra.mxu0 %v7528
        %9006 = vmatprep.subr.bf16.mxu0 %v7533
        %9007 = vmatpush1.bf16.msra.mxu0 %v7532
        %9008 = vmatprep.subr.bf16.mxu0 %v7537
        %9009 = vmatpush1.bf16.msra.mxu0 %v7536
        %9010 = vmatprep.subr.bf16.mxu0 %v7541
        %9011 = vmatpush1.bf16.msra.mxu0 %v7540
        %9012 = vmatprep.subr.bf16.mxu0 %v7545
        %9013 = vmatpush1.bf16.msra.mxu0 %v7544
        %9014 = vmatprep.subr.bf16.mxu0 %v7549
        %9015 = vmatpush1.bf16.msra.mxu0 %v7548
        %9016 = vmatprep.mubr.bf16.mxu0 %v5661
        %9017 = vmatmul.mubr.bf16.gmra.mrb[0].mxu0 %v5660
        %v9018 = vpop.f32.mrb[0].mxu0
        %v9019 = vadd.f32 %v8978, %v9018
        %v9020 = vpop.f32.mrb[0].mxu0
        %v9021 = vadd.f32 %v8980, %v9020
        %v9022 = vpop.f32.mrb[0].mxu0
        %v9023 = vpop.f32.mrb[0].mxu0
        %9024 = vdwg.mxu0
        %9025 = vmatprep.subr.bf16.mxu0 %v7553
        %9026 = vmatpush1.bf16.msra.mxu0 %v7552
        %9027 = vmatprep.subr.bf16.mxu0 %v7557
        %9028 = vmatpush1.bf16.msra.mxu0 %v7556
        %9029 = vmatprep.subr.bf16.mxu0 %v7561
        %9030 = vmatpush1.bf16.msra.mxu0 %v7560
        %9031 = vmatprep.subr.bf16.mxu0 %v7565
        %9032 = vmatpush1.bf16.msra.mxu0 %v7564
        %9033 = vmatprep.subr.bf16.mxu0 %v7569
        %9034 = vmatpush1.bf16.msra.mxu0 %v7568
        %9035 = vmatprep.subr.bf16.mxu0 %v7573
        %9036 = vmatpush1.bf16.msra.mxu0 %v7572
        %9037 = vmatprep.subr.bf16.mxu0 %v7577
        %9038 = vmatpush1.bf16.msra.mxu0 %v7576
        %9039 = vmatprep.subr.bf16.mxu0 %v7581
        %9040 = vmatpush1.bf16.msra.mxu0 %v7580
        %9041 = vmatprep.subr.bf16.mxu0 %v7585
        %9042 = vmatpush1.bf16.msra.mxu0 %v7584
        %9043 = vmatprep.subr.bf16.mxu0 %v7589
        %9044 = vmatpush1.bf16.msra.mxu0 %v7588
        %9045 = vmatprep.subr.bf16.mxu0 %v7593
        %9046 = vmatpush1.bf16.msra.mxu0 %v7592
        %9047 = vmatprep.subr.bf16.mxu0 %v7597
        %9048 = vmatpush1.bf16.msra.mxu0 %v7596
        %9049 = vmatprep.subr.bf16.mxu0 %v7601
        %9050 = vmatpush1.bf16.msra.mxu0 %v7600
        %9051 = vmatprep.subr.bf16.mxu0 %v7605
        %9052 = vmatpush1.bf16.msra.mxu0 %v7604
        %9053 = vmatprep.subr.bf16.mxu0 %v7609
        %9054 = vmatpush1.bf16.msra.mxu0 %v7608
        %9055 = vmatprep.subr.bf16.mxu0 %v7613
        %9056 = vmatpush1.bf16.msra.mxu0 %v7612
        %9057 = vmatprep.mubr.bf16.mxu0 %v5663
        %9058 = vmatmul.mubr.bf16.gmra.mrb[0].mxu0 %v5662
        %v9059 = vpop.f32.mrb[0].mxu0
        %v9060 = vadd.f32 %v9019, %v9059
        %v9061 = vpop.f32.mrb[0].mxu0
        %v9062 = vadd.f32 %v9021, %v9061
        %v9063 = vpop.f32.mrb[0].mxu0
        %v9064 = vpop.f32.mrb[0].mxu0
        %9065 = vdwg.mxu0
        %9066 = vmatprep.subr.bf16.mxu0 %v7617
        %9067 = vmatpush1.bf16.msra.mxu0 %v7616
        %9068 = vmatprep.subr.bf16.mxu0 %v7621
        %9069 = vmatpush1.bf16.msra.mxu0 %v7620
        %9070 = vmatprep.subr.bf16.mxu0 %v7625
        %9071 = vmatpush1.bf16.msra.mxu0 %v7624
        %9072 = vmatprep.subr.bf16.mxu0 %v7629
        %9073 = vmatpush1.bf16.msra.mxu0 %v7628
        %9074 = vmatprep.subr.bf16.mxu0 %v7633
        %9075 = vmatpush1.bf16.msra.mxu0 %v7632
        %9076 = vmatprep.subr.bf16.mxu0 %v7637
        %9077 = vmatpush1.bf16.msra.mxu0 %v7636
        %9078 = vmatprep.subr.bf16.mxu0 %v7641
        %9079 = vmatpush1.bf16.msra.mxu0 %v7640
        %9080 = vmatprep.subr.bf16.mxu0 %v7645
        %9081 = vmatpush1.bf16.msra.mxu0 %v7644
        %9082 = vmatprep.subr.bf16.mxu0 %v7649
        %9083 = vmatpush1.bf16.msra.mxu0 %v7648
        %9084 = vmatprep.subr.bf16.mxu0 %v7653
        %9085 = vmatpush1.bf16.msra.mxu0 %v7652
        %9086 = vmatprep.subr.bf16.mxu0 %v7657
        %9087 = vmatpush1.bf16.msra.mxu0 %v7656
        %9088 = vmatprep.subr.bf16.mxu0 %v7661
        %9089 = vmatpush1.bf16.msra.mxu0 %v7660
        %9090 = vmatprep.subr.bf16.mxu0 %v7665
        %9091 = vmatpush1.bf16.msra.mxu0 %v7664
        %9092 = vmatprep.subr.bf16.mxu0 %v7669
        %9093 = vmatpush1.bf16.msra.mxu0 %v7668
        %9094 = vmatprep.subr.bf16.mxu0 %v7673
        %9095 = vmatpush1.bf16.msra.mxu0 %v7672
        %9096 = vmatprep.subr.bf16.mxu0 %v7677
        %9097 = vmatpush1.bf16.msra.mxu0 %v7676
        %9098 = vmatprep.mubr.bf16.mxu0 %v5665
        %9099 = vmatmul.mubr.bf16.gmra.mrb[0].mxu0 %v5664
        %v9100 = vpop.f32.mrb[0].mxu0
        %v9101 = vadd.f32 %v9060, %v9100
        %v9102 = vpop.f32.mrb[0].mxu0
        %v9103 = vadd.f32 %v9062, %v9102
        %v9104 = vpop.f32.mrb[0].mxu0
        %v9105 = vpop.f32.mrb[0].mxu0
        %9106 = vdwg.mxu0
        %9107 = vmatprep.subr.bf16.mxu0 %v7681
        %9108 = vmatpush1.bf16.msra.mxu0 %v7680
        %9109 = vmatprep.subr.bf16.mxu0 %v7685
        %9110 = vmatpush1.bf16.msra.mxu0 %v7684
        %9111 = vmatprep.subr.bf16.mxu0 %v7689
        %9112 = vmatpush1.bf16.msra.mxu0 %v7688
        %9113 = vmatprep.subr.bf16.mxu0 %v7693
        %9114 = vmatpush1.bf16.msra.mxu0 %v7692
        %9115 = vmatprep.subr.bf16.mxu0 %v7697
        %9116 = vmatpush1.bf16.msra.mxu0 %v7696
        %9117 = vmatprep.subr.bf16.mxu0 %v7701
        %9118 = vmatpush1.bf16.msra.mxu0 %v7700
        %9119 = vmatprep.subr.bf16.mxu0 %v7705
        %9120 = vmatpush1.bf16.msra.mxu0 %v7704
        %9121 = vmatprep.subr.bf16.mxu0 %v7709
        %9122 = vmatpush1.bf16.msra.mxu0 %v7708
        %9123 = vmatprep.subr.bf16.mxu0 %v7713
        %9124 = vmatpush1.bf16.msra.mxu0 %v7712
        %9125 = vmatprep.subr.bf16.mxu0 %v7717
        %9126 = vmatpush1.bf16.msra.mxu0 %v7716
        %9127 = vmatprep.subr.bf16.mxu0 %v7721
        %9128 = vmatpush1.bf16.msra.mxu0 %v7720
        %9129 = vmatprep.subr.bf16.mxu0 %v7725
        %9130 = vmatpush1.bf16.msra.mxu0 %v7724
        %9131 = vmatprep.subr.bf16.mxu0 %v7729
        %9132 = vmatpush1.bf16.msra.mxu0 %v7728
        %9133 = vmatprep.subr.bf16.mxu0 %v7733
        %9134 = vmatpush1.bf16.msra.mxu0 %v7732
        %9135 = vmatprep.subr.bf16.mxu0 %v7737
        %9136 = vmatpush1.bf16.msra.mxu0 %v7736
        %9137 = vmatprep.subr.bf16.mxu0 %v7741
        %9138 = vmatpush1.bf16.msra.mxu0 %v7740
        %9139 = vmatprep.mubr.bf16.mxu0 %v5667
        %9140 = vmatmul.mubr.bf16.gmra.mrb[0].mxu0 %v5666
        %v9141 = vpop.f32.mrb[0].mxu0
        %v9142 = vadd.f32 %v9101, %v9141
        %v9143 = vpop.f32.mrb[0].mxu0
        %v9144 = vadd.f32 %v9103, %v9143
        %v9145 = vpop.f32.mrb[0].mxu0
        %v9146 = vpop.f32.mrb[0].mxu0
        %9147 = vdwg.mxu0
        %9148 = vmatprep.subr.bf16.mxu0 %v7745
        %9149 = vmatpush1.bf16.msra.mxu0 %v7744
        %9150 = vmatprep.subr.bf16.mxu0 %v7749
        %9151 = vmatpush1.bf16.msra.mxu0 %v7748
        %9152 = vmatprep.subr.bf16.mxu0 %v7753
        %9153 = vmatpush1.bf16.msra.mxu0 %v7752
        %9154 = vmatprep.subr.bf16.mxu0 %v7757
        %9155 = vmatpush1.bf16.msra.mxu0 %v7756
        %9156 = vmatprep.subr.bf16.mxu0 %v7761
        %9157 = vmatpush1.bf16.msra.mxu0 %v7760
        %9158 = vmatprep.subr.bf16.mxu0 %v7765
        %9159 = vmatpush1.bf16.msra.mxu0 %v7764
        %9160 = vmatprep.subr.bf16.mxu0 %v7769
        %9161 = vmatpush1.bf16.msra.mxu0 %v7768
        %9162 = vmatprep.subr.bf16.mxu0 %v7773
        %9163 = vmatpush1.bf16.msra.mxu0 %v7772
        %9164 = vmatprep.subr.bf16.mxu0 %v7777
        %9165 = vmatpush1.bf16.msra.mxu0 %v7776
        %9166 = vmatprep.subr.bf16.mxu0 %v7781
        %9167 = vmatpush1.bf16.msra.mxu0 %v7780
        %9168 = vmatprep.subr.bf16.mxu0 %v7785
        %9169 = vmatpush1.bf16.msra.mxu0 %v7784
        %9170 = vmatprep.subr.bf16.mxu0 %v7789
        %9171 = vmatpush1.bf16.msra.mxu0 %v7788
        %9172 = vmatprep.subr.bf16.mxu0 %v7793
        %9173 = vmatpush1.bf16.msra.mxu0 %v7792
        %9174 = vmatprep.subr.bf16.mxu0 %v7797
        %9175 = vmatpush1.bf16.msra.mxu0 %v7796
        %9176 = vmatprep.subr.bf16.mxu0 %v7801
        %9177 = vmatpush1.bf16.msra.mxu0 %v7800
        %9178 = vmatprep.subr.bf16.mxu0 %v7805
        %9179 = vmatpush1.bf16.msra.mxu0 %v7804
        %9180 = vmatprep.mubr.bf16.mxu0 %v5669
        %9181 = vmatmul.mubr.bf16.gmra.mrb[0].mxu0 %v5668
        %v9182 = vpop.f32.mrb[0].mxu0
        %v9183 = vadd.f32 %v9142, %v9182
        %v9184 = vpop.f32.mrb[0].mxu0
        %v9185 = vadd.f32 %v9144, %v9184
        %v9186 = vpop.f32.mrb[0].mxu0
        %v9187 = vpop.f32.mrb[0].mxu0
        %9188 = vdwg.mxu0
        %9189 = vmatprep.subr.bf16.mxu0 %v7809
        %9190 = vmatpush1.bf16.msra.mxu0 %v7808
        %9191 = vmatprep.subr.bf16.mxu0 %v7813
        %9192 = vmatpush1.bf16.msra.mxu0 %v7812
        %9193 = vmatprep.subr.bf16.mxu0 %v7817
        %9194 = vmatpush1.bf16.msra.mxu0 %v7816
        %9195 = vmatprep.subr.bf16.mxu0 %v7821
        %9196 = vmatpush1.bf16.msra.mxu0 %v7820
        %9197 = vmatprep.subr.bf16.mxu0 %v7825
        %9198 = vmatpush1.bf16.msra.mxu0 %v7824
        %9199 = vmatprep.subr.bf16.mxu0 %v7829
        %9200 = vmatpush1.bf16.msra.mxu0 %v7828
        %9201 = vmatprep.subr.bf16.mxu0 %v7833
        %9202 = vmatpush1.bf16.msra.mxu0 %v7832
        %9203 = vmatprep.subr.bf16.mxu0 %v7837
        %9204 = vmatpush1.bf16.msra.mxu0 %v7836
        %9205 = vmatprep.subr.bf16.mxu0 %v7841
        %9206 = vmatpush1.bf16.msra.mxu0 %v7840
        %9207 = vmatprep.subr.bf16.mxu0 %v7845
        %9208 = vmatpush1.bf16.msra.mxu0 %v7844
        %9209 = vmatprep.subr.bf16.mxu0 %v7849
        %9210 = vmatpush1.bf16.msra.mxu0 %v7848
        %9211 = vmatprep.subr.bf16.mxu0 %v7853
        %9212 = vmatpush1.bf16.msra.mxu0 %v7852
        %9213 = vmatprep.subr.bf16.mxu0 %v7857
        %9214 = vmatpush1.bf16.msra.mxu0 %v7856
        %9215 = vmatprep.subr.bf16.mxu0 %v7861
        %9216 = vmatpush1.bf16.msra.mxu0 %v7860
        %9217 = vmatprep.subr.bf16.mxu0 %v7865
        %9218 = vmatpush1.bf16.msra.mxu0 %v7864
        %9219 = vmatprep.subr.bf16.mxu0 %v7869
        %9220 = vmatpush1.bf16.msra.mxu0 %v7868
        %9221 = vmatprep.mubr.bf16.mxu0 %v5671
        %9222 = vmatmul.mubr.bf16.gmra.mrb[0].mxu0 %v5670
        %v9223 = vpop.f32.mrb[0].mxu0
        %v9224 = vadd.f32 %v9183, %v9223
        %v9225 = vpop.f32.mrb[0].mxu0
        %v9226 = vadd.f32 %v9185, %v9225
        %v9227 = vpop.f32.mrb[0].mxu0
        %v9228 = vpop.f32.mrb[0].mxu0
        %9229 = vdwg.mxu0
        %9230 = vmatprep.subr.bf16.mxu0 %v7873
        %9231 = vmatpush1.bf16.msra.mxu0 %v7872
        %9232 = vmatprep.subr.bf16.mxu0 %v7877
        %9233 = vmatpush1.bf16.msra.mxu0 %v7876
        %9234 = vmatprep.subr.bf16.mxu0 %v7881
        %9235 = vmatpush1.bf16.msra.mxu0 %v7880
        %9236 = vmatprep.subr.bf16.mxu0 %v7885
        %9237 = vmatpush1.bf16.msra.mxu0 %v7884
        %9238 = vmatprep.subr.bf16.mxu0 %v7889
        %9239 = vmatpush1.bf16.msra.mxu0 %v7888
        %9240 = vmatprep.subr.bf16.mxu0 %v7893
        %9241 = vmatpush1.bf16.msra.mxu0 %v7892
        %9242 = vmatprep.subr.bf16.mxu0 %v7897
        %9243 = vmatpush1.bf16.msra.mxu0 %v7896
        %9244 = vmatprep.subr.bf16.mxu0 %v7901
        %9245 = vmatpush1.bf16.msra.mxu0 %v7900
        %9246 = vmatprep.subr.bf16.mxu0 %v7905
        %9247 = vmatpush1.bf16.msra.mxu0 %v7904
        %9248 = vmatprep.subr.bf16.mxu0 %v7909
        %9249 = vmatpush1.bf16.msra.mxu0 %v7908
        %9250 = vmatprep.subr.bf16.mxu0 %v7913
        %9251 = vmatpush1.bf16.msra.mxu0 %v7912
        %9252 = vmatprep.subr.bf16.mxu0 %v7917
        %9253 = vmatpush1.bf16.msra.mxu0 %v7916
        %9254 = vmatprep.subr.bf16.mxu0 %v7921
        %9255 = vmatpush1.bf16.msra.mxu0 %v7920
        %9256 = vmatprep.subr.bf16.mxu0 %v7925
        %9257 = vmatpush1.bf16.msra.mxu0 %v7924
        %9258 = vmatprep.subr.bf16.mxu0 %v7929
        %9259 = vmatpush1.bf16.msra.mxu0 %v7928
        %9260 = vmatprep.subr.bf16.mxu0 %v7933
        %9261 = vmatpush1.bf16.msra.mxu0 %v7932
        %9262 = vmatprep.mubr.bf16.mxu0 %v5673
        %9263 = vmatmul.mubr.bf16.gmra.mrb[0].mxu0 %v5672
        %v9264 = vpop.f32.mrb[0].mxu0
        %v9265 = vadd.f32 %v9224, %v9264
        %v9266 = vpop.f32.mrb[0].mxu0
        %v9267 = vadd.f32 %v9226, %v9266
        %v9268 = vpop.f32.mrb[0].mxu0
        %v9269 = vpop.f32.mrb[0].mxu0
        %9270 = vdwg.mxu0
        %9271 = vmatprep.subr.bf16.mxu0 %v7937
        %9272 = vmatpush1.bf16.msra.mxu0 %v7936
        %9273 = vmatprep.subr.bf16.mxu0 %v7941
        %9274 = vmatpush1.bf16.msra.mxu0 %v7940
        %9275 = vmatprep.subr.bf16.mxu0 %v7945
        %9276 = vmatpush1.bf16.msra.mxu0 %v7944
        %9277 = vmatprep.subr.bf16.mxu0 %v7949
        %9278 = vmatpush1.bf16.msra.mxu0 %v7948
        %9279 = vmatprep.subr.bf16.mxu0 %v7953
        %9280 = vmatpush1.bf16.msra.mxu0 %v7952
        %9281 = vmatprep.subr.bf16.mxu0 %v7957
        %9282 = vmatpush1.bf16.msra.mxu0 %v7956
        %9283 = vmatprep.subr.bf16.mxu0 %v7961
        %9284 = vmatpush1.bf16.msra.mxu0 %v7960
        %9285 = vmatprep.subr.bf16.mxu0 %v7965
        %9286 = vmatpush1.bf16.msra.mxu0 %v7964
        %9287 = vmatprep.subr.bf16.mxu0 %v7969
        %9288 = vmatpush1.bf16.msra.mxu0 %v7968
        %9289 = vmatprep.subr.bf16.mxu0 %v7973
        %9290 = vmatpush1.bf16.msra.mxu0 %v7972
        %9291 = vmatprep.subr.bf16.mxu0 %v7977
        %9292 = vmatpush1.bf16.msra.mxu0 %v7976
        %9293 = vmatprep.subr.bf16.mxu0 %v7981
        %9294 = vmatpush1.bf16.msra.mxu0 %v7980
        %9295 = vmatprep.subr.bf16.mxu0 %v7985
        %9296 = vmatpush1.bf16.msra.mxu0 %v7984
        %9297 = vmatprep.subr.bf16.mxu0 %v7989
        %9298 = vmatpush1.bf16.msra.mxu0 %v7988
        %9299 = vmatprep.subr.bf16.mxu0 %v7993
        %9300 = vmatpush1.bf16.msra.mxu0 %v7992
        %9301 = vmatprep.subr.bf16.mxu0 %v7997
        %9302 = vmatpush1.bf16.msra.mxu0 %v7996
        %9303 = vmatprep.mubr.bf16.mxu0 %v5675
        %9304 = vmatmul.mubr.bf16.gmra.mrb[0].mxu0 %v5674
        %v9305 = vpop.f32.mrb[0].mxu0
        %v9306 = vadd.f32 %v9265, %v9305
        %v9307 = vpop.f32.mrb[0].mxu0
        %v9308 = vadd.f32 %v9267, %v9307
        %v9309 = vpop.f32.mrb[0].mxu0
        %v9310 = vpop.f32.mrb[0].mxu0
        %9311 = vdwg.mxu0
        %v9312 = vmax.f32 %v8937, 0.0
        %v9313 = vmax.f32 %v8939, 0.0
        %v9314 = vmax.f32 %v9306, 0.0
        %v9315 = vmax.f32 %v9308, 0.0
        %v9316 = vsel %vm702, %v9312, 0.0
        %v9317 = vrot.slane %v9316, 4
        %v9318 = vadd.f32 %v9316, %v9317
        %v9319 = vrot.slane %v9318, 2
        %v9320 = vadd.f32 %v9318, %v9319
        %v9321 = vrot.slane %v9320, 1
        %v9322 = vadd.f32 %v9320, %v9321
        %v9323 = vsel %vm702, %v9313, 0.0
        %v9324 = vrot.slane %v9323, 4
        %v9325 = vadd.f32 %v9323, %v9324
        %v9326 = vrot.slane %v9325, 2
        %v9327 = vadd.f32 %v9325, %v9326
        %v9328 = vrot.slane %v9327, 1
        %v9329 = vadd.f32 %v9327, %v9328
        %v9330 = vsel %vm702, %v9314, 0.0
        %v9331 = vrot.slane %v9330, 4
        %v9332 = vadd.f32 %v9330, %v9331
        %v9333 = vrot.slane %v9332, 2
        %v9334 = vadd.f32 %v9332, %v9333
        %v9335 = vrot.slane %v9334, 1
        %v9336 = vadd.f32 %v9334, %v9335
        %v9337 = vsel %vm702, %v9315, 0.0
        %v9338 = vrot.slane %v9337, 4
        %v9339 = vadd.f32 %v9337, %v9338
        %v9340 = vrot.slane %v9339, 2
        %v9341 = vadd.f32 %v9339, %v9340
        %v9342 = vrot.slane %v9341, 1
        %v9343 = vadd.f32 %v9341, %v9342
        %v9348 = vrot.slane %v9312, 4
        %v9349 = vrot.slane %v9313, 4
        %v9350 = vrot.slane %v9314, 4
        %v9351 = vrot.slane %v9315, 4
        %v9356 = vsel %vm702, %v9348, 0.0
        %v9357 = vrot.slane %v9356, 4
        %v9358 = vadd.f32 %v9356, %v9357
        %v9359 = vrot.slane %v9358, 2
        %v9360 = vadd.f32 %v9358, %v9359
        %v9361 = vrot.slane %v9360, 1
        %v9362 = vadd.f32 %v9360, %v9361
        %v9363 = vsel %vm702, %v9349, 0.0
        %v9364 = vrot.slane %v9363, 4
        %v9365 = vadd.f32 %v9363, %v9364
        %v9366 = vrot.slane %v9365, 2
        %v9367 = vadd.f32 %v9365, %v9366
        %v9368 = vrot.slane %v9367, 1
        %v9369 = vadd.f32 %v9367, %v9368
        %v9370 = vsel %vm702, %v9350, 0.0
        %v9371 = vrot.slane %v9370, 4
        %v9372 = vadd.f32 %v9370, %v9371
        %v9373 = vrot.slane %v9372, 2
        %v9374 = vadd.f32 %v9372, %v9373
        %v9375 = vrot.slane %v9374, 1
        %v9376 = vadd.f32 %v9374, %v9375
        %v9377 = vsel %vm702, %v9351, 0.0
        %v9378 = vrot.slane %v9377, 4
        %v9379 = vadd.f32 %v9377, %v9378
        %v9380 = vrot.slane %v9379, 2
        %v9381 = vadd.f32 %v9379, %v9380
        %v9382 = vrot.slane %v9381, 1
        %v9383 = vadd.f32 %v9381, %v9382
        %v9384 = vadd.f32 %v9322, %v9362
        %v9385 = vadd.f32 %v9329, %v9369
        %v9386 = vadd.f32 %v9336, %v9376
        %v9387 = vadd.f32 %v9343, %v9383
        %v9388 = vmul.f32 %v9384, 0.25
        %v9389 = vmul.f32 %v9385, 0.25
        %v9390 = vmul.f32 %v9386, 0.25
        %v9391 = vmul.f32 %v9387, 0.25
        %v9392 = vld [vmem:[%s9] sm:$0xff]
        %v9393 = vld [vmem:[%s9 + $0x8] sm:$0xff]
        %v9394 = vld [vmem:[%s9 + $0x10] sm:$0xff]
        %v9395 = vld [vmem:[%s9 + $0x18] sm:$0xff]
        %v9396 = vld [vmem:[%s9 + $0x20] sm:$0xff]
        %v9397 = vld [vmem:[%s9 + $0x28] sm:$0xff]
        %v9398 = vld [vmem:[%s9 + $0x30] sm:$0xff]
        %v9399 = vld [vmem:[%s9 + $0x38] sm:$0xff]
        %v9400 = vld [vmem:[%s9 + $0x40] sm:$0xff]
        %v9401 = vld [vmem:[%s9 + $0x48] sm:$0xff]
        %v9402 = vld [vmem:[%s9 + $0x50] sm:$0xff]
        %v9403 = vld [vmem:[%s9 + $0x58] sm:$0xff]
        %v9404 = vld [vmem:[%s9 + $0x60] sm:$0xff]
        %v9405 = vld [vmem:[%s9 + $0x68] sm:$0xff]
        %v9406 = vld [vmem:[%s9 + $0x70] sm:$0xff]
        %v9407 = vld [vmem:[%s9 + $0x78] sm:$0xff]
        %v9408 = vld [vmem:[%s9 + $0x80] sm:$0xff]
        %v9409 = vld [vmem:[%s9 + $0x88] sm:$0xff]
        %v9410 = vld [vmem:[%s9 + $0x90] sm:$0xff]
        %v9411 = vld [vmem:[%s9 + $0x98] sm:$0xff]
        %v9412 = vld [vmem:[%s9 + $0xa0] sm:$0xff]
        %v9413 = vld [vmem:[%s9 + $0xa8] sm:$0xff]
        %v9414 = vld [vmem:[%s9 + $0xb0] sm:$0xff]
        %v9415 = vld [vmem:[%s9 + $0xb8] sm:$0xff]
        %v9416 = vld [vmem:[%s9 + $0xc0] sm:$0xff]
        %v9417 = vld [vmem:[%s9 + $0xc8] sm:$0xff]
        %v9418 = vld [vmem:[%s9 + $0xd0] sm:$0xff]
        %v9419 = vld [vmem:[%s9 + $0xd8] sm:$0xff]
        %v9420 = vld [vmem:[%s9 + $0xe0] sm:$0xff]
        %v9421 = vld [vmem:[%s9 + $0xe8] sm:$0xff]
        %v9422 = vld [vmem:[%s9 + $0xf0] sm:$0xff]
        %v9423 = vld [vmem:[%s9 + $0xf8] sm:$0xff]
        %v9424 = vld [vmem:[%s9 + $0x100] sm:$0xff]
        %v9425 = vld [vmem:[%s9 + $0x108] sm:$0xff]
        %v9426 = vld [vmem:[%s9 + $0x110] sm:$0xff]
        %v9427 = vld [vmem:[%s9 + $0x118] sm:$0xff]
        %v9428 = vld [vmem:[%s9 + $0x120] sm:$0xff]
        %v9429 = vld [vmem:[%s9 + $0x128] sm:$0xff]
        %v9430 = vld [vmem:[%s9 + $0x130] sm:$0xff]
        %v9431 = vld [vmem:[%s9 + $0x138] sm:$0xff]
        %v9432 = vld [vmem:[%s9 + $0x140] sm:$0xff]
        %v9433 = vld [vmem:[%s9 + $0x148] sm:$0xff]
        %v9434 = vld [vmem:[%s9 + $0x150] sm:$0xff]
        %v9435 = vld [vmem:[%s9 + $0x158] sm:$0xff]
        %v9436 = vld [vmem:[%s9 + $0x160] sm:$0xff]
        %v9437 = vld [vmem:[%s9 + $0x168] sm:$0xff]
        %v9438 = vld [vmem:[%s9 + $0x170] sm:$0xff]
        %v9439 = vld [vmem:[%s9 + $0x178] sm:$0xff]
        %v9440 = vld [vmem:[%s9 + $0x180] sm:$0xff]
        %v9441 = vld [vmem:[%s9 + $0x188] sm:$0xff]
        %v9442 = vld [vmem:[%s9 + $0x190] sm:$0xff]
        %v9443 = vld [vmem:[%s9 + $0x198] sm:$0xff]
        %v9444 = vld [vmem:[%s9 + $0x1a0] sm:$0xff]
        %v9445 = vld [vmem:[%s9 + $0x1a8] sm:$0xff]
        %v9446 = vld [vmem:[%s9 + $0x1b0] sm:$0xff]
        %v9447 = vld [vmem:[%s9 + $0x1b8] sm:$0xff]
        %v9448 = vld [vmem:[%s9 + $0x1c0] sm:$0xff]
        %v9449 = vld [vmem:[%s9 + $0x1c8] sm:$0xff]
        %v9450 = vld [vmem:[%s9 + $0x1d0] sm:$0xff]
        %v9451 = vld [vmem:[%s9 + $0x1d8] sm:$0xff]
        %v9452 = vld [vmem:[%s9 + $0x1e0] sm:$0xff]
        %v9453 = vld [vmem:[%s9 + $0x1e8] sm:$0xff]
        %v9454 = vld [vmem:[%s9 + $0x1f0] sm:$0xff]
        %v9455 = vld [vmem:[%s9 + $0x1f8] sm:$0xff]
        %v9456 = vld [vmem:[%s9 + $0x200] sm:$0xff]
        %v9457 = vld [vmem:[%s9 + $0x208] sm:$0xff]
        %v9458 = vld [vmem:[%s9 + $0x210] sm:$0xff]
        %v9459 = vld [vmem:[%s9 + $0x218] sm:$0xff]
        %v9460 = vld [vmem:[%s9 + $0x220] sm:$0xff]
        %v9461 = vld [vmem:[%s9 + $0x228] sm:$0xff]
        %v9462 = vld [vmem:[%s9 + $0x230] sm:$0xff]
        %v9463 = vld [vmem:[%s9 + $0x238] sm:$0xff]
        %v9464 = vld [vmem:[%s9 + $0x240] sm:$0xff]
        %v9465 = vld [vmem:[%s9 + $0x248] sm:$0xff]
        %v9466 = vld [vmem:[%s9 + $0x250] sm:$0xff]
        %v9467 = vld [vmem:[%s9 + $0x258] sm:$0xff]
        %v9468 = vld [vmem:[%s9 + $0x260] sm:$0xff]
        %v9469 = vld [vmem:[%s9 + $0x268] sm:$0xff]
        %v9470 = vld [vmem:[%s9 + $0x270] sm:$0xff]
        %v9471 = vld [vmem:[%s9 + $0x278] sm:$0xff]
        %v9472 = vld [vmem:[%s9 + $0x280] sm:$0xff]
        %v9473 = vld [vmem:[%s9 + $0x288] sm:$0xff]
        %v9474 = vld [vmem:[%s9 + $0x290] sm:$0xff]
        %v9475 = vld [vmem:[%s9 + $0x298] sm:$0xff]
        %v9476 = vld [vmem:[%s9 + $0x2a0] sm:$0xff]
        %v9477 = vld [vmem:[%s9 + $0x2a8] sm:$0xff]
        %v9478 = vld [vmem:[%s9 + $0x2b0] sm:$0xff]
        %v9479 = vld [vmem:[%s9 + $0x2b8] sm:$0xff]
        %v9480 = vld [vmem:[%s9 + $0x2c0] sm:$0xff]
        %v9481 = vld [vmem:[%s9 + $0x2c8] sm:$0xff]
        %v9482 = vld [vmem:[%s9 + $0x2d0] sm:$0xff]
        %v9483 = vld [vmem:[%s9 + $0x2d8] sm:$0xff]
        %v9484 = vld [vmem:[%s9 + $0x2e0] sm:$0xff]
        %v9485 = vld [vmem:[%s9 + $0x2e8] sm:$0xff]
        %v9486 = vld [vmem:[%s9 + $0x2f0] sm:$0xff]
        %v9487 = vld [vmem:[%s9 + $0x2f8] sm:$0xff]
        %v9488 = vld [vmem:[%s9 + $0x300] sm:$0xff]
        %v9489 = vld [vmem:[%s9 + $0x308] sm:$0xff]
        %v9490 = vld [vmem:[%s9 + $0x310] sm:$0xff]
        %v9491 = vld [vmem:[%s9 + $0x318] sm:$0xff]
        %v9492 = vld [vmem:[%s9 + $0x320] sm:$0xff]
        %v9493 = vld [vmem:[%s9 + $0x328] sm:$0xff]
        %v9494 = vld [vmem:[%s9 + $0x330] sm:$0xff]
        %v9495 = vld [vmem:[%s9 + $0x338] sm:$0xff]
        %v9496 = vld [vmem:[%s9 + $0x340] sm:$0xff]
        %v9497 = vld [vmem:[%s9 + $0x348] sm:$0xff]
        %v9498 = vld [vmem:[%s9 + $0x350] sm:$0xff]
        %v9499 = vld [vmem:[%s9 + $0x358] sm:$0xff]
        %v9500 = vld [vmem:[%s9 + $0x360] sm:$0xff]
        %v9501 = vld [vmem:[%s9 + $0x368] sm:$0xff]
        %v9502 = vld [vmem:[%s9 + $0x370] sm:$0xff]
        %v9503 = vld [vmem:[%s9 + $0x378] sm:$0xff]
        %v9504 = vld [vmem:[%s9 + $0x380] sm:$0xff]
        %v9505 = vld [vmem:[%s9 + $0x388] sm:$0xff]
        %v9506 = vld [vmem:[%s9 + $0x390] sm:$0xff]
        %v9507 = vld [vmem:[%s9 + $0x398] sm:$0xff]
        %v9508 = vld [vmem:[%s9 + $0x3a0] sm:$0xff]
        %v9509 = vld [vmem:[%s9 + $0x3a8] sm:$0xff]
        %v9510 = vld [vmem:[%s9 + $0x3b0] sm:$0xff]
        %v9511 = vld [vmem:[%s9 + $0x3b8] sm:$0xff]
        %v9512 = vld [vmem:[%s9 + $0x3c0] sm:$0xff]
        %v9513 = vld [vmem:[%s9 + $0x3c8] sm:$0xff]
        %v9514 = vld [vmem:[%s9 + $0x3d0] sm:$0xff]
        %v9515 = vld [vmem:[%s9 + $0x3d8] sm:$0xff]
        %v9516 = vld [vmem:[%s9 + $0x3e0] sm:$0xff]
        %v9517 = vld [vmem:[%s9 + $0x3e8] sm:$0xff]
        %v9518 = vld [vmem:[%s9 + $0x3f0] sm:$0xff]
        %v9519 = vld [vmem:[%s9 + $0x3f8] sm:$0xff]
        %v9520 = vld [vmem:[%s10] sm:$0x3]
        %v9522 = vlaneseq
        %v9523 = vshrl.u32 %v9522, 7
        %v9524 = vsub.s32 0, %v9523
        %v9525 = vrot.slane %v9520, %v9524
        %v9526 = vlaneseq
        %v9527 = vshrl.u32 %v9526, 7
        %v9528 = vsub.s32 1, %v9527
        %v9529 = vrot.slane %v9520, %v9528
        %9532 = vmatprep.subr.mxu0 %v9393
        %9533 = vmatpush1.msra.mxu0 %v9392
        %9534 = vmatprep.subr.mxu0 %v9395
        %9535 = vmatpush1.msra.mxu0 %v9394
        %9536 = vmatprep.subr.mxu0 %v9397
        %9537 = vmatpush1.msra.mxu0 %v9396
        %9538 = vmatprep.subr.mxu0 %v9399
        %9539 = vmatpush1.msra.mxu0 %v9398
        %9540 = vmatprep.subr.mxu0 %v9401
        %9541 = vmatpush1.msra.mxu0 %v9400
        %9542 = vmatprep.subr.mxu0 %v9403
        %9543 = vmatpush1.msra.mxu0 %v9402
        %9544 = vmatprep.subr.mxu0 %v9405
        %9545 = vmatpush1.msra.mxu0 %v9404
        %9546 = vmatprep.subr.mxu0 %v9407
        %9547 = vmatpush1.msra.mxu0 %v9406
        %9548 = vmatprep.subr.mxu0 %v9409
        %9549 = vmatpush1.msra.mxu0 %v9408
        %9550 = vmatprep.subr.mxu0 %v9411
        %9551 = vmatpush1.msra.mxu0 %v9410
        %9552 = vmatprep.subr.mxu0 %v9413
        %9553 = vmatpush1.msra.mxu0 %v9412
        %9554 = vmatprep.subr.mxu0 %v9415
        %9555 = vmatpush1.msra.mxu0 %v9414
        %9556 = vmatprep.subr.mxu0 %v9417
        %9557 = vmatpush1.msra.mxu0 %v9416
        %9558 = vmatprep.subr.mxu0 %v9419
        %9559 = vmatpush1.msra.mxu0 %v9418
        %9560 = vmatprep.subr.mxu0 %v9421
        %9561 = vmatpush1.msra.mxu0 %v9420
        %9562 = vmatprep.subr.mxu0 %v9423
        %9563 = vmatpush1.msra.mxu0 %v9422
        %9564 = vmatprep.subr.mxu0 %v9425
        %9565 = vmatpush1.msra.mxu0 %v9424
        %9566 = vmatprep.subr.mxu0 %v9427
        %9567 = vmatpush1.msra.mxu0 %v9426
        %9568 = vmatprep.subr.mxu0 %v9429
        %9569 = vmatpush1.msra.mxu0 %v9428
        %9570 = vmatprep.subr.mxu0 %v9431
        %9571 = vmatpush1.msra.mxu0 %v9430
        %9572 = vmatprep.subr.mxu0 %v9433
        %9573 = vmatpush1.msra.mxu0 %v9432
        %9574 = vmatprep.subr.mxu0 %v9435
        %9575 = vmatpush1.msra.mxu0 %v9434
        %9576 = vmatprep.subr.mxu0 %v9437
        %9577 = vmatpush1.msra.mxu0 %v9436
        %9578 = vmatprep.subr.mxu0 %v9439
        %9579 = vmatpush1.msra.mxu0 %v9438
        %9580 = vmatprep.subr.mxu0 %v9441
        %9581 = vmatpush1.msra.mxu0 %v9440
        %9582 = vmatprep.subr.mxu0 %v9443
        %9583 = vmatpush1.msra.mxu0 %v9442
        %9584 = vmatprep.subr.mxu0 %v9445
        %9585 = vmatpush1.msra.mxu0 %v9444
        %9586 = vmatprep.subr.mxu0 %v9447
        %9587 = vmatpush1.msra.mxu0 %v9446
        %9588 = vmatprep.subr.mxu0 %v9449
        %9589 = vmatpush1.msra.mxu0 %v9448
        %9590 = vmatprep.subr.mxu0 %v9451
        %9591 = vmatpush1.msra.mxu0 %v9450
        %9592 = vmatprep.subr.mxu0 %v9453
        %9593 = vmatpush1.msra.mxu0 %v9452
        %9594 = vmatprep.subr.mxu0 %v9455
        %9595 = vmatpush1.msra.mxu0 %v9454
        %9596 = vmatprep.mubr.f32.mxu0 %v9389
        %9597 = vmatmul.mubr.f32.gmra.mrb[0].mxu0 %v9388
        %v9598 = vpop.f32.mrb[0].mxu0
        %v9599 = vadd.f32 %v9525, %v9598
        %v9600 = vpop.f32.mrb[0].mxu0
        %v9601 = vadd.f32 %v9529, %v9600
        %9602 = vdwg.mxu0
        %9603 = vmatprep.subr.mxu0 %v9457
        %9604 = vmatpush1.msra.mxu0 %v9456
        %9605 = vmatprep.subr.mxu0 %v9459
        %9606 = vmatpush1.msra.mxu0 %v9458
        %9607 = vmatprep.subr.mxu0 %v9461
        %9608 = vmatpush1.msra.mxu0 %v9460
        %9609 = vmatprep.subr.mxu0 %v9463
        %9610 = vmatpush1.msra.mxu0 %v9462
        %9611 = vmatprep.subr.mxu0 %v9465
        %9612 = vmatpush1.msra.mxu0 %v9464
        %9613 = vmatprep.subr.mxu0 %v9467
        %9614 = vmatpush1.msra.mxu0 %v9466
        %9615 = vmatprep.subr.mxu0 %v9469
        %9616 = vmatpush1.msra.mxu0 %v9468
        %9617 = vmatprep.subr.mxu0 %v9471
        %9618 = vmatpush1.msra.mxu0 %v9470
        %9619 = vmatprep.subr.mxu0 %v9473
        %9620 = vmatpush1.msra.mxu0 %v9472
        %9621 = vmatprep.subr.mxu0 %v9475
        %9622 = vmatpush1.msra.mxu0 %v9474
        %9623 = vmatprep.subr.mxu0 %v9477
        %9624 = vmatpush1.msra.mxu0 %v9476
        %9625 = vmatprep.subr.mxu0 %v9479
        %9626 = vmatpush1.msra.mxu0 %v9478
        %9627 = vmatprep.subr.mxu0 %v9481
        %9628 = vmatpush1.msra.mxu0 %v9480
        %9629 = vmatprep.subr.mxu0 %v9483
        %9630 = vmatpush1.msra.mxu0 %v9482
        %9631 = vmatprep.subr.mxu0 %v9485
        %9632 = vmatpush1.msra.mxu0 %v9484
        %9633 = vmatprep.subr.mxu0 %v9487
        %9634 = vmatpush1.msra.mxu0 %v9486
        %9635 = vmatprep.subr.mxu0 %v9489
        %9636 = vmatpush1.msra.mxu0 %v9488
        %9637 = vmatprep.subr.mxu0 %v9491
        %9638 = vmatpush1.msra.mxu0 %v9490
        %9639 = vmatprep.subr.mxu0 %v9493
        %9640 = vmatpush1.msra.mxu0 %v9492
        %9641 = vmatprep.subr.mxu0 %v9495
        %9642 = vmatpush1.msra.mxu0 %v9494
        %9643 = vmatprep.subr.mxu0 %v9497
        %9644 = vmatpush1.msra.mxu0 %v9496
        %9645 = vmatprep.subr.mxu0 %v9499
        %9646 = vmatpush1.msra.mxu0 %v9498
        %9647 = vmatprep.subr.mxu0 %v9501
        %9648 = vmatpush1.msra.mxu0 %v9500
        %9649 = vmatprep.subr.mxu0 %v9503
        %9650 = vmatpush1.msra.mxu0 %v9502
        %9651 = vmatprep.subr.mxu0 %v9505
        %9652 = vmatpush1.msra.mxu0 %v9504
        %9653 = vmatprep.subr.mxu0 %v9507
        %9654 = vmatpush1.msra.mxu0 %v9506
        %9655 = vmatprep.subr.mxu0 %v9509
        %9656 = vmatpush1.msra.mxu0 %v9508
        %9657 = vmatprep.subr.mxu0 %v9511
        %9658 = vmatpush1.msra.mxu0 %v9510
        %9659 = vmatprep.subr.mxu0 %v9513
        %9660 = vmatpush1.msra.mxu0 %v9512
        %9661 = vmatprep.subr.mxu0 %v9515
        %9662 = vmatpush1.msra.mxu0 %v9514
        %9663 = vmatprep.subr.mxu0 %v9517
        %9664 = vmatpush1.msra.mxu0 %v9516
        %9665 = vmatprep.subr.mxu0 %v9519
        %9666 = vmatpush1.msra.mxu0 %v9518
        %9667 = vmatprep.mubr.f32.mxu0 %v9391
        %9668 = vmatmul.mubr.f32.gmra.mrb[0].mxu0 %v9390
        %v9669 = vpop.f32.mrb[0].mxu0
        %v9670 = vadd.f32 %v9599, %v9669
        %v9671 = vpop.f32.mrb[0].mxu0
        %v9672 = vadd.f32 %v9601, %v9671
        %9673 = vdwg.mxu0
        %v9674 = vmax.f32 %v9670, 0.0
        %v9675 = vmax.f32 %v9672, 0.0
        %v9676 = vld [vmem:[%s11] sm:$0xff]
        %v9677 = vld [vmem:[%s11 + $0x8] sm:$0xff]
        %v9678 = vld [vmem:[%s11 + $0x10] sm:$0xff]
        %v9679 = vld [vmem:[%s11 + $0x18] sm:$0xff]
        %v9680 = vld [vmem:[%s11 + $0x20] sm:$0xff]
        %v9681 = vld [vmem:[%s11 + $0x28] sm:$0xff]
        %v9682 = vld [vmem:[%s11 + $0x30] sm:$0xff]
        %v9683 = vld [vmem:[%s11 + $0x38] sm:$0xff]
        %v9684 = vld [vmem:[%s11 + $0x40] sm:$0xff]
        %v9685 = vld [vmem:[%s11 + $0x48] sm:$0xff]
        %v9686 = vld [vmem:[%s11 + $0x50] sm:$0xff]
        %v9687 = vld [vmem:[%s11 + $0x58] sm:$0xff]
        %v9688 = vld [vmem:[%s11 + $0x60] sm:$0xff]
        %v9689 = vld [vmem:[%s11 + $0x68] sm:$0xff]
        %v9690 = vld [vmem:[%s11 + $0x70] sm:$0xff]
        %v9691 = vld [vmem:[%s11 + $0x78] sm:$0xff]
        %v9692 = vld [vmem:[%s11 + $0x80] sm:$0xff]
        %v9693 = vld [vmem:[%s11 + $0x88] sm:$0xff]
        %v9694 = vld [vmem:[%s11 + $0x90] sm:$0xff]
        %v9695 = vld [vmem:[%s11 + $0x98] sm:$0xff]
        %v9696 = vld [vmem:[%s11 + $0xa0] sm:$0xff]
        %v9697 = vld [vmem:[%s11 + $0xa8] sm:$0xff]
        %v9698 = vld [vmem:[%s11 + $0xb0] sm:$0xff]
        %v9699 = vld [vmem:[%s11 + $0xb8] sm:$0xff]
        %v9700 = vld [vmem:[%s11 + $0xc0] sm:$0xff]
        %v9701 = vld [vmem:[%s11 + $0xc8] sm:$0xff]
        %v9702 = vld [vmem:[%s11 + $0xd0] sm:$0xff]
        %v9703 = vld [vmem:[%s11 + $0xd8] sm:$0xff]
        %v9704 = vld [vmem:[%s11 + $0xe0] sm:$0xff]
        %v9705 = vld [vmem:[%s11 + $0xe8] sm:$0xff]
        %v9706 = vld [vmem:[%s11 + $0xf0] sm:$0xff]
        %v9707 = vld [vmem:[%s11 + $0xf8] sm:$0xff]
        %v9708 = vld [vmem:[%s11 + $0x100] sm:$0xff]
        %v9709 = vld [vmem:[%s11 + $0x108] sm:$0xff]
        %v9710 = vld [vmem:[%s11 + $0x110] sm:$0xff]
        %v9711 = vld [vmem:[%s11 + $0x118] sm:$0xff]
        %v9712 = vld [vmem:[%s11 + $0x120] sm:$0xff]
        %v9713 = vld [vmem:[%s11 + $0x128] sm:$0xff]
        %v9714 = vld [vmem:[%s11 + $0x130] sm:$0xff]
        %v9715 = vld [vmem:[%s11 + $0x138] sm:$0xff]
        %v9716 = vld [vmem:[%s11 + $0x140] sm:$0xff]
        %v9717 = vld [vmem:[%s11 + $0x148] sm:$0xff]
        %v9718 = vld [vmem:[%s11 + $0x150] sm:$0xff]
        %v9719 = vld [vmem:[%s11 + $0x158] sm:$0xff]
        %v9720 = vld [vmem:[%s11 + $0x160] sm:$0xff]
        %v9721 = vld [vmem:[%s11 + $0x168] sm:$0xff]
        %v9722 = vld [vmem:[%s11 + $0x170] sm:$0xff]
        %v9723 = vld [vmem:[%s11 + $0x178] sm:$0xff]
        %v9724 = vld [vmem:[%s11 + $0x180] sm:$0xff]
        %v9725 = vld [vmem:[%s11 + $0x188] sm:$0xff]
        %v9726 = vld [vmem:[%s11 + $0x190] sm:$0xff]
        %v9727 = vld [vmem:[%s11 + $0x198] sm:$0xff]
        %v9728 = vld [vmem:[%s11 + $0x1a0] sm:$0xff]
        %v9729 = vld [vmem:[%s11 + $0x1a8] sm:$0xff]
        %v9730 = vld [vmem:[%s11 + $0x1b0] sm:$0xff]
        %v9731 = vld [vmem:[%s11 + $0x1b8] sm:$0xff]
        %v9732 = vld [vmem:[%s11 + $0x1c0] sm:$0xff]
        %v9733 = vld [vmem:[%s11 + $0x1c8] sm:$0xff]
        %v9734 = vld [vmem:[%s11 + $0x1d0] sm:$0xff]
        %v9735 = vld [vmem:[%s11 + $0x1d8] sm:$0xff]
        %v9736 = vld [vmem:[%s11 + $0x1e0] sm:$0xff]
        %v9737 = vld [vmem:[%s11 + $0x1e8] sm:$0xff]
        %v9738 = vld [vmem:[%s11 + $0x1f0] sm:$0xff]
        %v9739 = vld [vmem:[%s11 + $0x1f8] sm:$0xff]
        %v9740 = vld [vmem:[%s11 + $0x200] sm:$0xff]
        %v9741 = vld [vmem:[%s11 + $0x208] sm:$0xff]
        %v9742 = vld [vmem:[%s11 + $0x210] sm:$0xff]
        %v9743 = vld [vmem:[%s11 + $0x218] sm:$0xff]
        %v9744 = vld [vmem:[%s11 + $0x220] sm:$0xff]
        %v9745 = vld [vmem:[%s11 + $0x228] sm:$0xff]
        %v9746 = vld [vmem:[%s11 + $0x230] sm:$0xff]
        %v9747 = vld [vmem:[%s11 + $0x238] sm:$0xff]
        %v9748 = vld [vmem:[%s11 + $0x240] sm:$0xff]
        %v9749 = vld [vmem:[%s11 + $0x248] sm:$0xff]
        %v9750 = vld [vmem:[%s11 + $0x250] sm:$0xff]
        %v9751 = vld [vmem:[%s11 + $0x258] sm:$0xff]
        %v9752 = vld [vmem:[%s11 + $0x260] sm:$0xff]
        %v9753 = vld [vmem:[%s11 + $0x268] sm:$0xff]
        %v9754 = vld [vmem:[%s11 + $0x270] sm:$0xff]
        %v9755 = vld [vmem:[%s11 + $0x278] sm:$0xff]
        %v9756 = vld [vmem:[%s11 + $0x280] sm:$0xff]
        %v9757 = vld [vmem:[%s11 + $0x288] sm:$0xff]
        %v9758 = vld [vmem:[%s11 + $0x290] sm:$0xff]
        %v9759 = vld [vmem:[%s11 + $0x298] sm:$0xff]
        %v9760 = vld [vmem:[%s11 + $0x2a0] sm:$0xff]
        %v9761 = vld [vmem:[%s11 + $0x2a8] sm:$0xff]
        %v9762 = vld [vmem:[%s11 + $0x2b0] sm:$0xff]
        %v9763 = vld [vmem:[%s11 + $0x2b8] sm:$0xff]
        %v9764 = vld [vmem:[%s11 + $0x2c0] sm:$0xff]
        %v9765 = vld [vmem:[%s11 + $0x2c8] sm:$0xff]
        %v9766 = vld [vmem:[%s11 + $0x2d0] sm:$0xff]
        %v9767 = vld [vmem:[%s11 + $0x2d8] sm:$0xff]
        %v9768 = vld [vmem:[%s11 + $0x2e0] sm:$0xff]
        %v9769 = vld [vmem:[%s11 + $0x2e8] sm:$0xff]
        %v9770 = vld [vmem:[%s11 + $0x2f0] sm:$0xff]
        %v9771 = vld [vmem:[%s11 + $0x2f8] sm:$0xff]
        %v9772 = vld [vmem:[%s11 + $0x300] sm:$0xff]
        %v9773 = vld [vmem:[%s11 + $0x308] sm:$0xff]
        %v9774 = vld [vmem:[%s11 + $0x310] sm:$0xff]
        %v9775 = vld [vmem:[%s11 + $0x318] sm:$0xff]
        %v9776 = vld [vmem:[%s11 + $0x320] sm:$0xff]
        %v9777 = vld [vmem:[%s11 + $0x328] sm:$0xff]
        %v9778 = vld [vmem:[%s11 + $0x330] sm:$0xff]
        %v9779 = vld [vmem:[%s11 + $0x338] sm:$0xff]
        %v9780 = vld [vmem:[%s11 + $0x340] sm:$0xff]
        %v9781 = vld [vmem:[%s11 + $0x348] sm:$0xff]
        %v9782 = vld [vmem:[%s11 + $0x350] sm:$0xff]
        %v9783 = vld [vmem:[%s11 + $0x358] sm:$0xff]
        %v9784 = vld [vmem:[%s11 + $0x360] sm:$0xff]
        %v9785 = vld [vmem:[%s11 + $0x368] sm:$0xff]
        %v9786 = vld [vmem:[%s11 + $0x370] sm:$0xff]
        %v9787 = vld [vmem:[%s11 + $0x378] sm:$0xff]
        %v9788 = vld [vmem:[%s11 + $0x380] sm:$0xff]
        %v9789 = vld [vmem:[%s11 + $0x388] sm:$0xff]
        %v9790 = vld [vmem:[%s11 + $0x390] sm:$0xff]
        %v9791 = vld [vmem:[%s11 + $0x398] sm:$0xff]
        %v9792 = vld [vmem:[%s11 + $0x3a0] sm:$0xff]
        %v9793 = vld [vmem:[%s11 + $0x3a8] sm:$0xff]
        %v9794 = vld [vmem:[%s11 + $0x3b0] sm:$0xff]
        %v9795 = vld [vmem:[%s11 + $0x3b8] sm:$0xff]
        %v9796 = vld [vmem:[%s11 + $0x3c0] sm:$0xff]
        %v9797 = vld [vmem:[%s11 + $0x3c8] sm:$0xff]
        %v9798 = vld [vmem:[%s11 + $0x3d0] sm:$0xff]
        %v9799 = vld [vmem:[%s11 + $0x3d8] sm:$0xff]
        %v9800 = vld [vmem:[%s11 + $0x3e0] sm:$0xff]
        %v9801 = vld [vmem:[%s11 + $0x3e8] sm:$0xff]
        %v9802 = vld [vmem:[%s11 + $0x3f0] sm:$0xff]
        %v9803 = vld [vmem:[%s11 + $0x3f8] sm:$0xff]
        %v9804 = vld [vmem:[%s12] sm:$0xf]
        %v9806 = vlaneseq
        %v9807 = vshrl.u32 %v9806, 7
        %v9808 = vsub.s32 0, %v9807
        %v9809 = vrot.slane %v9804, %v9808
        %v9810 = vlaneseq
        %v9811 = vshrl.u32 %v9810, 7
        %v9812 = vsub.s32 1, %v9811
        %v9813 = vrot.slane %v9804, %v9812
        %v9814 = vlaneseq
        %v9815 = vshrl.u32 %v9814, 7
        %v9816 = vsub.s32 2, %v9815
        %v9817 = vrot.slane %v9804, %v9816
        %v9818 = vlaneseq
        %v9819 = vshrl.u32 %v9818, 7
        %v9820 = vsub.s32 3, %v9819
        %v9821 = vrot.slane %v9804, %v9820
        %9826 = vmatprep.subr.mxu0 %v9677
        %9827 = vmatpush1.msra.mxu0 %v9676
        %9828 = vmatprep.subr.mxu0 %v9681
        %9829 = vmatpush1.msra.mxu0 %v9680
        %9830 = vmatprep.subr.mxu0 %v9685
        %9831 = vmatpush1.msra.mxu0 %v9684
        %9832 = vmatprep.subr.mxu0 %v9689
        %9833 = vmatpush1.msra.mxu0 %v9688
        %9834 = vmatprep.subr.mxu0 %v9693
        %9835 = vmatpush1.msra.mxu0 %v9692
        %9836 = vmatprep.subr.mxu0 %v9697
        %9837 = vmatpush1.msra.mxu0 %v9696
        %9838 = vmatprep.subr.mxu0 %v9701
        %9839 = vmatpush1.msra.mxu0 %v9700
        %9840 = vmatprep.subr.mxu0 %v9705
        %9841 = vmatpush1.msra.mxu0 %v9704
        %9842 = vmatprep.subr.mxu0 %v9709
        %9843 = vmatpush1.msra.mxu0 %v9708
        %9844 = vmatprep.subr.mxu0 %v9713
        %9845 = vmatpush1.msra.mxu0 %v9712
        %9846 = vmatprep.subr.mxu0 %v9717
        %9847 = vmatpush1.msra.mxu0 %v9716
        %9848 = vmatprep.subr.mxu0 %v9721
        %9849 = vmatpush1.msra.mxu0 %v9720
        %9850 = vmatprep.subr.mxu0 %v9725
        %9851 = vmatpush1.msra.mxu0 %v9724
        %9852 = vmatprep.subr.mxu0 %v9729
        %9853 = vmatpush1.msra.mxu0 %v9728
        %9854 = vmatprep.subr.mxu0 %v9733
        %9855 = vmatpush1.msra.mxu0 %v9732
        %9856 = vmatprep.subr.mxu0 %v9737
        %9857 = vmatpush1.msra.mxu0 %v9736
        %9858 = vmatprep.subr.mxu0 %v9741
        %9859 = vmatpush1.msra.mxu0 %v9740
        %9860 = vmatprep.subr.mxu0 %v9745
        %9861 = vmatpush1.msra.mxu0 %v9744
        %9862 = vmatprep.subr.mxu0 %v9749
        %9863 = vmatpush1.msra.mxu0 %v9748
        %9864 = vmatprep.subr.mxu0 %v9753
        %9865 = vmatpush1.msra.mxu0 %v9752
        %9866 = vmatprep.subr.mxu0 %v9757
        %9867 = vmatpush1.msra.mxu0 %v9756
        %9868 = vmatprep.subr.mxu0 %v9761
        %9869 = vmatpush1.msra.mxu0 %v9760
        %9870 = vmatprep.subr.mxu0 %v9765
        %9871 = vmatpush1.msra.mxu0 %v9764
        %9872 = vmatprep.subr.mxu0 %v9769
        %9873 = vmatpush1.msra.mxu0 %v9768
        %9874 = vmatprep.subr.mxu0 %v9773
        %9875 = vmatpush1.msra.mxu0 %v9772
        %9876 = vmatprep.subr.mxu0 %v9777
        %9877 = vmatpush1.msra.mxu0 %v9776
        %9878 = vmatprep.subr.mxu0 %v9781
        %9879 = vmatpush1.msra.mxu0 %v9780
        %9880 = vmatprep.subr.mxu0 %v9785
        %9881 = vmatpush1.msra.mxu0 %v9784
        %9882 = vmatprep.subr.mxu0 %v9789
        %9883 = vmatpush1.msra.mxu0 %v9788
        %9884 = vmatprep.subr.mxu0 %v9793
        %9885 = vmatpush1.msra.mxu0 %v9792
        %9886 = vmatprep.subr.mxu0 %v9797
        %9887 = vmatpush1.msra.mxu0 %v9796
        %9888 = vmatprep.subr.mxu0 %v9801
        %9889 = vmatpush1.msra.mxu0 %v9800
        %9890 = vmatprep.mubr.f32.mxu0 %v9675
        %9891 = vmatmul.mubr.f32.gmra.mrb[0].mxu0 %v9674
        %v9892 = vpop.f32.mrb[0].mxu0
        %v9893 = vadd.f32 %v9809, %v9892
        %v9894 = vpop.f32.mrb[0].mxu0
        %v9895 = vadd.f32 %v9813, %v9894
        %9896 = vdwg.mxu0
        %9897 = vmatprep.subr.mxu0 %v9679
        %9898 = vmatpush1.msra.mxu0 %v9678
        %9899 = vmatprep.subr.mxu0 %v9683
        %9900 = vmatpush1.msra.mxu0 %v9682
        %9901 = vmatprep.subr.mxu0 %v9687
        %9902 = vmatpush1.msra.mxu0 %v9686
        %9903 = vmatprep.subr.mxu0 %v9691
        %9904 = vmatpush1.msra.mxu0 %v9690
        %9905 = vmatprep.subr.mxu0 %v9695
        %9906 = vmatpush1.msra.mxu0 %v9694
        %9907 = vmatprep.subr.mxu0 %v9699
        %9908 = vmatpush1.msra.mxu0 %v9698
        %9909 = vmatprep.subr.mxu0 %v9703
        %9910 = vmatpush1.msra.mxu0 %v9702
        %9911 = vmatprep.subr.mxu0 %v9707
        %9912 = vmatpush1.msra.mxu0 %v9706
        %9913 = vmatprep.subr.mxu0 %v9711
        %9914 = vmatpush1.msra.mxu0 %v9710
        %9915 = vmatprep.subr.mxu0 %v9715
        %9916 = vmatpush1.msra.mxu0 %v9714
        %9917 = vmatprep.subr.mxu0 %v9719
        %9918 = vmatpush1.msra.mxu0 %v9718
        %9919 = vmatprep.subr.mxu0 %v9723
        %9920 = vmatpush1.msra.mxu0 %v9722
        %9921 = vmatprep.subr.mxu0 %v9727
        %9922 = vmatpush1.msra.mxu0 %v9726
        %9923 = vmatprep.subr.mxu0 %v9731
        %9924 = vmatpush1.msra.mxu0 %v9730
        %9925 = vmatprep.subr.mxu0 %v9735
        %9926 = vmatpush1.msra.mxu0 %v9734
        %9927 = vmatprep.subr.mxu0 %v9739
        %9928 = vmatpush1.msra.mxu0 %v9738
        %9929 = vmatprep.subr.mxu0 %v9743
        %9930 = vmatpush1.msra.mxu0 %v9742
        %9931 = vmatprep.subr.mxu0 %v9747
        %9932 = vmatpush1.msra.mxu0 %v9746
        %9933 = vmatprep.subr.mxu0 %v9751
        %9934 = vmatpush1.msra.mxu0 %v9750
        %9935 = vmatprep.subr.mxu0 %v9755
        %9936 = vmatpush1.msra.mxu0 %v9754
        %9937 = vmatprep.subr.mxu0 %v9759
        %9938 = vmatpush1.msra.mxu0 %v9758
        %9939 = vmatprep.subr.mxu0 %v9763
        %9940 = vmatpush1.msra.mxu0 %v9762
        %9941 = vmatprep.subr.mxu0 %v9767
        %9942 = vmatpush1.msra.mxu0 %v9766
        %9943 = vmatprep.subr.mxu0 %v9771
        %9944 = vmatpush1.msra.mxu0 %v9770
        %9945 = vmatprep.subr.mxu0 %v9775
        %9946 = vmatpush1.msra.mxu0 %v9774
        %9947 = vmatprep.subr.mxu0 %v9779
        %9948 = vmatpush1.msra.mxu0 %v9778
        %9949 = vmatprep.subr.mxu0 %v9783
        %9950 = vmatpush1.msra.mxu0 %v9782
        %9951 = vmatprep.subr.mxu0 %v9787
        %9952 = vmatpush1.msra.mxu0 %v9786
        %9953 = vmatprep.subr.mxu0 %v9791
        %9954 = vmatpush1.msra.mxu0 %v9790
        %9955 = vmatprep.subr.mxu0 %v9795
        %9956 = vmatpush1.msra.mxu0 %v9794
        %9957 = vmatprep.subr.mxu0 %v9799
        %9958 = vmatpush1.msra.mxu0 %v9798
        %9959 = vmatprep.subr.mxu0 %v9803
        %9960 = vmatpush1.msra.mxu0 %v9802
        %9961 = vmatprep.mubr.f32.mxu0 %v9675
        %9962 = vmatmul.mubr.f32.gmra.mrb[0].mxu0 %v9674
        %v9963 = vpop.f32.mrb[0].mxu0
        %v9964 = vadd.f32 %v9817, %v9963
        %v9965 = vpop.f32.mrb[0].mxu0
        %v9966 = vadd.f32 %v9821, %v9965
        %9967 = vdwg.mxu0
        %v9968 = vadd.f32 %v9893, 1.0
        %v9969 = vadd.f32 %v9895, 1.0
        %v9970 = vmul.f32 %v9968, 8.0
        %v9971 = vmul.f32 %v9969, 8.0
        %v9972 = vsub.f32 %v9970, 0.5
        %v9973 = vsub.f32 %v9971, 0.5
        %v9974 = vmax.f32 %v9972, 0.0
        %v9975 = vmax.f32 %v9973, 0.0
        %v9976 = vmin.f32 %v9974, 15.0
        %v9977 = vmin.f32 %v9975, 15.0
        %v9978 = vadd.f32 %v9964, 1.0
        %v9979 = vadd.f32 %v9966, 1.0
        %v9980 = vmul.f32 %v9978, 8.0
        %v9981 = vmul.f32 %v9979, 8.0
        %v9982 = vsub.f32 %v9980, 0.5
        %v9983 = vsub.f32 %v9981, 0.5
        %v9984 = vmax.f32 %v9982, 0.0
        %v9985 = vmax.f32 %v9983, 0.0
        %v9986 = vmin.f32 %v9984, 15.0
        %v9987 = vmin.f32 %v9985, 15.0
        %v9988 = vfloor.f32 %v9976
        %v9989 = vfloor.f32 %v9977
        %v9990 = vfloor.f32 %v9986
        %v9991 = vfloor.f32 %v9987
        %v9992 = vsub.f32 %v9976, %v9988
        %v9993 = vsub.f32 %v9977, %v9989
        %v9994 = vsub.f32 %v9986, %v9990
        %v9995 = vsub.f32 %v9987, %v9991
        %v9996 = vcvt.f32.s32.to.zero.pseudo %v9988
        %v9997 = vcvt.f32.s32.to.zero.pseudo %v9989
        %v9998 = vcvt.f32.s32.to.zero.pseudo %v9990
        %v9999 = vcvt.f32.s32.to.zero.pseudo %v9991
        %v10000 = vadd.s32 %v9996, 1
        %v10001 = vadd.s32 %v9997, 1
        %vm10002 = vcmp.lt.s32.totalorder %v10000, 15
        %v10003 = vsel %vm10002, %v10000, 15
        %vm10004 = vcmp.lt.s32.totalorder %v10001, 15
        %v10005 = vsel %vm10004, %v10001, 15
        %v10006 = vadd.s32 %v9998, 1
        %v10007 = vadd.s32 %v9999, 1
        %vm10008 = vcmp.lt.s32.totalorder %v10006, 15
        %v10009 = vsel %vm10008, %v10006, 15
        %vm10010 = vcmp.lt.s32.totalorder %v10007, 15
        %v10011 = vsel %vm10010, %v10007, 15
        %v10012 = vlaneseq
        %v10013 = vshrl.u32 %v10012, 7
        %v10014 = vadd.s32 %v10013, 8
        %v10015 = vadd.s32 %v10013, 16
        %v10016 = vadd.s32 %v10013, 24
        %v10017 = vadd.s32 %v10013, 32
        %v10018 = vadd.s32 %v10013, 40
        %v10019 = vadd.s32 %v10013, 48
        %v10020 = vadd.s32 %v10013, 56
        %v10021 = vadd.s32 %v10013, 64
        %v10022 = vadd.s32 %v10013, 72
        %v10023 = vadd.s32 %v10013, 80
        %v10024 = vadd.s32 %v10013, 88
        %v10025 = vadd.s32 %v10013, 96
        %v10026 = vadd.s32 %v10013, 104
        %v10027 = vadd.s32 %v10013, 112
        %v10028 = vadd.s32 %v10013, 120
        %v10029 = vadd.s32 %v10013, 128
        %v10030 = vadd.s32 %v10013, 136
        %v10031 = vadd.s32 %v10013, 144
        %v10032 = vadd.s32 %v10013, 152
        %v10033 = vadd.s32 %v10013, 160
        %v10034 = vadd.s32 %v10013, 168
        %v10035 = vadd.s32 %v10013, 176
        %v10036 = vadd.s32 %v10013, 184
        %v10037 = vadd.s32 %v10013, 192
        %v10038 = vadd.s32 %v10013, 200
        %v10039 = vadd.s32 %v10013, 208
        %v10040 = vadd.s32 %v10013, 216
        %v10041 = vadd.s32 %v10013, 224
        %v10042 = vadd.s32 %v10013, 232
        %v10043 = vadd.s32 %v10013, 240
        %v10044 = vadd.s32 %v10013, 248
        %v10045 = vmul.u32 %v9998, 16
        %v10046 = vmul.u32 %v9999, 16
        %v10047 = vadd.s32 %v10045, %v9996
        %v10048 = vadd.s32 %v10046, %v9997
        %v10049 = vlaneseq
        %v10050 = vshrl.u32 %v10049, 7
        %v10051 = vsub.s32 0, %v10050
        %v10052 = vrot.slane %v10047, %v10051
        %v10053 = vlaneseq
        %v10054 = vshrl.u32 %v10053, 7
        %v10055 = vsub.s32 0, %v10054
        %v10056 = vrot.slane %v10048, %v10055
        %vm10057 = vcmp.eq.s32.totalorder %v10013, %v10052
        %vm10058 = vcmp.eq.s32.totalorder %v10013, %v10056
        %vm10059 = vcmp.eq.s32.totalorder %v10014, %v10052
        %vm10060 = vcmp.eq.s32.totalorder %v10014, %v10056
        %vm10061 = vcmp.eq.s32.totalorder %v10015, %v10052
        %vm10062 = vcmp.eq.s32.totalorder %v10015, %v10056
        %vm10063 = vcmp.eq.s32.totalorder %v10016, %v10052
        %vm10064 = vcmp.eq.s32.totalorder %v10016, %v10056
        %vm10065 = vcmp.eq.s32.totalorder %v10017, %v10052
        %vm10066 = vcmp.eq.s32.totalorder %v10017, %v10056
        %vm10067 = vcmp.eq.s32.totalorder %v10018, %v10052
        %vm10068 = vcmp.eq.s32.totalorder %v10018, %v10056
        %vm10069 = vcmp.eq.s32.totalorder %v10019, %v10052
        %vm10070 = vcmp.eq.s32.totalorder %v10019, %v10056
        %vm10071 = vcmp.eq.s32.totalorder %v10020, %v10052
        %vm10072 = vcmp.eq.s32.totalorder %v10020, %v10056
        %vm10073 = vcmp.eq.s32.totalorder %v10021, %v10052
        %vm10074 = vcmp.eq.s32.totalorder %v10021, %v10056
        %vm10075 = vcmp.eq.s32.totalorder %v10022, %v10052
        %vm10076 = vcmp.eq.s32.totalorder %v10022, %v10056
        %vm10077 = vcmp.eq.s32.totalorder %v10023, %v10052
        %vm10078 = vcmp.eq.s32.totalorder %v10023, %v10056
        %vm10079 = vcmp.eq.s32.totalorder %v10024, %v10052
        %vm10080 = vcmp.eq.s32.totalorder %v10024, %v10056
        %vm10081 = vcmp.eq.s32.totalorder %v10025, %v10052
        %vm10082 = vcmp.eq.s32.totalorder %v10025, %v10056
        %vm10083 = vcmp.eq.s32.totalorder %v10026, %v10052
        %vm10084 = vcmp.eq.s32.totalorder %v10026, %v10056
        %vm10085 = vcmp.eq.s32.totalorder %v10027, %v10052
        %vm10086 = vcmp.eq.s32.totalorder %v10027, %v10056
        %vm10087 = vcmp.eq.s32.totalorder %v10028, %v10052
        %vm10088 = vcmp.eq.s32.totalorder %v10028, %v10056
        %vm10089 = vcmp.eq.s32.totalorder %v10029, %v10052
        %vm10090 = vcmp.eq.s32.totalorder %v10029, %v10056
        %vm10091 = vcmp.eq.s32.totalorder %v10030, %v10052
        %vm10092 = vcmp.eq.s32.totalorder %v10030, %v10056
        %vm10093 = vcmp.eq.s32.totalorder %v10031, %v10052
        %vm10094 = vcmp.eq.s32.totalorder %v10031, %v10056
        %vm10095 = vcmp.eq.s32.totalorder %v10032, %v10052
        %vm10096 = vcmp.eq.s32.totalorder %v10032, %v10056
        %vm10097 = vcmp.eq.s32.totalorder %v10033, %v10052
        %vm10098 = vcmp.eq.s32.totalorder %v10033, %v10056
        %vm10099 = vcmp.eq.s32.totalorder %v10034, %v10052
        %vm10100 = vcmp.eq.s32.totalorder %v10034, %v10056
        %vm10101 = vcmp.eq.s32.totalorder %v10035, %v10052
        %vm10102 = vcmp.eq.s32.totalorder %v10035, %v10056
        %vm10103 = vcmp.eq.s32.totalorder %v10036, %v10052
        %vm10104 = vcmp.eq.s32.totalorder %v10036, %v10056
        %vm10105 = vcmp.eq.s32.totalorder %v10037, %v10052
        %vm10106 = vcmp.eq.s32.totalorder %v10037, %v10056
        %vm10107 = vcmp.eq.s32.totalorder %v10038, %v10052
        %vm10108 = vcmp.eq.s32.totalorder %v10038, %v10056
        %vm10109 = vcmp.eq.s32.totalorder %v10039, %v10052
        %vm10110 = vcmp.eq.s32.totalorder %v10039, %v10056
        %vm10111 = vcmp.eq.s32.totalorder %v10040, %v10052
        %vm10112 = vcmp.eq.s32.totalorder %v10040, %v10056
        %vm10113 = vcmp.eq.s32.totalorder %v10041, %v10052
        %vm10114 = vcmp.eq.s32.totalorder %v10041, %v10056
        %vm10115 = vcmp.eq.s32.totalorder %v10042, %v10052
        %vm10116 = vcmp.eq.s32.totalorder %v10042, %v10056
        %vm10117 = vcmp.eq.s32.totalorder %v10043, %v10052
        %vm10118 = vcmp.eq.s32.totalorder %v10043, %v10056
        %vm10119 = vcmp.eq.s32.totalorder %v10044, %v10052
        %vm10120 = vcmp.eq.s32.totalorder %v10044, %v10056
        %v10121 = vsub.f32 1.0, %v9992
        %v10122 = vsub.f32 1.0, %v9993
        %v10123 = vsub.f32 1.0, %v9994
        %v10124 = vsub.f32 1.0, %v9995
        %v10125 = vmul.f32 %v10121, %v10123
        %v10126 = vmul.f32 %v10122, %v10124
        %v10127 = vlaneseq
        %v10128 = vshrl.u32 %v10127, 7
        %v10129 = vsub.s32 0, %v10128
        %v10130 = vrot.slane %v10125, %v10129
        %v10131 = vlaneseq
        %v10132 = vshrl.u32 %v10131, 7
        %v10133 = vsub.s32 0, %v10132
        %v10134 = vrot.slane %v10126, %v10133
        %v10135 = vsel %vm10057, %v10130, 0.0
        %v10136 = vsel %vm10058, %v10134, 0.0
        %v10137 = vsel %vm10059, %v10130, 0.0
        %v10138 = vsel %vm10060, %v10134, 0.0
        %v10139 = vsel %vm10061, %v10130, 0.0
        %v10140 = vsel %vm10062, %v10134, 0.0
        %v10141 = vsel %vm10063, %v10130, 0.0
        %v10142 = vsel %vm10064, %v10134, 0.0
        %v10143 = vsel %vm10065, %v10130, 0.0
        %v10144 = vsel %vm10066, %v10134, 0.0
        %v10145 = vsel %vm10067, %v10130, 0.0
        %v10146 = vsel %vm10068, %v10134, 0.0
        %v10147 = vsel %vm10069, %v10130, 0.0
        %v10148 = vsel %vm10070, %v10134, 0.0
        %v10149 = vsel %vm10071, %v10130, 0.0
        %v10150 = vsel %vm10072, %v10134, 0.0
        %v10151 = vsel %vm10073, %v10130, 0.0
        %v10152 = vsel %vm10074, %v10134, 0.0
        %v10153 = vsel %vm10075, %v10130, 0.0
        %v10154 = vsel %vm10076, %v10134, 0.0
        %v10155 = vsel %vm10077, %v10130, 0.0
        %v10156 = vsel %vm10078, %v10134, 0.0
        %v10157 = vsel %vm10079, %v10130, 0.0
        %v10158 = vsel %vm10080, %v10134, 0.0
        %v10159 = vsel %vm10081, %v10130, 0.0
        %v10160 = vsel %vm10082, %v10134, 0.0
        %v10161 = vsel %vm10083, %v10130, 0.0
        %v10162 = vsel %vm10084, %v10134, 0.0
        %v10163 = vsel %vm10085, %v10130, 0.0
        %v10164 = vsel %vm10086, %v10134, 0.0
        %v10165 = vsel %vm10087, %v10130, 0.0
        %v10166 = vsel %vm10088, %v10134, 0.0
        %v10167 = vsel %vm10089, %v10130, 0.0
        %v10168 = vsel %vm10090, %v10134, 0.0
        %v10169 = vsel %vm10091, %v10130, 0.0
        %v10170 = vsel %vm10092, %v10134, 0.0
        %v10171 = vsel %vm10093, %v10130, 0.0
        %v10172 = vsel %vm10094, %v10134, 0.0
        %v10173 = vsel %vm10095, %v10130, 0.0
        %v10174 = vsel %vm10096, %v10134, 0.0
        %v10175 = vsel %vm10097, %v10130, 0.0
        %v10176 = vsel %vm10098, %v10134, 0.0
        %v10177 = vsel %vm10099, %v10130, 0.0
        %v10178 = vsel %vm10100, %v10134, 0.0
        %v10179 = vsel %vm10101, %v10130, 0.0
        %v10180 = vsel %vm10102, %v10134, 0.0
        %v10181 = vsel %vm10103, %v10130, 0.0
        %v10182 = vsel %vm10104, %v10134, 0.0
        %v10183 = vsel %vm10105, %v10130, 0.0
        %v10184 = vsel %vm10106, %v10134, 0.0
        %v10185 = vsel %vm10107, %v10130, 0.0
        %v10186 = vsel %vm10108, %v10134, 0.0
        %v10187 = vsel %vm10109, %v10130, 0.0
        %v10188 = vsel %vm10110, %v10134, 0.0
        %v10189 = vsel %vm10111, %v10130, 0.0
        %v10190 = vsel %vm10112, %v10134, 0.0
        %v10191 = vsel %vm10113, %v10130, 0.0
        %v10192 = vsel %vm10114, %v10134, 0.0
        %v10193 = vsel %vm10115, %v10130, 0.0
        %v10194 = vsel %vm10116, %v10134, 0.0
        %v10195 = vsel %vm10117, %v10130, 0.0
        %v10196 = vsel %vm10118, %v10134, 0.0
        %v10197 = vsel %vm10119, %v10130, 0.0
        %v10198 = vsel %vm10120, %v10134, 0.0
        %v10199 = vadd.s32 %v10045, %v10003
        %v10200 = vadd.s32 %v10046, %v10005
        %v10201 = vlaneseq
        %v10202 = vshrl.u32 %v10201, 7
        %v10203 = vsub.s32 0, %v10202
        %v10204 = vrot.slane %v10199, %v10203
        %v10205 = vlaneseq
        %v10206 = vshrl.u32 %v10205, 7
        %v10207 = vsub.s32 0, %v10206
        %v10208 = vrot.slane %v10200, %v10207
        %vm10209 = vcmp.eq.s32.totalorder %v10013, %v10204
        %vm10210 = vcmp.eq.s32.totalorder %v10013, %v10208
        %vm10211 = vcmp.eq.s32.totalorder %v10014, %v10204
        %vm10212 = vcmp.eq.s32.totalorder %v10014, %v10208
        %vm10213 = vcmp.eq.s32.totalorder %v10015, %v10204
        %vm10214 = vcmp.eq.s32.totalorder %v10015, %v10208
        %vm10215 = vcmp.eq.s32.totalorder %v10016, %v10204
        %vm10216 = vcmp.eq.s32.totalorder %v10016, %v10208
        %vm10217 = vcmp.eq.s32.totalorder %v10017, %v10204
        %vm10218 = vcmp.eq.s32.totalorder %v10017, %v10208
        %vm10219 = vcmp.eq.s32.totalorder %v10018, %v10204
        %vm10220 = vcmp.eq.s32.totalorder %v10018, %v10208
        %vm10221 = vcmp.eq.s32.totalorder %v10019, %v10204
        %vm10222 = vcmp.eq.s32.totalorder %v10019, %v10208
        %vm10223 = vcmp.eq.s32.totalorder %v10020, %v10204
        %vm10224 = vcmp.eq.s32.totalorder %v10020, %v10208
        %vm10225 = vcmp.eq.s32.totalorder %v10021, %v10204
        %vm10226 = vcmp.eq.s32.totalorder %v10021, %v10208
        %vm10227 = vcmp.eq.s32.totalorder %v10022, %v10204
        %vm10228 = vcmp.eq.s32.totalorder %v10022, %v10208
        %vm10229 = vcmp.eq.s32.totalorder %v10023, %v10204
        %vm10230 = vcmp.eq.s32.totalorder %v10023, %v10208
        %vm10231 = vcmp.eq.s32.totalorder %v10024, %v10204
        %vm10232 = vcmp.eq.s32.totalorder %v10024, %v10208
        %vm10233 = vcmp.eq.s32.totalorder %v10025, %v10204
        %vm10234 = vcmp.eq.s32.totalorder %v10025, %v10208
        %vm10235 = vcmp.eq.s32.totalorder %v10026, %v10204
        %vm10236 = vcmp.eq.s32.totalorder %v10026, %v10208
        %vm10237 = vcmp.eq.s32.totalorder %v10027, %v10204
        %vm10238 = vcmp.eq.s32.totalorder %v10027, %v10208
        %vm10239 = vcmp.eq.s32.totalorder %v10028, %v10204
        %vm10240 = vcmp.eq.s32.totalorder %v10028, %v10208
        %vm10241 = vcmp.eq.s32.totalorder %v10029, %v10204
        %vm10242 = vcmp.eq.s32.totalorder %v10029, %v10208
        %vm10243 = vcmp.eq.s32.totalorder %v10030, %v10204
        %vm10244 = vcmp.eq.s32.totalorder %v10030, %v10208
        %vm10245 = vcmp.eq.s32.totalorder %v10031, %v10204
        %vm10246 = vcmp.eq.s32.totalorder %v10031, %v10208
        %vm10247 = vcmp.eq.s32.totalorder %v10032, %v10204
        %vm10248 = vcmp.eq.s32.totalorder %v10032, %v10208
        %vm10249 = vcmp.eq.s32.totalorder %v10033, %v10204
        %vm10250 = vcmp.eq.s32.totalorder %v10033, %v10208
        %vm10251 = vcmp.eq.s32.totalorder %v10034, %v10204
        %vm10252 = vcmp.eq.s32.totalorder %v10034, %v10208
        %vm10253 = vcmp.eq.s32.totalorder %v10035, %v10204
        %vm10254 = vcmp.eq.s32.totalorder %v10035, %v10208
        %vm10255 = vcmp.eq.s32.totalorder %v10036, %v10204
        %vm10256 = vcmp.eq.s32.totalorder %v10036, %v10208
        %vm10257 = vcmp.eq.s32.totalorder %v10037, %v10204
        %vm10258 = vcmp.eq.s32.totalorder %v10037, %v10208
        %vm10259 = vcmp.eq.s32.totalorder %v10038, %v10204
        %vm10260 = vcmp.eq.s32.totalorder %v10038, %v10208
        %vm10261 = vcmp.eq.s32.totalorder %v10039, %v10204
        %vm10262 = vcmp.eq.s32.totalorder %v10039, %v10208
        %vm10263 = vcmp.eq.s32.totalorder %v10040, %v10204
        %vm10264 = vcmp.eq.s32.totalorder %v10040, %v10208
        %vm10265 = vcmp.eq.s32.totalorder %v10041, %v10204
        %vm10266 = vcmp.eq.s32.totalorder %v10041, %v10208
        %vm10267 = vcmp.eq.s32.totalorder %v10042, %v10204
        %vm10268 = vcmp.eq.s32.totalorder %v10042, %v10208
        %vm10269 = vcmp.eq.s32.totalorder %v10043, %v10204
        %vm10270 = vcmp.eq.s32.totalorder %v10043, %v10208
        %vm10271 = vcmp.eq.s32.totalorder %v10044, %v10204
        %vm10272 = vcmp.eq.s32.totalorder %v10044, %v10208
        %v10273 = vmul.f32 %v9992, %v10123
        %v10274 = vmul.f32 %v9993, %v10124
        %v10275 = vlaneseq
        %v10276 = vshrl.u32 %v10275, 7
        %v10277 = vsub.s32 0, %v10276
        %v10278 = vrot.slane %v10273, %v10277
        %v10279 = vlaneseq
        %v10280 = vshrl.u32 %v10279, 7
        %v10281 = vsub.s32 0, %v10280
        %v10282 = vrot.slane %v10274, %v10281
        %v10283 = vsel %vm10209, %v10278, 0.0
        %v10284 = vsel %vm10210, %v10282, 0.0
        %v10285 = vsel %vm10211, %v10278, 0.0
        %v10286 = vsel %vm10212, %v10282, 0.0
        %v10287 = vsel %vm10213, %v10278, 0.0
        %v10288 = vsel %vm10214, %v10282, 0.0
        %v10289 = vsel %vm10215, %v10278, 0.0
        %v10290 = vsel %vm10216, %v10282, 0.0
        %v10291 = vsel %vm10217, %v10278, 0.0
        %v10292 = vsel %vm10218, %v10282, 0.0
        %v10293 = vsel %vm10219, %v10278, 0.0
        %v10294 = vsel %vm10220, %v10282, 0.0
        %v10295 = vsel %vm10221, %v10278, 0.0
        %v10296 = vsel %vm10222, %v10282, 0.0
        %v10297 = vsel %vm10223, %v10278, 0.0
        %v10298 = vsel %vm10224, %v10282, 0.0
        %v10299 = vsel %vm10225, %v10278, 0.0
        %v10300 = vsel %vm10226, %v10282, 0.0
        %v10301 = vsel %vm10227, %v10278, 0.0
        %v10302 = vsel %vm10228, %v10282, 0.0
        %v10303 = vsel %vm10229, %v10278, 0.0
        %v10304 = vsel %vm10230, %v10282, 0.0
        %v10305 = vsel %vm10231, %v10278, 0.0
        %v10306 = vsel %vm10232, %v10282, 0.0
        %v10307 = vsel %vm10233, %v10278, 0.0
        %v10308 = vsel %vm10234, %v10282, 0.0
        %v10309 = vsel %vm10235, %v10278, 0.0
        %v10310 = vsel %vm10236, %v10282, 0.0
        %v10311 = vsel %vm10237, %v10278, 0.0
        %v10312 = vsel %vm10238, %v10282, 0.0
        %v10313 = vsel %vm10239, %v10278, 0.0
        %v10314 = vsel %vm10240, %v10282, 0.0
        %v10315 = vsel %vm10241, %v10278, 0.0
        %v10316 = vsel %vm10242, %v10282, 0.0
        %v10317 = vsel %vm10243, %v10278, 0.0
        %v10318 = vsel %vm10244, %v10282, 0.0
        %v10319 = vsel %vm10245, %v10278, 0.0
        %v10320 = vsel %vm10246, %v10282, 0.0
        %v10321 = vsel %vm10247, %v10278, 0.0
        %v10322 = vsel %vm10248, %v10282, 0.0
        %v10323 = vsel %vm10249, %v10278, 0.0
        %v10324 = vsel %vm10250, %v10282, 0.0
        %v10325 = vsel %vm10251, %v10278, 0.0
        %v10326 = vsel %vm10252, %v10282, 0.0
        %v10327 = vsel %vm10253, %v10278, 0.0
        %v10328 = vsel %vm10254, %v10282, 0.0
        %v10329 = vsel %vm10255, %v10278, 0.0
        %v10330 = vsel %vm10256, %v10282, 0.0
        %v10331 = vsel %vm10257, %v10278, 0.0
        %v10332 = vsel %vm10258, %v10282, 0.0
        %v10333 = vsel %vm10259, %v10278, 0.0
        %v10334 = vsel %vm10260, %v10282, 0.0
        %v10335 = vsel %vm10261, %v10278, 0.0
        %v10336 = vsel %vm10262, %v10282, 0.0
        %v10337 = vsel %vm10263, %v10278, 0.0
        %v10338 = vsel %vm10264, %v10282, 0.0
        %v10339 = vsel %vm10265, %v10278, 0.0
        %v10340 = vsel %vm10266, %v10282, 0.0
        %v10341 = vsel %vm10267, %v10278, 0.0
        %v10342 = vsel %vm10268, %v10282, 0.0
        %v10343 = vsel %vm10269, %v10278, 0.0
        %v10344 = vsel %vm10270, %v10282, 0.0
        %v10345 = vsel %vm10271, %v10278, 0.0
        %v10346 = vsel %vm10272, %v10282, 0.0
        %v10347 = vadd.f32 %v10135, %v10283
        %v10348 = vadd.f32 %v10136, %v10284
        %v10349 = vadd.f32 %v10137, %v10285
        %v10350 = vadd.f32 %v10138, %v10286
        %v10351 = vadd.f32 %v10139, %v10287
        %v10352 = vadd.f32 %v10140, %v10288
        %v10353 = vadd.f32 %v10141, %v10289
        %v10354 = vadd.f32 %v10142, %v10290
        %v10355 = vadd.f32 %v10143, %v10291
        %v10356 = vadd.f32 %v10144, %v10292
        %v10357 = vadd.f32 %v10145, %v10293
        %v10358 = vadd.f32 %v10146, %v10294
        %v10359 = vadd.f32 %v10147, %v10295
        %v10360 = vadd.f32 %v10148, %v10296
        %v10361 = vadd.f32 %v10149, %v10297
        %v10362 = vadd.f32 %v10150, %v10298
        %v10363 = vadd.f32 %v10151, %v10299
        %v10364 = vadd.f32 %v10152, %v10300
        %v10365 = vadd.f32 %v10153, %v10301
        %v10366 = vadd.f32 %v10154, %v10302
        %v10367 = vadd.f32 %v10155, %v10303
        %v10368 = vadd.f32 %v10156, %v10304
        %v10369 = vadd.f32 %v10157, %v10305
        %v10370 = vadd.f32 %v10158, %v10306
        %v10371 = vadd.f32 %v10159, %v10307
        %v10372 = vadd.f32 %v10160, %v10308
        %v10373 = vadd.f32 %v10161, %v10309
        %v10374 = vadd.f32 %v10162, %v10310
        %v10375 = vadd.f32 %v10163, %v10311
        %v10376 = vadd.f32 %v10164, %v10312
        %v10377 = vadd.f32 %v10165, %v10313
        %v10378 = vadd.f32 %v10166, %v10314
        %v10379 = vadd.f32 %v10167, %v10315
        %v10380 = vadd.f32 %v10168, %v10316
        %v10381 = vadd.f32 %v10169, %v10317
        %v10382 = vadd.f32 %v10170, %v10318
        %v10383 = vadd.f32 %v10171, %v10319
        %v10384 = vadd.f32 %v10172, %v10320
        %v10385 = vadd.f32 %v10173, %v10321
        %v10386 = vadd.f32 %v10174, %v10322
        %v10387 = vadd.f32 %v10175, %v10323
        %v10388 = vadd.f32 %v10176, %v10324
        %v10389 = vadd.f32 %v10177, %v10325
        %v10390 = vadd.f32 %v10178, %v10326
        %v10391 = vadd.f32 %v10179, %v10327
        %v10392 = vadd.f32 %v10180, %v10328
        %v10393 = vadd.f32 %v10181, %v10329
        %v10394 = vadd.f32 %v10182, %v10330
        %v10395 = vadd.f32 %v10183, %v10331
        %v10396 = vadd.f32 %v10184, %v10332
        %v10397 = vadd.f32 %v10185, %v10333
        %v10398 = vadd.f32 %v10186, %v10334
        %v10399 = vadd.f32 %v10187, %v10335
        %v10400 = vadd.f32 %v10188, %v10336
        %v10401 = vadd.f32 %v10189, %v10337
        %v10402 = vadd.f32 %v10190, %v10338
        %v10403 = vadd.f32 %v10191, %v10339
        %v10404 = vadd.f32 %v10192, %v10340
        %v10405 = vadd.f32 %v10193, %v10341
        %v10406 = vadd.f32 %v10194, %v10342
        %v10407 = vadd.f32 %v10195, %v10343
        %v10408 = vadd.f32 %v10196, %v10344
        %v10409 = vadd.f32 %v10197, %v10345
        %v10410 = vadd.f32 %v10198, %v10346
        %v10411 = vmul.u32 %v10009, 16
        %v10412 = vmul.u32 %v10011, 16
        %v10413 = vadd.s32 %v10411, %v9996
        %v10414 = vadd.s32 %v10412, %v9997
        %v10415 = vlaneseq
        %v10416 = vshrl.u32 %v10415, 7
        %v10417 = vsub.s32 0, %v10416
        %v10418 = vrot.slane %v10413, %v10417
        %v10419 = vlaneseq
        %v10420 = vshrl.u32 %v10419, 7
        %v10421 = vsub.s32 0, %v10420
        %v10422 = vrot.slane %v10414, %v10421
        %vm10423 = vcmp.eq.s32.totalorder %v10013, %v10418
        %vm10424 = vcmp.eq.s32.totalorder %v10013, %v10422
        %vm10425 = vcmp.eq.s32.totalorder %v10014, %v10418
        %vm10426 = vcmp.eq.s32.totalorder %v10014, %v10422
        %vm10427 = vcmp.eq.s32.totalorder %v10015, %v10418
        %vm10428 = vcmp.eq.s32.totalorder %v10015, %v10422
        %vm10429 = vcmp.eq.s32.totalorder %v10016, %v10418
        %vm10430 = vcmp.eq.s32.totalorder %v10016, %v10422
        %vm10431 = vcmp.eq.s32.totalorder %v10017, %v10418
        %vm10432 = vcmp.eq.s32.totalorder %v10017, %v10422
        %vm10433 = vcmp.eq.s32.totalorder %v10018, %v10418
        %vm10434 = vcmp.eq.s32.totalorder %v10018, %v10422
        %vm10435 = vcmp.eq.s32.totalorder %v10019, %v10418
        %vm10436 = vcmp.eq.s32.totalorder %v10019, %v10422
        %vm10437 = vcmp.eq.s32.totalorder %v10020, %v10418
        %vm10438 = vcmp.eq.s32.totalorder %v10020, %v10422
        %vm10439 = vcmp.eq.s32.totalorder %v10021, %v10418
        %vm10440 = vcmp.eq.s32.totalorder %v10021, %v10422
        %vm10441 = vcmp.eq.s32.totalorder %v10022, %v10418
        %vm10442 = vcmp.eq.s32.totalorder %v10022, %v10422
        %vm10443 = vcmp.eq.s32.totalorder %v10023, %v10418
        %vm10444 = vcmp.eq.s32.totalorder %v10023, %v10422
        %vm10445 = vcmp.eq.s32.totalorder %v10024, %v10418
        %vm10446 = vcmp.eq.s32.totalorder %v10024, %v10422
        %vm10447 = vcmp.eq.s32.totalorder %v10025, %v10418
        %vm10448 = vcmp.eq.s32.totalorder %v10025, %v10422
        %vm10449 = vcmp.eq.s32.totalorder %v10026, %v10418
        %vm10450 = vcmp.eq.s32.totalorder %v10026, %v10422
        %vm10451 = vcmp.eq.s32.totalorder %v10027, %v10418
        %vm10452 = vcmp.eq.s32.totalorder %v10027, %v10422
        %vm10453 = vcmp.eq.s32.totalorder %v10028, %v10418
        %vm10454 = vcmp.eq.s32.totalorder %v10028, %v10422
        %vm10455 = vcmp.eq.s32.totalorder %v10029, %v10418
        %vm10456 = vcmp.eq.s32.totalorder %v10029, %v10422
        %vm10457 = vcmp.eq.s32.totalorder %v10030, %v10418
        %vm10458 = vcmp.eq.s32.totalorder %v10030, %v10422
        %vm10459 = vcmp.eq.s32.totalorder %v10031, %v10418
        %vm10460 = vcmp.eq.s32.totalorder %v10031, %v10422
        %vm10461 = vcmp.eq.s32.totalorder %v10032, %v10418
        %vm10462 = vcmp.eq.s32.totalorder %v10032, %v10422
        %vm10463 = vcmp.eq.s32.totalorder %v10033, %v10418
        %vm10464 = vcmp.eq.s32.totalorder %v10033, %v10422
        %vm10465 = vcmp.eq.s32.totalorder %v10034, %v10418
        %vm10466 = vcmp.eq.s32.totalorder %v10034, %v10422
        %vm10467 = vcmp.eq.s32.totalorder %v10035, %v10418
        %vm10468 = vcmp.eq.s32.totalorder %v10035, %v10422
        %vm10469 = vcmp.eq.s32.totalorder %v10036, %v10418
        %vm10470 = vcmp.eq.s32.totalorder %v10036, %v10422
        %vm10471 = vcmp.eq.s32.totalorder %v10037, %v10418
        %vm10472 = vcmp.eq.s32.totalorder %v10037, %v10422
        %vm10473 = vcmp.eq.s32.totalorder %v10038, %v10418
        %vm10474 = vcmp.eq.s32.totalorder %v10038, %v10422
        %vm10475 = vcmp.eq.s32.totalorder %v10039, %v10418
        %vm10476 = vcmp.eq.s32.totalorder %v10039, %v10422
        %vm10477 = vcmp.eq.s32.totalorder %v10040, %v10418
        %vm10478 = vcmp.eq.s32.totalorder %v10040, %v10422
        %vm10479 = vcmp.eq.s32.totalorder %v10041, %v10418
        %vm10480 = vcmp.eq.s32.totalorder %v10041, %v10422
        %vm10481 = vcmp.eq.s32.totalorder %v10042, %v10418
        %vm10482 = vcmp.eq.s32.totalorder %v10042, %v10422
        %vm10483 = vcmp.eq.s32.totalorder %v10043, %v10418
        %vm10484 = vcmp.eq.s32.totalorder %v10043, %v10422
        %vm10485 = vcmp.eq.s32.totalorder %v10044, %v10418
        %vm10486 = vcmp.eq.s32.totalorder %v10044, %v10422
        %v10487 = vmul.f32 %v10121, %v9994
        %v10488 = vmul.f32 %v10122, %v9995
        %v10489 = vlaneseq
        %v10490 = vshrl.u32 %v10489, 7
        %v10491 = vsub.s32 0, %v10490
        %v10492 = vrot.slane %v10487, %v10491
        %v10493 = vlaneseq
        %v10494 = vshrl.u32 %v10493, 7
        %v10495 = vsub.s32 0, %v10494
        %v10496 = vrot.slane %v10488, %v10495
        %v10497 = vsel %vm10423, %v10492, 0.0
        %v10498 = vsel %vm10424, %v10496, 0.0
        %v10499 = vsel %vm10425, %v10492, 0.0
        %v10500 = vsel %vm10426, %v10496, 0.0
        %v10501 = vsel %vm10427, %v10492, 0.0
        %v10502 = vsel %vm10428, %v10496, 0.0
        %v10503 = vsel %vm10429, %v10492, 0.0
        %v10504 = vsel %vm10430, %v10496, 0.0
        %v10505 = vsel %vm10431, %v10492, 0.0
        %v10506 = vsel %vm10432, %v10496, 0.0
        %v10507 = vsel %vm10433, %v10492, 0.0
        %v10508 = vsel %vm10434, %v10496, 0.0
        %v10509 = vsel %vm10435, %v10492, 0.0
        %v10510 = vsel %vm10436, %v10496, 0.0
        %v10511 = vsel %vm10437, %v10492, 0.0
        %v10512 = vsel %vm10438, %v10496, 0.0
        %v10513 = vsel %vm10439, %v10492, 0.0
        %v10514 = vsel %vm10440, %v10496, 0.0
        %v10515 = vsel %vm10441, %v10492, 0.0
        %v10516 = vsel %vm10442, %v10496, 0.0
        %v10517 = vsel %vm10443, %v10492, 0.0
        %v10518 = vsel %vm10444, %v10496, 0.0
        %v10519 = vsel %vm10445, %v10492, 0.0
        %v10520 = vsel %vm10446, %v10496, 0.0
        %v10521 = vsel %vm10447, %v10492, 0.0
        %v10522 = vsel %vm10448, %v10496, 0.0
        %v10523 = vsel %vm10449, %v10492, 0.0
        %v10524 = vsel %vm10450, %v10496, 0.0
        %v10525 = vsel %vm10451, %v10492, 0.0
        %v10526 = vsel %vm10452, %v10496, 0.0
        %v10527 = vsel %vm10453, %v10492, 0.0
        %v10528 = vsel %vm10454, %v10496, 0.0
        %v10529 = vsel %vm10455, %v10492, 0.0
        %v10530 = vsel %vm10456, %v10496, 0.0
        %v10531 = vsel %vm10457, %v10492, 0.0
        %v10532 = vsel %vm10458, %v10496, 0.0
        %v10533 = vsel %vm10459, %v10492, 0.0
        %v10534 = vsel %vm10460, %v10496, 0.0
        %v10535 = vsel %vm10461, %v10492, 0.0
        %v10536 = vsel %vm10462, %v10496, 0.0
        %v10537 = vsel %vm10463, %v10492, 0.0
        %v10538 = vsel %vm10464, %v10496, 0.0
        %v10539 = vsel %vm10465, %v10492, 0.0
        %v10540 = vsel %vm10466, %v10496, 0.0
        %v10541 = vsel %vm10467, %v10492, 0.0
        %v10542 = vsel %vm10468, %v10496, 0.0
        %v10543 = vsel %vm10469, %v10492, 0.0
        %v10544 = vsel %vm10470, %v10496, 0.0
        %v10545 = vsel %vm10471, %v10492, 0.0
        %v10546 = vsel %vm10472, %v10496, 0.0
        %v10547 = vsel %vm10473, %v10492, 0.0
        %v10548 = vsel %vm10474, %v10496, 0.0
        %v10549 = vsel %vm10475, %v10492, 0.0
        %v10550 = vsel %vm10476, %v10496, 0.0
        %v10551 = vsel %vm10477, %v10492, 0.0
        %v10552 = vsel %vm10478, %v10496, 0.0
        %v10553 = vsel %vm10479, %v10492, 0.0
        %v10554 = vsel %vm10480, %v10496, 0.0
        %v10555 = vsel %vm10481, %v10492, 0.0
        %v10556 = vsel %vm10482, %v10496, 0.0
        %v10557 = vsel %vm10483, %v10492, 0.0
        %v10558 = vsel %vm10484, %v10496, 0.0
        %v10559 = vsel %vm10485, %v10492, 0.0
        %v10560 = vsel %vm10486, %v10496, 0.0
        %v10561 = vadd.f32 %v10347, %v10497
        %v10562 = vadd.f32 %v10348, %v10498
        %v10563 = vadd.f32 %v10349, %v10499
        %v10564 = vadd.f32 %v10350, %v10500
        %v10565 = vadd.f32 %v10351, %v10501
        %v10566 = vadd.f32 %v10352, %v10502
        %v10567 = vadd.f32 %v10353, %v10503
        %v10568 = vadd.f32 %v10354, %v10504
        %v10569 = vadd.f32 %v10355, %v10505
        %v10570 = vadd.f32 %v10356, %v10506
        %v10571 = vadd.f32 %v10357, %v10507
        %v10572 = vadd.f32 %v10358, %v10508
        %v10573 = vadd.f32 %v10359, %v10509
        %v10574 = vadd.f32 %v10360, %v10510
        %v10575 = vadd.f32 %v10361, %v10511
        %v10576 = vadd.f32 %v10362, %v10512
        %v10577 = vadd.f32 %v10363, %v10513
        %v10578 = vadd.f32 %v10364, %v10514
        %v10579 = vadd.f32 %v10365, %v10515
        %v10580 = vadd.f32 %v10366, %v10516
        %v10581 = vadd.f32 %v10367, %v10517
        %v10582 = vadd.f32 %v10368, %v10518
        %v10583 = vadd.f32 %v10369, %v10519
        %v10584 = vadd.f32 %v10370, %v10520
        %v10585 = vadd.f32 %v10371, %v10521
        %v10586 = vadd.f32 %v10372, %v10522
        %v10587 = vadd.f32 %v10373, %v10523
        %v10588 = vadd.f32 %v10374, %v10524
        %v10589 = vadd.f32 %v10375, %v10525
        %v10590 = vadd.f32 %v10376, %v10526
        %v10591 = vadd.f32 %v10377, %v10527
        %v10592 = vadd.f32 %v10378, %v10528
        %v10593 = vadd.f32 %v10379, %v10529
        %v10594 = vadd.f32 %v10380, %v10530
        %v10595 = vadd.f32 %v10381, %v10531
        %v10596 = vadd.f32 %v10382, %v10532
        %v10597 = vadd.f32 %v10383, %v10533
        %v10598 = vadd.f32 %v10384, %v10534
        %v10599 = vadd.f32 %v10385, %v10535
        %v10600 = vadd.f32 %v10386, %v10536
        %v10601 = vadd.f32 %v10387, %v10537
        %v10602 = vadd.f32 %v10388, %v10538
        %v10603 = vadd.f32 %v10389, %v10539
        %v10604 = vadd.f32 %v10390, %v10540
        %v10605 = vadd.f32 %v10391, %v10541
        %v10606 = vadd.f32 %v10392, %v10542
        %v10607 = vadd.f32 %v10393, %v10543
        %v10608 = vadd.f32 %v10394, %v10544
        %v10609 = vadd.f32 %v10395, %v10545
        %v10610 = vadd.f32 %v10396, %v10546
        %v10611 = vadd.f32 %v10397, %v10547
        %v10612 = vadd.f32 %v10398, %v10548
        %v10613 = vadd.f32 %v10399, %v10549
        %v10614 = vadd.f32 %v10400, %v10550
        %v10615 = vadd.f32 %v10401, %v10551
        %v10616 = vadd.f32 %v10402, %v10552
        %v10617 = vadd.f32 %v10403, %v10553
        %v10618 = vadd.f32 %v10404, %v10554
        %v10619 = vadd.f32 %v10405, %v10555
        %v10620 = vadd.f32 %v10406, %v10556
        %v10621 = vadd.f32 %v10407, %v10557
        %v10622 = vadd.f32 %v10408, %v10558
        %v10623 = vadd.f32 %v10409, %v10559
        %v10624 = vadd.f32 %v10410, %v10560
        %v10625 = vadd.s32 %v10411, %v10003
        %v10626 = vadd.s32 %v10412, %v10005
        %v10627 = vlaneseq
        %v10628 = vshrl.u32 %v10627, 7
        %v10629 = vsub.s32 0, %v10628
        %v10630 = vrot.slane %v10625, %v10629
        %v10631 = vlaneseq
        %v10632 = vshrl.u32 %v10631, 7
        %v10633 = vsub.s32 0, %v10632
        %v10634 = vrot.slane %v10626, %v10633
        %vm10635 = vcmp.eq.s32.totalorder %v10013, %v10630
        %vm10636 = vcmp.eq.s32.totalorder %v10013, %v10634
        %vm10637 = vcmp.eq.s32.totalorder %v10014, %v10630
        %vm10638 = vcmp.eq.s32.totalorder %v10014, %v10634
        %vm10639 = vcmp.eq.s32.totalorder %v10015, %v10630
        %vm10640 = vcmp.eq.s32.totalorder %v10015, %v10634
        %vm10641 = vcmp.eq.s32.totalorder %v10016, %v10630
        %vm10642 = vcmp.eq.s32.totalorder %v10016, %v10634
        %vm10643 = vcmp.eq.s32.totalorder %v10017, %v10630
        %vm10644 = vcmp.eq.s32.totalorder %v10017, %v10634
        %vm10645 = vcmp.eq.s32.totalorder %v10018, %v10630
        %vm10646 = vcmp.eq.s32.totalorder %v10018, %v10634
        %vm10647 = vcmp.eq.s32.totalorder %v10019, %v10630
        %vm10648 = vcmp.eq.s32.totalorder %v10019, %v10634
        %vm10649 = vcmp.eq.s32.totalorder %v10020, %v10630
        %vm10650 = vcmp.eq.s32.totalorder %v10020, %v10634
        %vm10651 = vcmp.eq.s32.totalorder %v10021, %v10630
        %vm10652 = vcmp.eq.s32.totalorder %v10021, %v10634
        %vm10653 = vcmp.eq.s32.totalorder %v10022, %v10630
        %vm10654 = vcmp.eq.s32.totalorder %v10022, %v10634
        %vm10655 = vcmp.eq.s32.totalorder %v10023, %v10630
        %vm10656 = vcmp.eq.s32.totalorder %v10023, %v10634
        %vm10657 = vcmp.eq.s32.totalorder %v10024, %v10630
        %vm10658 = vcmp.eq.s32.totalorder %v10024, %v10634
        %vm10659 = vcmp.eq.s32.totalorder %v10025, %v10630
        %vm10660 = vcmp.eq.s32.totalorder %v10025, %v10634
        %vm10661 = vcmp.eq.s32.totalorder %v10026, %v10630
        %vm10662 = vcmp.eq.s32.totalorder %v10026, %v10634
        %vm10663 = vcmp.eq.s32.totalorder %v10027, %v10630
        %vm10664 = vcmp.eq.s32.totalorder %v10027, %v10634
        %vm10665 = vcmp.eq.s32.totalorder %v10028, %v10630
        %vm10666 = vcmp.eq.s32.totalorder %v10028, %v10634
        %vm10667 = vcmp.eq.s32.totalorder %v10029, %v10630
        %vm10668 = vcmp.eq.s32.totalorder %v10029, %v10634
        %vm10669 = vcmp.eq.s32.totalorder %v10030, %v10630
        %vm10670 = vcmp.eq.s32.totalorder %v10030, %v10634
        %vm10671 = vcmp.eq.s32.totalorder %v10031, %v10630
        %vm10672 = vcmp.eq.s32.totalorder %v10031, %v10634
        %vm10673 = vcmp.eq.s32.totalorder %v10032, %v10630
        %vm10674 = vcmp.eq.s32.totalorder %v10032, %v10634
        %vm10675 = vcmp.eq.s32.totalorder %v10033, %v10630
        %vm10676 = vcmp.eq.s32.totalorder %v10033, %v10634
        %vm10677 = vcmp.eq.s32.totalorder %v10034, %v10630
        %vm10678 = vcmp.eq.s32.totalorder %v10034, %v10634
        %vm10679 = vcmp.eq.s32.totalorder %v10035, %v10630
        %vm10680 = vcmp.eq.s32.totalorder %v10035, %v10634
        %vm10681 = vcmp.eq.s32.totalorder %v10036, %v10630
        %vm10682 = vcmp.eq.s32.totalorder %v10036, %v10634
        %vm10683 = vcmp.eq.s32.totalorder %v10037, %v10630
        %vm10684 = vcmp.eq.s32.totalorder %v10037, %v10634
        %vm10685 = vcmp.eq.s32.totalorder %v10038, %v10630
        %vm10686 = vcmp.eq.s32.totalorder %v10038, %v10634
        %vm10687 = vcmp.eq.s32.totalorder %v10039, %v10630
        %vm10688 = vcmp.eq.s32.totalorder %v10039, %v10634
        %vm10689 = vcmp.eq.s32.totalorder %v10040, %v10630
        %vm10690 = vcmp.eq.s32.totalorder %v10040, %v10634
        %vm10691 = vcmp.eq.s32.totalorder %v10041, %v10630
        %vm10692 = vcmp.eq.s32.totalorder %v10041, %v10634
        %vm10693 = vcmp.eq.s32.totalorder %v10042, %v10630
        %vm10694 = vcmp.eq.s32.totalorder %v10042, %v10634
        %vm10695 = vcmp.eq.s32.totalorder %v10043, %v10630
        %vm10696 = vcmp.eq.s32.totalorder %v10043, %v10634
        %vm10697 = vcmp.eq.s32.totalorder %v10044, %v10630
        %vm10698 = vcmp.eq.s32.totalorder %v10044, %v10634
        %v10699 = vmul.f32 %v9992, %v9994
        %v10700 = vmul.f32 %v9993, %v9995
        %v10701 = vlaneseq
        %v10702 = vshrl.u32 %v10701, 7
        %v10703 = vsub.s32 0, %v10702
        %v10704 = vrot.slane %v10699, %v10703
        %v10705 = vlaneseq
        %v10706 = vshrl.u32 %v10705, 7
        %v10707 = vsub.s32 0, %v10706
        %v10708 = vrot.slane %v10700, %v10707
        %v10709 = vsel %vm10635, %v10704, 0.0
        %v10710 = vsel %vm10636, %v10708, 0.0
        %v10711 = vsel %vm10637, %v10704, 0.0
        %v10712 = vsel %vm10638, %v10708, 0.0
        %v10713 = vsel %vm10639, %v10704, 0.0
        %v10714 = vsel %vm10640, %v10708, 0.0
        %v10715 = vsel %vm10641, %v10704, 0.0
        %v10716 = vsel %vm10642, %v10708, 0.0
        %v10717 = vsel %vm10643, %v10704, 0.0
        %v10718 = vsel %vm10644, %v10708, 0.0
        %v10719 = vsel %vm10645, %v10704, 0.0
        %v10720 = vsel %vm10646, %v10708, 0.0
        %v10721 = vsel %vm10647, %v10704, 0.0
        %v10722 = vsel %vm10648, %v10708, 0.0
        %v10723 = vsel %vm10649, %v10704, 0.0
        %v10724 = vsel %vm10650, %v10708, 0.0
        %v10725 = vsel %vm10651, %v10704, 0.0
        %v10726 = vsel %vm10652, %v10708, 0.0
        %v10727 = vsel %vm10653, %v10704, 0.0
        %v10728 = vsel %vm10654, %v10708, 0.0
        %v10729 = vsel %vm10655, %v10704, 0.0
        %v10730 = vsel %vm10656, %v10708, 0.0
        %v10731 = vsel %vm10657, %v10704, 0.0
        %v10732 = vsel %vm10658, %v10708, 0.0
        %v10733 = vsel %vm10659, %v10704, 0.0
        %v10734 = vsel %vm10660, %v10708, 0.0
        %v10735 = vsel %vm10661, %v10704, 0.0
        %v10736 = vsel %vm10662, %v10708, 0.0
        %v10737 = vsel %vm10663, %v10704, 0.0
        %v10738 = vsel %vm10664, %v10708, 0.0
        %v10739 = vsel %vm10665, %v10704, 0.0
        %v10740 = vsel %vm10666, %v10708, 0.0
        %v10741 = vsel %vm10667, %v10704, 0.0
        %v10742 = vsel %vm10668, %v10708, 0.0
        %v10743 = vsel %vm10669, %v10704, 0.0
        %v10744 = vsel %vm10670, %v10708, 0.0
        %v10745 = vsel %vm10671, %v10704, 0.0
        %v10746 = vsel %vm10672, %v10708, 0.0
        %v10747 = vsel %vm10673, %v10704, 0.0
        %v10748 = vsel %vm10674, %v10708, 0.0
        %v10749 = vsel %vm10675, %v10704, 0.0
        %v10750 = vsel %vm10676, %v10708, 0.0
        %v10751 = vsel %vm10677, %v10704, 0.0
        %v10752 = vsel %vm10678, %v10708, 0.0
        %v10753 = vsel %vm10679, %v10704, 0.0
        %v10754 = vsel %vm10680, %v10708, 0.0
        %v10755 = vsel %vm10681, %v10704, 0.0
        %v10756 = vsel %vm10682, %v10708, 0.0
        %v10757 = vsel %vm10683, %v10704, 0.0
        %v10758 = vsel %vm10684, %v10708, 0.0
        %v10759 = vsel %vm10685, %v10704, 0.0
        %v10760 = vsel %vm10686, %v10708, 0.0
        %v10761 = vsel %vm10687, %v10704, 0.0
        %v10762 = vsel %vm10688, %v10708, 0.0
        %v10763 = vsel %vm10689, %v10704, 0.0
        %v10764 = vsel %vm10690, %v10708, 0.0
        %v10765 = vsel %vm10691, %v10704, 0.0
        %v10766 = vsel %vm10692, %v10708, 0.0
        %v10767 = vsel %vm10693, %v10704, 0.0
        %v10768 = vsel %vm10694, %v10708, 0.0
        %v10769 = vsel %vm10695, %v10704, 0.0
        %v10770 = vsel %vm10696, %v10708, 0.0
        %v10771 = vsel %vm10697, %v10704, 0.0
        %v10772 = vsel %vm10698, %v10708, 0.0
        %v10773 = vadd.f32 %v10561, %v10709
        %v10774 = vadd.f32 %v10562, %v10710
        %v10775 = vadd.f32 %v10563, %v10711
        %v10776 = vadd.f32 %v10564, %v10712
        %v10777 = vadd.f32 %v10565, %v10713
        %v10778 = vadd.f32 %v10566, %v10714
        %v10779 = vadd.f32 %v10567, %v10715
        %v10780 = vadd.f32 %v10568, %v10716
        %v10781 = vadd.f32 %v10569, %v10717
        %v10782 = vadd.f32 %v10570, %v10718
        %v10783 = vadd.f32 %v10571, %v10719
        %v10784 = vadd.f32 %v10572, %v10720
        %v10785 = vadd.f32 %v10573, %v10721
        %v10786 = vadd.f32 %v10574, %v10722
        %v10787 = vadd.f32 %v10575, %v10723
        %v10788 = vadd.f32 %v10576, %v10724
        %v10789 = vadd.f32 %v10577, %v10725
        %v10790 = vadd.f32 %v10578, %v10726
        %v10791 = vadd.f32 %v10579, %v10727
        %v10792 = vadd.f32 %v10580, %v10728
        %v10793 = vadd.f32 %v10581, %v10729
        %v10794 = vadd.f32 %v10582, %v10730
        %v10795 = vadd.f32 %v10583, %v10731
        %v10796 = vadd.f32 %v10584, %v10732
        %v10797 = vadd.f32 %v10585, %v10733
        %v10798 = vadd.f32 %v10586, %v10734
        %v10799 = vadd.f32 %v10587, %v10735
        %v10800 = vadd.f32 %v10588, %v10736
        %v10801 = vadd.f32 %v10589, %v10737
        %v10802 = vadd.f32 %v10590, %v10738
        %v10803 = vadd.f32 %v10591, %v10739
        %v10804 = vadd.f32 %v10592, %v10740
        %v10805 = vadd.f32 %v10593, %v10741
        %v10806 = vadd.f32 %v10594, %v10742
        %v10807 = vadd.f32 %v10595, %v10743
        %v10808 = vadd.f32 %v10596, %v10744
        %v10809 = vadd.f32 %v10597, %v10745
        %v10810 = vadd.f32 %v10598, %v10746
        %v10811 = vadd.f32 %v10599, %v10747
        %v10812 = vadd.f32 %v10600, %v10748
        %v10813 = vadd.f32 %v10601, %v10749
        %v10814 = vadd.f32 %v10602, %v10750
        %v10815 = vadd.f32 %v10603, %v10751
        %v10816 = vadd.f32 %v10604, %v10752
        %v10817 = vadd.f32 %v10605, %v10753
        %v10818 = vadd.f32 %v10606, %v10754
        %v10819 = vadd.f32 %v10607, %v10755
        %v10820 = vadd.f32 %v10608, %v10756
        %v10821 = vadd.f32 %v10609, %v10757
        %v10822 = vadd.f32 %v10610, %v10758
        %v10823 = vadd.f32 %v10611, %v10759
        %v10824 = vadd.f32 %v10612, %v10760
        %v10825 = vadd.f32 %v10613, %v10761
        %v10826 = vadd.f32 %v10614, %v10762
        %v10827 = vadd.f32 %v10615, %v10763
        %v10828 = vadd.f32 %v10616, %v10764
        %v10829 = vadd.f32 %v10617, %v10765
        %v10830 = vadd.f32 %v10618, %v10766
        %v10831 = vadd.f32 %v10619, %v10767
        %v10832 = vadd.f32 %v10620, %v10768
        %v10833 = vadd.f32 %v10621, %v10769
        %v10834 = vadd.f32 %v10622, %v10770
        %v10835 = vadd.f32 %v10623, %v10771
        %v10836 = vadd.f32 %v10624, %v10772
        %v10837 = vld [vmem:[%s514] sm:$0xff]
        %v10839 = vcombine.high %v10837, %v10837
        %10841 = vmatprep.subr.mxu0 %v10774
        %10842 = vmatpush1.msra.mxu0 %v10773
        %10843 = vmatprep.subr.mxu0 %v10776
        %10844 = vmatpush1.msra.mxu0 %v10775
        %10845 = vmatprep.subr.mxu0 %v10778
        %10846 = vmatpush1.msra.mxu0 %v10777
        %10847 = vmatprep.subr.mxu0 %v10780
        %10848 = vmatpush1.msra.mxu0 %v10779
        %10849 = vmatprep.subr.mxu0 %v10782
        %10850 = vmatpush1.msra.mxu0 %v10781
        %10851 = vmatprep.subr.mxu0 %v10784
        %10852 = vmatpush1.msra.mxu0 %v10783
        %10853 = vmatprep.subr.mxu0 %v10786
        %10854 = vmatpush1.msra.mxu0 %v10785
        %10855 = vmatprep.subr.mxu0 %v10788
        %10856 = vmatpush1.msra.mxu0 %v10787
        %10857 = vmatprep.subr.mxu0 %v10790
        %10858 = vmatpush1.msra.mxu0 %v10789
        %10859 = vmatprep.subr.mxu0 %v10792
        %10860 = vmatpush1.msra.mxu0 %v10791
        %10861 = vmatprep.subr.mxu0 %v10794
        %10862 = vmatpush1.msra.mxu0 %v10793
        %10863 = vmatprep.subr.mxu0 %v10796
        %10864 = vmatpush1.msra.mxu0 %v10795
        %10865 = vmatprep.subr.mxu0 %v10798
        %10866 = vmatpush1.msra.mxu0 %v10797
        %10867 = vmatprep.subr.mxu0 %v10800
        %10868 = vmatpush1.msra.mxu0 %v10799
        %10869 = vmatprep.subr.mxu0 %v10802
        %10870 = vmatpush1.msra.mxu0 %v10801
        %10871 = vmatprep.subr.mxu0 %v10804
        %10872 = vmatpush1.msra.mxu0 %v10803
        %10873 = vmatprep.subr.mxu0 %v10806
        %10874 = vmatpush1.msra.mxu0 %v10805
        %10875 = vmatprep.subr.mxu0 %v10808
        %10876 = vmatpush1.msra.mxu0 %v10807
        %10877 = vmatprep.subr.mxu0 %v10810
        %10878 = vmatpush1.msra.mxu0 %v10809
        %10879 = vmatprep.subr.mxu0 %v10812
        %10880 = vmatpush1.msra.mxu0 %v10811
        %10881 = vmatprep.subr.mxu0 %v10814
        %10882 = vmatpush1.msra.mxu0 %v10813
        %10883 = vmatprep.subr.mxu0 %v10816
        %10884 = vmatpush1.msra.mxu0 %v10815
        %10885 = vmatprep.subr.mxu0 %v10818
        %10886 = vmatpush1.msra.mxu0 %v10817
        %10887 = vmatprep.subr.mxu0 %v10820
        %10888 = vmatpush1.msra.mxu0 %v10819
        %10889 = vmatprep.subr.mxu0 %v10822
        %10890 = vmatpush1.msra.mxu0 %v10821
        %10891 = vmatprep.subr.mxu0 %v10824
        %10892 = vmatpush1.msra.mxu0 %v10823
        %10893 = vmatprep.subr.mxu0 %v10826
        %10894 = vmatpush1.msra.mxu0 %v10825
        %10895 = vmatprep.subr.mxu0 %v10828
        %10896 = vmatpush1.msra.mxu0 %v10827
        %10897 = vmatprep.subr.mxu0 %v10830
        %10898 = vmatpush1.msra.mxu0 %v10829
        %10899 = vmatprep.subr.mxu0 %v10832
        %10900 = vmatpush1.msra.mxu0 %v10831
        %10901 = vmatprep.subr.mxu0 %v10834
        %10902 = vmatpush1.msra.mxu0 %v10833
        %10903 = vmatprep.subr.mxu0 %v10836
        %10904 = vmatpush1.msra.mxu0 %v10835
        %10905 = vmatprep.mubr.f32.mxu0 %v10839
        %10906 = vmatmul.mubr.f32.gmra.mrb[0].mxu0 %v10837
        %v10907 = vpop.f32.mrb[0].mxu0
        %v10908 = vadd.f32 0.0, %v10907
        %v10909 = vpop.f32.mrb[0].mxu0
        %v10910 = vadd.f32 0.0, %v10909
        %10911 = vdwg.mxu0
        %v10914 = vcombine.low %v10908, %v10910
        %10916 = vst [vmem:[%s519] sm:$0xff] %v10914
        %p10917 = scmp.lt.s32.totalorder %s27, 1
        %s10918 = scalar_select %p10917, %s27, 1
        %s10919 = smul.addr %s10918, 2
        %s10920 = smul.addr %s10919, 4
        %s10921 = scalar_lea.vmem %s13, %s10920
        // Predicated region
        $region89: #{tps_forward.1} parent=71 // pred_check
          %p10922 = pneg %p328
        $region90: #{tps_forward.1} parent=71 // pred_check_branch
          %10924 = sbr.rel (%p10922) target = $region92
        $region91: #{tps_forward.1} parent=71 // pred_region
          _
        $region92: #{tps_forward.1} parent=71 // pred_fallthru
          _
      $region72: #{tps_forward.1} parent=5 // pred_fallthru
        _
      %p10925 = scmp.le.s32.totalorder 2, %s22
      // Predicated region
      $region93: #{tps_forward.1} parent=5 // pred_check
        %p10926 = pneg %p10925
      $region94: #{tps_forward.1} parent=5 // pred_check_branch
        %10928 = sbr.rel (%p10926) target = $region96
      $region95: #{tps_forward.1} parent=5 // pred_region
        %s10929 = ssub.s32 %s22, 2
        // Predicated region
        $region97: #{tps_forward.1} parent=95 // pred_check
          %p10930 = pneg %p334
        $region98: #{tps_forward.1} parent=95 // pred_check_branch
          %10932 = sbr.rel (%p10930) target = $region100
        $region99: #{tps_forward.1} parent=95 // pred_region
          %p10933 = scmp.lt.s32.totalorder %s28, 1
          %s10934 = scalar_select %p10933, %s28, 1
          %s10935 = smul.addr %s10934, 2
          %s10936 = smul.addr %s10935, 4
          %s10937 = scalar_lea.vmem %s13, %s10936
        $region100: #{tps_forward.1} parent=95 // pred_fallthru
          _
      $region96: #{tps_forward.1} parent=5 // pred_fallthru
        _
    $region6: #{tps_forward.1} parent=1 // loop_footer
      %s26 = sadd.s32 1, %s22
    $region7: #{tps_forward.1} parent=1 // loop_footer_branch
      %21 = sbr.rel target = $region3
    $region8: #{tps_forward.1} parent=1 // loop_exit
      _
    %10938 = vsyncpa [#allocation6], 1
    %s10939 = scalar_lea.sflag [#allocation6], 1
    %10940 = vsyncpa %s10939, 1
    %10941 = vsyncpa [#allocation8], 1
    %10942 = vsyncpa [#allocation11], 1

</llo_original>
